<compile_context>
chip_gen: v7x
topology: tpu7x:2x2x1
jax: 0.10.0
libtpu: 0.0.40
codegen_flags: <defaults>
</compile_context>

<pallas_src>
import numpy as np

import jax
import jax.numpy as jnp
from jax import lax
from jax.experimental import pallas as pl
from jax.experimental.pallas import tpu as pltpu


# Architecture constants (fixed by the PyTorch module: 6 x /2 pools 128 -> 2,
# flatten 64*2*2 = 256).
CHANNELS = [1, 2, 4, 8, 16, 32, 64]
NUM_BLOCKS = 6
H0 = 128
HID = 200
HID_PAD = 256
NCLS = 80
LANES = 128          # W*Cin == Wo*Cout == 128 at every block, by construction


# ----------------------------------------------------------------------------
# The single fused kernel (one grid step == B batch samples)
# ----------------------------------------------------------------------------
def make_kernel(B):
    def kernel(x_ref,
               m1, a1, m2, a2, m3, a3, m4, a4, m5, a5, m6, a6,
               w1_ref, b1_ref, w2_ref, b2_ref,
               out_ref, shift_ref, pool_ref):
        mcats = (m1, m2, m3, m4, m5, m6)
        affs = (a1, a2, a3, a4, a5, a6)

        x = x_ref[...]                                  # (B*128, 128) f32
        H = H0
        for l in range(NUM_BLOCKS):
            M = B * H

            # ---- 3x3 conv row taps: aligned store + two offset loads -------
            # shift_ref[8 + j] = x[j], so a load at offset 7 gives x[i-1] and
            # at offset 9 gives x[i+1]; per-sample borders (the conv's zero
            # padding in h) are masked on the VPU.  No MXU work for shifts.
            shift_ref[pl.ds(8, M), :] = x
            x_dn = shift_ref[pl.ds(7, M), :]            # row i -> x[i-1]
            x_up = shift_ref[pl.ds(9, M), :]            # row i -> x[i+1]
            rows = lax.broadcasted_iota(jnp.int32, (M, LANES), 0)
            r_in = jnp.bitwise_and(rows, H - 1)         # row index inside sample
            x_dn = jnp.where(r_in == 0, 0.0, x_dn)
            x_up = jnp.where(r_in == H - 1, 0.0, x_up)

            # ---- conv over (ky, kx, cin) + both w-pool parities: ONE dot ----
            x_cat = jnp.concatenate([x_dn, x, x_up], axis=1).astype(jnp.bfloat16)
            a = jnp.dot(x_cat, mcats[l][...],
                        preferred_element_type=jnp.float32)     # (M, 256) f32

            # ---- BatchNorm (eval) + conv bias + ReLU, f32 on the VPU --------
            aff = affs[l][...]
            z = jnp.maximum(a * aff[0:1, :] + aff[1:2, :], 0.0)

            # ---- MaxPool 2x2: lane-half max (w) + stride-2 pair max (h) -----
            zw = jnp.maximum(z[:, 0:LANES], z[:, LANES:2 * LANES])   # (M, 128)
            pool_ref[pl.ds(0, M), :] = zw
            x = jnp.maximum(pool_ref[pl.ds(0, M // 2, stride=2), :],
                            pool_ref[pl.ds(1, M // 2, stride=2), :])  # (M/2,128)
            H //= 2

        # ---- MLP head: x is (2B, 128), rows = (sample, ho) ------------------
        # (the PyTorch NCHW flatten permutation is folded into w1 at build time)
        pool_ref[pl.ds(0, 2 * B), :] = x
        x0 = pool_ref[pl.ds(0, B, stride=2), :]          # ho == 0 rows
        x1 = pool_ref[pl.ds(1, B, stride=2), :]          # ho == 1 rows
        feat = jnp.concatenate([x0, x1], axis=1).astype(jnp.bfloat16)   # (B,256)
        h = jnp.dot(feat, w1_ref[...],
                    preferred_element_type=jnp.float32) + b1_ref[...]
        h = jnp.maximum(h, 0.0)                                          # (B,256)
        logits = (jnp.dot(h.astype(jnp.bfloat16), w2_ref[...],
                          preferred_element_type=jnp.float32)
                  + b2_ref[...])                                         # (B,128)
        m = jnp.max(logits, axis=-1, keepdims=True)
        e = jnp.exp(logits - m)                   # padded lanes: exp(-1e30) = 0
        out_ref[...] = e * pl.reciprocal(jnp.sum(e, axis=-1, keepdims=True),
                                         approx=False)
    return kernel


# ----------------------------------------------------------------------------
# Parameter init (same layer shapes / eval-mode BN semantics as the module)
# ----------------------------------------------------------------------------
def init_params(key):
    eps = 1e-5
    blocks = []
    for l in range(NUM_BLOCKS):
        cin, cout = CHANNELS[l], CHANNELS[l + 1]
        key, k1, k2, k3, k4, k5, k6 = jax.random.split(key, 7)
        w = jax.random.normal(k1, (3, 3, cin, cout), jnp.float32) * (0.3 / np.sqrt(cin))
        bias = jax.random.normal(k2, (cout,), jnp.float32) * 0.1
        gamma = 1.0 + 0.1 * jax.random.normal(k3, (cout,), jnp.float32)
        beta = 0.1 * jax.random.normal(k4, (cout,), jnp.float32)
        rmean = 0.1 * jax.random.normal(k5, (cout,), jnp.float32)
        rvar = 0.5 + 0.1 * jnp.abs(jax.random.normal(k6, (cout,), jnp.float32))
        scale = gamma / jnp.sqrt(rvar + eps)            # BN eval-mode scale
        shift = beta + (bias - rmean) * scale           # BN shift (+ conv bias)
        blocks.append(dict(w=w, scale=scale, shift=shift))

    key, k1, k2, k3, k4 = jax.random.split(key, 5)
    w1 = jax.random.normal(k1, (64 * 2 * 2, HID), jnp.float32) * 0.05
    b1 = jax.random.normal(k2, (HID,), jnp.float32) * 0.05
    w2 = jax.random.normal(k3, (HID, NCLS), jnp.float32) * 0.05
    b2 = jax.random.normal(k4, (NCLS,), jnp.float32) * 0.05
    return blocks, dict(w1=w1, b1=b1, w2=w2, b2=b2)


# ----------------------------------------------------------------------------
# Fold conv / BN / w-pool structure into lane-dense bf16 matmul operands
# ----------------------------------------------------------------------------
def build_kernel_constants(blocks, head):
    consts = []
    H = H0
    for l, blk in enumerate(blocks):
        cin, cout = CHANNELS[l], CHANNELS[l + 1]
        W = H
        Wo = W // 2
        assert W * cin == LANES and Wo * cout == LANES

        # Which input column (w', ci) feeds which output column (wo, co), for
        # each kx tap and each w-pooling parity (the conv's zero padding in w
        # falls out automatically: out-of-range w' simply matches nothing).
        wp = np.arange(W)[None, :, None]
        wo = np.arange(Wo)[None, None, :]
        kx = np.arange(3)[:, None, None]
        sel_e = (wp == 2 * wo + kx - 1).astype(np.float32)     # even w pixel
        sel_o = (wp == 2 * wo + kx).astype(np.float32)         # odd  w pixel

        per_ky = []
        for ky in range(3):
            wt = blk["w"][ky]                                  # (kx, ci, co)
            m_e = jnp.einsum("kvw,kcd->vcwd", jnp.asarray(sel_e), wt
                             ).reshape(W * cin, Wo * cout)
            m_o = jnp.einsum("kvw,kcd->vcwd", jnp.asarray(sel_o), wt
                             ).reshape(W * cin, Wo * cout)
            per_ky.append(jnp.concatenate([m_e, m_o], axis=1))  # (128, 256)
        # K layout matches x_cat = [x[i-1] | x[i] | x[i+1]]  ->  ky = 0, 1, 2.
        mcat = jnp.concatenate(per_ky, axis=0).astype(jnp.bfloat16)   # (384,256)

        # BN affine pre-tiled to the (wo, co) lane layout, for both parities.
        st = jnp.tile(blk["scale"], Wo)
        sh = jnp.tile(blk["shift"], Wo)
        aff = jnp.stack([jnp.concatenate([st, st]),
                         jnp.concatenate([sh, sh])])            # (2, 256) f32

        consts += [mcat, aff]
        H = H // 2

    # Head: fold PyTorch's NCHW x.view(N,-1) order into lin_1; pad 200 -> 256
    # and 80 -> 128 (padded logit biases are -1e30 so softmax ignores them).
    w1, b1, w2, b2 = head["w1"], head["b1"], head["w2"], head["b2"]
    cols = np.arange(LANES)
    wo_i, co_i = cols // 64, cols % 64
    rows = []
    for ho_i in range(2):
        f = co_i * 4 + ho_i * 2 + wo_i                          # NCHW flatten idx
        rows.append(w1[jnp.asarray(f), :])                      # (128, 200)
    w1p = jnp.concatenate(rows, axis=0)                         # (256, 200)
    w1p = jnp.pad(w1p, ((0, 0), (0, HID_PAD - HID))).astype(jnp.bfloat16)
    b1p = jnp.pad(b1, (0, HID_PAD - HID)).reshape(1, HID_PAD)
    w2p = jnp.pad(w2, ((0, HID_PAD - HID), (0, LANES - NCLS))).astype(jnp.bfloat16)
    b2p = jnp.pad(b2, (0, LANES - NCLS), constant_values=-1e30).reshape(1, LANES)
    consts += [w1p, b1p, w2p, b2p]
    return consts


def convnn_forward(x_nchw, consts, batch_per_step=8):
    N = x_nchw.shape[0]
    B = batch_per_step
    assert N % B == 0 and B >= 2, (N, B)   # B >= 2 keeps every row count >= 8
    x2d = x_nchw.reshape(N * H0, LANES)    # Cin == 1: rows = (n, h), cols = w

    in_specs = [pl.BlockSpec((B * H0, LANES), lambda i: (i, 0))]
    in_specs += [pl.BlockSpec(c.shape, lambda i: (0, 0)) for c in consts]

    out = pl.pallas_call(
        make_kernel(B),
        out_shape=jax.ShapeDtypeStruct((N // B, B, LANES), jnp.float32),
        grid=(N // B,),
        in_specs=in_specs,
        out_specs=pl.BlockSpec((None, B, LANES), lambda i: (i, 0, 0)),
        scratch_shapes=[
            pltpu.VMEM((B * H0 + 16, LANES), jnp.float32),   # row-shift buffer
            pltpu.VMEM((B * H0, LANES), jnp.float32),        # pooling buffer
        ],
        compiler_params=pltpu.CompilerParams(
            dimension_semantics=("parallel",),       # batch groups across TCs
            vmem_limit_bytes=32 * 1024 * 1024,       # safe on v5e/v6e/v7x
        ),
    )(x2d, *consts)
    return out.reshape(N, LANES)[:, :NCLS]


# ----------------------------------------------------------------------------
# Pure-JAX reference (bf16_dots=True mirrors the kernel's matmul quantisation)
# ----------------------------------------------------------------------------
def reference_forward(x_nchw, blocks, head, bf16_dots=True):
    dd = jnp.bfloat16 if bf16_dots else jnp.float32
    x = jnp.transpose(x_nchw, (0, 2, 3, 1))          # NHWC
    for blk in blocks:
        y = lax.conv_general_dilated(
            x.astype(dd), blk["w"].astype(dd),
            window_strides=(1, 1), padding="SAME",
            dimension_numbers=("NHWC", "HWIO", "NHWC"),
            preferred_element_type=jnp.float32,
            precision=lax.Precision.HIGHEST)
        y = y * blk["scale"] + blk["shift"]
        y = jnp.maximum(y, 0.0)
        x = lax.reduce_window(y, -jnp.inf, lax.max,
                              (1, 2, 2, 1), (1, 2, 2, 1), "VALID")
    n = x.shape[0]
    flat = jnp.transpose(x, (0, 3, 1, 2)).reshape(n, -1)     # PyTorch NCHW flatten
    h = jnp.dot(flat.astype(dd), head["w1"].astype(dd),
                preferred_element_type=jnp.float32,
                precision=lax.Precision.HIGHEST) + head["b1"]
    h = jnp.maximum(h, 0.0)
    logits = jnp.dot(h.astype(dd), head["w2"].astype(dd),
                     preferred_element_type=jnp.float32,
                     precision=lax.Precision.HIGHEST) + head["b2"]
    return jax.nn.softmax(logits, axis=-1)


if __name__ == "__main__":
    key = jax.random.PRNGKey(0)
    kx, kp = jax.random.split(key)
    # 6 maxpools of /2 down to 2x2 with a 64*2*2 flatten => input must be 128x128x1.
    N, B = 8, 4                               # grid = (2,), 4 samples per step
    x = jax.random.normal(kx, (N, 1, H0, H0), jnp.float32)
    blocks, head = init_params(kp)
    consts = build_kernel_constants(blocks, head)

    fwd = jax.jit(lambda xx, cc: convnn_forward(xx, cc, batch_per_step=B))
    out = jax.block_until_ready(fwd(x, consts))

    assert out.shape == (N, NCLS), out.shape
    assert out.dtype == jnp.float32
    assert bool(jnp.all(jnp.isfinite(out)))
    row_sums = jnp.sum(out, axis=1)
    assert bool(jnp.all(jnp.abs(row_sums - 1.0) < 1e-4)), row_sums

    # Exact-semantics check against a pure-JAX forward that uses the same bf16
    # matmul operands (f32 accumulate) as the kernel.
    ref = jax.block_until_ready(
        jax.jit(lambda xx: reference_forward(xx, blocks, head, bf16_dots=True))(x))
    err = float(jnp.max(jnp.abs(out - ref)))
    assert err < 2e-3, err

    # Sanity check against the full-f32 forward (bf16 quantisation noise only).
    ref32 = jax.block_until_ready(
        jax.jit(lambda xx: reference_forward(xx, blocks, head, bf16_dots=False))(x))
    err32 = float(jnp.max(jnp.abs(out - ref32)))
    assert err32 < 2e-2, err32

    print("KERNEL_OK")
</pallas_src>

<mosaic_0001>
module attributes {stable_mosaic.version = 11 : i64} {
  func.func @kernel(%arg0: i32, %arg1: memref<512x128xf32, #tpu.memory_space<vmem>>, %arg2: memref<384x256xbf16, #tpu.memory_space<vmem>>, %arg3: memref<2x256xf32, #tpu.memory_space<vmem>>, %arg4: memref<384x256xbf16, #tpu.memory_space<vmem>>, %arg5: memref<2x256xf32, #tpu.memory_space<vmem>>, %arg6: memref<384x256xbf16, #tpu.memory_space<vmem>>, %arg7: memref<2x256xf32, #tpu.memory_space<vmem>>, %arg8: memref<384x256xbf16, #tpu.memory_space<vmem>>, %arg9: memref<2x256xf32, #tpu.memory_space<vmem>>, %arg10: memref<384x256xbf16, #tpu.memory_space<vmem>>, %arg11: memref<2x256xf32, #tpu.memory_space<vmem>>, %arg12: memref<384x256xbf16, #tpu.memory_space<vmem>>, %arg13: memref<2x256xf32, #tpu.memory_space<vmem>>, %arg14: memref<256x256xbf16, #tpu.memory_space<vmem>>, %arg15: memref<1x256xf32, #tpu.memory_space<vmem>>, %arg16: memref<256x128xbf16, #tpu.memory_space<vmem>>, %arg17: memref<1x128xf32, #tpu.memory_space<vmem>>, %arg18: memref<1x4x128xf32, #tpu.memory_space<vmem>>, %arg19: memref<528x128xf32, #tpu.memory_space<vmem>>, %arg20: memref<512x128xf32, #tpu.memory_space<vmem>>) attributes {dimension_semantics = [#tpu.dimension_semantics<parallel>], iteration_bounds = array<i64: 2>, scalar_prefetch = 0 : i64, scratch_operands = 2 : i64, tpu.core_type = #tpu.core_type<tc>, window_params = [{transform_indices = @transform_0, window_bounds = array<i64: 512, 128>}, {pipeline_mode = #tpu.pipeline_mode<synchronous>, transform_indices = @transform_1, window_bounds = array<i64: 384, 256>}, {pipeline_mode = #tpu.pipeline_mode<synchronous>, transform_indices = @transform_2, window_bounds = array<i64: 2, 256>}, {pipeline_mode = #tpu.pipeline_mode<synchronous>, transform_indices = @transform_3, window_bounds = array<i64: 384, 256>}, {pipeline_mode = #tpu.pipeline_mode<synchronous>, transform_indices = @transform_4, window_bounds = array<i64: 2, 256>}, {pipeline_mode = #tpu.pipeline_mode<synchronous>, transform_indices = @transform_5, window_bounds = array<i64: 384, 256>}, {pipeline_mode = #tpu.pipeline_mode<synchronous>, transform_indices = @transform_6, window_bounds = array<i64: 2, 256>}, {pipeline_mode = #tpu.pipeline_mode<synchronous>, transform_indices = @transform_7, window_bounds = array<i64: 384, 256>}, {pipeline_mode = #tpu.pipeline_mode<synchronous>, transform_indices = @transform_8, window_bounds = array<i64: 2, 256>}, {pipeline_mode = #tpu.pipeline_mode<synchronous>, transform_indices = @transform_9, window_bounds = array<i64: 384, 256>}, {pipeline_mode = #tpu.pipeline_mode<synchronous>, transform_indices = @transform_10, window_bounds = array<i64: 2, 256>}, {pipeline_mode = #tpu.pipeline_mode<synchronous>, transform_indices = @transform_11, window_bounds = array<i64: 384, 256>}, {pipeline_mode = #tpu.pipeline_mode<synchronous>, transform_indices = @transform_12, window_bounds = array<i64: 2, 256>}, {pipeline_mode = #tpu.pipeline_mode<synchronous>, transform_indices = @transform_13, window_bounds = array<i64: 256, 256>}, {pipeline_mode = #tpu.pipeline_mode<synchronous>, transform_indices = @transform_14, window_bounds = array<i64: 1, 256>}, {pipeline_mode = #tpu.pipeline_mode<synchronous>, transform_indices = @transform_15, window_bounds = array<i64: 256, 128>}, {pipeline_mode = #tpu.pipeline_mode<synchronous>, transform_indices = @transform_16, window_bounds = array<i64: 1, 128>}, {transform_indices = @transform_17, window_bounds = array<i64: 1, 4, 128>}]} {
    %c0 = arith.constant 0 : index
    %c0_0 = arith.constant 0 : index
    %0 = vector.load %arg1[%c0, %c0_0] : memref<512x128xf32, #tpu.memory_space<vmem>>, vector<512x128xf32>
    %c8 = arith.constant 8 : index
    %c0_1 = arith.constant 0 : index
    %1 = vector.load %arg19[%c8, %c0_1] : memref<528x128xf32, #tpu.memory_space<vmem>>, vector<512x128xf32>
    tpu.vector_store %arg19[%c8, %c0_1], %0 {strides = array<i32>} : memref<528x128xf32, #tpu.memory_space<vmem>>, vector<512x128xf32>,
    %c7 = arith.constant 7 : index
    %c0_2 = arith.constant 0 : index
    %2 = vector.load %arg19[%c7, %c0_2] : memref<528x128xf32, #tpu.memory_space<vmem>>, vector<512x128xf32>
    %c9 = arith.constant 9 : index
    %c0_3 = arith.constant 0 : index
    %3 = vector.load %arg19[%c9, %c0_3] : memref<528x128xf32, #tpu.memory_space<vmem>>, vector<512x128xf32>
    %4 = tpu.iota {dimensions = array<i32: 0>} : vector<512x128xi32>
    %c127_i32 = arith.constant 127 : i32
    %5 = vector.broadcast %c127_i32 : i32 to vector<512x128xi32>
    %6 = arith.andi %4, %5 : vector<512x128xi32>
    %c0_i32 = arith.constant 0 : i32
    %7 = vector.broadcast %c0_i32 : i32 to vector<512x128xi32>
    %8 = arith.cmpi eq, %6, %7 : vector<512x128xi32>
    %cst = arith.constant 0.000000e+00 : f32
    %9 = vector.broadcast %cst : f32 to vector<512x128xf32>
    %10 = arith.select %8, %9, %2 : vector<512x128xi1>, vector<512x128xf32>
    %c127_i32_4 = arith.constant 127 : i32
    %11 = vector.broadcast %c127_i32_4 : i32 to vector<512x128xi32>
    %12 = arith.cmpi eq, %6, %11 : vector<512x128xi32>
    %cst_5 = arith.constant 0.000000e+00 : f32
    %13 = vector.broadcast %cst_5 : f32 to vector<512x128xf32>
    %14 = arith.select %12, %13, %3 : vector<512x128xi1>, vector<512x128xf32>
    %15 = tpu.concatenate %10, %0, %14 in 1 : vector<512x128xf32>, vector<512x128xf32>, vector<512x128xf32> -> vector<512x384xf32>
    %16 = arith.truncf %15 : vector<512x384xf32> to vector<512x384xbf16>
    %c0_6 = arith.constant 0 : index
    %c0_7 = arith.constant 0 : index
    %17 = vector.load %arg2[%c0_6, %c0_7] : memref<384x256xbf16, #tpu.memory_space<vmem>>, vector<384x256xbf16>
    %cst_8 = arith.constant dense<0.000000e+00> : vector<512x256xf32>
    %18 = tpu.matmul %16, %17, %cst_8 {dimension_numbers = #tpu.dot_dimension_numbers<[1], [0], [0], [1], [0, 0, 1, 1], [], []>} : vector<512x384xbf16>, vector<384x256xbf16>, vector<512x256xf32> -> vector<512x256xf32>
    %c0_9 = arith.constant 0 : index
    %c0_10 = arith.constant 0 : index
    %19 = vector.load %arg3[%c0_9, %c0_10] : memref<2x256xf32, #tpu.memory_space<vmem>>, vector<2x256xf32>
    %20 = vector.extract_strided_slice %19 {offsets = [0, 0], sizes = [1, 256], strides = [1, 1]} : vector<2x256xf32> to vector<1x256xf32>
    %21 = vector.broadcast %20 : vector<1x256xf32> to vector<512x256xf32>
    %22 = arith.mulf %18, %21 : vector<512x256xf32>
    %23 = vector.extract_strided_slice %19 {offsets = [1, 0], sizes = [1, 256], strides = [1, 1]} : vector<2x256xf32> to vector<1x256xf32>
    %24 = vector.broadcast %23 : vector<1x256xf32> to vector<512x256xf32>
    %25 = arith.addf %22, %24 : vector<512x256xf32>
    %cst_11 = arith.constant 0.000000e+00 : f32
    %26 = vector.broadcast %cst_11 : f32 to vector<512x256xf32>
    %27 = arith.maximumf %25, %26 : vector<512x256xf32>
    %28 = vector.extract_strided_slice %27 {offsets = [0, 0], sizes = [512, 128], strides = [1, 1]} : vector<512x256xf32> to vector<512x128xf32>
    %29 = vector.extract_strided_slice %27 {offsets = [0, 128], sizes = [512, 128], strides = [1, 1]} : vector<512x256xf32> to vector<512x128xf32>
    %30 = arith.maximumf %28, %29 : vector<512x128xf32>
    %c0_12 = arith.constant 0 : index
    %c0_13 = arith.constant 0 : index
    %31 = vector.load %arg20[%c0_12, %c0_13] : memref<512x128xf32, #tpu.memory_space<vmem>>, vector<512x128xf32>
    tpu.vector_store %arg20[%c0_12, %c0_13], %30 {strides = array<i32>} : memref<512x128xf32, #tpu.memory_space<vmem>>, vector<512x128xf32>,
    %c0_14 = arith.constant 0 : index
    %c0_15 = arith.constant 0 : index
    %32 = tpu.strided_load %arg20[%c0_14, %c0_15] {strides = array<i32: 2, 1>} : memref<512x128xf32, #tpu.memory_space<vmem>>, vector<256x128xf32>
    %c1 = arith.constant 1 : index
    %c0_16 = arith.constant 0 : index
    %33 = tpu.strided_load %arg20[%c1, %c0_16] {strides = array<i32: 2, 1>} : memref<512x128xf32, #tpu.memory_space<vmem>>, vector<256x128xf32>
    %34 = arith.maximumf %32, %33 : vector<256x128xf32>
    %c8_17 = arith.constant 8 : index
    %c0_18 = arith.constant 0 : index
    %35 = vector.load %arg19[%c8_17, %c0_18] : memref<528x128xf32, #tpu.memory_space<vmem>>, vector<256x128xf32>
    tpu.vector_store %arg19[%c8_17, %c0_18], %34 {strides = array<i32>} : memref<528x128xf32, #tpu.memory_space<vmem>>, vector<256x128xf32>,
    %c7_19 = arith.constant 7 : index
    %c0_20 = arith.constant 0 : index
    %36 = vector.load %arg19[%c7_19, %c0_20] : memref<528x128xf32, #tpu.memory_space<vmem>>, vector<256x128xf32>
    %c9_21 = arith.constant 9 : index
    %c0_22 = arith.constant 0 : index
    %37 = vector.load %arg19[%c9_21, %c0_22] : memref<528x128xf32, #tpu.memory_space<vmem>>, vector<256x128xf32>
    %38 = tpu.iota {dimensions = array<i32: 0>} : vector<256x128xi32>
    %c63_i32 = arith.constant 63 : i32
    %39 = vector.broadcast %c63_i32 : i32 to vector<256x128xi32>
    %40 = arith.andi %38, %39 : vector<256x128xi32>
    %c0_i32_23 = arith.constant 0 : i32
    %41 = vector.broadcast %c0_i32_23 : i32 to vector<256x128xi32>
    %42 = arith.cmpi eq, %40, %41 : vector<256x128xi32>
    %cst_24 = arith.constant 0.000000e+00 : f32
    %43 = vector.broadcast %cst_24 : f32 to vector<256x128xf32>
    %44 = arith.select %42, %43, %36 : vector<256x128xi1>, vector<256x128xf32>
    %c63_i32_25 = arith.constant 63 : i32
    %45 = vector.broadcast %c63_i32_25 : i32 to vector<256x128xi32>
    %46 = arith.cmpi eq, %40, %45 : vector<256x128xi32>
    %cst_26 = arith.constant 0.000000e+00 : f32
    %47 = vector.broadcast %cst_26 : f32 to vector<256x128xf32>
    %48 = arith.select %46, %47, %37 : vector<256x128xi1>, vector<256x128xf32>
    %49 = tpu.concatenate %44, %34, %48 in 1 : vector<256x128xf32>, vector<256x128xf32>, vector<256x128xf32> -> vector<256x384xf32>
    %50 = arith.truncf %49 : vector<256x384xf32> to vector<256x384xbf16>
    %c0_27 = arith.constant 0 : index
    %c0_28 = arith.constant 0 : index
    %51 = vector.load %arg4[%c0_27, %c0_28] : memref<384x256xbf16, #tpu.memory_space<vmem>>, vector<384x256xbf16>
    %cst_29 = arith.constant dense<0.000000e+00> : vector<256x256xf32>
    %52 = tpu.matmul %50, %51, %cst_29 {dimension_numbers = #tpu.dot_dimension_numbers<[1], [0], [0], [1], [0, 0, 1, 1], [], []>} : vector<256x384xbf16>, vector<384x256xbf16>, vector<256x256xf32> -> vector<256x256xf32>
    %c0_30 = arith.constant 0 : index
    %c0_31 = arith.constant 0 : index
    %53 = vector.load %arg5[%c0_30, %c0_31] : memref<2x256xf32, #tpu.memory_space<vmem>>, vector<2x256xf32>
    %54 = vector.extract_strided_slice %53 {offsets = [0, 0], sizes = [1, 256], strides = [1, 1]} : vector<2x256xf32> to vector<1x256xf32>
    %55 = vector.broadcast %54 : vector<1x256xf32> to vector<256x256xf32>
    %56 = arith.mulf %52, %55 : vector<256x256xf32>
    %57 = vector.extract_strided_slice %53 {offsets = [1, 0], sizes = [1, 256], strides = [1, 1]} : vector<2x256xf32> to vector<1x256xf32>
    %58 = vector.broadcast %57 : vector<1x256xf32> to vector<256x256xf32>
    %59 = arith.addf %56, %58 : vector<256x256xf32>
    %cst_32 = arith.constant 0.000000e+00 : f32
    %60 = vector.broadcast %cst_32 : f32 to vector<256x256xf32>
    %61 = arith.maximumf %59, %60 : vector<256x256xf32>
    %62 = vector.extract_strided_slice %61 {offsets = [0, 0], sizes = [256, 128], strides = [1, 1]} : vector<256x256xf32> to vector<256x128xf32>
    %63 = vector.extract_strided_slice %61 {offsets = [0, 128], sizes = [256, 128], strides = [1, 1]} : vector<256x256xf32> to vector<256x128xf32>
    %64 = arith.maximumf %62, %63 : vector<256x128xf32>
    %c0_33 = arith.constant 0 : index
    %c0_34 = arith.constant 0 : index
    %65 = vector.load %arg20[%c0_33, %c0_34] : memref<512x128xf32, #tpu.memory_space<vmem>>, vector<256x128xf32>
    tpu.vector_store %arg20[%c0_33, %c0_34], %64 {strides = array<i32>} : memref<512x128xf32, #tpu.memory_space<vmem>>, vector<256x128xf32>,
    %c0_35 = arith.constant 0 : index
    %c0_36 = arith.constant 0 : index
    %66 = tpu.strided_load %arg20[%c0_35, %c0_36] {strides = array<i32: 2, 1>} : memref<512x128xf32, #tpu.memory_space<vmem>>, vector<128x128xf32>
    %c1_37 = arith.constant 1 : index
    %c0_38 = arith.constant 0 : index
    %67 = tpu.strided_load %arg20[%c1_37, %c0_38] {strides = array<i32: 2, 1>} : memref<512x128xf32, #tpu.memory_space<vmem>>, vector<128x128xf32>
    %68 = arith.maximumf %66, %67 : vector<128x128xf32>
    %c8_39 = arith.constant 8 : index
    %c0_40 = arith.constant 0 : index
    %69 = vector.load %arg19[%c8_39, %c0_40] : memref<528x128xf32, #tpu.memory_space<vmem>>, vector<128x128xf32>
    tpu.vector_store %arg19[%c8_39, %c0_40], %68 {strides = array<i32>} : memref<528x128xf32, #tpu.memory_space<vmem>>, vector<128x128xf32>,
    %c7_41 = arith.constant 7 : index
    %c0_42 = arith.constant 0 : index
    %70 = vector.load %arg19[%c7_41, %c0_42] : memref<528x128xf32, #tpu.memory_space<vmem>>, vector<128x128xf32>
    %c9_43 = arith.constant 9 : index
    %c0_44 = arith.constant 0 : index
    %71 = vector.load %arg19[%c9_43, %c0_44] : memref<528x128xf32, #tpu.memory_space<vmem>>, vector<128x128xf32>
    %72 = tpu.iota {dimensions = array<i32: 0>} : vector<128x128xi32>
    %c31_i32 = arith.constant 31 : i32
    %73 = vector.broadcast %c31_i32 : i32 to vector<128x128xi32>
    %74 = arith.andi %72, %73 : vector<128x128xi32>
    %c0_i32_45 = arith.constant 0 : i32
    %75 = vector.broadcast %c0_i32_45 : i32 to vector<128x128xi32>
    %76 = arith.cmpi eq, %74, %75 : vector<128x128xi32>
    %cst_46 = arith.constant 0.000000e+00 : f32
    %77 = vector.broadcast %cst_46 : f32 to vector<128x128xf32>
    %78 = arith.select %76, %77, %70 : vector<128x128xi1>, vector<128x128xf32>
    %c31_i32_47 = arith.constant 31 : i32
    %79 = vector.broadcast %c31_i32_47 : i32 to vector<128x128xi32>
    %80 = arith.cmpi eq, %74, %79 : vector<128x128xi32>
    %cst_48 = arith.constant 0.000000e+00 : f32
    %81 = vector.broadcast %cst_48 : f32 to vector<128x128xf32>
    %82 = arith.select %80, %81, %71 : vector<128x128xi1>, vector<128x128xf32>
    %83 = tpu.concatenate %78, %68, %82 in 1 : vector<128x128xf32>, vector<128x128xf32>, vector<128x128xf32> -> vector<128x384xf32>
    %84 = arith.truncf %83 : vector<128x384xf32> to vector<128x384xbf16>
    %c0_49 = arith.constant 0 : index
    %c0_50 = arith.constant 0 : index
    %85 = vector.load %arg6[%c0_49, %c0_50] : memref<384x256xbf16, #tpu.memory_space<vmem>>, vector<384x256xbf16>
    %cst_51 = arith.constant dense<0.000000e+00> : vector<128x256xf32>
    %86 = tpu.matmul %84, %85, %cst_51 {dimension_numbers = #tpu.dot_dimension_numbers<[1], [0], [0], [1], [0, 0, 1, 1], [], []>} : vector<128x384xbf16>, vector<384x256xbf16>, vector<128x256xf32> -> vector<128x256xf32>
    %c0_52 = arith.constant 0 : index
    %c0_53 = arith.constant 0 : index
    %87 = vector.load %arg7[%c0_52, %c0_53] : memref<2x256xf32, #tpu.memory_space<vmem>>, vector<2x256xf32>
    %88 = vector.extract_strided_slice %87 {offsets = [0, 0], sizes = [1, 256], strides = [1, 1]} : vector<2x256xf32> to vector<1x256xf32>
    %89 = vector.broadcast %88 : vector<1x256xf32> to vector<128x256xf32>
    %90 = arith.mulf %86, %89 : vector<128x256xf32>
    %91 = vector.extract_strided_slice %87 {offsets = [1, 0], sizes = [1, 256], strides = [1, 1]} : vector<2x256xf32> to vector<1x256xf32>
    %92 = vector.broadcast %91 : vector<1x256xf32> to vector<128x256xf32>
    %93 = arith.addf %90, %92 : vector<128x256xf32>
    %cst_54 = arith.constant 0.000000e+00 : f32
    %94 = vector.broadcast %cst_54 : f32 to vector<128x256xf32>
    %95 = arith.maximumf %93, %94 : vector<128x256xf32>
    %96 = vector.extract_strided_slice %95 {offsets = [0, 0], sizes = [128, 128], strides = [1, 1]} : vector<128x256xf32> to vector<128x128xf32>
    %97 = vector.extract_strided_slice %95 {offsets = [0, 128], sizes = [128, 128], strides = [1, 1]} : vector<128x256xf32> to vector<128x128xf32>
    %98 = arith.maximumf %96, %97 : vector<128x128xf32>
    %c0_55 = arith.constant 0 : index
    %c0_56 = arith.constant 0 : index
    %99 = vector.load %arg20[%c0_55, %c0_56] : memref<512x128xf32, #tpu.memory_space<vmem>>, vector<128x128xf32>
    tpu.vector_store %arg20[%c0_55, %c0_56], %98 {strides = array<i32>} : memref<512x128xf32, #tpu.memory_space<vmem>>, vector<128x128xf32>,
    %c0_57 = arith.constant 0 : index
    %c0_58 = arith.constant 0 : index
    %100 = tpu.strided_load %arg20[%c0_57, %c0_58] {strides = array<i32: 2, 1>} : memref<512x128xf32, #tpu.memory_space<vmem>>, vector<64x128xf32>
    %c1_59 = arith.constant 1 : index
    %c0_60 = arith.constant 0 : index
    %101 = tpu.strided_load %arg20[%c1_59, %c0_60] {strides = array<i32: 2, 1>} : memref<512x128xf32, #tpu.memory_space<vmem>>, vector<64x128xf32>
    %102 = arith.maximumf %100, %101 : vector<64x128xf32>
    %c8_61 = arith.constant 8 : index
    %c0_62 = arith.constant 0 : index
    %103 = vector.load %arg19[%c8_61, %c0_62] : memref<528x128xf32, #tpu.memory_space<vmem>>, vector<64x128xf32>
    tpu.vector_store %arg19[%c8_61, %c0_62], %102 {strides = array<i32>} : memref<528x128xf32, #tpu.memory_space<vmem>>, vector<64x128xf32>,
    %c7_63 = arith.constant 7 : index
    %c0_64 = arith.constant 0 : index
    %104 = vector.load %arg19[%c7_63, %c0_64] : memref<528x128xf32, #tpu.memory_space<vmem>>, vector<64x128xf32>
    %c9_65 = arith.constant 9 : index
    %c0_66 = arith.constant 0 : index
    %105 = vector.load %arg19[%c9_65, %c0_66] : memref<528x128xf32, #tpu.memory_space<vmem>>, vector<64x128xf32>
    %106 = tpu.iota {dimensions = array<i32: 0>} : vector<64x128xi32>
    %c15_i32 = arith.constant 15 : i32
    %107 = vector.broadcast %c15_i32 : i32 to vector<64x128xi32>
    %108 = arith.andi %106, %107 : vector<64x128xi32>
    %c0_i32_67 = arith.constant 0 : i32
    %109 = vector.broadcast %c0_i32_67 : i32 to vector<64x128xi32>
    %110 = arith.cmpi eq, %108, %109 : vector<64x128xi32>
    %cst_68 = arith.constant 0.000000e+00 : f32
    %111 = vector.broadcast %cst_68 : f32 to vector<64x128xf32>
    %112 = arith.select %110, %111, %104 : vector<64x128xi1>, vector<64x128xf32>
    %c15_i32_69 = arith.constant 15 : i32
    %113 = vector.broadcast %c15_i32_69 : i32 to vector<64x128xi32>
    %114 = arith.cmpi eq, %108, %113 : vector<64x128xi32>
    %cst_70 = arith.constant 0.000000e+00 : f32
    %115 = vector.broadcast %cst_70 : f32 to vector<64x128xf32>
    %116 = arith.select %114, %115, %105 : vector<64x128xi1>, vector<64x128xf32>
    %117 = tpu.concatenate %112, %102, %116 in 1 : vector<64x128xf32>, vector<64x128xf32>, vector<64x128xf32> -> vector<64x384xf32>
    %118 = arith.truncf %117 : vector<64x384xf32> to vector<64x384xbf16>
    %c0_71 = arith.constant 0 : index
    %c0_72 = arith.constant 0 : index
    %119 = vector.load %arg8[%c0_71, %c0_72] : memref<384x256xbf16, #tpu.memory_space<vmem>>, vector<384x256xbf16>
    %cst_73 = arith.constant dense<0.000000e+00> : vector<64x256xf32>
    %120 = tpu.matmul %118, %119, %cst_73 {dimension_numbers = #tpu.dot_dimension_numbers<[1], [0], [0], [1], [0, 0, 1, 1], [], []>} : vector<64x384xbf16>, vector<384x256xbf16>, vector<64x256xf32> -> vector<64x256xf32>
    %c0_74 = arith.constant 0 : index
    %c0_75 = arith.constant 0 : index
    %121 = vector.load %arg9[%c0_74, %c0_75] : memref<2x256xf32, #tpu.memory_space<vmem>>, vector<2x256xf32>
    %122 = vector.extract_strided_slice %121 {offsets = [0, 0], sizes = [1, 256], strides = [1, 1]} : vector<2x256xf32> to vector<1x256xf32>
    %123 = vector.broadcast %122 : vector<1x256xf32> to vector<64x256xf32>
    %124 = arith.mulf %120, %123 : vector<64x256xf32>
    %125 = vector.extract_strided_slice %121 {offsets = [1, 0], sizes = [1, 256], strides = [1, 1]} : vector<2x256xf32> to vector<1x256xf32>
    %126 = vector.broadcast %125 : vector<1x256xf32> to vector<64x256xf32>
    %127 = arith.addf %124, %126 : vector<64x256xf32>
    %cst_76 = arith.constant 0.000000e+00 : f32
    %128 = vector.broadcast %cst_76 : f32 to vector<64x256xf32>
    %129 = arith.maximumf %127, %128 : vector<64x256xf32>
    %130 = vector.extract_strided_slice %129 {offsets = [0, 0], sizes = [64, 128], strides = [1, 1]} : vector<64x256xf32> to vector<64x128xf32>
    %131 = vector.extract_strided_slice %129 {offsets = [0, 128], sizes = [64, 128], strides = [1, 1]} : vector<64x256xf32> to vector<64x128xf32>
    %132 = arith.maximumf %130, %131 : vector<64x128xf32>
    %c0_77 = arith.constant 0 : index
    %c0_78 = arith.constant 0 : index
    %133 = vector.load %arg20[%c0_77, %c0_78] : memref<512x128xf32, #tpu.memory_space<vmem>>, vector<64x128xf32>
    tpu.vector_store %arg20[%c0_77, %c0_78], %132 {strides = array<i32>} : memref<512x128xf32, #tpu.memory_space<vmem>>, vector<64x128xf32>,
    %c0_79 = arith.constant 0 : index
    %c0_80 = arith.constant 0 : index
    %134 = tpu.strided_load %arg20[%c0_79, %c0_80] {strides = array<i32: 2, 1>} : memref<512x128xf32, #tpu.memory_space<vmem>>, vector<32x128xf32>
    %c1_81 = arith.constant 1 : index
    %c0_82 = arith.constant 0 : index
    %135 = tpu.strided_load %arg20[%c1_81, %c0_82] {strides = array<i32: 2, 1>} : memref<512x128xf32, #tpu.memory_space<vmem>>, vector<32x128xf32>
    %136 = arith.maximumf %134, %135 : vector<32x128xf32>
    %c8_83 = arith.constant 8 : index
    %c0_84 = arith.constant 0 : index
    %137 = vector.load %arg19[%c8_83, %c0_84] : memref<528x128xf32, #tpu.memory_space<vmem>>, vector<32x128xf32>
    tpu.vector_store %arg19[%c8_83, %c0_84], %136 {strides = array<i32>} : memref<528x128xf32, #tpu.memory_space<vmem>>, vector<32x128xf32>,
    %c7_85 = arith.constant 7 : index
    %c0_86 = arith.constant 0 : index
    %138 = vector.load %arg19[%c7_85, %c0_86] : memref<528x128xf32, #tpu.memory_space<vmem>>, vector<32x128xf32>
    %c9_87 = arith.constant 9 : index
    %c0_88 = arith.constant 0 : index
    %139 = vector.load %arg19[%c9_87, %c0_88] : memref<528x128xf32, #tpu.memory_space<vmem>>, vector<32x128xf32>
    %140 = tpu.iota {dimensions = array<i32: 0>} : vector<32x128xi32>
    %c7_i32 = arith.constant 7 : i32
    %141 = vector.broadcast %c7_i32 : i32 to vector<32x128xi32>
    %142 = arith.andi %140, %141 : vector<32x128xi32>
    %c0_i32_89 = arith.constant 0 : i32
    %143 = vector.broadcast %c0_i32_89 : i32 to vector<32x128xi32>
    %144 = arith.cmpi eq, %142, %143 : vector<32x128xi32>
    %cst_90 = arith.constant 0.000000e+00 : f32
    %145 = vector.broadcast %cst_90 : f32 to vector<32x128xf32>
    %146 = arith.select %144, %145, %138 : vector<32x128xi1>, vector<32x128xf32>
    %c7_i32_91 = arith.constant 7 : i32
    %147 = vector.broadcast %c7_i32_91 : i32 to vector<32x128xi32>
    %148 = arith.cmpi eq, %142, %147 : vector<32x128xi32>
    %cst_92 = arith.constant 0.000000e+00 : f32
    %149 = vector.broadcast %cst_92 : f32 to vector<32x128xf32>
    %150 = arith.select %148, %149, %139 : vector<32x128xi1>, vector<32x128xf32>
    %151 = tpu.concatenate %146, %136, %150 in 1 : vector<32x128xf32>, vector<32x128xf32>, vector<32x128xf32> -> vector<32x384xf32>
    %152 = arith.truncf %151 : vector<32x384xf32> to vector<32x384xbf16>
    %c0_93 = arith.constant 0 : index
    %c0_94 = arith.constant 0 : index
    %153 = vector.load %arg10[%c0_93, %c0_94] : memref<384x256xbf16, #tpu.memory_space<vmem>>, vector<384x256xbf16>
    %cst_95 = arith.constant dense<0.000000e+00> : vector<32x256xf32>
    %154 = tpu.matmul %152, %153, %cst_95 {dimension_numbers = #tpu.dot_dimension_numbers<[1], [0], [0], [1], [0, 0, 1, 1], [], []>} : vector<32x384xbf16>, vector<384x256xbf16>, vector<32x256xf32> -> vector<32x256xf32>
    %c0_96 = arith.constant 0 : index
    %c0_97 = arith.constant 0 : index
    %155 = vector.load %arg11[%c0_96, %c0_97] : memref<2x256xf32, #tpu.memory_space<vmem>>, vector<2x256xf32>
    %156 = vector.extract_strided_slice %155 {offsets = [0, 0], sizes = [1, 256], strides = [1, 1]} : vector<2x256xf32> to vector<1x256xf32>
    %157 = vector.broadcast %156 : vector<1x256xf32> to vector<32x256xf32>
    %158 = arith.mulf %154, %157 : vector<32x256xf32>
    %159 = vector.extract_strided_slice %155 {offsets = [1, 0], sizes = [1, 256], strides = [1, 1]} : vector<2x256xf32> to vector<1x256xf32>
    %160 = vector.broadcast %159 : vector<1x256xf32> to vector<32x256xf32>
    %161 = arith.addf %158, %160 : vector<32x256xf32>
    %cst_98 = arith.constant 0.000000e+00 : f32
    %162 = vector.broadcast %cst_98 : f32 to vector<32x256xf32>
    %163 = arith.maximumf %161, %162 : vector<32x256xf32>
    %164 = vector.extract_strided_slice %163 {offsets = [0, 0], sizes = [32, 128], strides = [1, 1]} : vector<32x256xf32> to vector<32x128xf32>
    %165 = vector.extract_strided_slice %163 {offsets = [0, 128], sizes = [32, 128], strides = [1, 1]} : vector<32x256xf32> to vector<32x128xf32>
    %166 = arith.maximumf %164, %165 : vector<32x128xf32>
    %c0_99 = arith.constant 0 : index
    %c0_100 = arith.constant 0 : index
    %167 = vector.load %arg20[%c0_99, %c0_100] : memref<512x128xf32, #tpu.memory_space<vmem>>, vector<32x128xf32>
    tpu.vector_store %arg20[%c0_99, %c0_100], %166 {strides = array<i32>} : memref<512x128xf32, #tpu.memory_space<vmem>>, vector<32x128xf32>,
    %c0_101 = arith.constant 0 : index
    %c0_102 = arith.constant 0 : index
    %168 = tpu.strided_load %arg20[%c0_101, %c0_102] {strides = array<i32: 2, 1>} : memref<512x128xf32, #tpu.memory_space<vmem>>, vector<16x128xf32>
    %c1_103 = arith.constant 1 : index
    %c0_104 = arith.constant 0 : index
    %169 = tpu.strided_load %arg20[%c1_103, %c0_104] {strides = array<i32: 2, 1>} : memref<512x128xf32, #tpu.memory_space<vmem>>, vector<16x128xf32>
    %170 = arith.maximumf %168, %169 : vector<16x128xf32>
    %c8_105 = arith.constant 8 : index
    %c0_106 = arith.constant 0 : index
    %171 = vector.load %arg19[%c8_105, %c0_106] : memref<528x128xf32, #tpu.memory_space<vmem>>, vector<16x128xf32>
    tpu.vector_store %arg19[%c8_105, %c0_106], %170 {strides = array<i32>} : memref<528x128xf32, #tpu.memory_space<vmem>>, vector<16x128xf32>,
    %c7_107 = arith.constant 7 : index
    %c0_108 = arith.constant 0 : index
    %172 = vector.load %arg19[%c7_107, %c0_108] : memref<528x128xf32, #tpu.memory_space<vmem>>, vector<16x128xf32>
    %c9_109 = arith.constant 9 : index
    %c0_110 = arith.constant 0 : index
    %173 = vector.load %arg19[%c9_109, %c0_110] : memref<528x128xf32, #tpu.memory_space<vmem>>, vector<16x128xf32>
    %174 = tpu.iota {dimensions = array<i32: 0>} : vector<16x128xi32>
    %c3_i32 = arith.constant 3 : i32
    %175 = vector.broadcast %c3_i32 : i32 to vector<16x128xi32>
    %176 = arith.andi %174, %175 : vector<16x128xi32>
    %c0_i32_111 = arith.constant 0 : i32
    %177 = vector.broadcast %c0_i32_111 : i32 to vector<16x128xi32>
    %178 = arith.cmpi eq, %176, %177 : vector<16x128xi32>
    %cst_112 = arith.constant 0.000000e+00 : f32
    %179 = vector.broadcast %cst_112 : f32 to vector<16x128xf32>
    %180 = arith.select %178, %179, %172 : vector<16x128xi1>, vector<16x128xf32>
    %c3_i32_113 = arith.constant 3 : i32
    %181 = vector.broadcast %c3_i32_113 : i32 to vector<16x128xi32>
    %182 = arith.cmpi eq, %176, %181 : vector<16x128xi32>
    %cst_114 = arith.constant 0.000000e+00 : f32
    %183 = vector.broadcast %cst_114 : f32 to vector<16x128xf32>
    %184 = arith.select %182, %183, %173 : vector<16x128xi1>, vector<16x128xf32>
    %185 = tpu.concatenate %180, %170, %184 in 1 : vector<16x128xf32>, vector<16x128xf32>, vector<16x128xf32> -> vector<16x384xf32>
    %186 = arith.truncf %185 : vector<16x384xf32> to vector<16x384xbf16>
    %c0_115 = arith.constant 0 : index
    %c0_116 = arith.constant 0 : index
    %187 = vector.load %arg12[%c0_115, %c0_116] : memref<384x256xbf16, #tpu.memory_space<vmem>>, vector<384x256xbf16>
    %cst_117 = arith.constant dense<0.000000e+00> : vector<16x256xf32>
    %188 = tpu.matmul %186, %187, %cst_117 {dimension_numbers = #tpu.dot_dimension_numbers<[1], [0], [0], [1], [0, 0, 1, 1], [], []>} : vector<16x384xbf16>, vector<384x256xbf16>, vector<16x256xf32> -> vector<16x256xf32>
    %c0_118 = arith.constant 0 : index
    %c0_119 = arith.constant 0 : index
    %189 = vector.load %arg13[%c0_118, %c0_119] : memref<2x256xf32, #tpu.memory_space<vmem>>, vector<2x256xf32>
    %190 = vector.extract_strided_slice %189 {offsets = [0, 0], sizes = [1, 256], strides = [1, 1]} : vector<2x256xf32> to vector<1x256xf32>
    %191 = vector.broadcast %190 : vector<1x256xf32> to vector<16x256xf32>
    %192 = arith.mulf %188, %191 : vector<16x256xf32>
    %193 = vector.extract_strided_slice %189 {offsets = [1, 0], sizes = [1, 256], strides = [1, 1]} : vector<2x256xf32> to vector<1x256xf32>
    %194 = vector.broadcast %193 : vector<1x256xf32> to vector<16x256xf32>
    %195 = arith.addf %192, %194 : vector<16x256xf32>
    %cst_120 = arith.constant 0.000000e+00 : f32
    %196 = vector.broadcast %cst_120 : f32 to vector<16x256xf32>
    %197 = arith.maximumf %195, %196 : vector<16x256xf32>
    %198 = vector.extract_strided_slice %197 {offsets = [0, 0], sizes = [16, 128], strides = [1, 1]} : vector<16x256xf32> to vector<16x128xf32>
    %199 = vector.extract_strided_slice %197 {offsets = [0, 128], sizes = [16, 128], strides = [1, 1]} : vector<16x256xf32> to vector<16x128xf32>
    %200 = arith.maximumf %198, %199 : vector<16x128xf32>
    %c0_121 = arith.constant 0 : index
    %c0_122 = arith.constant 0 : index
    %201 = vector.load %arg20[%c0_121, %c0_122] : memref<512x128xf32, #tpu.memory_space<vmem>>, vector<16x128xf32>
    tpu.vector_store %arg20[%c0_121, %c0_122], %200 {strides = array<i32>} : memref<512x128xf32, #tpu.memory_space<vmem>>, vector<16x128xf32>,
    %c0_123 = arith.constant 0 : index
    %c0_124 = arith.constant 0 : index
    %202 = tpu.strided_load %arg20[%c0_123, %c0_124] {strides = array<i32: 2, 1>} : memref<512x128xf32, #tpu.memory_space<vmem>>, vector<8x128xf32>
    %c1_125 = arith.constant 1 : index
    %c0_126 = arith.constant 0 : index
    %203 = tpu.strided_load %arg20[%c1_125, %c0_126] {strides = array<i32: 2, 1>} : memref<512x128xf32, #tpu.memory_space<vmem>>, vector<8x128xf32>
    %204 = arith.maximumf %202, %203 : vector<8x128xf32>
    %c0_127 = arith.constant 0 : index
    %c0_128 = arith.constant 0 : index
    %205 = vector.load %arg20[%c0_127, %c0_128] : memref<512x128xf32, #tpu.memory_space<vmem>>, vector<8x128xf32>
    tpu.vector_store %arg20[%c0_127, %c0_128], %204 {strides = array<i32>} : memref<512x128xf32, #tpu.memory_space<vmem>>, vector<8x128xf32>,
    %c0_129 = arith.constant 0 : index
    %c0_130 = arith.constant 0 : index
    %206 = tpu.strided_load %arg20[%c0_129, %c0_130] {strides = array<i32: 2, 1>} : memref<512x128xf32, #tpu.memory_space<vmem>>, vector<4x128xf32>
    %c1_131 = arith.constant 1 : index
    %c0_132 = arith.constant 0 : index
    %207 = tpu.strided_load %arg20[%c1_131, %c0_132] {strides = array<i32: 2, 1>} : memref<512x128xf32, #tpu.memory_space<vmem>>, vector<4x128xf32>
    %208 = tpu.concatenate %206, %207 in 1 : vector<4x128xf32>, vector<4x128xf32> -> vector<4x256xf32>
    %209 = arith.truncf %208 : vector<4x256xf32> to vector<4x256xbf16>
    %c0_133 = arith.constant 0 : index
    %c0_134 = arith.constant 0 : index
    %210 = vector.load %arg14[%c0_133, %c0_134] : memref<256x256xbf16, #tpu.memory_space<vmem>>, vector<256x256xbf16>
    %cst_135 = arith.constant dense<0.000000e+00> : vector<4x256xf32>
    %211 = tpu.matmul %209, %210, %cst_135 {dimension_numbers = #tpu.dot_dimension_numbers<[1], [0], [0], [1], [0, 0, 1, 1], [], []>} : vector<4x256xbf16>, vector<256x256xbf16>, vector<4x256xf32> -> vector<4x256xf32>
    %c0_136 = arith.constant 0 : index
    %c0_137 = arith.constant 0 : index
    %212 = vector.load %arg15[%c0_136, %c0_137] : memref<1x256xf32, #tpu.memory_space<vmem>>, vector<1x256xf32>
    %213 = vector.broadcast %212 : vector<1x256xf32> to vector<4x256xf32>
    %214 = arith.addf %211, %213 : vector<4x256xf32>
    %cst_138 = arith.constant 0.000000e+00 : f32
    %215 = vector.broadcast %cst_138 : f32 to vector<4x256xf32>
    %216 = arith.maximumf %214, %215 : vector<4x256xf32>
    %217 = arith.truncf %216 : vector<4x256xf32> to vector<4x256xbf16>
    %c0_139 = arith.constant 0 : index
    %c0_140 = arith.constant 0 : index
    %218 = vector.load %arg16[%c0_139, %c0_140] : memref<256x128xbf16, #tpu.memory_space<vmem>>, vector<256x128xbf16>
    %cst_141 = arith.constant dense<0.000000e+00> : vector<4x128xf32>
    %219 = tpu.matmul %217, %218, %cst_141 {dimension_numbers = #tpu.dot_dimension_numbers<[1], [0], [0], [1], [0, 0, 1, 1], [], []>} : vector<4x256xbf16>, vector<256x128xbf16>, vector<4x128xf32> -> vector<4x128xf32>
    %c0_142 = arith.constant 0 : index
    %c0_143 = arith.constant 0 : index
    %220 = vector.load %arg17[%c0_142, %c0_143] : memref<1x128xf32, #tpu.memory_space<vmem>>, vector<1x128xf32>
    %221 = vector.broadcast %220 : vector<1x128xf32> to vector<4x128xf32>
    %222 = arith.addf %219, %221 : vector<4x128xf32>
    %cst_144 = arith.constant dense<0xFF800000> : vector<4xf32>
    %223 = vector.multi_reduction <maximumf>, %222, %cst_144 [1] : vector<4x128xf32> to vector<4xf32>
    %224 = vector.shape_cast %223 : vector<4xf32> to vector<4x1xf32>
    %225 = vector.broadcast %224 : vector<4x1xf32> to vector<4x128xf32>
    %226 = arith.subf %222, %225 : vector<4x128xf32>
    %227 = math.exp %226 : vector<4x128xf32>
    %cst_145 = arith.constant dense<0.000000e+00> : vector<4xf32>
    %228 = vector.multi_reduction <add>, %227, %cst_145 [1] : vector<4x128xf32> to vector<4xf32>
    %229 = vector.shape_cast %228 : vector<4xf32> to vector<4x1xf32>
    %230 = tpu.reciprocal %229 : vector<4x1xf32> -> vector<4x1xf32>
    %231 = vector.broadcast %230 : vector<4x1xf32> to vector<4x128xf32>
    %232 = arith.mulf %227, %231 : vector<4x128xf32>
    %c0_146 = arith.constant 0 : index
    %c0_147 = arith.constant 0 : index
    %c0_148 = arith.constant 0 : index
    %233 = vector.load %arg18[%c0_146, %c0_147, %c0_148] : memref<1x4x128xf32, #tpu.memory_space<vmem>>, vector<1x4x128xf32>
    %234 = vector.shape_cast %233 : vector<1x4x128xf32> to vector<4x128xf32>
    %235 = vector.shape_cast %232 : vector<4x128xf32> to vector<1x4x128xf32>
    tpu.vector_store %arg18[%c0_146, %c0_147, %c0_148], %235 {strides = array<i32>} : memref<1x4x128xf32, #tpu.memory_space<vmem>>, vector<1x4x128xf32>,
    return
  }
  func.func @transform_0(%arg0: i32) -> (i32, i32) {
    %c0_i32 = arith.constant 0 : i32
    %c0_i32_0 = arith.constant 0 : i32
    return %arg0, %c0_i32 : i32, i32
  }
  func.func @transform_1(%arg0: i32) -> (i32, i32) {
    %c0_i32 = arith.constant 0 : i32
    %c0_i32_0 = arith.constant 0 : i32
    %c0_i32_1 = arith.constant 0 : i32
    return %c0_i32, %c0_i32_0 : i32, i32
  }
  func.func @transform_2(%arg0: i32) -> (i32, i32) {
    %c0_i32 = arith.constant 0 : i32
    %c0_i32_0 = arith.constant 0 : i32
    %c0_i32_1 = arith.constant 0 : i32
    return %c0_i32, %c0_i32_0 : i32, i32
  }
  func.func @transform_3(%arg0: i32) -> (i32, i32) {
    %c0_i32 = arith.constant 0 : i32
    %c0_i32_0 = arith.constant 0 : i32
    %c0_i32_1 = arith.constant 0 : i32
    return %c0_i32, %c0_i32_0 : i32, i32
  }
  func.func @transform_4(%arg0: i32) -> (i32, i32) {
    %c0_i32 = arith.constant 0 : i32
    %c0_i32_0 = arith.constant 0 : i32
    %c0_i32_1 = arith.constant 0 : i32
    return %c0_i32, %c0_i32_0 : i32, i32
  }
  func.func @transform_5(%arg0: i32) -> (i32, i32) {
    %c0_i32 = arith.constant 0 : i32
    %c0_i32_0 = arith.constant 0 : i32
    %c0_i32_1 = arith.constant 0 : i32
    return %c0_i32, %c0_i32_0 : i32, i32
  }
  func.func @transform_6(%arg0: i32) -> (i32, i32) {
    %c0_i32 = arith.constant 0 : i32
    %c0_i32_0 = arith.constant 0 : i32
    %c0_i32_1 = arith.constant 0 : i32
    return %c0_i32, %c0_i32_0 : i32, i32
  }
  func.func @transform_7(%arg0: i32) -> (i32, i32) {
    %c0_i32 = arith.constant 0 : i32
    %c0_i32_0 = arith.constant 0 : i32
    %c0_i32_1 = arith.constant 0 : i32
    return %c0_i32, %c0_i32_0 : i32, i32
  }
  func.func @transform_8(%arg0: i32) -> (i32, i32) {
    %c0_i32 = arith.constant 0 : i32
    %c0_i32_0 = arith.constant 0 : i32
    %c0_i32_1 = arith.constant 0 : i32
    return %c0_i32, %c0_i32_0 : i32, i32
  }
  func.func @transform_9(%arg0: i32) -> (i32, i32) {
    %c0_i32 = arith.constant 0 : i32
    %c0_i32_0 = arith.constant 0 : i32
    %c0_i32_1 = arith.constant 0 : i32
    return %c0_i32, %c0_i32_0 : i32, i32
  }
  func.func @transform_10(%arg0: i32) -> (i32, i32) {
    %c0_i32 = arith.constant 0 : i32
    %c0_i32_0 = arith.constant 0 : i32
    %c0_i32_1 = arith.constant 0 : i32
    return %c0_i32, %c0_i32_0 : i32, i32
  }
  func.func @transform_11(%arg0: i32) -> (i32, i32) {
    %c0_i32 = arith.constant 0 : i32
    %c0_i32_0 = arith.constant 0 : i32
    %c0_i32_1 = arith.constant 0 : i32
    return %c0_i32, %c0_i32_0 : i32, i32
  }
  func.func @transform_12(%arg0: i32) -> (i32, i32) {
    %c0_i32 = arith.constant 0 : i32
    %c0_i32_0 = arith.constant 0 : i32
    %c0_i32_1 = arith.constant 0 : i32
    return %c0_i32, %c0_i32_0 : i32, i32
  }
  func.func @transform_13(%arg0: i32) -> (i32, i32) {
    %c0_i32 = arith.constant 0 : i32
    %c0_i32_0 = arith.constant 0 : i32
    %c0_i32_1 = arith.constant 0 : i32
    return %c0_i32, %c0_i32_0 : i32, i32
  }
  func.func @transform_14(%arg0: i32) -> (i32, i32) {
    %c0_i32 = arith.constant 0 : i32
    %c0_i32_0 = arith.constant 0 : i32
    %c0_i32_1 = arith.constant 0 : i32
    return %c0_i32, %c0_i32_0 : i32, i32
  }
  func.func @transform_15(%arg0: i32) -> (i32, i32) {
    %c0_i32 = arith.constant 0 : i32
    %c0_i32_0 = arith.constant 0 : i32
    %c0_i32_1 = arith.constant 0 : i32
    return %c0_i32, %c0_i32_0 : i32, i32
  }
  func.func @transform_16(%arg0: i32) -> (i32, i32) {
    %c0_i32 = arith.constant 0 : i32
    %c0_i32_0 = arith.constant 0 : i32
    %c0_i32_1 = arith.constant 0 : i32
    return %c0_i32, %c0_i32_0 : i32, i32
  }
  func.func @transform_17(%arg0: i32) -> (i32, i32, i32) {
    %c0_i32 = arith.constant 0 : i32
    %c0_i32_0 = arith.constant 0 : i32
    %c0_i32_1 = arith.constant 0 : i32
    return %arg0, %c0_i32, %c0_i32_0 : i32, i32, i32
  }
}

</mosaic_0001>

<llo_original>
// kernel: _lambda_.1
$region0: #{_lambda_.1}
  #allocation0 [shape = 'u32[]', space=smem, size = 0x4, offset = 0x4, fixed_abs, tag = 'smem constant byte address 0x4 - core index']
  #allocation1 [shape = 'u32[144,128]{1,0:T(1,128)}', space=vmem, size = 0x12000, scoped, tag = 'internal scratch']
  #allocation2 [shape = 'f32[528,128]{1,0:T(8,128)}', space=vmem, size = 0x42000, scoped, tag = 'scratch operand']
  #allocation3 [shape = 'f32[512,128]{1,0:T(8,128)}', space=vmem, size = 0x40000, scoped, tag = 'scratch operand']
  %s0 = inlined_call_operand.hbm [shape: f32[1024,128], index: 0, kind: input, shape index: {}]
  %s1 = inlined_call_operand.hbm [shape: bf16[384,256], index: 1, kind: input, shape index: {}]
  %s2 = inlined_call_operand.vmem [shape: f32[2,256], index: 2, kind: input, shape index: {}]
  %s3 = inlined_call_operand.hbm [shape: bf16[384,256], index: 3, kind: input, shape index: {}]
  %s4 = inlined_call_operand.vmem [shape: f32[2,256], index: 4, kind: input, shape index: {}]
  %s5 = inlined_call_operand.hbm [shape: bf16[384,256], index: 5, kind: input, shape index: {}]
  %s6 = inlined_call_operand.vmem [shape: f32[2,256], index: 6, kind: input, shape index: {}]
  %s7 = inlined_call_operand.hbm [shape: bf16[384,256], index: 7, kind: input, shape index: {}]
  %s8 = inlined_call_operand.vmem [shape: f32[2,256], index: 8, kind: input, shape index: {}]
  %s9 = inlined_call_operand.hbm [shape: bf16[384,256], index: 9, kind: input, shape index: {}]
  %s10 = inlined_call_operand.vmem [shape: f32[2,256], index: 10, kind: input, shape index: {}]
  %s11 = inlined_call_operand.hbm [shape: bf16[384,256], index: 11, kind: input, shape index: {}]
  %s12 = inlined_call_operand.vmem [shape: f32[2,256], index: 12, kind: input, shape index: {}]
  %s13 = inlined_call_operand.hbm [shape: bf16[256,256], index: 13, kind: input, shape index: {}]
  %s14 = inlined_call_operand.vmem [shape: f32[1,256], index: 14, kind: input, shape index: {}]
  %s15 = inlined_call_operand.hbm [shape: bf16[256,128], index: 15, kind: input, shape index: {}]
  %s16 = inlined_call_operand.vmem [shape: f32[1,128], index: 16, kind: input, shape index: {}]
  %s17 = inlined_call_operand.hbm [shape: f32[2,4,128], index: 17, kind: output, shape index: {}]
  %s18 = sld [smem:[#allocation0]]
  $region137: #{_lambda_.1} parent=0
    _
  %s20 = ssub.s32 1, %s18
  %s21 = scalar_select 0, %s20, %s18
  $region1: #{_lambda_.1} parent=0
    #allocation4 [shape = 'u8[524288]{0}', space=vmem, size = 0x80000, scoped, tag = 'input window, operand 0']
    #allocation5 [shape = 's32[2]{0}', space=sflag, size = 0x8, scoped, tag = 'scoped memory for _lambda_.1']
    #allocation6 [shape = 's32[2]{0}', space=sflag, size = 0x8, scoped, tag = 'scoped memory for _lambda_.1']
    #allocation7 [shape = 'u8[196608]{0}', space=vmem, size = 0x30000, scoped, tag = 'input window, operand 1, single buffered']
    #allocation8 [shape = 's32[1]{0}', space=sflag, size = 0x4, scoped, tag = 'scoped memory for _lambda_.1']
    #allocation9 [shape = 'u8[196608]{0}', space=vmem, size = 0x30000, scoped, tag = 'input window, operand 3, single buffered']
    #allocation10 [shape = 'u8[196608]{0}', space=vmem, size = 0x30000, scoped, tag = 'input window, operand 5, single buffered']
    #allocation11 [shape = 's32[1]{0}', space=sflag, size = 0x4, scoped, tag = 'scoped memory for _lambda_.1']
    #allocation12 [shape = 'u8[196608]{0}', space=vmem, size = 0x30000, scoped, tag = 'input window, operand 7, single buffered']
    #allocation13 [shape = 'u8[196608]{0}', space=vmem, size = 0x30000, scoped, tag = 'input window, operand 9, single buffered']
    #allocation14 [shape = 's32[1]{0}', space=sflag, size = 0x4, scoped, tag = 'scoped memory for _lambda_.1']
    #allocation15 [shape = 'u8[196608]{0}', space=vmem, size = 0x30000, scoped, tag = 'input window, operand 11, single buffered']
    #allocation16 [shape = 'u8[131072]{0}', space=vmem, size = 0x20000, scoped, tag = 'input window, operand 13, single buffered']
    #allocation17 [shape = 's32[1]{0}', space=sflag, size = 0x4, scoped, tag = 'scoped memory for _lambda_.1']
    #allocation18 [shape = 'u8[65536]{0}', space=vmem, size = 0x10000, scoped, tag = 'input window, operand 15, single buffered']
    #allocation19 [shape = 'u8[4096]{0}', space=vmem, size = 0x1000, scoped, tag = 'output window, operand 0']
    %22 = vsyncpa [#allocation5], 0
    %s23 = scalar_lea.sflag [#allocation5], 1
    %24 = vsyncpa %s23, 0
    %25 = vsyncpa [#allocation8], 0
    %26 = vsyncpa [#allocation11], 0
    %27 = vsyncpa [#allocation14], 0
    %28 = vsyncpa [#allocation17], 0
    %29 = vsyncpa [#allocation6], 0
    %s30 = scalar_lea.sflag [#allocation6], 1
    %31 = vsyncpa %s30, 0
    loop: start=0, step=1, limit=4
    $region2: #{_lambda_.1} parent=1 // loop_pre_header
      _
    $region3: #{_lambda_.1} parent=1 // loop_header
      %s33 = sphi 0, %s37
      %p34 = scmp.ge.s32.totalorder %s33, 4
      %s43 = sphi 0, %s45
      %s46 = sphi 0, %s43
      %s47 = sphi 0, %s46
      %s63 = sphi 0, %s47
      %s67 = sphi 0, %s67
      %s69 = sphi 0, %s67
      %s70 = sphi 0, %s69
      %s84 = sphi 0, %s70
      %s88 = sphi 0, %s88
      %s90 = sphi 0, %s88
      %s91 = sphi 0, %s90
      %s105 = sphi 0, %s91
      %s109 = sphi 0, %s109
      %s111 = sphi 0, %s109
      %s112 = sphi 0, %s111
      %s126 = sphi 0, %s112
      %s130 = sphi 0, %s130
      %s132 = sphi 0, %s130
      %s133 = sphi 0, %s132
      %s147 = sphi 0, %s133
      %s151 = sphi 0, %s151
      %s153 = sphi 0, %s151
      %s154 = sphi 0, %s153
      %s168 = sphi 0, %s154
      %s172 = sphi 0, %s172
      %s174 = sphi 0, %s172
      %s175 = sphi 0, %s174
      %s189 = sphi 0, %s175
      %s193 = sphi 0, %s193
      %s195 = sphi 0, %s193
      %s196 = sphi 0, %s195
      %s210 = sphi 0, %s196
      %s214 = sphi 0, %s214
      %s216 = sphi 0, %s214
      %s217 = sphi 0, %s216
      %s231 = sphi 0, %s217
      %s235 = sphi 0, %s235
      %s237 = sphi 0, %s235
      %s238 = sphi 0, %s237
      %s252 = sphi 0, %s238
      %s256 = sphi 0, %s256
      %s258 = sphi 0, %s256
      %s259 = sphi 0, %s258
      %s273 = sphi 0, %s259
      %s277 = sphi 0, %s277
      %s279 = sphi 0, %s277
      %s280 = sphi 0, %s279
      %s294 = sphi 0, %s280
      %s298 = sphi 0, %s298
      %s300 = sphi 0, %s298
      %s301 = sphi 0, %s300
      %s315 = sphi 0, %s301
      %s319 = sphi 0, %s319
      %s321 = sphi 0, %s319
      %s322 = sphi 0, %s321
      %s336 = sphi 0, %s322
      %s340 = sphi 0, %s340
      %s342 = sphi 0, %s340
      %s343 = sphi 0, %s342
      %s357 = sphi 0, %s343
      %s361 = sphi 0, %s361
      %s363 = sphi 0, %s361
      %s364 = sphi 0, %s363
      %s378 = sphi 0, %s364
      %s382 = sphi 0, %s382
      %s384 = sphi 0, %s382
      %s385 = sphi 0, %s384
      %s399 = sphi 0, %s385
      %s405 = sphi 0, %s407
      %s408 = sphi 0, %s405
      %s409 = sphi 0, %s408
      %s425 = sphi 0, %s409
    $region4: #{_lambda_.1} parent=1 // loop_header_branch
      %36 = sbr.rel (%p34) target = $region8
    $region5: #{_lambda_.1} parent=1 // loop_body
      %s38 = ssub.s32 %s33, 1
      %s39 = ssub.s32 %s33, 2
      %s40 = sadd.s32 %s33, 1
      %s41 = ssub.s32 %s33, %s40
      %p42 = scmp.eq.s32.totalorder %s41, 0
      %s44 = sadd.s32 %s43, 1
      %s45 = scalar_select %p42, %s43, %s44
      %p48 = pneg %p42
      %p49 = scmp.eq.s32.totalorder %s33, 1
      %p50 = por %p48, %p49
      %p51 = scmp.ne.s32.totalorder %s43, %s46
      %p52 = scmp.eq.s32.totalorder %s33, 0
      %p53 = por %p51, %p52
      %p54 = scmp.ne.s32.totalorder %s43, %s46
      %p55 = scmp.eq.s32.totalorder %s38, 1
      %p56 = por %p54, %p55
      %p57 = scmp.ne.s32.totalorder %s46, %s47
      %p58 = scmp.eq.s32.totalorder %s38, 0
      %p59 = por %p57, %p58
      %p60 = scmp.ne.s32.totalorder %s46, %s47
      %p61 = scmp.eq.s32.totalorder %s39, 1
      %p62 = por %p60, %p61
      %p64 = scmp.ne.s32.totalorder %s47, %s63
      %p65 = scmp.eq.s32.totalorder %s39, 0
      %p66 = por %p64, %p65
      %s68 = sadd.s32 %s67, 1
      %p71 = scmp.eq.s32.totalorder %s33, 1
      %p72 = scmp.ne.s32.totalorder %s67, %s69
      %p73 = scmp.eq.s32.totalorder %s33, 0
      %p74 = por %p72, %p73
      %p75 = scmp.ne.s32.totalorder %s67, %s69
      %p76 = scmp.eq.s32.totalorder %s38, 1
      %p77 = por %p75, %p76
      %p78 = scmp.ne.s32.totalorder %s69, %s70
      %p79 = scmp.eq.s32.totalorder %s38, 0
      %p80 = por %p78, %p79
      %p81 = scmp.ne.s32.totalorder %s69, %s70
      %p82 = scmp.eq.s32.totalorder %s39, 1
      %p83 = por %p81, %p82
      %p85 = scmp.ne.s32.totalorder %s70, %s84
      %p86 = scmp.eq.s32.totalorder %s39, 0
      %p87 = por %p85, %p86
      %s89 = sadd.s32 %s88, 1
      %p92 = scmp.eq.s32.totalorder %s33, 1
      %p93 = scmp.ne.s32.totalorder %s88, %s90
      %p94 = scmp.eq.s32.totalorder %s33, 0
      %p95 = por %p93, %p94
      %p96 = scmp.ne.s32.totalorder %s88, %s90
      %p97 = scmp.eq.s32.totalorder %s38, 1
      %p98 = por %p96, %p97
      %p99 = scmp.ne.s32.totalorder %s90, %s91
      %p100 = scmp.eq.s32.totalorder %s38, 0
      %p101 = por %p99, %p100
      %p102 = scmp.ne.s32.totalorder %s90, %s91
      %p103 = scmp.eq.s32.totalorder %s39, 1
      %p104 = por %p102, %p103
      %p106 = scmp.ne.s32.totalorder %s91, %s105
      %p107 = scmp.eq.s32.totalorder %s39, 0
      %p108 = por %p106, %p107
      %s110 = sadd.s32 %s109, 1
      %p113 = scmp.eq.s32.totalorder %s33, 1
      %p114 = scmp.ne.s32.totalorder %s109, %s111
      %p115 = scmp.eq.s32.totalorder %s33, 0
      %p116 = por %p114, %p115
      %p117 = scmp.ne.s32.totalorder %s109, %s111
      %p118 = scmp.eq.s32.totalorder %s38, 1
      %p119 = por %p117, %p118
      %p120 = scmp.ne.s32.totalorder %s111, %s112
      %p121 = scmp.eq.s32.totalorder %s38, 0
      %p122 = por %p120, %p121
      %p123 = scmp.ne.s32.totalorder %s111, %s112
      %p124 = scmp.eq.s32.totalorder %s39, 1
      %p125 = por %p123, %p124
      %p127 = scmp.ne.s32.totalorder %s112, %s126
      %p128 = scmp.eq.s32.totalorder %s39, 0
      %p129 = por %p127, %p128
      %s131 = sadd.s32 %s130, 1
      %p134 = scmp.eq.s32.totalorder %s33, 1
      %p135 = scmp.ne.s32.totalorder %s130, %s132
      %p136 = scmp.eq.s32.totalorder %s33, 0
      %p137 = por %p135, %p136
      %p138 = scmp.ne.s32.totalorder %s130, %s132
      %p139 = scmp.eq.s32.totalorder %s38, 1
      %p140 = por %p138, %p139
      %p141 = scmp.ne.s32.totalorder %s132, %s133
      %p142 = scmp.eq.s32.totalorder %s38, 0
      %p143 = por %p141, %p142
      %p144 = scmp.ne.s32.totalorder %s132, %s133
      %p145 = scmp.eq.s32.totalorder %s39, 1
      %p146 = por %p144, %p145
      %p148 = scmp.ne.s32.totalorder %s133, %s147
      %p149 = scmp.eq.s32.totalorder %s39, 0
      %p150 = por %p148, %p149
      %s152 = sadd.s32 %s151, 1
      %p155 = scmp.eq.s32.totalorder %s33, 1
      %p156 = scmp.ne.s32.totalorder %s151, %s153
      %p157 = scmp.eq.s32.totalorder %s33, 0
      %p158 = por %p156, %p157
      %p159 = scmp.ne.s32.totalorder %s151, %s153
      %p160 = scmp.eq.s32.totalorder %s38, 1
      %p161 = por %p159, %p160
      %p162 = scmp.ne.s32.totalorder %s153, %s154
      %p163 = scmp.eq.s32.totalorder %s38, 0
      %p164 = por %p162, %p163
      %p165 = scmp.ne.s32.totalorder %s153, %s154
      %p166 = scmp.eq.s32.totalorder %s39, 1
      %p167 = por %p165, %p166
      %p169 = scmp.ne.s32.totalorder %s154, %s168
      %p170 = scmp.eq.s32.totalorder %s39, 0
      %p171 = por %p169, %p170
      %s173 = sadd.s32 %s172, 1
      %p176 = scmp.eq.s32.totalorder %s33, 1
      %p177 = scmp.ne.s32.totalorder %s172, %s174
      %p178 = scmp.eq.s32.totalorder %s33, 0
      %p179 = por %p177, %p178
      %p180 = scmp.ne.s32.totalorder %s172, %s174
      %p181 = scmp.eq.s32.totalorder %s38, 1
      %p182 = por %p180, %p181
      %p183 = scmp.ne.s32.totalorder %s174, %s175
      %p184 = scmp.eq.s32.totalorder %s38, 0
      %p185 = por %p183, %p184
      %p186 = scmp.ne.s32.totalorder %s174, %s175
      %p187 = scmp.eq.s32.totalorder %s39, 1
      %p188 = por %p186, %p187
      %p190 = scmp.ne.s32.totalorder %s175, %s189
      %p191 = scmp.eq.s32.totalorder %s39, 0
      %p192 = por %p190, %p191
      %s194 = sadd.s32 %s193, 1
      %p197 = scmp.eq.s32.totalorder %s33, 1
      %p198 = scmp.ne.s32.totalorder %s193, %s195
      %p199 = scmp.eq.s32.totalorder %s33, 0
      %p200 = por %p198, %p199
      %p201 = scmp.ne.s32.totalorder %s193, %s195
      %p202 = scmp.eq.s32.totalorder %s38, 1
      %p203 = por %p201, %p202
      %p204 = scmp.ne.s32.totalorder %s195, %s196
      %p205 = scmp.eq.s32.totalorder %s38, 0
      %p206 = por %p204, %p205
      %p207 = scmp.ne.s32.totalorder %s195, %s196
      %p208 = scmp.eq.s32.totalorder %s39, 1
      %p209 = por %p207, %p208
      %p211 = scmp.ne.s32.totalorder %s196, %s210
      %p212 = scmp.eq.s32.totalorder %s39, 0
      %p213 = por %p211, %p212
      %s215 = sadd.s32 %s214, 1
      %p218 = scmp.eq.s32.totalorder %s33, 1
      %p219 = scmp.ne.s32.totalorder %s214, %s216
      %p220 = scmp.eq.s32.totalorder %s33, 0
      %p221 = por %p219, %p220
      %p222 = scmp.ne.s32.totalorder %s214, %s216
      %p223 = scmp.eq.s32.totalorder %s38, 1
      %p224 = por %p222, %p223
      %p225 = scmp.ne.s32.totalorder %s216, %s217
      %p226 = scmp.eq.s32.totalorder %s38, 0
      %p227 = por %p225, %p226
      %p228 = scmp.ne.s32.totalorder %s216, %s217
      %p229 = scmp.eq.s32.totalorder %s39, 1
      %p230 = por %p228, %p229
      %p232 = scmp.ne.s32.totalorder %s217, %s231
      %p233 = scmp.eq.s32.totalorder %s39, 0
      %p234 = por %p232, %p233
      %s236 = sadd.s32 %s235, 1
      %p239 = scmp.eq.s32.totalorder %s33, 1
      %p240 = scmp.ne.s32.totalorder %s235, %s237
      %p241 = scmp.eq.s32.totalorder %s33, 0
      %p242 = por %p240, %p241
      %p243 = scmp.ne.s32.totalorder %s235, %s237
      %p244 = scmp.eq.s32.totalorder %s38, 1
      %p245 = por %p243, %p244
      %p246 = scmp.ne.s32.totalorder %s237, %s238
      %p247 = scmp.eq.s32.totalorder %s38, 0
      %p248 = por %p246, %p247
      %p249 = scmp.ne.s32.totalorder %s237, %s238
      %p250 = scmp.eq.s32.totalorder %s39, 1
      %p251 = por %p249, %p250
      %p253 = scmp.ne.s32.totalorder %s238, %s252
      %p254 = scmp.eq.s32.totalorder %s39, 0
      %p255 = por %p253, %p254
      %s257 = sadd.s32 %s256, 1
      %p260 = scmp.eq.s32.totalorder %s33, 1
      %p261 = scmp.ne.s32.totalorder %s256, %s258
      %p262 = scmp.eq.s32.totalorder %s33, 0
      %p263 = por %p261, %p262
      %p264 = scmp.ne.s32.totalorder %s256, %s258
      %p265 = scmp.eq.s32.totalorder %s38, 1
      %p266 = por %p264, %p265
      %p267 = scmp.ne.s32.totalorder %s258, %s259
      %p268 = scmp.eq.s32.totalorder %s38, 0
      %p269 = por %p267, %p268
      %p270 = scmp.ne.s32.totalorder %s258, %s259
      %p271 = scmp.eq.s32.totalorder %s39, 1
      %p272 = por %p270, %p271
      %p274 = scmp.ne.s32.totalorder %s259, %s273
      %p275 = scmp.eq.s32.totalorder %s39, 0
      %p276 = por %p274, %p275
      %s278 = sadd.s32 %s277, 1
      %p281 = scmp.eq.s32.totalorder %s33, 1
      %p282 = scmp.ne.s32.totalorder %s277, %s279
      %p283 = scmp.eq.s32.totalorder %s33, 0
      %p284 = por %p282, %p283
      %p285 = scmp.ne.s32.totalorder %s277, %s279
      %p286 = scmp.eq.s32.totalorder %s38, 1
      %p287 = por %p285, %p286
      %p288 = scmp.ne.s32.totalorder %s279, %s280
      %p289 = scmp.eq.s32.totalorder %s38, 0
      %p290 = por %p288, %p289
      %p291 = scmp.ne.s32.totalorder %s279, %s280
      %p292 = scmp.eq.s32.totalorder %s39, 1
      %p293 = por %p291, %p292
      %p295 = scmp.ne.s32.totalorder %s280, %s294
      %p296 = scmp.eq.s32.totalorder %s39, 0
      %p297 = por %p295, %p296
      %s299 = sadd.s32 %s298, 1
      %p302 = scmp.eq.s32.totalorder %s33, 1
      %p303 = scmp.ne.s32.totalorder %s298, %s300
      %p304 = scmp.eq.s32.totalorder %s33, 0
      %p305 = por %p303, %p304
      %p306 = scmp.ne.s32.totalorder %s298, %s300
      %p307 = scmp.eq.s32.totalorder %s38, 1
      %p308 = por %p306, %p307
      %p309 = scmp.ne.s32.totalorder %s300, %s301
      %p310 = scmp.eq.s32.totalorder %s38, 0
      %p311 = por %p309, %p310
      %p312 = scmp.ne.s32.totalorder %s300, %s301
      %p313 = scmp.eq.s32.totalorder %s39, 1
      %p314 = por %p312, %p313
      %p316 = scmp.ne.s32.totalorder %s301, %s315
      %p317 = scmp.eq.s32.totalorder %s39, 0
      %p318 = por %p316, %p317
      %s320 = sadd.s32 %s319, 1
      %p323 = scmp.eq.s32.totalorder %s33, 1
      %p324 = scmp.ne.s32.totalorder %s319, %s321
      %p325 = scmp.eq.s32.totalorder %s33, 0
      %p326 = por %p324, %p325
      %p327 = scmp.ne.s32.totalorder %s319, %s321
      %p328 = scmp.eq.s32.totalorder %s38, 1
      %p329 = por %p327, %p328
      %p330 = scmp.ne.s32.totalorder %s321, %s322
      %p331 = scmp.eq.s32.totalorder %s38, 0
      %p332 = por %p330, %p331
      %p333 = scmp.ne.s32.totalorder %s321, %s322
      %p334 = scmp.eq.s32.totalorder %s39, 1
      %p335 = por %p333, %p334
      %p337 = scmp.ne.s32.totalorder %s322, %s336
      %p338 = scmp.eq.s32.totalorder %s39, 0
      %p339 = por %p337, %p338
      %s341 = sadd.s32 %s340, 1
      %p344 = scmp.eq.s32.totalorder %s33, 1
      %p345 = scmp.ne.s32.totalorder %s340, %s342
      %p346 = scmp.eq.s32.totalorder %s33, 0
      %p347 = por %p345, %p346
      %p348 = scmp.ne.s32.totalorder %s340, %s342
      %p349 = scmp.eq.s32.totalorder %s38, 1
      %p350 = por %p348, %p349
      %p351 = scmp.ne.s32.totalorder %s342, %s343
      %p352 = scmp.eq.s32.totalorder %s38, 0
      %p353 = por %p351, %p352
      %p354 = scmp.ne.s32.totalorder %s342, %s343
      %p355 = scmp.eq.s32.totalorder %s39, 1
      %p356 = por %p354, %p355
      %p358 = scmp.ne.s32.totalorder %s343, %s357
      %p359 = scmp.eq.s32.totalorder %s39, 0
      %p360 = por %p358, %p359
      %s362 = sadd.s32 %s361, 1
      %p365 = scmp.eq.s32.totalorder %s33, 1
      %p366 = scmp.ne.s32.totalorder %s361, %s363
      %p367 = scmp.eq.s32.totalorder %s33, 0
      %p368 = por %p366, %p367
      %p369 = scmp.ne.s32.totalorder %s361, %s363
      %p370 = scmp.eq.s32.totalorder %s38, 1
      %p371 = por %p369, %p370
      %p372 = scmp.ne.s32.totalorder %s363, %s364
      %p373 = scmp.eq.s32.totalorder %s38, 0
      %p374 = por %p372, %p373
      %p375 = scmp.ne.s32.totalorder %s363, %s364
      %p376 = scmp.eq.s32.totalorder %s39, 1
      %p377 = por %p375, %p376
      %p379 = scmp.ne.s32.totalorder %s364, %s378
      %p380 = scmp.eq.s32.totalorder %s39, 0
      %p381 = por %p379, %p380
      %s383 = sadd.s32 %s382, 1
      %p386 = scmp.eq.s32.totalorder %s33, 1
      %p387 = scmp.ne.s32.totalorder %s382, %s384
      %p388 = scmp.eq.s32.totalorder %s33, 0
      %p389 = por %p387, %p388
      %p390 = scmp.ne.s32.totalorder %s382, %s384
      %p391 = scmp.eq.s32.totalorder %s38, 1
      %p392 = por %p390, %p391
      %p393 = scmp.ne.s32.totalorder %s384, %s385
      %p394 = scmp.eq.s32.totalorder %s38, 0
      %p395 = por %p393, %p394
      %p396 = scmp.ne.s32.totalorder %s384, %s385
      %p397 = scmp.eq.s32.totalorder %s39, 1
      %p398 = por %p396, %p397
      %p400 = scmp.ne.s32.totalorder %s385, %s399
      %p401 = scmp.eq.s32.totalorder %s39, 0
      %p402 = por %p400, %p401
      %s403 = ssub.s32 %s33, %s40
      %p404 = scmp.eq.s32.totalorder %s403, 0
      %s406 = sadd.s32 %s405, 1
      %s407 = scalar_select %p404, %s405, %s406
      %p410 = pneg %p404
      %p411 = scmp.eq.s32.totalorder %s33, 1
      %p412 = por %p410, %p411
      %p413 = scmp.ne.s32.totalorder %s405, %s408
      %p414 = scmp.eq.s32.totalorder %s33, 0
      %p415 = por %p413, %p414
      %p416 = scmp.ne.s32.totalorder %s405, %s408
      %p417 = scmp.eq.s32.totalorder %s38, 1
      %p418 = por %p416, %p417
      %p419 = scmp.ne.s32.totalorder %s408, %s409
      %p420 = scmp.eq.s32.totalorder %s38, 0
      %p421 = por %p419, %p420
      %p422 = scmp.ne.s32.totalorder %s408, %s409
      %p423 = scmp.eq.s32.totalorder %s39, 1
      %p424 = por %p422, %p423
      %p426 = scmp.ne.s32.totalorder %s409, %s425
      %p427 = scmp.eq.s32.totalorder %s39, 0
      %p428 = por %p426, %p427
      %p429 = scmp.le.s32.totalorder 1, %s33
      %p430 = scmp.lt.s32.totalorder %s33, 3
      %p431 = pnand %p429, %p430
      %p432 = pneg %p431
      // Predicated region
      $region9: #{_lambda_.1} parent=5 // pred_check
        _
      $region10: #{_lambda_.1} parent=5 // pred_check_branch
        %434 = sbr.rel (%p431) target = $region12
      $region11: #{_lambda_.1} parent=5 // pred_region
        %s435 = ssub.s32 %s33, 1
        // Predicated region
        $region13: #{_lambda_.1} parent=11 // pred_check
          %p436 = pneg %p80
        $region14: #{_lambda_.1} parent=11 // pred_check_branch
          %438 = sbr.rel (%p436) target = $region16
        $region15: #{_lambda_.1} parent=11 // pred_region
          %s440 = ssub.s32 6144, 6144
          %441 = vsyncadd [#allocation8], %s440
          %s442 = sshll.u32 [#allocation7], 4
          %s443 = int_to_ptr.vmem [resolvable:$true] %s442
          %448 = dma.hbm_to_vmem [thread:$0]  %s1, 6144, %s443, [#allocation8], 128, 128, 8
        $region16: #{_lambda_.1} parent=11 // pred_fallthru
          _
        // Predicated region
        $region17: #{_lambda_.1} parent=11 // pred_check
          %p449 = pneg %p101
        $region18: #{_lambda_.1} parent=11 // pred_check_branch
          %451 = sbr.rel (%p449) target = $region20
        $region19: #{_lambda_.1} parent=11 // pred_region
          _
        $region20: #{_lambda_.1} parent=11 // pred_fallthru
          _
        // Predicated region
        $region21: #{_lambda_.1} parent=11 // pred_check
          %p452 = pneg %p122
        $region22: #{_lambda_.1} parent=11 // pred_check_branch
          %454 = sbr.rel (%p452) target = $region24
        $region23: #{_lambda_.1} parent=11 // pred_region
          %s456 = ssub.s32 6144, 6144
          %457 = vsyncadd [#allocation8], %s456
          %s458 = sshll.u32 [#allocation9], 4
          %s459 = int_to_ptr.vmem [resolvable:$true] %s458
          %464 = dma.hbm_to_vmem [thread:$0]  %s3, 6144, %s459, [#allocation8], 128, 128, 8
        $region24: #{_lambda_.1} parent=11 // pred_fallthru
          _
        // Predicated region
        $region25: #{_lambda_.1} parent=11 // pred_check
          %p465 = pneg %p143
        $region26: #{_lambda_.1} parent=11 // pred_check_branch
          %467 = sbr.rel (%p465) target = $region28
        $region27: #{_lambda_.1} parent=11 // pred_region
          _
        $region28: #{_lambda_.1} parent=11 // pred_fallthru
          _
        // Predicated region
        $region29: #{_lambda_.1} parent=11 // pred_check
          %p468 = pneg %p164
        $region30: #{_lambda_.1} parent=11 // pred_check_branch
          %470 = sbr.rel (%p468) target = $region32
        $region31: #{_lambda_.1} parent=11 // pred_region
          %s472 = ssub.s32 6144, 6144
          %473 = vsyncadd [#allocation11], %s472
          %s474 = sshll.u32 [#allocation10], 4
          %s475 = int_to_ptr.vmem [resolvable:$true] %s474
          %480 = dma.hbm_to_vmem [thread:$0]  %s5, 6144, %s475, [#allocation11], 128, 128, 8
        $region32: #{_lambda_.1} parent=11 // pred_fallthru
          _
        // Predicated region
        $region33: #{_lambda_.1} parent=11 // pred_check
          %p481 = pneg %p185
        $region34: #{_lambda_.1} parent=11 // pred_check_branch
          %483 = sbr.rel (%p481) target = $region36
        $region35: #{_lambda_.1} parent=11 // pred_region
          _
        $region36: #{_lambda_.1} parent=11 // pred_fallthru
          _
        // Predicated region
        $region37: #{_lambda_.1} parent=11 // pred_check
          %p484 = pneg %p206
        $region38: #{_lambda_.1} parent=11 // pred_check_branch
          %486 = sbr.rel (%p484) target = $region40
        $region39: #{_lambda_.1} parent=11 // pred_region
          %s488 = ssub.s32 6144, 6144
          %489 = vsyncadd [#allocation11], %s488
          %s490 = sshll.u32 [#allocation12], 4
          %s491 = int_to_ptr.vmem [resolvable:$true] %s490
          %496 = dma.hbm_to_vmem [thread:$0]  %s7, 6144, %s491, [#allocation11], 128, 128, 8
        $region40: #{_lambda_.1} parent=11 // pred_fallthru
          _
        // Predicated region
        $region41: #{_lambda_.1} parent=11 // pred_check
          %p497 = pneg %p227
        $region42: #{_lambda_.1} parent=11 // pred_check_branch
          %499 = sbr.rel (%p497) target = $region44
        $region43: #{_lambda_.1} parent=11 // pred_region
          _
        $region44: #{_lambda_.1} parent=11 // pred_fallthru
          _
        // Predicated region
        $region45: #{_lambda_.1} parent=11 // pred_check
          %p500 = pneg %p248
        $region46: #{_lambda_.1} parent=11 // pred_check_branch
          %502 = sbr.rel (%p500) target = $region48
        $region47: #{_lambda_.1} parent=11 // pred_region
          %s504 = ssub.s32 6144, 6144
          %505 = vsyncadd [#allocation14], %s504
          %s506 = sshll.u32 [#allocation13], 4
          %s507 = int_to_ptr.vmem [resolvable:$true] %s506
          %512 = dma.hbm_to_vmem [thread:$0]  %s9, 6144, %s507, [#allocation14], 128, 128, 8
        $region48: #{_lambda_.1} parent=11 // pred_fallthru
          _
        // Predicated region
        $region49: #{_lambda_.1} parent=11 // pred_check
          %p513 = pneg %p269
        $region50: #{_lambda_.1} parent=11 // pred_check_branch
          %515 = sbr.rel (%p513) target = $region52
        $region51: #{_lambda_.1} parent=11 // pred_region
          _
        $region52: #{_lambda_.1} parent=11 // pred_fallthru
          _
        // Predicated region
        $region53: #{_lambda_.1} parent=11 // pred_check
          %p516 = pneg %p290
        $region54: #{_lambda_.1} parent=11 // pred_check_branch
          %518 = sbr.rel (%p516) target = $region56
        $region55: #{_lambda_.1} parent=11 // pred_region
          %s520 = ssub.s32 6144, 6144
          %521 = vsyncadd [#allocation14], %s520
          %s522 = sshll.u32 [#allocation15], 4
          %s523 = int_to_ptr.vmem [resolvable:$true] %s522
          %528 = dma.hbm_to_vmem [thread:$0]  %s11, 6144, %s523, [#allocation14], 128, 128, 8
        $region56: #{_lambda_.1} parent=11 // pred_fallthru
          _
        // Predicated region
        $region57: #{_lambda_.1} parent=11 // pred_check
          %p529 = pneg %p311
        $region58: #{_lambda_.1} parent=11 // pred_check_branch
          %531 = sbr.rel (%p529) target = $region60
        $region59: #{_lambda_.1} parent=11 // pred_region
          _
        $region60: #{_lambda_.1} parent=11 // pred_fallthru
          _
        // Predicated region
        $region61: #{_lambda_.1} parent=11 // pred_check
          %p532 = pneg %p332
        $region62: #{_lambda_.1} parent=11 // pred_check_branch
          %534 = sbr.rel (%p532) target = $region64
        $region63: #{_lambda_.1} parent=11 // pred_region
          %s536 = ssub.s32 4096, 4096
          %537 = vsyncadd [#allocation17], %s536
          %s538 = sshll.u32 [#allocation16], 4
          %s539 = int_to_ptr.vmem [resolvable:$true] %s538
          %544 = dma.hbm_to_vmem [thread:$0]  %s13, 4096, %s539, [#allocation17], 128, 128, 8
        $region64: #{_lambda_.1} parent=11 // pred_fallthru
          _
        // Predicated region
        $region65: #{_lambda_.1} parent=11 // pred_check
          %p545 = pneg %p353
        $region66: #{_lambda_.1} parent=11 // pred_check_branch
          %547 = sbr.rel (%p545) target = $region68
        $region67: #{_lambda_.1} parent=11 // pred_region
          _
        $region68: #{_lambda_.1} parent=11 // pred_fallthru
          _
        // Predicated region
        $region69: #{_lambda_.1} parent=11 // pred_check
          %p548 = pneg %p374
        $region70: #{_lambda_.1} parent=11 // pred_check_branch
          %550 = sbr.rel (%p548) target = $region72
        $region71: #{_lambda_.1} parent=11 // pred_region
          %s552 = ssub.s32 2048, 2048
          %553 = vsyncadd [#allocation17], %s552
          %s554 = sshll.u32 [#allocation18], 4
          %s555 = int_to_ptr.vmem [resolvable:$true] %s554
          %560 = dma.hbm_to_vmem [thread:$0]  %s15, 2048, %s555, [#allocation17], 64, 64, 4
        $region72: #{_lambda_.1} parent=11 // pred_fallthru
          _
        // Predicated region
        $region73: #{_lambda_.1} parent=11 // pred_check
          %p561 = pneg %p395
        $region74: #{_lambda_.1} parent=11 // pred_check_branch
          %563 = sbr.rel (%p561) target = $region76
        $region75: #{_lambda_.1} parent=11 // pred_region
          _
        $region76: #{_lambda_.1} parent=11 // pred_fallthru
          _
      $region12: #{_lambda_.1} parent=5 // pred_fallthru
        _
      %p564 = scmp.lt.s32.totalorder %s33, 2
      // Predicated region
      $region77: #{_lambda_.1} parent=5 // pred_check
        %p565 = pneg %p564
      $region78: #{_lambda_.1} parent=5 // pred_check_branch
        %567 = sbr.rel (%p565) target = $region80
      $region79: #{_lambda_.1} parent=5 // pred_region
        // Predicated region
        $region81: #{_lambda_.1} parent=79 // pred_check
          %p568 = pneg %p53
        $region82: #{_lambda_.1} parent=79 // pred_check_branch
          %570 = sbr.rel (%p568) target = $region84
        $region83: #{_lambda_.1} parent=79 // pred_region
          %s571 = sand.u32 %s43, 1
          %s572 = scalar_lea.sflag [#allocation5], %s571
          %s573 = sand.u32 %s43, 1
          %s574 = smul.addr %s573, 512
          %s575 = scalar_lea.vmem [#allocation4], %s574
          %s576 = smul.u32 64, %s33
          %s578 = ssub.s32 8192, 8192
          %579 = vsyncadd %s572, %s578
          %s580 = smul.addr %s576, 128
          %s581 = scalar_lea.hbm %s0, %s580
          %s582 = sshll.u32 %s575, 4
          %s583 = int_to_ptr.vmem [resolvable:$true] %s582
          %588 = dma.hbm_to_vmem [thread:$0]  %s581, 8192, %s583, %s572, 128, 128, 8
        $region84: #{_lambda_.1} parent=79 // pred_fallthru
          _
      $region80: #{_lambda_.1} parent=5 // pred_fallthru
        _
      %p589 = scmp.le.s32.totalorder 1, %s33
      %p590 = scmp.lt.s32.totalorder %s33, 3
      %p591 = pnand %p589, %p590
      %p592 = pneg %p591
      // Predicated region
      $region85: #{_lambda_.1} parent=5 // pred_check
        _
      $region86: #{_lambda_.1} parent=5 // pred_check_branch
        %594 = sbr.rel (%p591) target = $region88
      $region87: #{_lambda_.1} parent=5 // pred_region
        %s595 = ssub.s32 %s33, 1
        %s596 = sand.u32 %s46, 1
        %s597 = scalar_lea.sflag [#allocation5], %s596
        %s598 = sand.u32 %s46, 1
        %s599 = smul.addr %s598, 512
        %s600 = scalar_lea.vmem [#allocation4], %s599
        // Predicated region
        $region89: #{_lambda_.1} parent=87 // pred_check
          %p601 = pneg %p59
        $region90: #{_lambda_.1} parent=87 // pred_check_branch
          %603 = sbr.rel (%p601) target = $region92
        $region91: #{_lambda_.1} parent=87 // pred_region
          %604 = dma.done %s597, 8192
        $region92: #{_lambda_.1} parent=87 // pred_fallthru
          _
        // Predicated region
        $region93: #{_lambda_.1} parent=87 // pred_check
          %p605 = pneg %p80
        $region94: #{_lambda_.1} parent=87 // pred_check_branch
          %607 = sbr.rel (%p605) target = $region96
        $region95: #{_lambda_.1} parent=87 // pred_region
          %608 = dma.done [#allocation8], 6144
        $region96: #{_lambda_.1} parent=87 // pred_fallthru
          _
        // Predicated region
        $region97: #{_lambda_.1} parent=87 // pred_check
          %p609 = pneg %p122
        $region98: #{_lambda_.1} parent=87 // pred_check_branch
          %611 = sbr.rel (%p609) target = $region100
        $region99: #{_lambda_.1} parent=87 // pred_region
          %612 = dma.done [#allocation8], 6144
        $region100: #{_lambda_.1} parent=87 // pred_fallthru
          _
        // Predicated region
        $region101: #{_lambda_.1} parent=87 // pred_check
          %p613 = pneg %p164
        $region102: #{_lambda_.1} parent=87 // pred_check_branch
          %615 = sbr.rel (%p613) target = $region104
        $region103: #{_lambda_.1} parent=87 // pred_region
          %616 = dma.done [#allocation11], 6144
        $region104: #{_lambda_.1} parent=87 // pred_fallthru
          _
        // Predicated region
        $region105: #{_lambda_.1} parent=87 // pred_check
          %p617 = pneg %p206
        $region106: #{_lambda_.1} parent=87 // pred_check_branch
          %619 = sbr.rel (%p617) target = $region108
        $region107: #{_lambda_.1} parent=87 // pred_region
          %620 = dma.done [#allocation11], 6144
        $region108: #{_lambda_.1} parent=87 // pred_fallthru
          _
        // Predicated region
        $region109: #{_lambda_.1} parent=87 // pred_check
          %p621 = pneg %p248
        $region110: #{_lambda_.1} parent=87 // pred_check_branch
          %623 = sbr.rel (%p621) target = $region112
        $region111: #{_lambda_.1} parent=87 // pred_region
          %624 = dma.done [#allocation14], 6144
        $region112: #{_lambda_.1} parent=87 // pred_fallthru
          _
        // Predicated region
        $region113: #{_lambda_.1} parent=87 // pred_check
          %p625 = pneg %p290
        $region114: #{_lambda_.1} parent=87 // pred_check_branch
          %627 = sbr.rel (%p625) target = $region116
        $region115: #{_lambda_.1} parent=87 // pred_region
          %628 = dma.done [#allocation14], 6144
        $region116: #{_lambda_.1} parent=87 // pred_fallthru
          _
        // Predicated region
        $region117: #{_lambda_.1} parent=87 // pred_check
          %p629 = pneg %p332
        $region118: #{_lambda_.1} parent=87 // pred_check_branch
          %631 = sbr.rel (%p629) target = $region120
        $region119: #{_lambda_.1} parent=87 // pred_region
          %632 = dma.done [#allocation17], 4096
        $region120: #{_lambda_.1} parent=87 // pred_fallthru
          _
        // Predicated region
        $region121: #{_lambda_.1} parent=87 // pred_check
          %p633 = pneg %p374
        $region122: #{_lambda_.1} parent=87 // pred_check_branch
          %635 = sbr.rel (%p633) target = $region124
        $region123: #{_lambda_.1} parent=87 // pred_region
          %636 = dma.done [#allocation17], 2048
        $region124: #{_lambda_.1} parent=87 // pred_fallthru
          _
        %s637 = sand.u32 %s46, 1
        %s638 = scalar_lea.sflag [#allocation5], %s637
        %s639 = sand.u32 %s46, 1
        %s640 = smul.addr %s639, 512
        %s641 = scalar_lea.vmem [#allocation4], %s640
        %p642 = pneg %p59
        %p643 = pneg %p56
        %p644 = pneg %p80
        %p645 = pneg %p77
        %p646 = pneg %p101
        %p647 = pneg %p98
        %p648 = pneg %p122
        %p649 = pneg %p119
        %p650 = pneg %p143
        %p651 = pneg %p140
        %p652 = pneg %p164
        %p653 = pneg %p161
        %p654 = pneg %p185
        %p655 = pneg %p182
        %p656 = pneg %p206
        %p657 = pneg %p203
        %p658 = pneg %p227
        %p659 = pneg %p224
        %p660 = pneg %p248
        %p661 = pneg %p245
        %p662 = pneg %p269
        %p663 = pneg %p266
        %p664 = pneg %p290
        %p665 = pneg %p287
        %p666 = pneg %p311
        %p667 = pneg %p308
        %p668 = pneg %p332
        %p669 = pneg %p329
        %p670 = pneg %p353
        %p671 = pneg %p350
        %p672 = pneg %p374
        %p673 = pneg %p371
        %p674 = pneg %p395
        %p675 = pneg %p392
        %p676 = pneg %p421
        %p677 = pneg %p418
        %s678 = sand.u32 %s408, 1
        %s679 = scalar_lea.sflag [#allocation6], %s678
        %s680 = sand.u32 %s408, 1
        %s681 = smul.addr %s680, 4
        %s682 = scalar_lea.vmem [#allocation19], %s681
        %s683 = smul.u32 64, %s38
        %v685 = vld [vmem:[%s600] sm:$0xff]
        %v686 = vld [vmem:[%s600 + $0x8] sm:$0xff]
        %v687 = vld [vmem:[%s600 + $0x10] sm:$0xff]
        %v688 = vld [vmem:[%s600 + $0x18] sm:$0xff]
        %v689 = vld [vmem:[%s600 + $0x20] sm:$0xff]
        %v690 = vld [vmem:[%s600 + $0x28] sm:$0xff]
        %v691 = vld [vmem:[%s600 + $0x30] sm:$0xff]
        %v692 = vld [vmem:[%s600 + $0x38] sm:$0xff]
        %v693 = vld [vmem:[%s600 + $0x40] sm:$0xff]
        %v694 = vld [vmem:[%s600 + $0x48] sm:$0xff]
        %v695 = vld [vmem:[%s600 + $0x50] sm:$0xff]
        %v696 = vld [vmem:[%s600 + $0x58] sm:$0xff]
        %v697 = vld [vmem:[%s600 + $0x60] sm:$0xff]
        %v698 = vld [vmem:[%s600 + $0x68] sm:$0xff]
        %v699 = vld [vmem:[%s600 + $0x70] sm:$0xff]
        %v700 = vld [vmem:[%s600 + $0x78] sm:$0xff]
        %v701 = vld [vmem:[%s600 + $0x80] sm:$0xff]
        %v702 = vld [vmem:[%s600 + $0x88] sm:$0xff]
        %v703 = vld [vmem:[%s600 + $0x90] sm:$0xff]
        %v704 = vld [vmem:[%s600 + $0x98] sm:$0xff]
        %v705 = vld [vmem:[%s600 + $0xa0] sm:$0xff]
        %v706 = vld [vmem:[%s600 + $0xa8] sm:$0xff]
        %v707 = vld [vmem:[%s600 + $0xb0] sm:$0xff]
        %v708 = vld [vmem:[%s600 + $0xb8] sm:$0xff]
        %v709 = vld [vmem:[%s600 + $0xc0] sm:$0xff]
        %v710 = vld [vmem:[%s600 + $0xc8] sm:$0xff]
        %v711 = vld [vmem:[%s600 + $0xd0] sm:$0xff]
        %v712 = vld [vmem:[%s600 + $0xd8] sm:$0xff]
        %v713 = vld [vmem:[%s600 + $0xe0] sm:$0xff]
        %v714 = vld [vmem:[%s600 + $0xe8] sm:$0xff]
        %v715 = vld [vmem:[%s600 + $0xf0] sm:$0xff]
        %v716 = vld [vmem:[%s600 + $0xf8] sm:$0xff]
        %v717 = vld [vmem:[%s600 + $0x100] sm:$0xff]
        %v718 = vld [vmem:[%s600 + $0x108] sm:$0xff]
        %v719 = vld [vmem:[%s600 + $0x110] sm:$0xff]
        %v720 = vld [vmem:[%s600 + $0x118] sm:$0xff]
        %v721 = vld [vmem:[%s600 + $0x120] sm:$0xff]
        %v722 = vld [vmem:[%s600 + $0x128] sm:$0xff]
        %v723 = vld [vmem:[%s600 + $0x130] sm:$0xff]
        %v724 = vld [vmem:[%s600 + $0x138] sm:$0xff]
        %v725 = vld [vmem:[%s600 + $0x140] sm:$0xff]
        %v726 = vld [vmem:[%s600 + $0x148] sm:$0xff]
        %v727 = vld [vmem:[%s600 + $0x150] sm:$0xff]
        %v728 = vld [vmem:[%s600 + $0x158] sm:$0xff]
        %v729 = vld [vmem:[%s600 + $0x160] sm:$0xff]
        %v730 = vld [vmem:[%s600 + $0x168] sm:$0xff]
        %v731 = vld [vmem:[%s600 + $0x170] sm:$0xff]
        %v732 = vld [vmem:[%s600 + $0x178] sm:$0xff]
        %v733 = vld [vmem:[%s600 + $0x180] sm:$0xff]
        %v734 = vld [vmem:[%s600 + $0x188] sm:$0xff]
        %v735 = vld [vmem:[%s600 + $0x190] sm:$0xff]
        %v736 = vld [vmem:[%s600 + $0x198] sm:$0xff]
        %v737 = vld [vmem:[%s600 + $0x1a0] sm:$0xff]
        %v738 = vld [vmem:[%s600 + $0x1a8] sm:$0xff]
        %v739 = vld [vmem:[%s600 + $0x1b0] sm:$0xff]
        %v740 = vld [vmem:[%s600 + $0x1b8] sm:$0xff]
        %v741 = vld [vmem:[%s600 + $0x1c0] sm:$0xff]
        %v742 = vld [vmem:[%s600 + $0x1c8] sm:$0xff]
        %v743 = vld [vmem:[%s600 + $0x1d0] sm:$0xff]
        %v744 = vld [vmem:[%s600 + $0x1d8] sm:$0xff]
        %v745 = vld [vmem:[%s600 + $0x1e0] sm:$0xff]
        %v746 = vld [vmem:[%s600 + $0x1e8] sm:$0xff]
        %v747 = vld [vmem:[%s600 + $0x1f0] sm:$0xff]
        %v748 = vld [vmem:[%s600 + $0x1f8] sm:$0xff]
        %749 = vst [vmem:[#allocation2 + $0x8] sm:$0xff] %v685
        %750 = vst [vmem:[#allocation2 + $0x10] sm:$0xff] %v686
        %751 = vst [vmem:[#allocation2 + $0x18] sm:$0xff] %v687
        %752 = vst [vmem:[#allocation2 + $0x20] sm:$0xff] %v688
        %753 = vst [vmem:[#allocation2 + $0x28] sm:$0xff] %v689
        %754 = vst [vmem:[#allocation2 + $0x30] sm:$0xff] %v690
        %755 = vst [vmem:[#allocation2 + $0x38] sm:$0xff] %v691
        %756 = vst [vmem:[#allocation2 + $0x40] sm:$0xff] %v692
        %757 = vst [vmem:[#allocation2 + $0x48] sm:$0xff] %v693
        %758 = vst [vmem:[#allocation2 + $0x50] sm:$0xff] %v694
        %759 = vst [vmem:[#allocation2 + $0x58] sm:$0xff] %v695
        %760 = vst [vmem:[#allocation2 + $0x60] sm:$0xff] %v696
        %761 = vst [vmem:[#allocation2 + $0x68] sm:$0xff] %v697
        %762 = vst [vmem:[#allocation2 + $0x70] sm:$0xff] %v698
        %763 = vst [vmem:[#allocation2 + $0x78] sm:$0xff] %v699
        %764 = vst [vmem:[#allocation2 + $0x80] sm:$0xff] %v700
        %765 = vst [vmem:[#allocation2 + $0x88] sm:$0xff] %v701
        %766 = vst [vmem:[#allocation2 + $0x90] sm:$0xff] %v702
        %767 = vst [vmem:[#allocation2 + $0x98] sm:$0xff] %v703
        %768 = vst [vmem:[#allocation2 + $0xa0] sm:$0xff] %v704
        %769 = vst [vmem:[#allocation2 + $0xa8] sm:$0xff] %v705
        %770 = vst [vmem:[#allocation2 + $0xb0] sm:$0xff] %v706
        %771 = vst [vmem:[#allocation2 + $0xb8] sm:$0xff] %v707
        %772 = vst [vmem:[#allocation2 + $0xc0] sm:$0xff] %v708
        %773 = vst [vmem:[#allocation2 + $0xc8] sm:$0xff] %v709
        %774 = vst [vmem:[#allocation2 + $0xd0] sm:$0xff] %v710
        %775 = vst [vmem:[#allocation2 + $0xd8] sm:$0xff] %v711
        %776 = vst [vmem:[#allocation2 + $0xe0] sm:$0xff] %v712
        %777 = vst [vmem:[#allocation2 + $0xe8] sm:$0xff] %v713
        %778 = vst [vmem:[#allocation2 + $0xf0] sm:$0xff] %v714
        %779 = vst [vmem:[#allocation2 + $0xf8] sm:$0xff] %v715
        %780 = vst [vmem:[#allocation2 + $0x100] sm:$0xff] %v716
        %781 = vst [vmem:[#allocation2 + $0x108] sm:$0xff] %v717
        %782 = vst [vmem:[#allocation2 + $0x110] sm:$0xff] %v718
        %783 = vst [vmem:[#allocation2 + $0x118] sm:$0xff] %v719
        %784 = vst [vmem:[#allocation2 + $0x120] sm:$0xff] %v720
        %785 = vst [vmem:[#allocation2 + $0x128] sm:$0xff] %v721
        %786 = vst [vmem:[#allocation2 + $0x130] sm:$0xff] %v722
        %787 = vst [vmem:[#allocation2 + $0x138] sm:$0xff] %v723
        %788 = vst [vmem:[#allocation2 + $0x140] sm:$0xff] %v724
        %789 = vst [vmem:[#allocation2 + $0x148] sm:$0xff] %v725
        %790 = vst [vmem:[#allocation2 + $0x150] sm:$0xff] %v726
        %791 = vst [vmem:[#allocation2 + $0x158] sm:$0xff] %v727
        %792 = vst [vmem:[#allocation2 + $0x160] sm:$0xff] %v728
        %793 = vst [vmem:[#allocation2 + $0x168] sm:$0xff] %v729
        %794 = vst [vmem:[#allocation2 + $0x170] sm:$0xff] %v730
        %795 = vst [vmem:[#allocation2 + $0x178] sm:$0xff] %v731
        %796 = vst [vmem:[#allocation2 + $0x180] sm:$0xff] %v732
        %797 = vst [vmem:[#allocation2 + $0x188] sm:$0xff] %v733
        %798 = vst [vmem:[#allocation2 + $0x190] sm:$0xff] %v734
        %799 = vst [vmem:[#allocation2 + $0x198] sm:$0xff] %v735
        %800 = vst [vmem:[#allocation2 + $0x1a0] sm:$0xff] %v736
        %801 = vst [vmem:[#allocation2 + $0x1a8] sm:$0xff] %v737
        %802 = vst [vmem:[#allocation2 + $0x1b0] sm:$0xff] %v738
        %803 = vst [vmem:[#allocation2 + $0x1b8] sm:$0xff] %v739
        %804 = vst [vmem:[#allocation2 + $0x1c0] sm:$0xff] %v740
        %805 = vst [vmem:[#allocation2 + $0x1c8] sm:$0xff] %v741
        %806 = vst [vmem:[#allocation2 + $0x1d0] sm:$0xff] %v742
        %807 = vst [vmem:[#allocation2 + $0x1d8] sm:$0xff] %v743
        %808 = vst [vmem:[#allocation2 + $0x1e0] sm:$0xff] %v744
        %809 = vst [vmem:[#allocation2 + $0x1e8] sm:$0xff] %v745
        %810 = vst [vmem:[#allocation2 + $0x1f0] sm:$0xff] %v746
        %811 = vst [vmem:[#allocation2 + $0x1f8] sm:$0xff] %v747
        %812 = vst [vmem:[#allocation2 + $0x200] sm:$0xff] %v748
        %v813 = vld [vmem:[#allocation2 + $0x7] sm:$0xff]
        %v814 = vld [vmem:[#allocation2 + $0xf] sm:$0xff]
        %v815 = vld [vmem:[#allocation2 + $0x17] sm:$0xff]
        %v816 = vld [vmem:[#allocation2 + $0x1f] sm:$0xff]
        %v817 = vld [vmem:[#allocation2 + $0x27] sm:$0xff]
        %v818 = vld [vmem:[#allocation2 + $0x2f] sm:$0xff]
        %v819 = vld [vmem:[#allocation2 + $0x37] sm:$0xff]
        %v820 = vld [vmem:[#allocation2 + $0x3f] sm:$0xff]
        %v821 = vld [vmem:[#allocation2 + $0x47] sm:$0xff]
        %v822 = vld [vmem:[#allocation2 + $0x4f] sm:$0xff]
        %v823 = vld [vmem:[#allocation2 + $0x57] sm:$0xff]
        %v824 = vld [vmem:[#allocation2 + $0x5f] sm:$0xff]
        %v825 = vld [vmem:[#allocation2 + $0x67] sm:$0xff]
        %v826 = vld [vmem:[#allocation2 + $0x6f] sm:$0xff]
        %v827 = vld [vmem:[#allocation2 + $0x77] sm:$0xff]
        %v828 = vld [vmem:[#allocation2 + $0x7f] sm:$0xff]
        %v829 = vld [vmem:[#allocation2 + $0x87] sm:$0xff]
        %v830 = vld [vmem:[#allocation2 + $0x8f] sm:$0xff]
        %v831 = vld [vmem:[#allocation2 + $0x97] sm:$0xff]
        %v832 = vld [vmem:[#allocation2 + $0x9f] sm:$0xff]
        %v833 = vld [vmem:[#allocation2 + $0xa7] sm:$0xff]
        %v834 = vld [vmem:[#allocation2 + $0xaf] sm:$0xff]
        %v835 = vld [vmem:[#allocation2 + $0xb7] sm:$0xff]
        %v836 = vld [vmem:[#allocation2 + $0xbf] sm:$0xff]
        %v837 = vld [vmem:[#allocation2 + $0xc7] sm:$0xff]
        %v838 = vld [vmem:[#allocation2 + $0xcf] sm:$0xff]
        %v839 = vld [vmem:[#allocation2 + $0xd7] sm:$0xff]
        %v840 = vld [vmem:[#allocation2 + $0xdf] sm:$0xff]
        %v841 = vld [vmem:[#allocation2 + $0xe7] sm:$0xff]
        %v842 = vld [vmem:[#allocation2 + $0xef] sm:$0xff]
        %v843 = vld [vmem:[#allocation2 + $0xf7] sm:$0xff]
        %v844 = vld [vmem:[#allocation2 + $0xff] sm:$0xff]
        %v845 = vld [vmem:[#allocation2 + $0x107] sm:$0xff]
        %v846 = vld [vmem:[#allocation2 + $0x10f] sm:$0xff]
        %v847 = vld [vmem:[#allocation2 + $0x117] sm:$0xff]
        %v848 = vld [vmem:[#allocation2 + $0x11f] sm:$0xff]
        %v849 = vld [vmem:[#allocation2 + $0x127] sm:$0xff]
        %v850 = vld [vmem:[#allocation2 + $0x12f] sm:$0xff]
        %v851 = vld [vmem:[#allocation2 + $0x137] sm:$0xff]
        %v852 = vld [vmem:[#allocation2 + $0x13f] sm:$0xff]
        %v853 = vld [vmem:[#allocation2 + $0x147] sm:$0xff]
        %v854 = vld [vmem:[#allocation2 + $0x14f] sm:$0xff]
        %v855 = vld [vmem:[#allocation2 + $0x157] sm:$0xff]
        %v856 = vld [vmem:[#allocation2 + $0x15f] sm:$0xff]
        %v857 = vld [vmem:[#allocation2 + $0x167] sm:$0xff]
        %v858 = vld [vmem:[#allocation2 + $0x16f] sm:$0xff]
        %v859 = vld [vmem:[#allocation2 + $0x177] sm:$0xff]
        %v860 = vld [vmem:[#allocation2 + $0x17f] sm:$0xff]
        %v861 = vld [vmem:[#allocation2 + $0x187] sm:$0xff]
        %v862 = vld [vmem:[#allocation2 + $0x18f] sm:$0xff]
        %v863 = vld [vmem:[#allocation2 + $0x197] sm:$0xff]
        %v864 = vld [vmem:[#allocation2 + $0x19f] sm:$0xff]
        %v865 = vld [vmem:[#allocation2 + $0x1a7] sm:$0xff]
        %v866 = vld [vmem:[#allocation2 + $0x1af] sm:$0xff]
        %v867 = vld [vmem:[#allocation2 + $0x1b7] sm:$0xff]
        %v868 = vld [vmem:[#allocation2 + $0x1bf] sm:$0xff]
        %v869 = vld [vmem:[#allocation2 + $0x1c7] sm:$0xff]
        %v870 = vld [vmem:[#allocation2 + $0x1cf] sm:$0xff]
        %v871 = vld [vmem:[#allocation2 + $0x1d7] sm:$0xff]
        %v872 = vld [vmem:[#allocation2 + $0x1df] sm:$0xff]
        %v873 = vld [vmem:[#allocation2 + $0x1e7] sm:$0xff]
        %v874 = vld [vmem:[#allocation2 + $0x1ef] sm:$0xff]
        %v875 = vld [vmem:[#allocation2 + $0x1f7] sm:$0xff]
        %v876 = vld [vmem:[#allocation2 + $0x1ff] sm:$0xff]
        %v877 = vld [vmem:[#allocation2 + $0x9] sm:$0xff]
        %v878 = vld [vmem:[#allocation2 + $0x11] sm:$0xff]
        %v879 = vld [vmem:[#allocation2 + $0x19] sm:$0xff]
        %v880 = vld [vmem:[#allocation2 + $0x21] sm:$0xff]
        %v881 = vld [vmem:[#allocation2 + $0x29] sm:$0xff]
        %v882 = vld [vmem:[#allocation2 + $0x31] sm:$0xff]
        %v883 = vld [vmem:[#allocation2 + $0x39] sm:$0xff]
        %v884 = vld [vmem:[#allocation2 + $0x41] sm:$0xff]
        %v885 = vld [vmem:[#allocation2 + $0x49] sm:$0xff]
        %v886 = vld [vmem:[#allocation2 + $0x51] sm:$0xff]
        %v887 = vld [vmem:[#allocation2 + $0x59] sm:$0xff]
        %v888 = vld [vmem:[#allocation2 + $0x61] sm:$0xff]
        %v889 = vld [vmem:[#allocation2 + $0x69] sm:$0xff]
        %v890 = vld [vmem:[#allocation2 + $0x71] sm:$0xff]
        %v891 = vld [vmem:[#allocation2 + $0x79] sm:$0xff]
        %v892 = vld [vmem:[#allocation2 + $0x81] sm:$0xff]
        %v893 = vld [vmem:[#allocation2 + $0x89] sm:$0xff]
        %v894 = vld [vmem:[#allocation2 + $0x91] sm:$0xff]
        %v895 = vld [vmem:[#allocation2 + $0x99] sm:$0xff]
        %v896 = vld [vmem:[#allocation2 + $0xa1] sm:$0xff]
        %v897 = vld [vmem:[#allocation2 + $0xa9] sm:$0xff]
        %v898 = vld [vmem:[#allocation2 + $0xb1] sm:$0xff]
        %v899 = vld [vmem:[#allocation2 + $0xb9] sm:$0xff]
        %v900 = vld [vmem:[#allocation2 + $0xc1] sm:$0xff]
        %v901 = vld [vmem:[#allocation2 + $0xc9] sm:$0xff]
        %v902 = vld [vmem:[#allocation2 + $0xd1] sm:$0xff]
        %v903 = vld [vmem:[#allocation2 + $0xd9] sm:$0xff]
        %v904 = vld [vmem:[#allocation2 + $0xe1] sm:$0xff]
        %v905 = vld [vmem:[#allocation2 + $0xe9] sm:$0xff]
        %v906 = vld [vmem:[#allocation2 + $0xf1] sm:$0xff]
        %v907 = vld [vmem:[#allocation2 + $0xf9] sm:$0xff]
        %v908 = vld [vmem:[#allocation2 + $0x101] sm:$0xff]
        %v909 = vld [vmem:[#allocation2 + $0x109] sm:$0xff]
        %v910 = vld [vmem:[#allocation2 + $0x111] sm:$0xff]
        %v911 = vld [vmem:[#allocation2 + $0x119] sm:$0xff]
        %v912 = vld [vmem:[#allocation2 + $0x121] sm:$0xff]
        %v913 = vld [vmem:[#allocation2 + $0x129] sm:$0xff]
        %v914 = vld [vmem:[#allocation2 + $0x131] sm:$0xff]
        %v915 = vld [vmem:[#allocation2 + $0x139] sm:$0xff]
        %v916 = vld [vmem:[#allocation2 + $0x141] sm:$0xff]
        %v917 = vld [vmem:[#allocation2 + $0x149] sm:$0xff]
        %v918 = vld [vmem:[#allocation2 + $0x151] sm:$0xff]
        %v919 = vld [vmem:[#allocation2 + $0x159] sm:$0xff]
        %v920 = vld [vmem:[#allocation2 + $0x161] sm:$0xff]
        %v921 = vld [vmem:[#allocation2 + $0x169] sm:$0xff]
        %v922 = vld [vmem:[#allocation2 + $0x171] sm:$0xff]
        %v923 = vld [vmem:[#allocation2 + $0x179] sm:$0xff]
        %v924 = vld [vmem:[#allocation2 + $0x181] sm:$0xff]
        %v925 = vld [vmem:[#allocation2 + $0x189] sm:$0xff]
        %v926 = vld [vmem:[#allocation2 + $0x191] sm:$0xff]
        %v927 = vld [vmem:[#allocation2 + $0x199] sm:$0xff]
        %v928 = vld [vmem:[#allocation2 + $0x1a1] sm:$0xff]
        %v929 = vld [vmem:[#allocation2 + $0x1a9] sm:$0xff]
        %v930 = vld [vmem:[#allocation2 + $0x1b1] sm:$0xff]
        %v931 = vld [vmem:[#allocation2 + $0x1b9] sm:$0xff]
        %v932 = vld [vmem:[#allocation2 + $0x1c1] sm:$0xff]
        %v933 = vld [vmem:[#allocation2 + $0x1c9] sm:$0xff]
        %v934 = vld [vmem:[#allocation2 + $0x1d1] sm:$0xff]
        %v935 = vld [vmem:[#allocation2 + $0x1d9] sm:$0xff]
        %v936 = vld [vmem:[#allocation2 + $0x1e1] sm:$0xff]
        %v937 = vld [vmem:[#allocation2 + $0x1e9] sm:$0xff]
        %v938 = vld [vmem:[#allocation2 + $0x1f1] sm:$0xff]
        %v939 = vld [vmem:[#allocation2 + $0x1f9] sm:$0xff]
        %v940 = vld [vmem:[#allocation2 + $0x201] sm:$0xff]
        %v941 = vlaneseq
        %v942 = vshrl.u32 %v941, 7
        %v943 = vadd.s32 %v942, 8
        %v944 = vadd.s32 %v942, 16
        %v945 = vadd.s32 %v942, 24
        %v946 = vadd.s32 %v942, 32
        %v947 = vadd.s32 %v942, 40
        %v948 = vadd.s32 %v942, 48
        %v949 = vadd.s32 %v942, 56
        %v950 = vadd.s32 %v942, 64
        %v951 = vadd.s32 %v942, 72
        %v952 = vadd.s32 %v942, 80
        %v953 = vadd.s32 %v942, 88
        %v954 = vadd.s32 %v942, 96
        %v955 = vadd.s32 %v942, 104
        %v956 = vadd.s32 %v942, 112
        %v957 = vadd.s32 %v942, 120
        %v958 = vadd.s32 %v942, 128
        %v959 = vadd.s32 %v942, 136
        %v960 = vadd.s32 %v942, 144
        %v961 = vadd.s32 %v942, 152
        %v962 = vadd.s32 %v942, 160
        %v963 = vadd.s32 %v942, 168
        %v964 = vadd.s32 %v942, 176
        %v965 = vadd.s32 %v942, 184
        %v966 = vadd.s32 %v942, 192
        %v967 = vadd.s32 %v942, 200
        %v968 = vadd.s32 %v942, 208
        %v969 = vadd.s32 %v942, 216
        %v970 = vadd.s32 %v942, 224
        %v971 = vadd.s32 %v942, 232
        %v972 = vadd.s32 %v942, 240
        %v973 = vadd.s32 %v942, 248
        %v974 = vadd.s32 %v942, 256
        %v975 = vadd.s32 %v942, 264
        %v976 = vadd.s32 %v942, 272
        %v977 = vadd.s32 %v942, 280
        %v978 = vadd.s32 %v942, 288
        %v979 = vadd.s32 %v942, 296
        %v980 = vadd.s32 %v942, 304
        %v981 = vadd.s32 %v942, 312
        %v982 = vadd.s32 %v942, 320
        %v983 = vadd.s32 %v942, 328
        %v984 = vadd.s32 %v942, 336
        %v985 = vadd.s32 %v942, 344
        %v986 = vadd.s32 %v942, 352
        %v987 = vadd.s32 %v942, 360
        %v988 = vadd.s32 %v942, 368
        %v989 = vadd.s32 %v942, 376
        %v990 = vadd.s32 %v942, 384
        %v991 = vadd.s32 %v942, 392
        %v992 = vadd.s32 %v942, 400
        %v993 = vadd.s32 %v942, 408
        %v994 = vadd.s32 %v942, 416
        %v995 = vadd.s32 %v942, 424
        %v996 = vadd.s32 %v942, 432
        %v997 = vadd.s32 %v942, 440
        %v998 = vadd.s32 %v942, 448
        %v999 = vadd.s32 %v942, 456
        %v1000 = vadd.s32 %v942, 464
        %v1001 = vadd.s32 %v942, 472
        %v1002 = vadd.s32 %v942, 480
        %v1003 = vadd.s32 %v942, 488
        %v1004 = vadd.s32 %v942, 496
        %v1005 = vadd.s32 %v942, 504
        %v1006 = vand.u32 %v942, 127
        %v1007 = vand.u32 %v943, 127
        %v1008 = vand.u32 %v944, 127
        %v1009 = vand.u32 %v945, 127
        %v1010 = vand.u32 %v946, 127
        %v1011 = vand.u32 %v947, 127
        %v1012 = vand.u32 %v948, 127
        %v1013 = vand.u32 %v949, 127
        %v1014 = vand.u32 %v950, 127
        %v1015 = vand.u32 %v951, 127
        %v1016 = vand.u32 %v952, 127
        %v1017 = vand.u32 %v953, 127
        %v1018 = vand.u32 %v954, 127
        %v1019 = vand.u32 %v955, 127
        %v1020 = vand.u32 %v956, 127
        %v1021 = vand.u32 %v957, 127
        %v1022 = vand.u32 %v958, 127
        %v1023 = vand.u32 %v959, 127
        %v1024 = vand.u32 %v960, 127
        %v1025 = vand.u32 %v961, 127
        %v1026 = vand.u32 %v962, 127
        %v1027 = vand.u32 %v963, 127
        %v1028 = vand.u32 %v964, 127
        %v1029 = vand.u32 %v965, 127
        %v1030 = vand.u32 %v966, 127
        %v1031 = vand.u32 %v967, 127
        %v1032 = vand.u32 %v968, 127
        %v1033 = vand.u32 %v969, 127
        %v1034 = vand.u32 %v970, 127
        %v1035 = vand.u32 %v971, 127
        %v1036 = vand.u32 %v972, 127
        %v1037 = vand.u32 %v973, 127
        %v1038 = vand.u32 %v974, 127
        %v1039 = vand.u32 %v975, 127
        %v1040 = vand.u32 %v976, 127
        %v1041 = vand.u32 %v977, 127
        %v1042 = vand.u32 %v978, 127
        %v1043 = vand.u32 %v979, 127
        %v1044 = vand.u32 %v980, 127
        %v1045 = vand.u32 %v981, 127
        %v1046 = vand.u32 %v982, 127
        %v1047 = vand.u32 %v983, 127
        %v1048 = vand.u32 %v984, 127
        %v1049 = vand.u32 %v985, 127
        %v1050 = vand.u32 %v986, 127
        %v1051 = vand.u32 %v987, 127
        %v1052 = vand.u32 %v988, 127
        %v1053 = vand.u32 %v989, 127
        %v1054 = vand.u32 %v990, 127
        %v1055 = vand.u32 %v991, 127
        %v1056 = vand.u32 %v992, 127
        %v1057 = vand.u32 %v993, 127
        %v1058 = vand.u32 %v994, 127
        %v1059 = vand.u32 %v995, 127
        %v1060 = vand.u32 %v996, 127
        %v1061 = vand.u32 %v997, 127
        %v1062 = vand.u32 %v998, 127
        %v1063 = vand.u32 %v999, 127
        %v1064 = vand.u32 %v1000, 127
        %v1065 = vand.u32 %v1001, 127
        %v1066 = vand.u32 %v1002, 127
        %v1067 = vand.u32 %v1003, 127
        %v1068 = vand.u32 %v1004, 127
        %v1069 = vand.u32 %v1005, 127
        %vm1070 = vcmp.eq.s32.totalorder %v1006, 0
        %vm1071 = vcmp.eq.s32.totalorder %v1007, 0
        %vm1072 = vcmp.eq.s32.totalorder %v1008, 0
        %vm1073 = vcmp.eq.s32.totalorder %v1009, 0
        %vm1074 = vcmp.eq.s32.totalorder %v1010, 0
        %vm1075 = vcmp.eq.s32.totalorder %v1011, 0
        %vm1076 = vcmp.eq.s32.totalorder %v1012, 0
        %vm1077 = vcmp.eq.s32.totalorder %v1013, 0
        %vm1078 = vcmp.eq.s32.totalorder %v1014, 0
        %vm1079 = vcmp.eq.s32.totalorder %v1015, 0
        %vm1080 = vcmp.eq.s32.totalorder %v1016, 0
        %vm1081 = vcmp.eq.s32.totalorder %v1017, 0
        %vm1082 = vcmp.eq.s32.totalorder %v1018, 0
        %vm1083 = vcmp.eq.s32.totalorder %v1019, 0
        %vm1084 = vcmp.eq.s32.totalorder %v1020, 0
        %vm1085 = vcmp.eq.s32.totalorder %v1021, 0
        %vm1086 = vcmp.eq.s32.totalorder %v1022, 0
        %vm1087 = vcmp.eq.s32.totalorder %v1023, 0
        %vm1088 = vcmp.eq.s32.totalorder %v1024, 0
        %vm1089 = vcmp.eq.s32.totalorder %v1025, 0
        %vm1090 = vcmp.eq.s32.totalorder %v1026, 0
        %vm1091 = vcmp.eq.s32.totalorder %v1027, 0
        %vm1092 = vcmp.eq.s32.totalorder %v1028, 0
        %vm1093 = vcmp.eq.s32.totalorder %v1029, 0
        %vm1094 = vcmp.eq.s32.totalorder %v1030, 0
        %vm1095 = vcmp.eq.s32.totalorder %v1031, 0
        %vm1096 = vcmp.eq.s32.totalorder %v1032, 0
        %vm1097 = vcmp.eq.s32.totalorder %v1033, 0
        %vm1098 = vcmp.eq.s32.totalorder %v1034, 0
        %vm1099 = vcmp.eq.s32.totalorder %v1035, 0
        %vm1100 = vcmp.eq.s32.totalorder %v1036, 0
        %vm1101 = vcmp.eq.s32.totalorder %v1037, 0
        %vm1102 = vcmp.eq.s32.totalorder %v1038, 0
        %vm1103 = vcmp.eq.s32.totalorder %v1039, 0
        %vm1104 = vcmp.eq.s32.totalorder %v1040, 0
        %vm1105 = vcmp.eq.s32.totalorder %v1041, 0
        %vm1106 = vcmp.eq.s32.totalorder %v1042, 0
        %vm1107 = vcmp.eq.s32.totalorder %v1043, 0
        %vm1108 = vcmp.eq.s32.totalorder %v1044, 0
        %vm1109 = vcmp.eq.s32.totalorder %v1045, 0
        %vm1110 = vcmp.eq.s32.totalorder %v1046, 0
        %vm1111 = vcmp.eq.s32.totalorder %v1047, 0
        %vm1112 = vcmp.eq.s32.totalorder %v1048, 0
        %vm1113 = vcmp.eq.s32.totalorder %v1049, 0
        %vm1114 = vcmp.eq.s32.totalorder %v1050, 0
        %vm1115 = vcmp.eq.s32.totalorder %v1051, 0
        %vm1116 = vcmp.eq.s32.totalorder %v1052, 0
        %vm1117 = vcmp.eq.s32.totalorder %v1053, 0
        %vm1118 = vcmp.eq.s32.totalorder %v1054, 0
        %vm1119 = vcmp.eq.s32.totalorder %v1055, 0
        %vm1120 = vcmp.eq.s32.totalorder %v1056, 0
        %vm1121 = vcmp.eq.s32.totalorder %v1057, 0
        %vm1122 = vcmp.eq.s32.totalorder %v1058, 0
        %vm1123 = vcmp.eq.s32.totalorder %v1059, 0
        %vm1124 = vcmp.eq.s32.totalorder %v1060, 0
        %vm1125 = vcmp.eq.s32.totalorder %v1061, 0
        %vm1126 = vcmp.eq.s32.totalorder %v1062, 0
        %vm1127 = vcmp.eq.s32.totalorder %v1063, 0
        %vm1128 = vcmp.eq.s32.totalorder %v1064, 0
        %vm1129 = vcmp.eq.s32.totalorder %v1065, 0
        %vm1130 = vcmp.eq.s32.totalorder %v1066, 0
        %vm1131 = vcmp.eq.s32.totalorder %v1067, 0
        %vm1132 = vcmp.eq.s32.totalorder %v1068, 0
        %vm1133 = vcmp.eq.s32.totalorder %v1069, 0
        %v1134 = vsel %vm1070, 0.0, %v813
        %v1135 = vsel %vm1071, 0.0, %v814
        %v1136 = vsel %vm1072, 0.0, %v815
        %v1137 = vsel %vm1073, 0.0, %v816
        %v1138 = vsel %vm1074, 0.0, %v817
        %v1139 = vsel %vm1075, 0.0, %v818
        %v1140 = vsel %vm1076, 0.0, %v819
        %v1141 = vsel %vm1077, 0.0, %v820
        %v1142 = vsel %vm1078, 0.0, %v821
        %v1143 = vsel %vm1079, 0.0, %v822
        %v1144 = vsel %vm1080, 0.0, %v823
        %v1145 = vsel %vm1081, 0.0, %v824
        %v1146 = vsel %vm1082, 0.0, %v825
        %v1147 = vsel %vm1083, 0.0, %v826
        %v1148 = vsel %vm1084, 0.0, %v827
        %v1149 = vsel %vm1085, 0.0, %v828
        %v1150 = vsel %vm1086, 0.0, %v829
        %v1151 = vsel %vm1087, 0.0, %v830
        %v1152 = vsel %vm1088, 0.0, %v831
        %v1153 = vsel %vm1089, 0.0, %v832
        %v1154 = vsel %vm1090, 0.0, %v833
        %v1155 = vsel %vm1091, 0.0, %v834
        %v1156 = vsel %vm1092, 0.0, %v835
        %v1157 = vsel %vm1093, 0.0, %v836
        %v1158 = vsel %vm1094, 0.0, %v837
        %v1159 = vsel %vm1095, 0.0, %v838
        %v1160 = vsel %vm1096, 0.0, %v839
        %v1161 = vsel %vm1097, 0.0, %v840
        %v1162 = vsel %vm1098, 0.0, %v841
        %v1163 = vsel %vm1099, 0.0, %v842
        %v1164 = vsel %vm1100, 0.0, %v843
        %v1165 = vsel %vm1101, 0.0, %v844
        %v1166 = vsel %vm1102, 0.0, %v845
        %v1167 = vsel %vm1103, 0.0, %v846
        %v1168 = vsel %vm1104, 0.0, %v847
        %v1169 = vsel %vm1105, 0.0, %v848
        %v1170 = vsel %vm1106, 0.0, %v849
        %v1171 = vsel %vm1107, 0.0, %v850
        %v1172 = vsel %vm1108, 0.0, %v851
        %v1173 = vsel %vm1109, 0.0, %v852
        %v1174 = vsel %vm1110, 0.0, %v853
        %v1175 = vsel %vm1111, 0.0, %v854
        %v1176 = vsel %vm1112, 0.0, %v855
        %v1177 = vsel %vm1113, 0.0, %v856
        %v1178 = vsel %vm1114, 0.0, %v857
        %v1179 = vsel %vm1115, 0.0, %v858
        %v1180 = vsel %vm1116, 0.0, %v859
        %v1181 = vsel %vm1117, 0.0, %v860
        %v1182 = vsel %vm1118, 0.0, %v861
        %v1183 = vsel %vm1119, 0.0, %v862
        %v1184 = vsel %vm1120, 0.0, %v863
        %v1185 = vsel %vm1121, 0.0, %v864
        %v1186 = vsel %vm1122, 0.0, %v865
        %v1187 = vsel %vm1123, 0.0, %v866
        %v1188 = vsel %vm1124, 0.0, %v867
        %v1189 = vsel %vm1125, 0.0, %v868
        %v1190 = vsel %vm1126, 0.0, %v869
        %v1191 = vsel %vm1127, 0.0, %v870
        %v1192 = vsel %vm1128, 0.0, %v871
        %v1193 = vsel %vm1129, 0.0, %v872
        %v1194 = vsel %vm1130, 0.0, %v873
        %v1195 = vsel %vm1131, 0.0, %v874
        %v1196 = vsel %vm1132, 0.0, %v875
        %v1197 = vsel %vm1133, 0.0, %v876
        %vm1198 = vcmp.eq.s32.totalorder %v1006, 127
        %vm1199 = vcmp.eq.s32.totalorder %v1007, 127
        %vm1200 = vcmp.eq.s32.totalorder %v1008, 127
        %vm1201 = vcmp.eq.s32.totalorder %v1009, 127
        %vm1202 = vcmp.eq.s32.totalorder %v1010, 127
        %vm1203 = vcmp.eq.s32.totalorder %v1011, 127
        %vm1204 = vcmp.eq.s32.totalorder %v1012, 127
        %vm1205 = vcmp.eq.s32.totalorder %v1013, 127
        %vm1206 = vcmp.eq.s32.totalorder %v1014, 127
        %vm1207 = vcmp.eq.s32.totalorder %v1015, 127
        %vm1208 = vcmp.eq.s32.totalorder %v1016, 127
        %vm1209 = vcmp.eq.s32.totalorder %v1017, 127
        %vm1210 = vcmp.eq.s32.totalorder %v1018, 127
        %vm1211 = vcmp.eq.s32.totalorder %v1019, 127
        %vm1212 = vcmp.eq.s32.totalorder %v1020, 127
        %vm1213 = vcmp.eq.s32.totalorder %v1021, 127
        %vm1214 = vcmp.eq.s32.totalorder %v1022, 127
        %vm1215 = vcmp.eq.s32.totalorder %v1023, 127
        %vm1216 = vcmp.eq.s32.totalorder %v1024, 127
        %vm1217 = vcmp.eq.s32.totalorder %v1025, 127
        %vm1218 = vcmp.eq.s32.totalorder %v1026, 127
        %vm1219 = vcmp.eq.s32.totalorder %v1027, 127
        %vm1220 = vcmp.eq.s32.totalorder %v1028, 127
        %vm1221 = vcmp.eq.s32.totalorder %v1029, 127
        %vm1222 = vcmp.eq.s32.totalorder %v1030, 127
        %vm1223 = vcmp.eq.s32.totalorder %v1031, 127
        %vm1224 = vcmp.eq.s32.totalorder %v1032, 127
        %vm1225 = vcmp.eq.s32.totalorder %v1033, 127
        %vm1226 = vcmp.eq.s32.totalorder %v1034, 127
        %vm1227 = vcmp.eq.s32.totalorder %v1035, 127
        %vm1228 = vcmp.eq.s32.totalorder %v1036, 127
        %vm1229 = vcmp.eq.s32.totalorder %v1037, 127
        %vm1230 = vcmp.eq.s32.totalorder %v1038, 127
        %vm1231 = vcmp.eq.s32.totalorder %v1039, 127
        %vm1232 = vcmp.eq.s32.totalorder %v1040, 127
        %vm1233 = vcmp.eq.s32.totalorder %v1041, 127
        %vm1234 = vcmp.eq.s32.totalorder %v1042, 127
        %vm1235 = vcmp.eq.s32.totalorder %v1043, 127
        %vm1236 = vcmp.eq.s32.totalorder %v1044, 127
        %vm1237 = vcmp.eq.s32.totalorder %v1045, 127
        %vm1238 = vcmp.eq.s32.totalorder %v1046, 127
        %vm1239 = vcmp.eq.s32.totalorder %v1047, 127
        %vm1240 = vcmp.eq.s32.totalorder %v1048, 127
        %vm1241 = vcmp.eq.s32.totalorder %v1049, 127
        %vm1242 = vcmp.eq.s32.totalorder %v1050, 127
        %vm1243 = vcmp.eq.s32.totalorder %v1051, 127
        %vm1244 = vcmp.eq.s32.totalorder %v1052, 127
        %vm1245 = vcmp.eq.s32.totalorder %v1053, 127
        %vm1246 = vcmp.eq.s32.totalorder %v1054, 127
        %vm1247 = vcmp.eq.s32.totalorder %v1055, 127
        %vm1248 = vcmp.eq.s32.totalorder %v1056, 127
        %vm1249 = vcmp.eq.s32.totalorder %v1057, 127
        %vm1250 = vcmp.eq.s32.totalorder %v1058, 127
        %vm1251 = vcmp.eq.s32.totalorder %v1059, 127
        %vm1252 = vcmp.eq.s32.totalorder %v1060, 127
        %vm1253 = vcmp.eq.s32.totalorder %v1061, 127
        %vm1254 = vcmp.eq.s32.totalorder %v1062, 127
        %vm1255 = vcmp.eq.s32.totalorder %v1063, 127
        %vm1256 = vcmp.eq.s32.totalorder %v1064, 127
        %vm1257 = vcmp.eq.s32.totalorder %v1065, 127
        %vm1258 = vcmp.eq.s32.totalorder %v1066, 127
        %vm1259 = vcmp.eq.s32.totalorder %v1067, 127
        %vm1260 = vcmp.eq.s32.totalorder %v1068, 127
        %vm1261 = vcmp.eq.s32.totalorder %v1069, 127
        %v1262 = vsel %vm1198, 0.0, %v877
        %v1263 = vsel %vm1199, 0.0, %v878
        %v1264 = vsel %vm1200, 0.0, %v879
        %v1265 = vsel %vm1201, 0.0, %v880
        %v1266 = vsel %vm1202, 0.0, %v881
        %v1267 = vsel %vm1203, 0.0, %v882
        %v1268 = vsel %vm1204, 0.0, %v883
        %v1269 = vsel %vm1205, 0.0, %v884
        %v1270 = vsel %vm1206, 0.0, %v885
        %v1271 = vsel %vm1207, 0.0, %v886
        %v1272 = vsel %vm1208, 0.0, %v887
        %v1273 = vsel %vm1209, 0.0, %v888
        %v1274 = vsel %vm1210, 0.0, %v889
        %v1275 = vsel %vm1211, 0.0, %v890
        %v1276 = vsel %vm1212, 0.0, %v891
        %v1277 = vsel %vm1213, 0.0, %v892
        %v1278 = vsel %vm1214, 0.0, %v893
        %v1279 = vsel %vm1215, 0.0, %v894
        %v1280 = vsel %vm1216, 0.0, %v895
        %v1281 = vsel %vm1217, 0.0, %v896
        %v1282 = vsel %vm1218, 0.0, %v897
        %v1283 = vsel %vm1219, 0.0, %v898
        %v1284 = vsel %vm1220, 0.0, %v899
        %v1285 = vsel %vm1221, 0.0, %v900
        %v1286 = vsel %vm1222, 0.0, %v901
        %v1287 = vsel %vm1223, 0.0, %v902
        %v1288 = vsel %vm1224, 0.0, %v903
        %v1289 = vsel %vm1225, 0.0, %v904
        %v1290 = vsel %vm1226, 0.0, %v905
        %v1291 = vsel %vm1227, 0.0, %v906
        %v1292 = vsel %vm1228, 0.0, %v907
        %v1293 = vsel %vm1229, 0.0, %v908
        %v1294 = vsel %vm1230, 0.0, %v909
        %v1295 = vsel %vm1231, 0.0, %v910
        %v1296 = vsel %vm1232, 0.0, %v911
        %v1297 = vsel %vm1233, 0.0, %v912
        %v1298 = vsel %vm1234, 0.0, %v913
        %v1299 = vsel %vm1235, 0.0, %v914
        %v1300 = vsel %vm1236, 0.0, %v915
        %v1301 = vsel %vm1237, 0.0, %v916
        %v1302 = vsel %vm1238, 0.0, %v917
        %v1303 = vsel %vm1239, 0.0, %v918
        %v1304 = vsel %vm1240, 0.0, %v919
        %v1305 = vsel %vm1241, 0.0, %v920
        %v1306 = vsel %vm1242, 0.0, %v921
        %v1307 = vsel %vm1243, 0.0, %v922
        %v1308 = vsel %vm1244, 0.0, %v923
        %v1309 = vsel %vm1245, 0.0, %v924
        %v1310 = vsel %vm1246, 0.0, %v925
        %v1311 = vsel %vm1247, 0.0, %v926
        %v1312 = vsel %vm1248, 0.0, %v927
        %v1313 = vsel %vm1249, 0.0, %v928
        %v1314 = vsel %vm1250, 0.0, %v929
        %v1315 = vsel %vm1251, 0.0, %v930
        %v1316 = vsel %vm1252, 0.0, %v931
        %v1317 = vsel %vm1253, 0.0, %v932
        %v1318 = vsel %vm1254, 0.0, %v933
        %v1319 = vsel %vm1255, 0.0, %v934
        %v1320 = vsel %vm1256, 0.0, %v935
        %v1321 = vsel %vm1257, 0.0, %v936
        %v1322 = vsel %vm1258, 0.0, %v937
        %v1323 = vsel %vm1259, 0.0, %v938
        %v1324 = vsel %vm1260, 0.0, %v939
        %v1325 = vsel %vm1261, 0.0, %v940
        %v1326 = vpack.c.bf16 %v1135, %v1134
        %v1327 = vpack.c.bf16 %v686, %v685
        %v1328 = vpack.c.bf16 %v1263, %v1262
        %v1329 = vpack.c.bf16 %v1137, %v1136
        %v1330 = vpack.c.bf16 %v688, %v687
        %v1331 = vpack.c.bf16 %v1265, %v1264
        %v1332 = vpack.c.bf16 %v1139, %v1138
        %v1333 = vpack.c.bf16 %v690, %v689
        %v1334 = vpack.c.bf16 %v1267, %v1266
        %v1335 = vpack.c.bf16 %v1141, %v1140
        %v1336 = vpack.c.bf16 %v692, %v691
        %v1337 = vpack.c.bf16 %v1269, %v1268
        %v1338 = vpack.c.bf16 %v1143, %v1142
        %v1339 = vpack.c.bf16 %v694, %v693
        %v1340 = vpack.c.bf16 %v1271, %v1270
        %v1341 = vpack.c.bf16 %v1145, %v1144
        %v1342 = vpack.c.bf16 %v696, %v695
        %v1343 = vpack.c.bf16 %v1273, %v1272
        %v1344 = vpack.c.bf16 %v1147, %v1146
        %v1345 = vpack.c.bf16 %v698, %v697
        %v1346 = vpack.c.bf16 %v1275, %v1274
        %v1347 = vpack.c.bf16 %v1149, %v1148
        %v1348 = vpack.c.bf16 %v700, %v699
        %v1349 = vpack.c.bf16 %v1277, %v1276
        %v1350 = vpack.c.bf16 %v1151, %v1150
        %v1351 = vpack.c.bf16 %v702, %v701
        %v1352 = vpack.c.bf16 %v1279, %v1278
        %v1353 = vpack.c.bf16 %v1153, %v1152
        %v1354 = vpack.c.bf16 %v704, %v703
        %v1355 = vpack.c.bf16 %v1281, %v1280
        %v1356 = vpack.c.bf16 %v1155, %v1154
        %v1357 = vpack.c.bf16 %v706, %v705
        %v1358 = vpack.c.bf16 %v1283, %v1282
        %v1359 = vpack.c.bf16 %v1157, %v1156
        %v1360 = vpack.c.bf16 %v708, %v707
        %v1361 = vpack.c.bf16 %v1285, %v1284
        %v1362 = vpack.c.bf16 %v1159, %v1158
        %v1363 = vpack.c.bf16 %v710, %v709
        %v1364 = vpack.c.bf16 %v1287, %v1286
        %v1365 = vpack.c.bf16 %v1161, %v1160
        %v1366 = vpack.c.bf16 %v712, %v711
        %v1367 = vpack.c.bf16 %v1289, %v1288
        %v1368 = vpack.c.bf16 %v1163, %v1162
        %v1369 = vpack.c.bf16 %v714, %v713
        %v1370 = vpack.c.bf16 %v1291, %v1290
        %v1371 = vpack.c.bf16 %v1165, %v1164
        %v1372 = vpack.c.bf16 %v716, %v715
        %v1373 = vpack.c.bf16 %v1293, %v1292
        %v1374 = vpack.c.bf16 %v1167, %v1166
        %v1375 = vpack.c.bf16 %v718, %v717
        %v1376 = vpack.c.bf16 %v1295, %v1294
        %v1377 = vpack.c.bf16 %v1169, %v1168
        %v1378 = vpack.c.bf16 %v720, %v719
        %v1379 = vpack.c.bf16 %v1297, %v1296
        %v1380 = vpack.c.bf16 %v1171, %v1170
        %v1381 = vpack.c.bf16 %v722, %v721
        %v1382 = vpack.c.bf16 %v1299, %v1298
        %v1383 = vpack.c.bf16 %v1173, %v1172
        %v1384 = vpack.c.bf16 %v724, %v723
        %v1385 = vpack.c.bf16 %v1301, %v1300
        %v1386 = vpack.c.bf16 %v1175, %v1174
        %v1387 = vpack.c.bf16 %v726, %v725
        %v1388 = vpack.c.bf16 %v1303, %v1302
        %v1389 = vpack.c.bf16 %v1177, %v1176
        %v1390 = vpack.c.bf16 %v728, %v727
        %v1391 = vpack.c.bf16 %v1305, %v1304
        %v1392 = vpack.c.bf16 %v1179, %v1178
        %v1393 = vpack.c.bf16 %v730, %v729
        %v1394 = vpack.c.bf16 %v1307, %v1306
        %v1395 = vpack.c.bf16 %v1181, %v1180
        %v1396 = vpack.c.bf16 %v732, %v731
        %v1397 = vpack.c.bf16 %v1309, %v1308
        %v1398 = vpack.c.bf16 %v1183, %v1182
        %v1399 = vpack.c.bf16 %v734, %v733
        %v1400 = vpack.c.bf16 %v1311, %v1310
        %v1401 = vpack.c.bf16 %v1185, %v1184
        %v1402 = vpack.c.bf16 %v736, %v735
        %v1403 = vpack.c.bf16 %v1313, %v1312
        %v1404 = vpack.c.bf16 %v1187, %v1186
        %v1405 = vpack.c.bf16 %v738, %v737
        %v1406 = vpack.c.bf16 %v1315, %v1314
        %v1407 = vpack.c.bf16 %v1189, %v1188
        %v1408 = vpack.c.bf16 %v740, %v739
        %v1409 = vpack.c.bf16 %v1317, %v1316
        %v1410 = vpack.c.bf16 %v1191, %v1190
        %v1411 = vpack.c.bf16 %v742, %v741
        %v1412 = vpack.c.bf16 %v1319, %v1318
        %v1413 = vpack.c.bf16 %v1193, %v1192
        %v1414 = vpack.c.bf16 %v744, %v743
        %v1415 = vpack.c.bf16 %v1321, %v1320
        %v1416 = vpack.c.bf16 %v1195, %v1194
        %v1417 = vpack.c.bf16 %v746, %v745
        %v1418 = vpack.c.bf16 %v1323, %v1322
        %v1419 = vpack.c.bf16 %v1197, %v1196
        %v1420 = vpack.c.bf16 %v748, %v747
        %v1421 = vpack.c.bf16 %v1325, %v1324
        %v1422 = vld [vmem:[#allocation7] sm:$0xff]
        %v1423 = vld [vmem:[#allocation7 + $0x8] sm:$0xff]
        %v1424 = vld [vmem:[#allocation7 + $0x10] sm:$0xff]
        %v1425 = vld [vmem:[#allocation7 + $0x18] sm:$0xff]
        %v1426 = vld [vmem:[#allocation7 + $0x20] sm:$0xff]
        %v1427 = vld [vmem:[#allocation7 + $0x28] sm:$0xff]
        %v1428 = vld [vmem:[#allocation7 + $0x30] sm:$0xff]
        %v1429 = vld [vmem:[#allocation7 + $0x38] sm:$0xff]
        %v1430 = vld [vmem:[#allocation7 + $0x40] sm:$0xff]
        %v1431 = vld [vmem:[#allocation7 + $0x48] sm:$0xff]
        %v1432 = vld [vmem:[#allocation7 + $0x50] sm:$0xff]
        %v1433 = vld [vmem:[#allocation7 + $0x58] sm:$0xff]
        %v1434 = vld [vmem:[#allocation7 + $0x60] sm:$0xff]
        %v1435 = vld [vmem:[#allocation7 + $0x68] sm:$0xff]
        %v1436 = vld [vmem:[#allocation7 + $0x70] sm:$0xff]
        %v1437 = vld [vmem:[#allocation7 + $0x78] sm:$0xff]
        %v1438 = vld [vmem:[#allocation7 + $0x80] sm:$0xff]
        %v1439 = vld [vmem:[#allocation7 + $0x88] sm:$0xff]
        %v1440 = vld [vmem:[#allocation7 + $0x90] sm:$0xff]
        %v1441 = vld [vmem:[#allocation7 + $0x98] sm:$0xff]
        %v1442 = vld [vmem:[#allocation7 + $0xa0] sm:$0xff]
        %v1443 = vld [vmem:[#allocation7 + $0xa8] sm:$0xff]
        %v1444 = vld [vmem:[#allocation7 + $0xb0] sm:$0xff]
        %v1445 = vld [vmem:[#allocation7 + $0xb8] sm:$0xff]
        %v1446 = vld [vmem:[#allocation7 + $0xc0] sm:$0xff]
        %v1447 = vld [vmem:[#allocation7 + $0xc8] sm:$0xff]
        %v1448 = vld [vmem:[#allocation7 + $0xd0] sm:$0xff]
        %v1449 = vld [vmem:[#allocation7 + $0xd8] sm:$0xff]
        %v1450 = vld [vmem:[#allocation7 + $0xe0] sm:$0xff]
        %v1451 = vld [vmem:[#allocation7 + $0xe8] sm:$0xff]
        %v1452 = vld [vmem:[#allocation7 + $0xf0] sm:$0xff]
        %v1453 = vld [vmem:[#allocation7 + $0xf8] sm:$0xff]
        %v1454 = vld [vmem:[#allocation7 + $0x100] sm:$0xff]
        %v1455 = vld [vmem:[#allocation7 + $0x108] sm:$0xff]
        %v1456 = vld [vmem:[#allocation7 + $0x110] sm:$0xff]
        %v1457 = vld [vmem:[#allocation7 + $0x118] sm:$0xff]
        %v1458 = vld [vmem:[#allocation7 + $0x120] sm:$0xff]
        %v1459 = vld [vmem:[#allocation7 + $0x128] sm:$0xff]
        %v1460 = vld [vmem:[#allocation7 + $0x130] sm:$0xff]
        %v1461 = vld [vmem:[#allocation7 + $0x138] sm:$0xff]
        %v1462 = vld [vmem:[#allocation7 + $0x140] sm:$0xff]
        %v1463 = vld [vmem:[#allocation7 + $0x148] sm:$0xff]
        %v1464 = vld [vmem:[#allocation7 + $0x150] sm:$0xff]
        %v1465 = vld [vmem:[#allocation7 + $0x158] sm:$0xff]
        %v1466 = vld [vmem:[#allocation7 + $0x160] sm:$0xff]
        %v1467 = vld [vmem:[#allocation7 + $0x168] sm:$0xff]
        %v1468 = vld [vmem:[#allocation7 + $0x170] sm:$0xff]
        %v1469 = vld [vmem:[#allocation7 + $0x178] sm:$0xff]
        %v1518 = vunpack.c.l.b16 %v1422
        %v1519 = vunpack.c.h.b16 %v1422
        %v1520 = vunpack.c.l.b16 %v1423
        %v1521 = vunpack.c.h.b16 %v1423
        %v1522 = vunpack.c.l.b16 %v1424
        %v1523 = vunpack.c.h.b16 %v1424
        %v1524 = vunpack.c.l.b16 %v1425
        %v1525 = vunpack.c.h.b16 %v1425
        %v1526 = vunpack.c.l.b16 %v1426
        %v1527 = vunpack.c.h.b16 %v1426
        %v1528 = vunpack.c.l.b16 %v1427
        %v1529 = vunpack.c.h.b16 %v1427
        %v1530 = vunpack.c.l.b16 %v1428
        %v1531 = vunpack.c.h.b16 %v1428
        %v1532 = vunpack.c.l.b16 %v1429
        %v1533 = vunpack.c.h.b16 %v1429
        %v1534 = vunpack.c.l.b16 %v1430
        %v1535 = vunpack.c.h.b16 %v1430
        %v1536 = vunpack.c.l.b16 %v1431
        %v1537 = vunpack.c.h.b16 %v1431
        %v1538 = vunpack.c.l.b16 %v1432
        %v1539 = vunpack.c.h.b16 %v1432
        %v1540 = vunpack.c.l.b16 %v1433
        %v1541 = vunpack.c.h.b16 %v1433
        %v1542 = vunpack.c.l.b16 %v1434
        %v1543 = vunpack.c.h.b16 %v1434
        %v1544 = vunpack.c.l.b16 %v1435
        %v1545 = vunpack.c.h.b16 %v1435
        %v1546 = vunpack.c.l.b16 %v1436
        %v1547 = vunpack.c.h.b16 %v1436
        %v1548 = vunpack.c.l.b16 %v1437
        %v1549 = vunpack.c.h.b16 %v1437
        %v1550 = vunpack.c.l.b16 %v1438
        %v1551 = vunpack.c.h.b16 %v1438
        %v1552 = vunpack.c.l.b16 %v1439
        %v1553 = vunpack.c.h.b16 %v1439
        %v1554 = vunpack.c.l.b16 %v1440
        %v1555 = vunpack.c.h.b16 %v1440
        %v1556 = vunpack.c.l.b16 %v1441
        %v1557 = vunpack.c.h.b16 %v1441
        %v1558 = vunpack.c.l.b16 %v1442
        %v1559 = vunpack.c.h.b16 %v1442
        %v1560 = vunpack.c.l.b16 %v1443
        %v1561 = vunpack.c.h.b16 %v1443
        %v1562 = vunpack.c.l.b16 %v1444
        %v1563 = vunpack.c.h.b16 %v1444
        %v1564 = vunpack.c.l.b16 %v1445
        %v1565 = vunpack.c.h.b16 %v1445
        %v1566 = vunpack.c.l.b16 %v1446
        %v1567 = vunpack.c.h.b16 %v1446
        %v1568 = vunpack.c.l.b16 %v1447
        %v1569 = vunpack.c.h.b16 %v1447
        %v1570 = vunpack.c.l.b16 %v1448
        %v1571 = vunpack.c.h.b16 %v1448
        %v1572 = vunpack.c.l.b16 %v1449
        %v1573 = vunpack.c.h.b16 %v1449
        %v1574 = vunpack.c.l.b16 %v1450
        %v1575 = vunpack.c.h.b16 %v1450
        %v1576 = vunpack.c.l.b16 %v1451
        %v1577 = vunpack.c.h.b16 %v1451
        %v1578 = vunpack.c.l.b16 %v1452
        %v1579 = vunpack.c.h.b16 %v1452
        %v1580 = vunpack.c.l.b16 %v1453
        %v1581 = vunpack.c.h.b16 %v1453
        %v1582 = vunpack.c.l.b16 %v1454
        %v1583 = vunpack.c.h.b16 %v1454
        %v1584 = vunpack.c.l.b16 %v1455
        %v1585 = vunpack.c.h.b16 %v1455
        %v1586 = vunpack.c.l.b16 %v1456
        %v1587 = vunpack.c.h.b16 %v1456
        %v1588 = vunpack.c.l.b16 %v1457
        %v1589 = vunpack.c.h.b16 %v1457
        %v1590 = vunpack.c.l.b16 %v1458
        %v1591 = vunpack.c.h.b16 %v1458
        %v1592 = vunpack.c.l.b16 %v1459
        %v1593 = vunpack.c.h.b16 %v1459
        %v1594 = vunpack.c.l.b16 %v1460
        %v1595 = vunpack.c.h.b16 %v1460
        %v1596 = vunpack.c.l.b16 %v1461
        %v1597 = vunpack.c.h.b16 %v1461
        %v1598 = vunpack.c.l.b16 %v1462
        %v1599 = vunpack.c.h.b16 %v1462
        %v1600 = vunpack.c.l.b16 %v1463
        %v1601 = vunpack.c.h.b16 %v1463
        %v1602 = vunpack.c.l.b16 %v1464
        %v1603 = vunpack.c.h.b16 %v1464
        %v1604 = vunpack.c.l.b16 %v1465
        %v1605 = vunpack.c.h.b16 %v1465
        %v1606 = vunpack.c.l.b16 %v1466
        %v1607 = vunpack.c.h.b16 %v1466
        %v1608 = vunpack.c.l.b16 %v1467
        %v1609 = vunpack.c.h.b16 %v1467
        %v1610 = vunpack.c.l.b16 %v1468
        %v1611 = vunpack.c.h.b16 %v1468
        %v1612 = vunpack.c.l.b16 %v1469
        %v1613 = vunpack.c.h.b16 %v1469
        %v1614 = vpack.c.b16 %v1520, %v1518
        %v1615 = vpack.c.b16 %v1521, %v1519
        %v1616 = vpack.c.b16 %v1524, %v1522
        %v1617 = vpack.c.b16 %v1525, %v1523
        %v1618 = vpack.c.b16 %v1528, %v1526
        %v1619 = vpack.c.b16 %v1529, %v1527
        %v1620 = vpack.c.b16 %v1532, %v1530
        %v1621 = vpack.c.b16 %v1533, %v1531
        %v1622 = vpack.c.b16 %v1536, %v1534
        %v1623 = vpack.c.b16 %v1537, %v1535
        %v1624 = vpack.c.b16 %v1540, %v1538
        %v1625 = vpack.c.b16 %v1541, %v1539
        %v1626 = vpack.c.b16 %v1544, %v1542
        %v1627 = vpack.c.b16 %v1545, %v1543
        %v1628 = vpack.c.b16 %v1548, %v1546
        %v1629 = vpack.c.b16 %v1549, %v1547
        %v1630 = vpack.c.b16 %v1552, %v1550
        %v1631 = vpack.c.b16 %v1553, %v1551
        %v1632 = vpack.c.b16 %v1556, %v1554
        %v1633 = vpack.c.b16 %v1557, %v1555
        %v1634 = vpack.c.b16 %v1560, %v1558
        %v1635 = vpack.c.b16 %v1561, %v1559
        %v1636 = vpack.c.b16 %v1564, %v1562
        %v1637 = vpack.c.b16 %v1565, %v1563
        %v1638 = vpack.c.b16 %v1568, %v1566
        %v1639 = vpack.c.b16 %v1569, %v1567
        %v1640 = vpack.c.b16 %v1572, %v1570
        %v1641 = vpack.c.b16 %v1573, %v1571
        %v1642 = vpack.c.b16 %v1576, %v1574
        %v1643 = vpack.c.b16 %v1577, %v1575
        %v1644 = vpack.c.b16 %v1580, %v1578
        %v1645 = vpack.c.b16 %v1581, %v1579
        %v1646 = vpack.c.b16 %v1584, %v1582
        %v1647 = vpack.c.b16 %v1585, %v1583
        %v1648 = vpack.c.b16 %v1588, %v1586
        %v1649 = vpack.c.b16 %v1589, %v1587
        %v1650 = vpack.c.b16 %v1592, %v1590
        %v1651 = vpack.c.b16 %v1593, %v1591
        %v1652 = vpack.c.b16 %v1596, %v1594
        %v1653 = vpack.c.b16 %v1597, %v1595
        %v1654 = vpack.c.b16 %v1600, %v1598
        %v1655 = vpack.c.b16 %v1601, %v1599
        %v1656 = vpack.c.b16 %v1604, %v1602
        %v1657 = vpack.c.b16 %v1605, %v1603
        %v1658 = vpack.c.b16 %v1608, %v1606
        %v1659 = vpack.c.b16 %v1609, %v1607
        %v1660 = vpack.c.b16 %v1612, %v1610
        %v1661 = vpack.c.b16 %v1613, %v1611
        %1710 = vmatprep.subr.bf16.mxu0 %v1615
        %1711 = vmatpush1.bf16.msra.mxu0 %v1614
        %1712 = vmatprep.subr.bf16.mxu0 %v1617
        %1713 = vmatpush1.bf16.msra.mxu0 %v1616
        %1714 = vmatprep.subr.bf16.mxu0 %v1619
        %1715 = vmatpush1.bf16.msra.mxu0 %v1618
        %1716 = vmatprep.subr.bf16.mxu0 %v1621
        %1717 = vmatpush1.bf16.msra.mxu0 %v1620
        %1718 = vmatprep.subr.bf16.mxu0 %v1623
        %1719 = vmatpush1.bf16.msra.mxu0 %v1622
        %1720 = vmatprep.subr.bf16.mxu0 %v1625
        %1721 = vmatpush1.bf16.msra.mxu0 %v1624
        %1722 = vmatprep.subr.bf16.mxu0 %v1627
        %1723 = vmatpush1.bf16.msra.mxu0 %v1626
        %1724 = vmatprep.subr.bf16.mxu0 %v1629
        %1725 = vmatpush1.bf16.msra.mxu0 %v1628
        %1726 = vmatprep.subr.bf16.mxu0 %v1631
        %1727 = vmatpush1.bf16.msra.mxu0 %v1630
        %1728 = vmatprep.subr.bf16.mxu0 %v1633
        %1729 = vmatpush1.bf16.msra.mxu0 %v1632
        %1730 = vmatprep.subr.bf16.mxu0 %v1635
        %1731 = vmatpush1.bf16.msra.mxu0 %v1634
        %1732 = vmatprep.subr.bf16.mxu0 %v1637
        %1733 = vmatpush1.bf16.msra.mxu0 %v1636
        %1734 = vmatprep.subr.bf16.mxu0 %v1639
        %1735 = vmatpush1.bf16.msra.mxu0 %v1638
        %1736 = vmatprep.subr.bf16.mxu0 %v1641
        %1737 = vmatpush1.bf16.msra.mxu0 %v1640
        %1738 = vmatprep.subr.bf16.mxu0 %v1643
        %1739 = vmatpush1.bf16.msra.mxu0 %v1642
        %1740 = vmatprep.subr.bf16.mxu0 %v1645
        %1741 = vmatpush1.bf16.msra.mxu0 %v1644
        %1742 = vmatprep.mubr.bf16.mxu0 %v1327
        %1743 = vmatmul.mubr.bf16.gmra.mrb[0].mxu0 %v1326
        %v1744 = vpop.f32.mrb[0].mxu0
        %v1745 = vadd.f32 0.0, %v1744
        %v1746 = vpop.f32.mrb[0].mxu0
        %v1747 = vadd.f32 0.0, %v1746
        %v1748 = vpop.f32.mrb[0].mxu0
        %v1749 = vadd.f32 0.0, %v1748
        %v1750 = vpop.f32.mrb[0].mxu0
        %v1751 = vadd.f32 0.0, %v1750
        %1752 = vmatprep.mubr.bf16.mxu0 %v1330
        %1753 = vmatmul.mubr.bf16.gmra.mrb[0].mxu0 %v1329
        %v1754 = vpop.f32.mrb[0].mxu0
        %v1755 = vadd.f32 0.0, %v1754
        %v1756 = vpop.f32.mrb[0].mxu0
        %v1757 = vadd.f32 0.0, %v1756
        %v1758 = vpop.f32.mrb[0].mxu0
        %v1759 = vadd.f32 0.0, %v1758
        %v1760 = vpop.f32.mrb[0].mxu0
        %v1761 = vadd.f32 0.0, %v1760
        %1762 = vmatprep.mubr.bf16.mxu0 %v1333
        %1763 = vmatmul.mubr.bf16.gmra.mrb[0].mxu0 %v1332
        %v1764 = vpop.f32.mrb[0].mxu0
        %v1765 = vadd.f32 0.0, %v1764
        %v1766 = vpop.f32.mrb[0].mxu0
        %v1767 = vadd.f32 0.0, %v1766
        %v1768 = vpop.f32.mrb[0].mxu0
        %v1769 = vadd.f32 0.0, %v1768
        %v1770 = vpop.f32.mrb[0].mxu0
        %v1771 = vadd.f32 0.0, %v1770
        %1772 = vmatprep.mubr.bf16.mxu0 %v1336
        %1773 = vmatmul.mubr.bf16.gmra.mrb[0].mxu0 %v1335
        %v1774 = vpop.f32.mrb[0].mxu0
        %v1775 = vadd.f32 0.0, %v1774
        %v1776 = vpop.f32.mrb[0].mxu0
        %v1777 = vadd.f32 0.0, %v1776
        %v1778 = vpop.f32.mrb[0].mxu0
        %v1779 = vadd.f32 0.0, %v1778
        %v1780 = vpop.f32.mrb[0].mxu0
        %v1781 = vadd.f32 0.0, %v1780
        %1782 = vmatprep.mubr.bf16.mxu0 %v1339
        %1783 = vmatmul.mubr.bf16.gmra.mrb[0].mxu0 %v1338
        %v1784 = vpop.f32.mrb[0].mxu0
        %v1785 = vadd.f32 0.0, %v1784
        %v1786 = vpop.f32.mrb[0].mxu0
        %v1787 = vadd.f32 0.0, %v1786
        %v1788 = vpop.f32.mrb[0].mxu0
        %v1789 = vadd.f32 0.0, %v1788
        %v1790 = vpop.f32.mrb[0].mxu0
        %v1791 = vadd.f32 0.0, %v1790
        %1792 = vmatprep.mubr.bf16.mxu0 %v1342
        %1793 = vmatmul.mubr.bf16.gmra.mrb[0].mxu0 %v1341
        %v1794 = vpop.f32.mrb[0].mxu0
        %v1795 = vadd.f32 0.0, %v1794
        %v1796 = vpop.f32.mrb[0].mxu0
        %v1797 = vadd.f32 0.0, %v1796
        %v1798 = vpop.f32.mrb[0].mxu0
        %v1799 = vadd.f32 0.0, %v1798
        %v1800 = vpop.f32.mrb[0].mxu0
        %v1801 = vadd.f32 0.0, %v1800
        %1802 = vmatprep.mubr.bf16.mxu0 %v1345
        %1803 = vmatmul.mubr.bf16.gmra.mrb[0].mxu0 %v1344
        %v1804 = vpop.f32.mrb[0].mxu0
        %v1805 = vadd.f32 0.0, %v1804
        %v1806 = vpop.f32.mrb[0].mxu0
        %v1807 = vadd.f32 0.0, %v1806
        %v1808 = vpop.f32.mrb[0].mxu0
        %v1809 = vadd.f32 0.0, %v1808
        %v1810 = vpop.f32.mrb[0].mxu0
        %v1811 = vadd.f32 0.0, %v1810
        %1812 = vmatprep.mubr.bf16.mxu0 %v1348
        %1813 = vmatmul.mubr.bf16.gmra.mrb[0].mxu0 %v1347
        %v1814 = vpop.f32.mrb[0].mxu0
        %v1815 = vadd.f32 0.0, %v1814
        %v1816 = vpop.f32.mrb[0].mxu0
        %v1817 = vadd.f32 0.0, %v1816
        %v1818 = vpop.f32.mrb[0].mxu0
        %v1819 = vadd.f32 0.0, %v1818
        %v1820 = vpop.f32.mrb[0].mxu0
        %v1821 = vadd.f32 0.0, %v1820
        %1822 = vmatprep.mubr.bf16.mxu0 %v1351
        %1823 = vmatmul.mubr.bf16.gmra.mrb[0].mxu0 %v1350
        %v1824 = vpop.f32.mrb[0].mxu0
        %v1825 = vadd.f32 0.0, %v1824
        %v1826 = vpop.f32.mrb[0].mxu0
        %v1827 = vadd.f32 0.0, %v1826
        %v1828 = vpop.f32.mrb[0].mxu0
        %v1829 = vadd.f32 0.0, %v1828
        %v1830 = vpop.f32.mrb[0].mxu0
        %v1831 = vadd.f32 0.0, %v1830
        %1832 = vmatprep.mubr.bf16.mxu0 %v1354
        %1833 = vmatmul.mubr.bf16.gmra.mrb[0].mxu0 %v1353
        %v1834 = vpop.f32.mrb[0].mxu0
        %v1835 = vadd.f32 0.0, %v1834
        %v1836 = vpop.f32.mrb[0].mxu0
        %v1837 = vadd.f32 0.0, %v1836
        %v1838 = vpop.f32.mrb[0].mxu0
        %v1839 = vadd.f32 0.0, %v1838
        %v1840 = vpop.f32.mrb[0].mxu0
        %v1841 = vadd.f32 0.0, %v1840
        %1842 = vmatprep.mubr.bf16.mxu0 %v1357
        %1843 = vmatmul.mubr.bf16.gmra.mrb[0].mxu0 %v1356
        %v1844 = vpop.f32.mrb[0].mxu0
        %v1845 = vadd.f32 0.0, %v1844
        %v1846 = vpop.f32.mrb[0].mxu0
        %v1847 = vadd.f32 0.0, %v1846
        %v1848 = vpop.f32.mrb[0].mxu0
        %v1849 = vadd.f32 0.0, %v1848
        %v1850 = vpop.f32.mrb[0].mxu0
        %v1851 = vadd.f32 0.0, %v1850
        %1852 = vmatprep.mubr.bf16.mxu0 %v1360
        %1853 = vmatmul.mubr.bf16.gmra.mrb[0].mxu0 %v1359
        %v1854 = vpop.f32.mrb[0].mxu0
        %v1855 = vadd.f32 0.0, %v1854
        %v1856 = vpop.f32.mrb[0].mxu0
        %v1857 = vadd.f32 0.0, %v1856
        %v1858 = vpop.f32.mrb[0].mxu0
        %v1859 = vadd.f32 0.0, %v1858
        %v1860 = vpop.f32.mrb[0].mxu0
        %v1861 = vadd.f32 0.0, %v1860
        %1862 = vmatprep.mubr.bf16.mxu0 %v1363
        %1863 = vmatmul.mubr.bf16.gmra.mrb[0].mxu0 %v1362
        %v1864 = vpop.f32.mrb[0].mxu0
        %v1865 = vadd.f32 0.0, %v1864
        %v1866 = vpop.f32.mrb[0].mxu0
        %v1867 = vadd.f32 0.0, %v1866
        %v1868 = vpop.f32.mrb[0].mxu0
        %v1869 = vadd.f32 0.0, %v1868
        %v1870 = vpop.f32.mrb[0].mxu0
        %v1871 = vadd.f32 0.0, %v1870
        %1872 = vmatprep.mubr.bf16.mxu0 %v1366
        %1873 = vmatmul.mubr.bf16.gmra.mrb[0].mxu0 %v1365
        %v1874 = vpop.f32.mrb[0].mxu0
        %v1875 = vadd.f32 0.0, %v1874
        %v1876 = vpop.f32.mrb[0].mxu0
        %v1877 = vadd.f32 0.0, %v1876
        %v1878 = vpop.f32.mrb[0].mxu0
        %v1879 = vadd.f32 0.0, %v1878
        %v1880 = vpop.f32.mrb[0].mxu0
        %v1881 = vadd.f32 0.0, %v1880
        %1882 = vmatprep.mubr.bf16.mxu0 %v1369
        %1883 = vmatmul.mubr.bf16.gmra.mrb[0].mxu0 %v1368
        %v1884 = vpop.f32.mrb[0].mxu0
        %v1885 = vadd.f32 0.0, %v1884
        %v1886 = vpop.f32.mrb[0].mxu0
        %v1887 = vadd.f32 0.0, %v1886
        %v1888 = vpop.f32.mrb[0].mxu0
        %v1889 = vadd.f32 0.0, %v1888
        %v1890 = vpop.f32.mrb[0].mxu0
        %v1891 = vadd.f32 0.0, %v1890
        %1892 = vmatprep.mubr.bf16.mxu0 %v1372
        %1893 = vmatmul.mubr.bf16.gmra.mrb[0].mxu0 %v1371
        %v1894 = vpop.f32.mrb[0].mxu0
        %v1895 = vadd.f32 0.0, %v1894
        %v1896 = vpop.f32.mrb[0].mxu0
        %v1897 = vadd.f32 0.0, %v1896
        %v1898 = vpop.f32.mrb[0].mxu0
        %v1899 = vadd.f32 0.0, %v1898
        %v1900 = vpop.f32.mrb[0].mxu0
        %v1901 = vadd.f32 0.0, %v1900
        %1902 = vmatprep.mubr.bf16.mxu0 %v1375
        %1903 = vmatmul.mubr.bf16.gmra.mrb[0].mxu0 %v1374
        %v1904 = vpop.f32.mrb[0].mxu0
        %v1905 = vadd.f32 0.0, %v1904
        %v1906 = vpop.f32.mrb[0].mxu0
        %v1907 = vadd.f32 0.0, %v1906
        %v1908 = vpop.f32.mrb[0].mxu0
        %v1909 = vadd.f32 0.0, %v1908
        %v1910 = vpop.f32.mrb[0].mxu0
        %v1911 = vadd.f32 0.0, %v1910
        %1912 = vmatprep.mubr.bf16.mxu0 %v1378
        %1913 = vmatmul.mubr.bf16.gmra.mrb[0].mxu0 %v1377
        %v1914 = vpop.f32.mrb[0].mxu0
        %v1915 = vadd.f32 0.0, %v1914
        %v1916 = vpop.f32.mrb[0].mxu0
        %v1917 = vadd.f32 0.0, %v1916
        %v1918 = vpop.f32.mrb[0].mxu0
        %v1919 = vadd.f32 0.0, %v1918
        %v1920 = vpop.f32.mrb[0].mxu0
        %v1921 = vadd.f32 0.0, %v1920
        %1922 = vmatprep.mubr.bf16.mxu0 %v1381
        %1923 = vmatmul.mubr.bf16.gmra.mrb[0].mxu0 %v1380
        %v1924 = vpop.f32.mrb[0].mxu0
        %v1925 = vadd.f32 0.0, %v1924
        %v1926 = vpop.f32.mrb[0].mxu0
        %v1927 = vadd.f32 0.0, %v1926
        %v1928 = vpop.f32.mrb[0].mxu0
        %v1929 = vadd.f32 0.0, %v1928
        %v1930 = vpop.f32.mrb[0].mxu0
        %v1931 = vadd.f32 0.0, %v1930
        %1932 = vmatprep.mubr.bf16.mxu0 %v1384
        %1933 = vmatmul.mubr.bf16.gmra.mrb[0].mxu0 %v1383
        %v1934 = vpop.f32.mrb[0].mxu0
        %v1935 = vadd.f32 0.0, %v1934
        %v1936 = vpop.f32.mrb[0].mxu0
        %v1937 = vadd.f32 0.0, %v1936
        %v1938 = vpop.f32.mrb[0].mxu0
        %v1939 = vadd.f32 0.0, %v1938
        %v1940 = vpop.f32.mrb[0].mxu0
        %v1941 = vadd.f32 0.0, %v1940
        %1942 = vmatprep.mubr.bf16.mxu0 %v1387
        %1943 = vmatmul.mubr.bf16.gmra.mrb[0].mxu0 %v1386
        %v1944 = vpop.f32.mrb[0].mxu0
        %v1945 = vadd.f32 0.0, %v1944
        %v1946 = vpop.f32.mrb[0].mxu0
        %v1947 = vadd.f32 0.0, %v1946
        %v1948 = vpop.f32.mrb[0].mxu0
        %v1949 = vadd.f32 0.0, %v1948
        %v1950 = vpop.f32.mrb[0].mxu0
        %v1951 = vadd.f32 0.0, %v1950
        %1952 = vmatprep.mubr.bf16.mxu0 %v1390
        %1953 = vmatmul.mubr.bf16.gmra.mrb[0].mxu0 %v1389
        %v1954 = vpop.f32.mrb[0].mxu0
        %v1955 = vadd.f32 0.0, %v1954
        %v1956 = vpop.f32.mrb[0].mxu0
        %v1957 = vadd.f32 0.0, %v1956
        %v1958 = vpop.f32.mrb[0].mxu0
        %v1959 = vadd.f32 0.0, %v1958
        %v1960 = vpop.f32.mrb[0].mxu0
        %v1961 = vadd.f32 0.0, %v1960
        %1962 = vmatprep.mubr.bf16.mxu0 %v1393
        %1963 = vmatmul.mubr.bf16.gmra.mrb[0].mxu0 %v1392
        %v1964 = vpop.f32.mrb[0].mxu0
        %v1965 = vadd.f32 0.0, %v1964
        %v1966 = vpop.f32.mrb[0].mxu0
        %v1967 = vadd.f32 0.0, %v1966
        %v1968 = vpop.f32.mrb[0].mxu0
        %v1969 = vadd.f32 0.0, %v1968
        %v1970 = vpop.f32.mrb[0].mxu0
        %v1971 = vadd.f32 0.0, %v1970
        %1972 = vmatprep.mubr.bf16.mxu0 %v1396
        %1973 = vmatmul.mubr.bf16.gmra.mrb[0].mxu0 %v1395
        %v1974 = vpop.f32.mrb[0].mxu0
        %v1975 = vadd.f32 0.0, %v1974
        %v1976 = vpop.f32.mrb[0].mxu0
        %v1977 = vadd.f32 0.0, %v1976
        %v1978 = vpop.f32.mrb[0].mxu0
        %v1979 = vadd.f32 0.0, %v1978
        %v1980 = vpop.f32.mrb[0].mxu0
        %v1981 = vadd.f32 0.0, %v1980
        %1982 = vmatprep.mubr.bf16.mxu0 %v1399
        %1983 = vmatmul.mubr.bf16.gmra.mrb[0].mxu0 %v1398
        %v1984 = vpop.f32.mrb[0].mxu0
        %v1985 = vadd.f32 0.0, %v1984
        %v1986 = vpop.f32.mrb[0].mxu0
        %v1987 = vadd.f32 0.0, %v1986
        %v1988 = vpop.f32.mrb[0].mxu0
        %v1989 = vadd.f32 0.0, %v1988
        %v1990 = vpop.f32.mrb[0].mxu0
        %v1991 = vadd.f32 0.0, %v1990
        %1992 = vmatprep.mubr.bf16.mxu0 %v1402
        %1993 = vmatmul.mubr.bf16.gmra.mrb[0].mxu0 %v1401
        %v1994 = vpop.f32.mrb[0].mxu0
        %v1995 = vadd.f32 0.0, %v1994
        %v1996 = vpop.f32.mrb[0].mxu0
        %v1997 = vadd.f32 0.0, %v1996
        %v1998 = vpop.f32.mrb[0].mxu0
        %v1999 = vadd.f32 0.0, %v1998
        %v2000 = vpop.f32.mrb[0].mxu0
        %v2001 = vadd.f32 0.0, %v2000
        %2002 = vmatprep.mubr.bf16.mxu0 %v1405
        %2003 = vmatmul.mubr.bf16.gmra.mrb[0].mxu0 %v1404
        %v2004 = vpop.f32.mrb[0].mxu0
        %v2005 = vadd.f32 0.0, %v2004
        %v2006 = vpop.f32.mrb[0].mxu0
        %v2007 = vadd.f32 0.0, %v2006
        %v2008 = vpop.f32.mrb[0].mxu0
        %v2009 = vadd.f32 0.0, %v2008
        %v2010 = vpop.f32.mrb[0].mxu0
        %v2011 = vadd.f32 0.0, %v2010
        %2012 = vmatprep.mubr.bf16.mxu0 %v1408
        %2013 = vmatmul.mubr.bf16.gmra.mrb[0].mxu0 %v1407
        %v2014 = vpop.f32.mrb[0].mxu0
        %v2015 = vadd.f32 0.0, %v2014
        %v2016 = vpop.f32.mrb[0].mxu0
        %v2017 = vadd.f32 0.0, %v2016
        %v2018 = vpop.f32.mrb[0].mxu0
        %v2019 = vadd.f32 0.0, %v2018
        %v2020 = vpop.f32.mrb[0].mxu0
        %v2021 = vadd.f32 0.0, %v2020
        %2022 = vmatprep.mubr.bf16.mxu0 %v1411
        %2023 = vmatmul.mubr.bf16.gmra.mrb[0].mxu0 %v1410
        %v2024 = vpop.f32.mrb[0].mxu0
        %v2025 = vadd.f32 0.0, %v2024
        %v2026 = vpop.f32.mrb[0].mxu0
        %v2027 = vadd.f32 0.0, %v2026
        %v2028 = vpop.f32.mrb[0].mxu0
        %v2029 = vadd.f32 0.0, %v2028
        %v2030 = vpop.f32.mrb[0].mxu0
        %v2031 = vadd.f32 0.0, %v2030
        %2032 = vmatprep.mubr.bf16.mxu0 %v1414
        %2033 = vmatmul.mubr.bf16.gmra.mrb[0].mxu0 %v1413
        %v2034 = vpop.f32.mrb[0].mxu0
        %v2035 = vadd.f32 0.0, %v2034
        %v2036 = vpop.f32.mrb[0].mxu0
        %v2037 = vadd.f32 0.0, %v2036
        %v2038 = vpop.f32.mrb[0].mxu0
        %v2039 = vadd.f32 0.0, %v2038
        %v2040 = vpop.f32.mrb[0].mxu0
        %v2041 = vadd.f32 0.0, %v2040
        %2042 = vmatprep.mubr.bf16.mxu0 %v1417
        %2043 = vmatmul.mubr.bf16.gmra.mrb[0].mxu0 %v1416
        %v2044 = vpop.f32.mrb[0].mxu0
        %v2045 = vadd.f32 0.0, %v2044
        %v2046 = vpop.f32.mrb[0].mxu0
        %v2047 = vadd.f32 0.0, %v2046
        %v2048 = vpop.f32.mrb[0].mxu0
        %v2049 = vadd.f32 0.0, %v2048
        %v2050 = vpop.f32.mrb[0].mxu0
        %v2051 = vadd.f32 0.0, %v2050
        %2052 = vmatprep.mubr.bf16.mxu0 %v1420
        %2053 = vmatmul.mubr.bf16.gmra.mrb[0].mxu0 %v1419
        %v2054 = vpop.f32.mrb[0].mxu0
        %v2055 = vadd.f32 0.0, %v2054
        %v2056 = vpop.f32.mrb[0].mxu0
        %v2057 = vadd.f32 0.0, %v2056
        %v2058 = vpop.f32.mrb[0].mxu0
        %v2059 = vadd.f32 0.0, %v2058
        %v2060 = vpop.f32.mrb[0].mxu0
        %v2061 = vadd.f32 0.0, %v2060
        %2062 = vdwg.mxu0
        %2063 = vmatprep.subr.bf16.mxu0 %v1647
        %2064 = vmatpush1.bf16.msra.mxu0 %v1646
        %2065 = vmatprep.subr.bf16.mxu0 %v1649
        %2066 = vmatpush1.bf16.msra.mxu0 %v1648
        %2067 = vmatprep.subr.bf16.mxu0 %v1651
        %2068 = vmatpush1.bf16.msra.mxu0 %v1650
        %2069 = vmatprep.subr.bf16.mxu0 %v1653
        %2070 = vmatpush1.bf16.msra.mxu0 %v1652
        %2071 = vmatprep.subr.bf16.mxu0 %v1655
        %2072 = vmatpush1.bf16.msra.mxu0 %v1654
        %2073 = vmatprep.subr.bf16.mxu0 %v1657
        %2074 = vmatpush1.bf16.msra.mxu0 %v1656
        %2075 = vmatprep.subr.bf16.mxu0 %v1659
        %2076 = vmatpush1.bf16.msra.mxu0 %v1658
        %2077 = vmatprep.subr.bf16.mxu0 %v1661
        %2078 = vmatpush1.bf16.msra.mxu0 %v1660
        %2079 = vmatprep.subr.bf16.mxu0 0
        %2080 = vmatpush1.bf16.msra.mxu0 0
        %2081 = vmatprep.subr.bf16.mxu0 0
        %2082 = vmatpush1.bf16.msra.mxu0 0
        %2083 = vmatprep.subr.bf16.mxu0 0
        %2084 = vmatpush1.bf16.msra.mxu0 0
        %2085 = vmatprep.subr.bf16.mxu0 0
        %2086 = vmatpush1.bf16.msra.mxu0 0
        %2087 = vmatprep.subr.bf16.mxu0 0
        %2088 = vmatpush1.bf16.msra.mxu0 0
        %2089 = vmatprep.subr.bf16.mxu0 0
        %2090 = vmatpush1.bf16.msra.mxu0 0
        %2091 = vmatprep.subr.bf16.mxu0 0
        %2092 = vmatpush1.bf16.msra.mxu0 0
        %2093 = vmatprep.subr.bf16.mxu0 0
        %2094 = vmatpush1.bf16.msra.mxu0 0
        %2095 = vmatprep.mubr.bf16.mxu0 0
        %2096 = vmatmul.mubr.bf16.gmra.mrb[0].mxu0 %v1328
        %v2097 = vpop.f32.mrb[0].mxu0
        %v2098 = vadd.f32 %v1745, %v2097
        %v2099 = vpop.f32.mrb[0].mxu0
        %v2100 = vadd.f32 %v1747, %v2099
        %v2101 = vpop.f32.mrb[0].mxu0
        %v2102 = vadd.f32 %v1749, %v2101
        %v2103 = vpop.f32.mrb[0].mxu0
        %v2104 = vadd.f32 %v1751, %v2103
        %2105 = vmatprep.mubr.bf16.mxu0 0
        %2106 = vmatmul.mubr.bf16.gmra.mrb[0].mxu0 %v1331
        %v2107 = vpop.f32.mrb[0].mxu0
        %v2108 = vadd.f32 %v1755, %v2107
        %v2109 = vpop.f32.mrb[0].mxu0
        %v2110 = vadd.f32 %v1757, %v2109
        %v2111 = vpop.f32.mrb[0].mxu0
        %v2112 = vadd.f32 %v1759, %v2111
        %v2113 = vpop.f32.mrb[0].mxu0
        %v2114 = vadd.f32 %v1761, %v2113
        %2115 = vmatprep.mubr.bf16.mxu0 0
        %2116 = vmatmul.mubr.bf16.gmra.mrb[0].mxu0 %v1334
        %v2117 = vpop.f32.mrb[0].mxu0
        %v2118 = vadd.f32 %v1765, %v2117
        %v2119 = vpop.f32.mrb[0].mxu0
        %v2120 = vadd.f32 %v1767, %v2119
        %v2121 = vpop.f32.mrb[0].mxu0
        %v2122 = vadd.f32 %v1769, %v2121
        %v2123 = vpop.f32.mrb[0].mxu0
        %v2124 = vadd.f32 %v1771, %v2123
        %2125 = vmatprep.mubr.bf16.mxu0 0
        %2126 = vmatmul.mubr.bf16.gmra.mrb[0].mxu0 %v1337
        %v2127 = vpop.f32.mrb[0].mxu0
        %v2128 = vadd.f32 %v1775, %v2127
        %v2129 = vpop.f32.mrb[0].mxu0
        %v2130 = vadd.f32 %v1777, %v2129
        %v2131 = vpop.f32.mrb[0].mxu0
        %v2132 = vadd.f32 %v1779, %v2131
        %v2133 = vpop.f32.mrb[0].mxu0
        %v2134 = vadd.f32 %v1781, %v2133
        %2135 = vmatprep.mubr.bf16.mxu0 0
        %2136 = vmatmul.mubr.bf16.gmra.mrb[0].mxu0 %v1340
        %v2137 = vpop.f32.mrb[0].mxu0
        %v2138 = vadd.f32 %v1785, %v2137
        %v2139 = vpop.f32.mrb[0].mxu0
        %v2140 = vadd.f32 %v1787, %v2139
        %v2141 = vpop.f32.mrb[0].mxu0
        %v2142 = vadd.f32 %v1789, %v2141
        %v2143 = vpop.f32.mrb[0].mxu0
        %v2144 = vadd.f32 %v1791, %v2143
        %2145 = vmatprep.mubr.bf16.mxu0 0
        %2146 = vmatmul.mubr.bf16.gmra.mrb[0].mxu0 %v1343
        %v2147 = vpop.f32.mrb[0].mxu0
        %v2148 = vadd.f32 %v1795, %v2147
        %v2149 = vpop.f32.mrb[0].mxu0
        %v2150 = vadd.f32 %v1797, %v2149
        %v2151 = vpop.f32.mrb[0].mxu0
        %v2152 = vadd.f32 %v1799, %v2151
        %v2153 = vpop.f32.mrb[0].mxu0
        %v2154 = vadd.f32 %v1801, %v2153
        %2155 = vmatprep.mubr.bf16.mxu0 0
        %2156 = vmatmul.mubr.bf16.gmra.mrb[0].mxu0 %v1346
        %v2157 = vpop.f32.mrb[0].mxu0
        %v2158 = vadd.f32 %v1805, %v2157
        %v2159 = vpop.f32.mrb[0].mxu0
        %v2160 = vadd.f32 %v1807, %v2159
        %v2161 = vpop.f32.mrb[0].mxu0
        %v2162 = vadd.f32 %v1809, %v2161
        %v2163 = vpop.f32.mrb[0].mxu0
        %v2164 = vadd.f32 %v1811, %v2163
        %2165 = vmatprep.mubr.bf16.mxu0 0
        %2166 = vmatmul.mubr.bf16.gmra.mrb[0].mxu0 %v1349
        %v2167 = vpop.f32.mrb[0].mxu0
        %v2168 = vadd.f32 %v1815, %v2167
        %v2169 = vpop.f32.mrb[0].mxu0
        %v2170 = vadd.f32 %v1817, %v2169
        %v2171 = vpop.f32.mrb[0].mxu0
        %v2172 = vadd.f32 %v1819, %v2171
        %v2173 = vpop.f32.mrb[0].mxu0
        %v2174 = vadd.f32 %v1821, %v2173
        %2175 = vmatprep.mubr.bf16.mxu0 0
        %2176 = vmatmul.mubr.bf16.gmra.mrb[0].mxu0 %v1352
        %v2177 = vpop.f32.mrb[0].mxu0
        %v2178 = vadd.f32 %v1825, %v2177
        %v2179 = vpop.f32.mrb[0].mxu0
        %v2180 = vadd.f32 %v1827, %v2179
        %v2181 = vpop.f32.mrb[0].mxu0
        %v2182 = vadd.f32 %v1829, %v2181
        %v2183 = vpop.f32.mrb[0].mxu0
        %v2184 = vadd.f32 %v1831, %v2183
        %2185 = vmatprep.mubr.bf16.mxu0 0
        %2186 = vmatmul.mubr.bf16.gmra.mrb[0].mxu0 %v1355
        %v2187 = vpop.f32.mrb[0].mxu0
        %v2188 = vadd.f32 %v1835, %v2187
        %v2189 = vpop.f32.mrb[0].mxu0
        %v2190 = vadd.f32 %v1837, %v2189
        %v2191 = vpop.f32.mrb[0].mxu0
        %v2192 = vadd.f32 %v1839, %v2191
        %v2193 = vpop.f32.mrb[0].mxu0
        %v2194 = vadd.f32 %v1841, %v2193
        %2195 = vmatprep.mubr.bf16.mxu0 0
        %2196 = vmatmul.mubr.bf16.gmra.mrb[0].mxu0 %v1358
        %v2197 = vpop.f32.mrb[0].mxu0
        %v2198 = vadd.f32 %v1845, %v2197
        %v2199 = vpop.f32.mrb[0].mxu0
        %v2200 = vadd.f32 %v1847, %v2199
        %v2201 = vpop.f32.mrb[0].mxu0
        %v2202 = vadd.f32 %v1849, %v2201
        %v2203 = vpop.f32.mrb[0].mxu0
        %v2204 = vadd.f32 %v1851, %v2203
        %2205 = vmatprep.mubr.bf16.mxu0 0
        %2206 = vmatmul.mubr.bf16.gmra.mrb[0].mxu0 %v1361
        %v2207 = vpop.f32.mrb[0].mxu0
        %v2208 = vadd.f32 %v1855, %v2207
        %v2209 = vpop.f32.mrb[0].mxu0
        %v2210 = vadd.f32 %v1857, %v2209
        %v2211 = vpop.f32.mrb[0].mxu0
        %v2212 = vadd.f32 %v1859, %v2211
        %v2213 = vpop.f32.mrb[0].mxu0
        %v2214 = vadd.f32 %v1861, %v2213
        %2215 = vmatprep.mubr.bf16.mxu0 0
        %2216 = vmatmul.mubr.bf16.gmra.mrb[0].mxu0 %v1364
        %v2217 = vpop.f32.mrb[0].mxu0
        %v2218 = vadd.f32 %v1865, %v2217
        %v2219 = vpop.f32.mrb[0].mxu0
        %v2220 = vadd.f32 %v1867, %v2219
        %v2221 = vpop.f32.mrb[0].mxu0
        %v2222 = vadd.f32 %v1869, %v2221
        %v2223 = vpop.f32.mrb[0].mxu0
        %v2224 = vadd.f32 %v1871, %v2223
        %2225 = vmatprep.mubr.bf16.mxu0 0
        %2226 = vmatmul.mubr.bf16.gmra.mrb[0].mxu0 %v1367
        %v2227 = vpop.f32.mrb[0].mxu0
        %v2228 = vadd.f32 %v1875, %v2227
        %v2229 = vpop.f32.mrb[0].mxu0
        %v2230 = vadd.f32 %v1877, %v2229
        %v2231 = vpop.f32.mrb[0].mxu0
        %v2232 = vadd.f32 %v1879, %v2231
        %v2233 = vpop.f32.mrb[0].mxu0
        %v2234 = vadd.f32 %v1881, %v2233
        %2235 = vmatprep.mubr.bf16.mxu0 0
        %2236 = vmatmul.mubr.bf16.gmra.mrb[0].mxu0 %v1370
        %v2237 = vpop.f32.mrb[0].mxu0
        %v2238 = vadd.f32 %v1885, %v2237
        %v2239 = vpop.f32.mrb[0].mxu0
        %v2240 = vadd.f32 %v1887, %v2239
        %v2241 = vpop.f32.mrb[0].mxu0
        %v2242 = vadd.f32 %v1889, %v2241
        %v2243 = vpop.f32.mrb[0].mxu0
        %v2244 = vadd.f32 %v1891, %v2243
        %2245 = vmatprep.mubr.bf16.mxu0 0
        %2246 = vmatmul.mubr.bf16.gmra.mrb[0].mxu0 %v1373
        %v2247 = vpop.f32.mrb[0].mxu0
        %v2248 = vadd.f32 %v1895, %v2247
        %v2249 = vpop.f32.mrb[0].mxu0
        %v2250 = vadd.f32 %v1897, %v2249
        %v2251 = vpop.f32.mrb[0].mxu0
        %v2252 = vadd.f32 %v1899, %v2251
        %v2253 = vpop.f32.mrb[0].mxu0
        %v2254 = vadd.f32 %v1901, %v2253
        %2255 = vmatprep.mubr.bf16.mxu0 0
        %2256 = vmatmul.mubr.bf16.gmra.mrb[0].mxu0 %v1376
        %v2257 = vpop.f32.mrb[0].mxu0
        %v2258 = vadd.f32 %v1905, %v2257
        %v2259 = vpop.f32.mrb[0].mxu0
        %v2260 = vadd.f32 %v1907, %v2259
        %v2261 = vpop.f32.mrb[0].mxu0
        %v2262 = vadd.f32 %v1909, %v2261
        %v2263 = vpop.f32.mrb[0].mxu0
        %v2264 = vadd.f32 %v1911, %v2263
        %2265 = vmatprep.mubr.bf16.mxu0 0
        %2266 = vmatmul.mubr.bf16.gmra.mrb[0].mxu0 %v1379
        %v2267 = vpop.f32.mrb[0].mxu0
        %v2268 = vadd.f32 %v1915, %v2267
        %v2269 = vpop.f32.mrb[0].mxu0
        %v2270 = vadd.f32 %v1917, %v2269
        %v2271 = vpop.f32.mrb[0].mxu0
        %v2272 = vadd.f32 %v1919, %v2271
        %v2273 = vpop.f32.mrb[0].mxu0
        %v2274 = vadd.f32 %v1921, %v2273
        %2275 = vmatprep.mubr.bf16.mxu0 0
        %2276 = vmatmul.mubr.bf16.gmra.mrb[0].mxu0 %v1382
        %v2277 = vpop.f32.mrb[0].mxu0
        %v2278 = vadd.f32 %v1925, %v2277
        %v2279 = vpop.f32.mrb[0].mxu0
        %v2280 = vadd.f32 %v1927, %v2279
        %v2281 = vpop.f32.mrb[0].mxu0
        %v2282 = vadd.f32 %v1929, %v2281
        %v2283 = vpop.f32.mrb[0].mxu0
        %v2284 = vadd.f32 %v1931, %v2283
        %2285 = vmatprep.mubr.bf16.mxu0 0
        %2286 = vmatmul.mubr.bf16.gmra.mrb[0].mxu0 %v1385
        %v2287 = vpop.f32.mrb[0].mxu0
        %v2288 = vadd.f32 %v1935, %v2287
        %v2289 = vpop.f32.mrb[0].mxu0
        %v2290 = vadd.f32 %v1937, %v2289
        %v2291 = vpop.f32.mrb[0].mxu0
        %v2292 = vadd.f32 %v1939, %v2291
        %v2293 = vpop.f32.mrb[0].mxu0
        %v2294 = vadd.f32 %v1941, %v2293
        %2295 = vmatprep.mubr.bf16.mxu0 0
        %2296 = vmatmul.mubr.bf16.gmra.mrb[0].mxu0 %v1388
        %v2297 = vpop.f32.mrb[0].mxu0
        %v2298 = vadd.f32 %v1945, %v2297
        %v2299 = vpop.f32.mrb[0].mxu0
        %v2300 = vadd.f32 %v1947, %v2299
        %v2301 = vpop.f32.mrb[0].mxu0
        %v2302 = vadd.f32 %v1949, %v2301
        %v2303 = vpop.f32.mrb[0].mxu0
        %v2304 = vadd.f32 %v1951, %v2303
        %2305 = vmatprep.mubr.bf16.mxu0 0
        %2306 = vmatmul.mubr.bf16.gmra.mrb[0].mxu0 %v1391
        %v2307 = vpop.f32.mrb[0].mxu0
        %v2308 = vadd.f32 %v1955, %v2307
        %v2309 = vpop.f32.mrb[0].mxu0
        %v2310 = vadd.f32 %v1957, %v2309
        %v2311 = vpop.f32.mrb[0].mxu0
        %v2312 = vadd.f32 %v1959, %v2311
        %v2313 = vpop.f32.mrb[0].mxu0
        %v2314 = vadd.f32 %v1961, %v2313
        %2315 = vmatprep.mubr.bf16.mxu0 0
        %2316 = vmatmul.mubr.bf16.gmra.mrb[0].mxu0 %v1394
        %v2317 = vpop.f32.mrb[0].mxu0
        %v2318 = vadd.f32 %v1965, %v2317
        %v2319 = vpop.f32.mrb[0].mxu0
        %v2320 = vadd.f32 %v1967, %v2319
        %v2321 = vpop.f32.mrb[0].mxu0
        %v2322 = vadd.f32 %v1969, %v2321
        %v2323 = vpop.f32.mrb[0].mxu0
        %v2324 = vadd.f32 %v1971, %v2323
        %2325 = vmatprep.mubr.bf16.mxu0 0
        %2326 = vmatmul.mubr.bf16.gmra.mrb[0].mxu0 %v1397
        %v2327 = vpop.f32.mrb[0].mxu0
        %v2328 = vadd.f32 %v1975, %v2327
        %v2329 = vpop.f32.mrb[0].mxu0
        %v2330 = vadd.f32 %v1977, %v2329
        %v2331 = vpop.f32.mrb[0].mxu0
        %v2332 = vadd.f32 %v1979, %v2331
        %v2333 = vpop.f32.mrb[0].mxu0
        %v2334 = vadd.f32 %v1981, %v2333
        %2335 = vmatprep.mubr.bf16.mxu0 0
        %2336 = vmatmul.mubr.bf16.gmra.mrb[0].mxu0 %v1400
        %v2337 = vpop.f32.mrb[0].mxu0
        %v2338 = vadd.f32 %v1985, %v2337
        %v2339 = vpop.f32.mrb[0].mxu0
        %v2340 = vadd.f32 %v1987, %v2339
        %v2341 = vpop.f32.mrb[0].mxu0
        %v2342 = vadd.f32 %v1989, %v2341
        %v2343 = vpop.f32.mrb[0].mxu0
        %v2344 = vadd.f32 %v1991, %v2343
        %2345 = vmatprep.mubr.bf16.mxu0 0
        %2346 = vmatmul.mubr.bf16.gmra.mrb[0].mxu0 %v1403
        %v2347 = vpop.f32.mrb[0].mxu0
        %v2348 = vadd.f32 %v1995, %v2347
        %v2349 = vpop.f32.mrb[0].mxu0
        %v2350 = vadd.f32 %v1997, %v2349
        %v2351 = vpop.f32.mrb[0].mxu0
        %v2352 = vadd.f32 %v1999, %v2351
        %v2353 = vpop.f32.mrb[0].mxu0
        %v2354 = vadd.f32 %v2001, %v2353
        %2355 = vmatprep.mubr.bf16.mxu0 0
        %2356 = vmatmul.mubr.bf16.gmra.mrb[0].mxu0 %v1406
        %v2357 = vpop.f32.mrb[0].mxu0
        %v2358 = vadd.f32 %v2005, %v2357
        %v2359 = vpop.f32.mrb[0].mxu0
        %v2360 = vadd.f32 %v2007, %v2359
        %v2361 = vpop.f32.mrb[0].mxu0
        %v2362 = vadd.f32 %v2009, %v2361
        %v2363 = vpop.f32.mrb[0].mxu0
        %v2364 = vadd.f32 %v2011, %v2363
        %2365 = vmatprep.mubr.bf16.mxu0 0
        %2366 = vmatmul.mubr.bf16.gmra.mrb[0].mxu0 %v1409
        %v2367 = vpop.f32.mrb[0].mxu0
        %v2368 = vadd.f32 %v2015, %v2367
        %v2369 = vpop.f32.mrb[0].mxu0
        %v2370 = vadd.f32 %v2017, %v2369
        %v2371 = vpop.f32.mrb[0].mxu0
        %v2372 = vadd.f32 %v2019, %v2371
        %v2373 = vpop.f32.mrb[0].mxu0
        %v2374 = vadd.f32 %v2021, %v2373
        %2375 = vmatprep.mubr.bf16.mxu0 0
        %2376 = vmatmul.mubr.bf16.gmra.mrb[0].mxu0 %v1412
        %v2377 = vpop.f32.mrb[0].mxu0
        %v2378 = vadd.f32 %v2025, %v2377
        %v2379 = vpop.f32.mrb[0].mxu0
        %v2380 = vadd.f32 %v2027, %v2379
        %v2381 = vpop.f32.mrb[0].mxu0
        %v2382 = vadd.f32 %v2029, %v2381
        %v2383 = vpop.f32.mrb[0].mxu0
        %v2384 = vadd.f32 %v2031, %v2383
        %2385 = vmatprep.mubr.bf16.mxu0 0
        %2386 = vmatmul.mubr.bf16.gmra.mrb[0].mxu0 %v1415
        %v2387 = vpop.f32.mrb[0].mxu0
        %v2388 = vadd.f32 %v2035, %v2387
        %v2389 = vpop.f32.mrb[0].mxu0
        %v2390 = vadd.f32 %v2037, %v2389
        %v2391 = vpop.f32.mrb[0].mxu0
        %v2392 = vadd.f32 %v2039, %v2391
        %v2393 = vpop.f32.mrb[0].mxu0
        %v2394 = vadd.f32 %v2041, %v2393
        %2395 = vmatprep.mubr.bf16.mxu0 0
        %2396 = vmatmul.mubr.bf16.gmra.mrb[0].mxu0 %v1418
        %v2397 = vpop.f32.mrb[0].mxu0
        %v2398 = vadd.f32 %v2045, %v2397
        %v2399 = vpop.f32.mrb[0].mxu0
        %v2400 = vadd.f32 %v2047, %v2399
        %v2401 = vpop.f32.mrb[0].mxu0
        %v2402 = vadd.f32 %v2049, %v2401
        %v2403 = vpop.f32.mrb[0].mxu0
        %v2404 = vadd.f32 %v2051, %v2403
        %2405 = vmatprep.mubr.bf16.mxu0 0
        %2406 = vmatmul.mubr.bf16.gmra.mrb[0].mxu0 %v1421
        %v2407 = vpop.f32.mrb[0].mxu0
        %v2408 = vadd.f32 %v2055, %v2407
        %v2409 = vpop.f32.mrb[0].mxu0
        %v2410 = vadd.f32 %v2057, %v2409
        %v2411 = vpop.f32.mrb[0].mxu0
        %v2412 = vadd.f32 %v2059, %v2411
        %v2413 = vpop.f32.mrb[0].mxu0
        %v2414 = vadd.f32 %v2061, %v2413
        %2415 = vdwg.mxu0
        %v2416 = vld [vmem:[%s2] sm:$0xf]
        %v2418 = vlaneseq
        %v2419 = vshrl.u32 %v2418, 7
        %v2420 = vsub.s32 0, %v2419
        %v2421 = vrot.slane %v2416, %v2420
        %v2422 = vlaneseq
        %v2423 = vshrl.u32 %v2422, 7
        %v2424 = vsub.s32 2, %v2423
        %v2425 = vrot.slane %v2416, %v2424
        %v2428 = vlaneseq
        %v2429 = vshrl.u32 %v2428, 7
        %v2430 = vsub.s32 0, %v2429
        %v2431 = vrot.slane %v2421, %v2430
        %v2432 = vlaneseq
        %v2433 = vshrl.u32 %v2432, 7
        %v2434 = vsub.s32 0, %v2433
        %v2435 = vrot.slane %v2425, %v2434
        %v2436 = vmul.f32 %v2098, %v2431
        %v2437 = vmul.f32 %v2100, %v2435
        %v2438 = vmul.f32 %v2102, %v2431
        %v2439 = vmul.f32 %v2104, %v2435
        %v2440 = vmul.f32 %v2108, %v2431
        %v2441 = vmul.f32 %v2110, %v2435
        %v2442 = vmul.f32 %v2112, %v2431
        %v2443 = vmul.f32 %v2114, %v2435
        %v2444 = vmul.f32 %v2118, %v2431
        %v2445 = vmul.f32 %v2120, %v2435
        %v2446 = vmul.f32 %v2122, %v2431
        %v2447 = vmul.f32 %v2124, %v2435
        %v2448 = vmul.f32 %v2128, %v2431
        %v2449 = vmul.f32 %v2130, %v2435
        %v2450 = vmul.f32 %v2132, %v2431
        %v2451 = vmul.f32 %v2134, %v2435
        %v2452 = vmul.f32 %v2138, %v2431
        %v2453 = vmul.f32 %v2140, %v2435
        %v2454 = vmul.f32 %v2142, %v2431
        %v2455 = vmul.f32 %v2144, %v2435
        %v2456 = vmul.f32 %v2148, %v2431
        %v2457 = vmul.f32 %v2150, %v2435
        %v2458 = vmul.f32 %v2152, %v2431
        %v2459 = vmul.f32 %v2154, %v2435
        %v2460 = vmul.f32 %v2158, %v2431
        %v2461 = vmul.f32 %v2160, %v2435
        %v2462 = vmul.f32 %v2162, %v2431
        %v2463 = vmul.f32 %v2164, %v2435
        %v2464 = vmul.f32 %v2168, %v2431
        %v2465 = vmul.f32 %v2170, %v2435
        %v2466 = vmul.f32 %v2172, %v2431
        %v2467 = vmul.f32 %v2174, %v2435
        %v2468 = vmul.f32 %v2178, %v2431
        %v2469 = vmul.f32 %v2180, %v2435
        %v2470 = vmul.f32 %v2182, %v2431
        %v2471 = vmul.f32 %v2184, %v2435
        %v2472 = vmul.f32 %v2188, %v2431
        %v2473 = vmul.f32 %v2190, %v2435
        %v2474 = vmul.f32 %v2192, %v2431
        %v2475 = vmul.f32 %v2194, %v2435
        %v2476 = vmul.f32 %v2198, %v2431
        %v2477 = vmul.f32 %v2200, %v2435
        %v2478 = vmul.f32 %v2202, %v2431
        %v2479 = vmul.f32 %v2204, %v2435
        %v2480 = vmul.f32 %v2208, %v2431
        %v2481 = vmul.f32 %v2210, %v2435
        %v2482 = vmul.f32 %v2212, %v2431
        %v2483 = vmul.f32 %v2214, %v2435
        %v2484 = vmul.f32 %v2218, %v2431
        %v2485 = vmul.f32 %v2220, %v2435
        %v2486 = vmul.f32 %v2222, %v2431
        %v2487 = vmul.f32 %v2224, %v2435
        %v2488 = vmul.f32 %v2228, %v2431
        %v2489 = vmul.f32 %v2230, %v2435
        %v2490 = vmul.f32 %v2232, %v2431
        %v2491 = vmul.f32 %v2234, %v2435
        %v2492 = vmul.f32 %v2238, %v2431
        %v2493 = vmul.f32 %v2240, %v2435
        %v2494 = vmul.f32 %v2242, %v2431
        %v2495 = vmul.f32 %v2244, %v2435
        %v2496 = vmul.f32 %v2248, %v2431
        %v2497 = vmul.f32 %v2250, %v2435
        %v2498 = vmul.f32 %v2252, %v2431
        %v2499 = vmul.f32 %v2254, %v2435
        %v2500 = vmul.f32 %v2258, %v2431
        %v2501 = vmul.f32 %v2260, %v2435
        %v2502 = vmul.f32 %v2262, %v2431
        %v2503 = vmul.f32 %v2264, %v2435
        %v2504 = vmul.f32 %v2268, %v2431
        %v2505 = vmul.f32 %v2270, %v2435
        %v2506 = vmul.f32 %v2272, %v2431
        %v2507 = vmul.f32 %v2274, %v2435
        %v2508 = vmul.f32 %v2278, %v2431
        %v2509 = vmul.f32 %v2280, %v2435
        %v2510 = vmul.f32 %v2282, %v2431
        %v2511 = vmul.f32 %v2284, %v2435
        %v2512 = vmul.f32 %v2288, %v2431
        %v2513 = vmul.f32 %v2290, %v2435
        %v2514 = vmul.f32 %v2292, %v2431
        %v2515 = vmul.f32 %v2294, %v2435
        %v2516 = vmul.f32 %v2298, %v2431
        %v2517 = vmul.f32 %v2300, %v2435
        %v2518 = vmul.f32 %v2302, %v2431
        %v2519 = vmul.f32 %v2304, %v2435
        %v2520 = vmul.f32 %v2308, %v2431
        %v2521 = vmul.f32 %v2310, %v2435
        %v2522 = vmul.f32 %v2312, %v2431
        %v2523 = vmul.f32 %v2314, %v2435
        %v2524 = vmul.f32 %v2318, %v2431
        %v2525 = vmul.f32 %v2320, %v2435
        %v2526 = vmul.f32 %v2322, %v2431
        %v2527 = vmul.f32 %v2324, %v2435
        %v2528 = vmul.f32 %v2328, %v2431
        %v2529 = vmul.f32 %v2330, %v2435
        %v2530 = vmul.f32 %v2332, %v2431
        %v2531 = vmul.f32 %v2334, %v2435
        %v2532 = vmul.f32 %v2338, %v2431
        %v2533 = vmul.f32 %v2340, %v2435
        %v2534 = vmul.f32 %v2342, %v2431
        %v2535 = vmul.f32 %v2344, %v2435
        %v2536 = vmul.f32 %v2348, %v2431
        %v2537 = vmul.f32 %v2350, %v2435
        %v2538 = vmul.f32 %v2352, %v2431
        %v2539 = vmul.f32 %v2354, %v2435
        %v2540 = vmul.f32 %v2358, %v2431
        %v2541 = vmul.f32 %v2360, %v2435
        %v2542 = vmul.f32 %v2362, %v2431
        %v2543 = vmul.f32 %v2364, %v2435
        %v2544 = vmul.f32 %v2368, %v2431
        %v2545 = vmul.f32 %v2370, %v2435
        %v2546 = vmul.f32 %v2372, %v2431
        %v2547 = vmul.f32 %v2374, %v2435
        %v2548 = vmul.f32 %v2378, %v2431
        %v2549 = vmul.f32 %v2380, %v2435
        %v2550 = vmul.f32 %v2382, %v2431
        %v2551 = vmul.f32 %v2384, %v2435
        %v2552 = vmul.f32 %v2388, %v2431
        %v2553 = vmul.f32 %v2390, %v2435
        %v2554 = vmul.f32 %v2392, %v2431
        %v2555 = vmul.f32 %v2394, %v2435
        %v2556 = vmul.f32 %v2398, %v2431
        %v2557 = vmul.f32 %v2400, %v2435
        %v2558 = vmul.f32 %v2402, %v2431
        %v2559 = vmul.f32 %v2404, %v2435
        %v2560 = vmul.f32 %v2408, %v2431
        %v2561 = vmul.f32 %v2410, %v2435
        %v2562 = vmul.f32 %v2412, %v2431
        %v2563 = vmul.f32 %v2414, %v2435
        %v2564 = vlaneseq
        %v2565 = vshrl.u32 %v2564, 7
        %v2566 = vsub.s32 1, %v2565
        %v2567 = vrot.slane %v2416, %v2566
        %v2568 = vlaneseq
        %v2569 = vshrl.u32 %v2568, 7
        %v2570 = vsub.s32 3, %v2569
        %v2571 = vrot.slane %v2416, %v2570
        %v2574 = vlaneseq
        %v2575 = vshrl.u32 %v2574, 7
        %v2576 = vsub.s32 1, %v2575
        %v2577 = vrot.slane %v2567, %v2576
        %v2578 = vlaneseq
        %v2579 = vshrl.u32 %v2578, 7
        %v2580 = vsub.s32 1, %v2579
        %v2581 = vrot.slane %v2571, %v2580
        %v2582 = vadd.f32 %v2436, %v2577
        %v2583 = vadd.f32 %v2437, %v2581
        %v2584 = vadd.f32 %v2438, %v2577
        %v2585 = vadd.f32 %v2439, %v2581
        %v2586 = vadd.f32 %v2440, %v2577
        %v2587 = vadd.f32 %v2441, %v2581
        %v2588 = vadd.f32 %v2442, %v2577
        %v2589 = vadd.f32 %v2443, %v2581
        %v2590 = vadd.f32 %v2444, %v2577
        %v2591 = vadd.f32 %v2445, %v2581
        %v2592 = vadd.f32 %v2446, %v2577
        %v2593 = vadd.f32 %v2447, %v2581
        %v2594 = vadd.f32 %v2448, %v2577
        %v2595 = vadd.f32 %v2449, %v2581
        %v2596 = vadd.f32 %v2450, %v2577
        %v2597 = vadd.f32 %v2451, %v2581
        %v2598 = vadd.f32 %v2452, %v2577
        %v2599 = vadd.f32 %v2453, %v2581
        %v2600 = vadd.f32 %v2454, %v2577
        %v2601 = vadd.f32 %v2455, %v2581
        %v2602 = vadd.f32 %v2456, %v2577
        %v2603 = vadd.f32 %v2457, %v2581
        %v2604 = vadd.f32 %v2458, %v2577
        %v2605 = vadd.f32 %v2459, %v2581
        %v2606 = vadd.f32 %v2460, %v2577
        %v2607 = vadd.f32 %v2461, %v2581
        %v2608 = vadd.f32 %v2462, %v2577
        %v2609 = vadd.f32 %v2463, %v2581
        %v2610 = vadd.f32 %v2464, %v2577
        %v2611 = vadd.f32 %v2465, %v2581
        %v2612 = vadd.f32 %v2466, %v2577
        %v2613 = vadd.f32 %v2467, %v2581
        %v2614 = vadd.f32 %v2468, %v2577
        %v2615 = vadd.f32 %v2469, %v2581
        %v2616 = vadd.f32 %v2470, %v2577
        %v2617 = vadd.f32 %v2471, %v2581
        %v2618 = vadd.f32 %v2472, %v2577
        %v2619 = vadd.f32 %v2473, %v2581
        %v2620 = vadd.f32 %v2474, %v2577
        %v2621 = vadd.f32 %v2475, %v2581
        %v2622 = vadd.f32 %v2476, %v2577
        %v2623 = vadd.f32 %v2477, %v2581
        %v2624 = vadd.f32 %v2478, %v2577
        %v2625 = vadd.f32 %v2479, %v2581
        %v2626 = vadd.f32 %v2480, %v2577
        %v2627 = vadd.f32 %v2481, %v2581
        %v2628 = vadd.f32 %v2482, %v2577
        %v2629 = vadd.f32 %v2483, %v2581
        %v2630 = vadd.f32 %v2484, %v2577
        %v2631 = vadd.f32 %v2485, %v2581
        %v2632 = vadd.f32 %v2486, %v2577
        %v2633 = vadd.f32 %v2487, %v2581
        %v2634 = vadd.f32 %v2488, %v2577
        %v2635 = vadd.f32 %v2489, %v2581
        %v2636 = vadd.f32 %v2490, %v2577
        %v2637 = vadd.f32 %v2491, %v2581
        %v2638 = vadd.f32 %v2492, %v2577
        %v2639 = vadd.f32 %v2493, %v2581
        %v2640 = vadd.f32 %v2494, %v2577
        %v2641 = vadd.f32 %v2495, %v2581
        %v2642 = vadd.f32 %v2496, %v2577
        %v2643 = vadd.f32 %v2497, %v2581
        %v2644 = vadd.f32 %v2498, %v2577
        %v2645 = vadd.f32 %v2499, %v2581
        %v2646 = vadd.f32 %v2500, %v2577
        %v2647 = vadd.f32 %v2501, %v2581
        %v2648 = vadd.f32 %v2502, %v2577
        %v2649 = vadd.f32 %v2503, %v2581
        %v2650 = vadd.f32 %v2504, %v2577
        %v2651 = vadd.f32 %v2505, %v2581
        %v2652 = vadd.f32 %v2506, %v2577
        %v2653 = vadd.f32 %v2507, %v2581
        %v2654 = vadd.f32 %v2508, %v2577
        %v2655 = vadd.f32 %v2509, %v2581
        %v2656 = vadd.f32 %v2510, %v2577
        %v2657 = vadd.f32 %v2511, %v2581
        %v2658 = vadd.f32 %v2512, %v2577
        %v2659 = vadd.f32 %v2513, %v2581
        %v2660 = vadd.f32 %v2514, %v2577
        %v2661 = vadd.f32 %v2515, %v2581
        %v2662 = vadd.f32 %v2516, %v2577
        %v2663 = vadd.f32 %v2517, %v2581
        %v2664 = vadd.f32 %v2518, %v2577
        %v2665 = vadd.f32 %v2519, %v2581
        %v2666 = vadd.f32 %v2520, %v2577
        %v2667 = vadd.f32 %v2521, %v2581
        %v2668 = vadd.f32 %v2522, %v2577
        %v2669 = vadd.f32 %v2523, %v2581
        %v2670 = vadd.f32 %v2524, %v2577
        %v2671 = vadd.f32 %v2525, %v2581
        %v2672 = vadd.f32 %v2526, %v2577
        %v2673 = vadd.f32 %v2527, %v2581
        %v2674 = vadd.f32 %v2528, %v2577
        %v2675 = vadd.f32 %v2529, %v2581
        %v2676 = vadd.f32 %v2530, %v2577
        %v2677 = vadd.f32 %v2531, %v2581
        %v2678 = vadd.f32 %v2532, %v2577
        %v2679 = vadd.f32 %v2533, %v2581
        %v2680 = vadd.f32 %v2534, %v2577
        %v2681 = vadd.f32 %v2535, %v2581
        %v2682 = vadd.f32 %v2536, %v2577
        %v2683 = vadd.f32 %v2537, %v2581
        %v2684 = vadd.f32 %v2538, %v2577
        %v2685 = vadd.f32 %v2539, %v2581
        %v2686 = vadd.f32 %v2540, %v2577
        %v2687 = vadd.f32 %v2541, %v2581
        %v2688 = vadd.f32 %v2542, %v2577
        %v2689 = vadd.f32 %v2543, %v2581
        %v2690 = vadd.f32 %v2544, %v2577
        %v2691 = vadd.f32 %v2545, %v2581
        %v2692 = vadd.f32 %v2546, %v2577
        %v2693 = vadd.f32 %v2547, %v2581
        %v2694 = vadd.f32 %v2548, %v2577
        %v2695 = vadd.f32 %v2549, %v2581
        %v2696 = vadd.f32 %v2550, %v2577
        %v2697 = vadd.f32 %v2551, %v2581
        %v2698 = vadd.f32 %v2552, %v2577
        %v2699 = vadd.f32 %v2553, %v2581
        %v2700 = vadd.f32 %v2554, %v2577
        %v2701 = vadd.f32 %v2555, %v2581
        %v2702 = vadd.f32 %v2556, %v2577
        %v2703 = vadd.f32 %v2557, %v2581
        %v2704 = vadd.f32 %v2558, %v2577
        %v2705 = vadd.f32 %v2559, %v2581
        %v2706 = vadd.f32 %v2560, %v2577
        %v2707 = vadd.f32 %v2561, %v2581
        %v2708 = vadd.f32 %v2562, %v2577
        %v2709 = vadd.f32 %v2563, %v2581
        %v2710 = vmax.f32 %v2582, 0.0
        %v2711 = vmax.f32 %v2583, 0.0
        %v2712 = vmax.f32 %v2584, 0.0
        %v2713 = vmax.f32 %v2585, 0.0
        %v2714 = vmax.f32 %v2586, 0.0
        %v2715 = vmax.f32 %v2587, 0.0
        %v2716 = vmax.f32 %v2588, 0.0
        %v2717 = vmax.f32 %v2589, 0.0
        %v2718 = vmax.f32 %v2590, 0.0
        %v2719 = vmax.f32 %v2591, 0.0
        %v2720 = vmax.f32 %v2592, 0.0
        %v2721 = vmax.f32 %v2593, 0.0
        %v2722 = vmax.f32 %v2594, 0.0
        %v2723 = vmax.f32 %v2595, 0.0
        %v2724 = vmax.f32 %v2596, 0.0
        %v2725 = vmax.f32 %v2597, 0.0
        %v2726 = vmax.f32 %v2598, 0.0
        %v2727 = vmax.f32 %v2599, 0.0
        %v2728 = vmax.f32 %v2600, 0.0
        %v2729 = vmax.f32 %v2601, 0.0
        %v2730 = vmax.f32 %v2602, 0.0
        %v2731 = vmax.f32 %v2603, 0.0
        %v2732 = vmax.f32 %v2604, 0.0
        %v2733 = vmax.f32 %v2605, 0.0
        %v2734 = vmax.f32 %v2606, 0.0
        %v2735 = vmax.f32 %v2607, 0.0
        %v2736 = vmax.f32 %v2608, 0.0
        %v2737 = vmax.f32 %v2609, 0.0
        %v2738 = vmax.f32 %v2610, 0.0
        %v2739 = vmax.f32 %v2611, 0.0
        %v2740 = vmax.f32 %v2612, 0.0
        %v2741 = vmax.f32 %v2613, 0.0
        %v2742 = vmax.f32 %v2614, 0.0
        %v2743 = vmax.f32 %v2615, 0.0
        %v2744 = vmax.f32 %v2616, 0.0
        %v2745 = vmax.f32 %v2617, 0.0
        %v2746 = vmax.f32 %v2618, 0.0
        %v2747 = vmax.f32 %v2619, 0.0
        %v2748 = vmax.f32 %v2620, 0.0
        %v2749 = vmax.f32 %v2621, 0.0
        %v2750 = vmax.f32 %v2622, 0.0
        %v2751 = vmax.f32 %v2623, 0.0
        %v2752 = vmax.f32 %v2624, 0.0
        %v2753 = vmax.f32 %v2625, 0.0
        %v2754 = vmax.f32 %v2626, 0.0
        %v2755 = vmax.f32 %v2627, 0.0
        %v2756 = vmax.f32 %v2628, 0.0
        %v2757 = vmax.f32 %v2629, 0.0
        %v2758 = vmax.f32 %v2630, 0.0
        %v2759 = vmax.f32 %v2631, 0.0
        %v2760 = vmax.f32 %v2632, 0.0
        %v2761 = vmax.f32 %v2633, 0.0
        %v2762 = vmax.f32 %v2634, 0.0
        %v2763 = vmax.f32 %v2635, 0.0
        %v2764 = vmax.f32 %v2636, 0.0
        %v2765 = vmax.f32 %v2637, 0.0
        %v2766 = vmax.f32 %v2638, 0.0
        %v2767 = vmax.f32 %v2639, 0.0
        %v2768 = vmax.f32 %v2640, 0.0
        %v2769 = vmax.f32 %v2641, 0.0
        %v2770 = vmax.f32 %v2642, 0.0
        %v2771 = vmax.f32 %v2643, 0.0
        %v2772 = vmax.f32 %v2644, 0.0
        %v2773 = vmax.f32 %v2645, 0.0
        %v2774 = vmax.f32 %v2646, 0.0
        %v2775 = vmax.f32 %v2647, 0.0
        %v2776 = vmax.f32 %v2648, 0.0
        %v2777 = vmax.f32 %v2649, 0.0
        %v2778 = vmax.f32 %v2650, 0.0
        %v2779 = vmax.f32 %v2651, 0.0
        %v2780 = vmax.f32 %v2652, 0.0
        %v2781 = vmax.f32 %v2653, 0.0
        %v2782 = vmax.f32 %v2654, 0.0
        %v2783 = vmax.f32 %v2655, 0.0
        %v2784 = vmax.f32 %v2656, 0.0
        %v2785 = vmax.f32 %v2657, 0.0
        %v2786 = vmax.f32 %v2658, 0.0
        %v2787 = vmax.f32 %v2659, 0.0
        %v2788 = vmax.f32 %v2660, 0.0
        %v2789 = vmax.f32 %v2661, 0.0
        %v2790 = vmax.f32 %v2662, 0.0
        %v2791 = vmax.f32 %v2663, 0.0
        %v2792 = vmax.f32 %v2664, 0.0
        %v2793 = vmax.f32 %v2665, 0.0
        %v2794 = vmax.f32 %v2666, 0.0
        %v2795 = vmax.f32 %v2667, 0.0
        %v2796 = vmax.f32 %v2668, 0.0
        %v2797 = vmax.f32 %v2669, 0.0
        %v2798 = vmax.f32 %v2670, 0.0
        %v2799 = vmax.f32 %v2671, 0.0
        %v2800 = vmax.f32 %v2672, 0.0
        %v2801 = vmax.f32 %v2673, 0.0
        %v2802 = vmax.f32 %v2674, 0.0
        %v2803 = vmax.f32 %v2675, 0.0
        %v2804 = vmax.f32 %v2676, 0.0
        %v2805 = vmax.f32 %v2677, 0.0
        %v2806 = vmax.f32 %v2678, 0.0
        %v2807 = vmax.f32 %v2679, 0.0
        %v2808 = vmax.f32 %v2680, 0.0
        %v2809 = vmax.f32 %v2681, 0.0
        %v2810 = vmax.f32 %v2682, 0.0
        %v2811 = vmax.f32 %v2683, 0.0
        %v2812 = vmax.f32 %v2684, 0.0
        %v2813 = vmax.f32 %v2685, 0.0
        %v2814 = vmax.f32 %v2686, 0.0
        %v2815 = vmax.f32 %v2687, 0.0
        %v2816 = vmax.f32 %v2688, 0.0
        %v2817 = vmax.f32 %v2689, 0.0
        %v2818 = vmax.f32 %v2690, 0.0
        %v2819 = vmax.f32 %v2691, 0.0
        %v2820 = vmax.f32 %v2692, 0.0
        %v2821 = vmax.f32 %v2693, 0.0
        %v2822 = vmax.f32 %v2694, 0.0
        %v2823 = vmax.f32 %v2695, 0.0
        %v2824 = vmax.f32 %v2696, 0.0
        %v2825 = vmax.f32 %v2697, 0.0
        %v2826 = vmax.f32 %v2698, 0.0
        %v2827 = vmax.f32 %v2699, 0.0
        %v2828 = vmax.f32 %v2700, 0.0
        %v2829 = vmax.f32 %v2701, 0.0
        %v2830 = vmax.f32 %v2702, 0.0
        %v2831 = vmax.f32 %v2703, 0.0
        %v2832 = vmax.f32 %v2704, 0.0
        %v2833 = vmax.f32 %v2705, 0.0
        %v2834 = vmax.f32 %v2706, 0.0
        %v2835 = vmax.f32 %v2707, 0.0
        %v2836 = vmax.f32 %v2708, 0.0
        %v2837 = vmax.f32 %v2709, 0.0
        %v2838 = vmax.f32 %v2710, %v2711
        %v2839 = vmax.f32 %v2712, %v2713
        %v2840 = vmax.f32 %v2714, %v2715
        %v2841 = vmax.f32 %v2716, %v2717
        %v2842 = vmax.f32 %v2718, %v2719
        %v2843 = vmax.f32 %v2720, %v2721
        %v2844 = vmax.f32 %v2722, %v2723
        %v2845 = vmax.f32 %v2724, %v2725
        %v2846 = vmax.f32 %v2726, %v2727
        %v2847 = vmax.f32 %v2728, %v2729
        %v2848 = vmax.f32 %v2730, %v2731
        %v2849 = vmax.f32 %v2732, %v2733
        %v2850 = vmax.f32 %v2734, %v2735
        %v2851 = vmax.f32 %v2736, %v2737
        %v2852 = vmax.f32 %v2738, %v2739
        %v2853 = vmax.f32 %v2740, %v2741
        %v2854 = vmax.f32 %v2742, %v2743
        %v2855 = vmax.f32 %v2744, %v2745
        %v2856 = vmax.f32 %v2746, %v2747
        %v2857 = vmax.f32 %v2748, %v2749
        %v2858 = vmax.f32 %v2750, %v2751
        %v2859 = vmax.f32 %v2752, %v2753
        %v2860 = vmax.f32 %v2754, %v2755
        %v2861 = vmax.f32 %v2756, %v2757
        %v2862 = vmax.f32 %v2758, %v2759
        %v2863 = vmax.f32 %v2760, %v2761
        %v2864 = vmax.f32 %v2762, %v2763
        %v2865 = vmax.f32 %v2764, %v2765
        %v2866 = vmax.f32 %v2766, %v2767
        %v2867 = vmax.f32 %v2768, %v2769
        %v2868 = vmax.f32 %v2770, %v2771
        %v2869 = vmax.f32 %v2772, %v2773
        %v2870 = vmax.f32 %v2774, %v2775
        %v2871 = vmax.f32 %v2776, %v2777
        %v2872 = vmax.f32 %v2778, %v2779
        %v2873 = vmax.f32 %v2780, %v2781
        %v2874 = vmax.f32 %v2782, %v2783
        %v2875 = vmax.f32 %v2784, %v2785
        %v2876 = vmax.f32 %v2786, %v2787
        %v2877 = vmax.f32 %v2788, %v2789
        %v2878 = vmax.f32 %v2790, %v2791
        %v2879 = vmax.f32 %v2792, %v2793
        %v2880 = vmax.f32 %v2794, %v2795
        %v2881 = vmax.f32 %v2796, %v2797
        %v2882 = vmax.f32 %v2798, %v2799
        %v2883 = vmax.f32 %v2800, %v2801
        %v2884 = vmax.f32 %v2802, %v2803
        %v2885 = vmax.f32 %v2804, %v2805
        %v2886 = vmax.f32 %v2806, %v2807
        %v2887 = vmax.f32 %v2808, %v2809
        %v2888 = vmax.f32 %v2810, %v2811
        %v2889 = vmax.f32 %v2812, %v2813
        %v2890 = vmax.f32 %v2814, %v2815
        %v2891 = vmax.f32 %v2816, %v2817
        %v2892 = vmax.f32 %v2818, %v2819
        %v2893 = vmax.f32 %v2820, %v2821
        %v2894 = vmax.f32 %v2822, %v2823
        %v2895 = vmax.f32 %v2824, %v2825
        %v2896 = vmax.f32 %v2826, %v2827
        %v2897 = vmax.f32 %v2828, %v2829
        %v2898 = vmax.f32 %v2830, %v2831
        %v2899 = vmax.f32 %v2832, %v2833
        %v2900 = vmax.f32 %v2834, %v2835
        %v2901 = vmax.f32 %v2836, %v2837
        %2902 = vst [vmem:[#allocation3] sm:$0xff] %v2838
        %2903 = vst [vmem:[#allocation3 + $0x8] sm:$0xff] %v2839
        %2904 = vst [vmem:[#allocation3 + $0x10] sm:$0xff] %v2840
        %2905 = vst [vmem:[#allocation3 + $0x18] sm:$0xff] %v2841
        %2906 = vst [vmem:[#allocation3 + $0x20] sm:$0xff] %v2842
        %2907 = vst [vmem:[#allocation3 + $0x28] sm:$0xff] %v2843
        %2908 = vst [vmem:[#allocation3 + $0x30] sm:$0xff] %v2844
        %2909 = vst [vmem:[#allocation3 + $0x38] sm:$0xff] %v2845
        %2910 = vst [vmem:[#allocation3 + $0x40] sm:$0xff] %v2846
        %2911 = vst [vmem:[#allocation3 + $0x48] sm:$0xff] %v2847
        %2912 = vst [vmem:[#allocation3 + $0x50] sm:$0xff] %v2848
        %2913 = vst [vmem:[#allocation3 + $0x58] sm:$0xff] %v2849
        %2914 = vst [vmem:[#allocation3 + $0x60] sm:$0xff] %v2850
        %2915 = vst [vmem:[#allocation3 + $0x68] sm:$0xff] %v2851
        %2916 = vst [vmem:[#allocation3 + $0x70] sm:$0xff] %v2852
        %2917 = vst [vmem:[#allocation3 + $0x78] sm:$0xff] %v2853
        %2918 = vst [vmem:[#allocation3 + $0x80] sm:$0xff] %v2854
        %2919 = vst [vmem:[#allocation3 + $0x88] sm:$0xff] %v2855
        %2920 = vst [vmem:[#allocation3 + $0x90] sm:$0xff] %v2856
        %2921 = vst [vmem:[#allocation3 + $0x98] sm:$0xff] %v2857
        %2922 = vst [vmem:[#allocation3 + $0xa0] sm:$0xff] %v2858
        %2923 = vst [vmem:[#allocation3 + $0xa8] sm:$0xff] %v2859
        %2924 = vst [vmem:[#allocation3 + $0xb0] sm:$0xff] %v2860
        %2925 = vst [vmem:[#allocation3 + $0xb8] sm:$0xff] %v2861
        %2926 = vst [vmem:[#allocation3 + $0xc0] sm:$0xff] %v2862
        %2927 = vst [vmem:[#allocation3 + $0xc8] sm:$0xff] %v2863
        %2928 = vst [vmem:[#allocation3 + $0xd0] sm:$0xff] %v2864
        %2929 = vst [vmem:[#allocation3 + $0xd8] sm:$0xff] %v2865
        %2930 = vst [vmem:[#allocation3 + $0xe0] sm:$0xff] %v2866
        %2931 = vst [vmem:[#allocation3 + $0xe8] sm:$0xff] %v2867
        %2932 = vst [vmem:[#allocation3 + $0xf0] sm:$0xff] %v2868
        %2933 = vst [vmem:[#allocation3 + $0xf8] sm:$0xff] %v2869
        %2934 = vst [vmem:[#allocation3 + $0x100] sm:$0xff] %v2870
        %2935 = vst [vmem:[#allocation3 + $0x108] sm:$0xff] %v2871
        %2936 = vst [vmem:[#allocation3 + $0x110] sm:$0xff] %v2872
        %2937 = vst [vmem:[#allocation3 + $0x118] sm:$0xff] %v2873
        %2938 = vst [vmem:[#allocation3 + $0x120] sm:$0xff] %v2874
        %2939 = vst [vmem:[#allocation3 + $0x128] sm:$0xff] %v2875
        %2940 = vst [vmem:[#allocation3 + $0x130] sm:$0xff] %v2876
        %2941 = vst [vmem:[#allocation3 + $0x138] sm:$0xff] %v2877
        %2942 = vst [vmem:[#allocation3 + $0x140] sm:$0xff] %v2878
        %2943 = vst [vmem:[#allocation3 + $0x148] sm:$0xff] %v2879
        %2944 = vst [vmem:[#allocation3 + $0x150] sm:$0xff] %v2880
        %2945 = vst [vmem:[#allocation3 + $0x158] sm:$0xff] %v2881
        %2946 = vst [vmem:[#allocation3 + $0x160] sm:$0xff] %v2882
        %2947 = vst [vmem:[#allocation3 + $0x168] sm:$0xff] %v2883
        %2948 = vst [vmem:[#allocation3 + $0x170] sm:$0xff] %v2884
        %2949 = vst [vmem:[#allocation3 + $0x178] sm:$0xff] %v2885
        %2950 = vst [vmem:[#allocation3 + $0x180] sm:$0xff] %v2886
        %2951 = vst [vmem:[#allocation3 + $0x188] sm:$0xff] %v2887
        %2952 = vst [vmem:[#allocation3 + $0x190] sm:$0xff] %v2888
        %2953 = vst [vmem:[#allocation3 + $0x198] sm:$0xff] %v2889
        %2954 = vst [vmem:[#allocation3 + $0x1a0] sm:$0xff] %v2890
        %2955 = vst [vmem:[#allocation3 + $0x1a8] sm:$0xff] %v2891
        %2956 = vst [vmem:[#allocation3 + $0x1b0] sm:$0xff] %v2892
        %2957 = vst [vmem:[#allocation3 + $0x1b8] sm:$0xff] %v2893
        %2958 = vst [vmem:[#allocation3 + $0x1c0] sm:$0xff] %v2894
        %2959 = vst [vmem:[#allocation3 + $0x1c8] sm:$0xff] %v2895
        %2960 = vst [vmem:[#allocation3 + $0x1d0] sm:$0xff] %v2896
        %2961 = vst [vmem:[#allocation3 + $0x1d8] sm:$0xff] %v2897
        %2962 = vst [vmem:[#allocation3 + $0x1e0] sm:$0xff] %v2898
        %2963 = vst [vmem:[#allocation3 + $0x1e8] sm:$0xff] %v2899
        %2964 = vst [vmem:[#allocation3 + $0x1f0] sm:$0xff] %v2900
        %2965 = vst [vmem:[#allocation3 + $0x1f8] sm:$0xff] %v2901
        %v2966 = vld [vmem:[#allocation3] ss:$2 sm:$0xff]
        %s2967 = scalar_lea.vmem [#allocation3], 16
        %v2968 = vld [vmem:[%s2967] ss:$2 sm:$0xff]
        %s2969 = scalar_lea.vmem [#allocation3], 32
        %v2970 = vld [vmem:[%s2969] ss:$2 sm:$0xff]
        %s2971 = scalar_lea.vmem [#allocation3], 48
        %v2972 = vld [vmem:[%s2971] ss:$2 sm:$0xff]
        %s2973 = scalar_lea.vmem [#allocation3], 64
        %v2974 = vld [vmem:[%s2973] ss:$2 sm:$0xff]
        %s2975 = scalar_lea.vmem [#allocation3], 80
        %v2976 = vld [vmem:[%s2975] ss:$2 sm:$0xff]
        %s2977 = scalar_lea.vmem [#allocation3], 96
        %v2978 = vld [vmem:[%s2977] ss:$2 sm:$0xff]
        %s2979 = scalar_lea.vmem [#allocation3], 112
        %v2980 = vld [vmem:[%s2979] ss:$2 sm:$0xff]
        %s2981 = scalar_lea.vmem [#allocation3], 128
        %v2982 = vld [vmem:[%s2981] ss:$2 sm:$0xff]
        %s2983 = scalar_lea.vmem [#allocation3], 144
        %v2984 = vld [vmem:[%s2983] ss:$2 sm:$0xff]
        %s2985 = scalar_lea.vmem [#allocation3], 160
        %v2986 = vld [vmem:[%s2985] ss:$2 sm:$0xff]
        %s2987 = scalar_lea.vmem [#allocation3], 176
        %v2988 = vld [vmem:[%s2987] ss:$2 sm:$0xff]
        %s2989 = scalar_lea.vmem [#allocation3], 192
        %v2990 = vld [vmem:[%s2989] ss:$2 sm:$0xff]
        %s2991 = scalar_lea.vmem [#allocation3], 208
        %v2992 = vld [vmem:[%s2991] ss:$2 sm:$0xff]
        %s2993 = scalar_lea.vmem [#allocation3], 224
        %v2994 = vld [vmem:[%s2993] ss:$2 sm:$0xff]
        %s2995 = scalar_lea.vmem [#allocation3], 240
        %v2996 = vld [vmem:[%s2995] ss:$2 sm:$0xff]
        %s2997 = scalar_lea.vmem [#allocation3], 256
        %v2998 = vld [vmem:[%s2997] ss:$2 sm:$0xff]
        %s2999 = scalar_lea.vmem [#allocation3], 272
        %v3000 = vld [vmem:[%s2999] ss:$2 sm:$0xff]
        %s3001 = scalar_lea.vmem [#allocation3], 288
        %v3002 = vld [vmem:[%s3001] ss:$2 sm:$0xff]
        %s3003 = scalar_lea.vmem [#allocation3], 304
        %v3004 = vld [vmem:[%s3003] ss:$2 sm:$0xff]
        %s3005 = scalar_lea.vmem [#allocation3], 320
        %v3006 = vld [vmem:[%s3005] ss:$2 sm:$0xff]
        %s3007 = scalar_lea.vmem [#allocation3], 336
        %v3008 = vld [vmem:[%s3007] ss:$2 sm:$0xff]
        %s3009 = scalar_lea.vmem [#allocation3], 352
        %v3010 = vld [vmem:[%s3009] ss:$2 sm:$0xff]
        %s3011 = scalar_lea.vmem [#allocation3], 368
        %v3012 = vld [vmem:[%s3011] ss:$2 sm:$0xff]
        %s3013 = scalar_lea.vmem [#allocation3], 384
        %v3014 = vld [vmem:[%s3013] ss:$2 sm:$0xff]
        %s3015 = scalar_lea.vmem [#allocation3], 400
        %v3016 = vld [vmem:[%s3015] ss:$2 sm:$0xff]
        %s3017 = scalar_lea.vmem [#allocation3], 416
        %v3018 = vld [vmem:[%s3017] ss:$2 sm:$0xff]
        %s3019 = scalar_lea.vmem [#allocation3], 432
        %v3020 = vld [vmem:[%s3019] ss:$2 sm:$0xff]
        %s3021 = scalar_lea.vmem [#allocation3], 448
        %v3022 = vld [vmem:[%s3021] ss:$2 sm:$0xff]
        %s3023 = scalar_lea.vmem [#allocation3], 464
        %v3024 = vld [vmem:[%s3023] ss:$2 sm:$0xff]
        %s3025 = scalar_lea.vmem [#allocation3], 480
        %v3026 = vld [vmem:[%s3025] ss:$2 sm:$0xff]
        %s3027 = scalar_lea.vmem [#allocation3], 496
        %v3028 = vld [vmem:[%s3027] ss:$2 sm:$0xff]
        %s3029 = scalar_lea.vmem [#allocation3], 1
        %v3030 = vld [vmem:[%s3029] ss:$2 sm:$0xff]
        %s3031 = scalar_lea.vmem [#allocation3], 17
        %v3032 = vld [vmem:[%s3031] ss:$2 sm:$0xff]
        %s3033 = scalar_lea.vmem [#allocation3], 33
        %v3034 = vld [vmem:[%s3033] ss:$2 sm:$0xff]
        %s3035 = scalar_lea.vmem [#allocation3], 49
        %v3036 = vld [vmem:[%s3035] ss:$2 sm:$0xff]
        %s3037 = scalar_lea.vmem [#allocation3], 65
        %v3038 = vld [vmem:[%s3037] ss:$2 sm:$0xff]
        %s3039 = scalar_lea.vmem [#allocation3], 81
        %v3040 = vld [vmem:[%s3039] ss:$2 sm:$0xff]
        %s3041 = scalar_lea.vmem [#allocation3], 97
        %v3042 = vld [vmem:[%s3041] ss:$2 sm:$0xff]
        %s3043 = scalar_lea.vmem [#allocation3], 113
        %v3044 = vld [vmem:[%s3043] ss:$2 sm:$0xff]
        %s3045 = scalar_lea.vmem [#allocation3], 129
        %v3046 = vld [vmem:[%s3045] ss:$2 sm:$0xff]
        %s3047 = scalar_lea.vmem [#allocation3], 145
        %v3048 = vld [vmem:[%s3047] ss:$2 sm:$0xff]
        %s3049 = scalar_lea.vmem [#allocation3], 161
        %v3050 = vld [vmem:[%s3049] ss:$2 sm:$0xff]
        %s3051 = scalar_lea.vmem [#allocation3], 177
        %v3052 = vld [vmem:[%s3051] ss:$2 sm:$0xff]
        %s3053 = scalar_lea.vmem [#allocation3], 193
        %v3054 = vld [vmem:[%s3053] ss:$2 sm:$0xff]
        %s3055 = scalar_lea.vmem [#allocation3], 209
        %v3056 = vld [vmem:[%s3055] ss:$2 sm:$0xff]
        %s3057 = scalar_lea.vmem [#allocation3], 225
        %v3058 = vld [vmem:[%s3057] ss:$2 sm:$0xff]
        %s3059 = scalar_lea.vmem [#allocation3], 241
        %v3060 = vld [vmem:[%s3059] ss:$2 sm:$0xff]
        %s3061 = scalar_lea.vmem [#allocation3], 257
        %v3062 = vld [vmem:[%s3061] ss:$2 sm:$0xff]
        %s3063 = scalar_lea.vmem [#allocation3], 273
        %v3064 = vld [vmem:[%s3063] ss:$2 sm:$0xff]
        %s3065 = scalar_lea.vmem [#allocation3], 289
        %v3066 = vld [vmem:[%s3065] ss:$2 sm:$0xff]
        %s3067 = scalar_lea.vmem [#allocation3], 305
        %v3068 = vld [vmem:[%s3067] ss:$2 sm:$0xff]
        %s3069 = scalar_lea.vmem [#allocation3], 321
        %v3070 = vld [vmem:[%s3069] ss:$2 sm:$0xff]
        %s3071 = scalar_lea.vmem [#allocation3], 337
        %v3072 = vld [vmem:[%s3071] ss:$2 sm:$0xff]
        %s3073 = scalar_lea.vmem [#allocation3], 353
        %v3074 = vld [vmem:[%s3073] ss:$2 sm:$0xff]
        %s3075 = scalar_lea.vmem [#allocation3], 369
        %v3076 = vld [vmem:[%s3075] ss:$2 sm:$0xff]
        %s3077 = scalar_lea.vmem [#allocation3], 385
        %v3078 = vld [vmem:[%s3077] ss:$2 sm:$0xff]
        %s3079 = scalar_lea.vmem [#allocation3], 401
        %v3080 = vld [vmem:[%s3079] ss:$2 sm:$0xff]
        %s3081 = scalar_lea.vmem [#allocation3], 417
        %v3082 = vld [vmem:[%s3081] ss:$2 sm:$0xff]
        %s3083 = scalar_lea.vmem [#allocation3], 433
        %v3084 = vld [vmem:[%s3083] ss:$2 sm:$0xff]
        %s3085 = scalar_lea.vmem [#allocation3], 449
        %v3086 = vld [vmem:[%s3085] ss:$2 sm:$0xff]
        %s3087 = scalar_lea.vmem [#allocation3], 465
        %v3088 = vld [vmem:[%s3087] ss:$2 sm:$0xff]
        %s3089 = scalar_lea.vmem [#allocation3], 481
        %v3090 = vld [vmem:[%s3089] ss:$2 sm:$0xff]
        %s3091 = scalar_lea.vmem [#allocation3], 497
        %v3092 = vld [vmem:[%s3091] ss:$2 sm:$0xff]
        %v3093 = vmax.f32 %v2966, %v3030
        %v3094 = vmax.f32 %v2968, %v3032
        %v3095 = vmax.f32 %v2970, %v3034
        %v3096 = vmax.f32 %v2972, %v3036
        %v3097 = vmax.f32 %v2974, %v3038
        %v3098 = vmax.f32 %v2976, %v3040
        %v3099 = vmax.f32 %v2978, %v3042
        %v3100 = vmax.f32 %v2980, %v3044
        %v3101 = vmax.f32 %v2982, %v3046
        %v3102 = vmax.f32 %v2984, %v3048
        %v3103 = vmax.f32 %v2986, %v3050
        %v3104 = vmax.f32 %v2988, %v3052
        %v3105 = vmax.f32 %v2990, %v3054
        %v3106 = vmax.f32 %v2992, %v3056
        %v3107 = vmax.f32 %v2994, %v3058
        %v3108 = vmax.f32 %v2996, %v3060
        %v3109 = vmax.f32 %v2998, %v3062
        %v3110 = vmax.f32 %v3000, %v3064
        %v3111 = vmax.f32 %v3002, %v3066
        %v3112 = vmax.f32 %v3004, %v3068
        %v3113 = vmax.f32 %v3006, %v3070
        %v3114 = vmax.f32 %v3008, %v3072
        %v3115 = vmax.f32 %v3010, %v3074
        %v3116 = vmax.f32 %v3012, %v3076
        %v3117 = vmax.f32 %v3014, %v3078
        %v3118 = vmax.f32 %v3016, %v3080
        %v3119 = vmax.f32 %v3018, %v3082
        %v3120 = vmax.f32 %v3020, %v3084
        %v3121 = vmax.f32 %v3022, %v3086
        %v3122 = vmax.f32 %v3024, %v3088
        %v3123 = vmax.f32 %v3026, %v3090
        %v3124 = vmax.f32 %v3028, %v3092
        %3125 = vst [vmem:[#allocation2 + $0x8] sm:$0xff] %v3093
        %3126 = vst [vmem:[#allocation2 + $0x10] sm:$0xff] %v3094
        %3127 = vst [vmem:[#allocation2 + $0x18] sm:$0xff] %v3095
        %3128 = vst [vmem:[#allocation2 + $0x20] sm:$0xff] %v3096
        %3129 = vst [vmem:[#allocation2 + $0x28] sm:$0xff] %v3097
        %3130 = vst [vmem:[#allocation2 + $0x30] sm:$0xff] %v3098
        %3131 = vst [vmem:[#allocation2 + $0x38] sm:$0xff] %v3099
        %3132 = vst [vmem:[#allocation2 + $0x40] sm:$0xff] %v3100
        %3133 = vst [vmem:[#allocation2 + $0x48] sm:$0xff] %v3101
        %3134 = vst [vmem:[#allocation2 + $0x50] sm:$0xff] %v3102
        %3135 = vst [vmem:[#allocation2 + $0x58] sm:$0xff] %v3103
        %3136 = vst [vmem:[#allocation2 + $0x60] sm:$0xff] %v3104
        %3137 = vst [vmem:[#allocation2 + $0x68] sm:$0xff] %v3105
        %3138 = vst [vmem:[#allocation2 + $0x70] sm:$0xff] %v3106
        %3139 = vst [vmem:[#allocation2 + $0x78] sm:$0xff] %v3107
        %3140 = vst [vmem:[#allocation2 + $0x80] sm:$0xff] %v3108
        %3141 = vst [vmem:[#allocation2 + $0x88] sm:$0xff] %v3109
        %3142 = vst [vmem:[#allocation2 + $0x90] sm:$0xff] %v3110
        %3143 = vst [vmem:[#allocation2 + $0x98] sm:$0xff] %v3111
        %3144 = vst [vmem:[#allocation2 + $0xa0] sm:$0xff] %v3112
        %3145 = vst [vmem:[#allocation2 + $0xa8] sm:$0xff] %v3113
        %3146 = vst [vmem:[#allocation2 + $0xb0] sm:$0xff] %v3114
        %3147 = vst [vmem:[#allocation2 + $0xb8] sm:$0xff] %v3115
        %3148 = vst [vmem:[#allocation2 + $0xc0] sm:$0xff] %v3116
        %3149 = vst [vmem:[#allocation2 + $0xc8] sm:$0xff] %v3117
        %3150 = vst [vmem:[#allocation2 + $0xd0] sm:$0xff] %v3118
        %3151 = vst [vmem:[#allocation2 + $0xd8] sm:$0xff] %v3119
        %3152 = vst [vmem:[#allocation2 + $0xe0] sm:$0xff] %v3120
        %3153 = vst [vmem:[#allocation2 + $0xe8] sm:$0xff] %v3121
        %3154 = vst [vmem:[#allocation2 + $0xf0] sm:$0xff] %v3122
        %3155 = vst [vmem:[#allocation2 + $0xf8] sm:$0xff] %v3123
        %3156 = vst [vmem:[#allocation2 + $0x100] sm:$0xff] %v3124
        %v3157 = vld [vmem:[#allocation2 + $0x7] sm:$0xff]
        %v3158 = vld [vmem:[#allocation2 + $0xf] sm:$0xff]
        %v3159 = vld [vmem:[#allocation2 + $0x17] sm:$0xff]
        %v3160 = vld [vmem:[#allocation2 + $0x1f] sm:$0xff]
        %v3161 = vld [vmem:[#allocation2 + $0x27] sm:$0xff]
        %v3162 = vld [vmem:[#allocation2 + $0x2f] sm:$0xff]
        %v3163 = vld [vmem:[#allocation2 + $0x37] sm:$0xff]
        %v3164 = vld [vmem:[#allocation2 + $0x3f] sm:$0xff]
        %v3165 = vld [vmem:[#allocation2 + $0x47] sm:$0xff]
        %v3166 = vld [vmem:[#allocation2 + $0x4f] sm:$0xff]
        %v3167 = vld [vmem:[#allocation2 + $0x57] sm:$0xff]
        %v3168 = vld [vmem:[#allocation2 + $0x5f] sm:$0xff]
        %v3169 = vld [vmem:[#allocation2 + $0x67] sm:$0xff]
        %v3170 = vld [vmem:[#allocation2 + $0x6f] sm:$0xff]
        %v3171 = vld [vmem:[#allocation2 + $0x77] sm:$0xff]
        %v3172 = vld [vmem:[#allocation2 + $0x7f] sm:$0xff]
        %v3173 = vld [vmem:[#allocation2 + $0x87] sm:$0xff]
        %v3174 = vld [vmem:[#allocation2 + $0x8f] sm:$0xff]
        %v3175 = vld [vmem:[#allocation2 + $0x97] sm:$0xff]
        %v3176 = vld [vmem:[#allocation2 + $0x9f] sm:$0xff]
        %v3177 = vld [vmem:[#allocation2 + $0xa7] sm:$0xff]
        %v3178 = vld [vmem:[#allocation2 + $0xaf] sm:$0xff]
        %v3179 = vld [vmem:[#allocation2 + $0xb7] sm:$0xff]
        %v3180 = vld [vmem:[#allocation2 + $0xbf] sm:$0xff]
        %v3181 = vld [vmem:[#allocation2 + $0xc7] sm:$0xff]
        %v3182 = vld [vmem:[#allocation2 + $0xcf] sm:$0xff]
        %v3183 = vld [vmem:[#allocation2 + $0xd7] sm:$0xff]
        %v3184 = vld [vmem:[#allocation2 + $0xdf] sm:$0xff]
        %v3185 = vld [vmem:[#allocation2 + $0xe7] sm:$0xff]
        %v3186 = vld [vmem:[#allocation2 + $0xef] sm:$0xff]
        %v3187 = vld [vmem:[#allocation2 + $0xf7] sm:$0xff]
        %v3188 = vld [vmem:[#allocation2 + $0xff] sm:$0xff]
        %v3189 = vld [vmem:[#allocation2 + $0x9] sm:$0xff]
        %v3190 = vld [vmem:[#allocation2 + $0x11] sm:$0xff]
        %v3191 = vld [vmem:[#allocation2 + $0x19] sm:$0xff]
        %v3192 = vld [vmem:[#allocation2 + $0x21] sm:$0xff]
        %v3193 = vld [vmem:[#allocation2 + $0x29] sm:$0xff]
        %v3194 = vld [vmem:[#allocation2 + $0x31] sm:$0xff]
        %v3195 = vld [vmem:[#allocation2 + $0x39] sm:$0xff]
        %v3196 = vld [vmem:[#allocation2 + $0x41] sm:$0xff]
        %v3197 = vld [vmem:[#allocation2 + $0x49] sm:$0xff]
        %v3198 = vld [vmem:[#allocation2 + $0x51] sm:$0xff]
        %v3199 = vld [vmem:[#allocation2 + $0x59] sm:$0xff]
        %v3200 = vld [vmem:[#allocation2 + $0x61] sm:$0xff]
        %v3201 = vld [vmem:[#allocation2 + $0x69] sm:$0xff]
        %v3202 = vld [vmem:[#allocation2 + $0x71] sm:$0xff]
        %v3203 = vld [vmem:[#allocation2 + $0x79] sm:$0xff]
        %v3204 = vld [vmem:[#allocation2 + $0x81] sm:$0xff]
        %v3205 = vld [vmem:[#allocation2 + $0x89] sm:$0xff]
        %v3206 = vld [vmem:[#allocation2 + $0x91] sm:$0xff]
        %v3207 = vld [vmem:[#allocation2 + $0x99] sm:$0xff]
        %v3208 = vld [vmem:[#allocation2 + $0xa1] sm:$0xff]
        %v3209 = vld [vmem:[#allocation2 + $0xa9] sm:$0xff]
        %v3210 = vld [vmem:[#allocation2 + $0xb1] sm:$0xff]
        %v3211 = vld [vmem:[#allocation2 + $0xb9] sm:$0xff]
        %v3212 = vld [vmem:[#allocation2 + $0xc1] sm:$0xff]
        %v3213 = vld [vmem:[#allocation2 + $0xc9] sm:$0xff]
        %v3214 = vld [vmem:[#allocation2 + $0xd1] sm:$0xff]
        %v3215 = vld [vmem:[#allocation2 + $0xd9] sm:$0xff]
        %v3216 = vld [vmem:[#allocation2 + $0xe1] sm:$0xff]
        %v3217 = vld [vmem:[#allocation2 + $0xe9] sm:$0xff]
        %v3218 = vld [vmem:[#allocation2 + $0xf1] sm:$0xff]
        %v3219 = vld [vmem:[#allocation2 + $0xf9] sm:$0xff]
        %v3220 = vld [vmem:[#allocation2 + $0x101] sm:$0xff]
        %v3221 = vand.u32 %v942, 63
        %v3222 = vand.u32 %v943, 63
        %v3223 = vand.u32 %v944, 63
        %v3224 = vand.u32 %v945, 63
        %v3225 = vand.u32 %v946, 63
        %v3226 = vand.u32 %v947, 63
        %v3227 = vand.u32 %v948, 63
        %v3228 = vand.u32 %v949, 63
        %v3229 = vand.u32 %v950, 63
        %v3230 = vand.u32 %v951, 63
        %v3231 = vand.u32 %v952, 63
        %v3232 = vand.u32 %v953, 63
        %v3233 = vand.u32 %v954, 63
        %v3234 = vand.u32 %v955, 63
        %v3235 = vand.u32 %v956, 63
        %v3236 = vand.u32 %v957, 63
        %v3237 = vand.u32 %v958, 63
        %v3238 = vand.u32 %v959, 63
        %v3239 = vand.u32 %v960, 63
        %v3240 = vand.u32 %v961, 63
        %v3241 = vand.u32 %v962, 63
        %v3242 = vand.u32 %v963, 63
        %v3243 = vand.u32 %v964, 63
        %v3244 = vand.u32 %v965, 63
        %v3245 = vand.u32 %v966, 63
        %v3246 = vand.u32 %v967, 63
        %v3247 = vand.u32 %v968, 63
        %v3248 = vand.u32 %v969, 63
        %v3249 = vand.u32 %v970, 63
        %v3250 = vand.u32 %v971, 63
        %v3251 = vand.u32 %v972, 63
        %v3252 = vand.u32 %v973, 63
        %vm3253 = vcmp.eq.s32.totalorder %v3221, 0
        %vm3254 = vcmp.eq.s32.totalorder %v3222, 0
        %vm3255 = vcmp.eq.s32.totalorder %v3223, 0
        %vm3256 = vcmp.eq.s32.totalorder %v3224, 0
        %vm3257 = vcmp.eq.s32.totalorder %v3225, 0
        %vm3258 = vcmp.eq.s32.totalorder %v3226, 0
        %vm3259 = vcmp.eq.s32.totalorder %v3227, 0
        %vm3260 = vcmp.eq.s32.totalorder %v3228, 0
        %vm3261 = vcmp.eq.s32.totalorder %v3229, 0
        %vm3262 = vcmp.eq.s32.totalorder %v3230, 0
        %vm3263 = vcmp.eq.s32.totalorder %v3231, 0
        %vm3264 = vcmp.eq.s32.totalorder %v3232, 0
        %vm3265 = vcmp.eq.s32.totalorder %v3233, 0
        %vm3266 = vcmp.eq.s32.totalorder %v3234, 0
        %vm3267 = vcmp.eq.s32.totalorder %v3235, 0
        %vm3268 = vcmp.eq.s32.totalorder %v3236, 0
        %vm3269 = vcmp.eq.s32.totalorder %v3237, 0
        %vm3270 = vcmp.eq.s32.totalorder %v3238, 0
        %vm3271 = vcmp.eq.s32.totalorder %v3239, 0
        %vm3272 = vcmp.eq.s32.totalorder %v3240, 0
        %vm3273 = vcmp.eq.s32.totalorder %v3241, 0
        %vm3274 = vcmp.eq.s32.totalorder %v3242, 0
        %vm3275 = vcmp.eq.s32.totalorder %v3243, 0
        %vm3276 = vcmp.eq.s32.totalorder %v3244, 0
        %vm3277 = vcmp.eq.s32.totalorder %v3245, 0
        %vm3278 = vcmp.eq.s32.totalorder %v3246, 0
        %vm3279 = vcmp.eq.s32.totalorder %v3247, 0
        %vm3280 = vcmp.eq.s32.totalorder %v3248, 0
        %vm3281 = vcmp.eq.s32.totalorder %v3249, 0
        %vm3282 = vcmp.eq.s32.totalorder %v3250, 0
        %vm3283 = vcmp.eq.s32.totalorder %v3251, 0
        %vm3284 = vcmp.eq.s32.totalorder %v3252, 0
        %v3285 = vsel %vm3253, 0.0, %v3157
        %v3286 = vsel %vm3254, 0.0, %v3158
        %v3287 = vsel %vm3255, 0.0, %v3159
        %v3288 = vsel %vm3256, 0.0, %v3160
        %v3289 = vsel %vm3257, 0.0, %v3161
        %v3290 = vsel %vm3258, 0.0, %v3162
        %v3291 = vsel %vm3259, 0.0, %v3163
        %v3292 = vsel %vm3260, 0.0, %v3164
        %v3293 = vsel %vm3261, 0.0, %v3165
        %v3294 = vsel %vm3262, 0.0, %v3166
        %v3295 = vsel %vm3263, 0.0, %v3167
        %v3296 = vsel %vm3264, 0.0, %v3168
        %v3297 = vsel %vm3265, 0.0, %v3169
        %v3298 = vsel %vm3266, 0.0, %v3170
        %v3299 = vsel %vm3267, 0.0, %v3171
        %v3300 = vsel %vm3268, 0.0, %v3172
        %v3301 = vsel %vm3269, 0.0, %v3173
        %v3302 = vsel %vm3270, 0.0, %v3174
        %v3303 = vsel %vm3271, 0.0, %v3175
        %v3304 = vsel %vm3272, 0.0, %v3176
        %v3305 = vsel %vm3273, 0.0, %v3177
        %v3306 = vsel %vm3274, 0.0, %v3178
        %v3307 = vsel %vm3275, 0.0, %v3179
        %v3308 = vsel %vm3276, 0.0, %v3180
        %v3309 = vsel %vm3277, 0.0, %v3181
        %v3310 = vsel %vm3278, 0.0, %v3182
        %v3311 = vsel %vm3279, 0.0, %v3183
        %v3312 = vsel %vm3280, 0.0, %v3184
        %v3313 = vsel %vm3281, 0.0, %v3185
        %v3314 = vsel %vm3282, 0.0, %v3186
        %v3315 = vsel %vm3283, 0.0, %v3187
        %v3316 = vsel %vm3284, 0.0, %v3188
        %vm3317 = vcmp.eq.s32.totalorder %v3221, 63
        %vm3318 = vcmp.eq.s32.totalorder %v3222, 63
        %vm3319 = vcmp.eq.s32.totalorder %v3223, 63
        %vm3320 = vcmp.eq.s32.totalorder %v3224, 63
        %vm3321 = vcmp.eq.s32.totalorder %v3225, 63
        %vm3322 = vcmp.eq.s32.totalorder %v3226, 63
        %vm3323 = vcmp.eq.s32.totalorder %v3227, 63
        %vm3324 = vcmp.eq.s32.totalorder %v3228, 63
        %vm3325 = vcmp.eq.s32.totalorder %v3229, 63
        %vm3326 = vcmp.eq.s32.totalorder %v3230, 63
        %vm3327 = vcmp.eq.s32.totalorder %v3231, 63
        %vm3328 = vcmp.eq.s32.totalorder %v3232, 63
        %vm3329 = vcmp.eq.s32.totalorder %v3233, 63
        %vm3330 = vcmp.eq.s32.totalorder %v3234, 63
        %vm3331 = vcmp.eq.s32.totalorder %v3235, 63
        %vm3332 = vcmp.eq.s32.totalorder %v3236, 63
        %vm3333 = vcmp.eq.s32.totalorder %v3237, 63
        %vm3334 = vcmp.eq.s32.totalorder %v3238, 63
        %vm3335 = vcmp.eq.s32.totalorder %v3239, 63
        %vm3336 = vcmp.eq.s32.totalorder %v3240, 63
        %vm3337 = vcmp.eq.s32.totalorder %v3241, 63
        %vm3338 = vcmp.eq.s32.totalorder %v3242, 63
        %vm3339 = vcmp.eq.s32.totalorder %v3243, 63
        %vm3340 = vcmp.eq.s32.totalorder %v3244, 63
        %vm3341 = vcmp.eq.s32.totalorder %v3245, 63
        %vm3342 = vcmp.eq.s32.totalorder %v3246, 63
        %vm3343 = vcmp.eq.s32.totalorder %v3247, 63
        %vm3344 = vcmp.eq.s32.totalorder %v3248, 63
        %vm3345 = vcmp.eq.s32.totalorder %v3249, 63
        %vm3346 = vcmp.eq.s32.totalorder %v3250, 63
        %vm3347 = vcmp.eq.s32.totalorder %v3251, 63
        %vm3348 = vcmp.eq.s32.totalorder %v3252, 63
        %v3349 = vsel %vm3317, 0.0, %v3189
        %v3350 = vsel %vm3318, 0.0, %v3190
        %v3351 = vsel %vm3319, 0.0, %v3191
        %v3352 = vsel %vm3320, 0.0, %v3192
        %v3353 = vsel %vm3321, 0.0, %v3193
        %v3354 = vsel %vm3322, 0.0, %v3194
        %v3355 = vsel %vm3323, 0.0, %v3195
        %v3356 = vsel %vm3324, 0.0, %v3196
        %v3357 = vsel %vm3325, 0.0, %v3197
        %v3358 = vsel %vm3326, 0.0, %v3198
        %v3359 = vsel %vm3327, 0.0, %v3199
        %v3360 = vsel %vm3328, 0.0, %v3200
        %v3361 = vsel %vm3329, 0.0, %v3201
        %v3362 = vsel %vm3330, 0.0, %v3202
        %v3363 = vsel %vm3331, 0.0, %v3203
        %v3364 = vsel %vm3332, 0.0, %v3204
        %v3365 = vsel %vm3333, 0.0, %v3205
        %v3366 = vsel %vm3334, 0.0, %v3206
        %v3367 = vsel %vm3335, 0.0, %v3207
        %v3368 = vsel %vm3336, 0.0, %v3208
        %v3369 = vsel %vm3337, 0.0, %v3209
        %v3370 = vsel %vm3338, 0.0, %v3210
        %v3371 = vsel %vm3339, 0.0, %v3211
        %v3372 = vsel %vm3340, 0.0, %v3212
        %v3373 = vsel %vm3341, 0.0, %v3213
        %v3374 = vsel %vm3342, 0.0, %v3214
        %v3375 = vsel %vm3343, 0.0, %v3215
        %v3376 = vsel %vm3344, 0.0, %v3216
        %v3377 = vsel %vm3345, 0.0, %v3217
        %v3378 = vsel %vm3346, 0.0, %v3218
        %v3379 = vsel %vm3347, 0.0, %v3219
        %v3380 = vsel %vm3348, 0.0, %v3220
        %v3381 = vpack.c.bf16 %v3286, %v3285
        %v3382 = vpack.c.bf16 %v3094, %v3093
        %v3383 = vpack.c.bf16 %v3350, %v3349
        %v3384 = vpack.c.bf16 %v3288, %v3287
        %v3385 = vpack.c.bf16 %v3096, %v3095
        %v3386 = vpack.c.bf16 %v3352, %v3351
        %v3387 = vpack.c.bf16 %v3290, %v3289
        %v3388 = vpack.c.bf16 %v3098, %v3097
        %v3389 = vpack.c.bf16 %v3354, %v3353
        %v3390 = vpack.c.bf16 %v3292, %v3291
        %v3391 = vpack.c.bf16 %v3100, %v3099
        %v3392 = vpack.c.bf16 %v3356, %v3355
        %v3393 = vpack.c.bf16 %v3294, %v3293
        %v3394 = vpack.c.bf16 %v3102, %v3101
        %v3395 = vpack.c.bf16 %v3358, %v3357
        %v3396 = vpack.c.bf16 %v3296, %v3295
        %v3397 = vpack.c.bf16 %v3104, %v3103
        %v3398 = vpack.c.bf16 %v3360, %v3359
        %v3399 = vpack.c.bf16 %v3298, %v3297
        %v3400 = vpack.c.bf16 %v3106, %v3105
        %v3401 = vpack.c.bf16 %v3362, %v3361
        %v3402 = vpack.c.bf16 %v3300, %v3299
        %v3403 = vpack.c.bf16 %v3108, %v3107
        %v3404 = vpack.c.bf16 %v3364, %v3363
        %v3405 = vpack.c.bf16 %v3302, %v3301
        %v3406 = vpack.c.bf16 %v3110, %v3109
        %v3407 = vpack.c.bf16 %v3366, %v3365
        %v3408 = vpack.c.bf16 %v3304, %v3303
        %v3409 = vpack.c.bf16 %v3112, %v3111
        %v3410 = vpack.c.bf16 %v3368, %v3367
        %v3411 = vpack.c.bf16 %v3306, %v3305
        %v3412 = vpack.c.bf16 %v3114, %v3113
        %v3413 = vpack.c.bf16 %v3370, %v3369
        %v3414 = vpack.c.bf16 %v3308, %v3307
        %v3415 = vpack.c.bf16 %v3116, %v3115
        %v3416 = vpack.c.bf16 %v3372, %v3371
        %v3417 = vpack.c.bf16 %v3310, %v3309
        %v3418 = vpack.c.bf16 %v3118, %v3117
        %v3419 = vpack.c.bf16 %v3374, %v3373
        %v3420 = vpack.c.bf16 %v3312, %v3311
        %v3421 = vpack.c.bf16 %v3120, %v3119
        %v3422 = vpack.c.bf16 %v3376, %v3375
        %v3423 = vpack.c.bf16 %v3314, %v3313
        %v3424 = vpack.c.bf16 %v3122, %v3121
        %v3425 = vpack.c.bf16 %v3378, %v3377
        %v3426 = vpack.c.bf16 %v3316, %v3315
        %v3427 = vpack.c.bf16 %v3124, %v3123
        %v3428 = vpack.c.bf16 %v3380, %v3379
        %v3429 = vld [vmem:[#allocation9] sm:$0xff]
        %v3430 = vld [vmem:[#allocation9 + $0x8] sm:$0xff]
        %v3431 = vld [vmem:[#allocation9 + $0x10] sm:$0xff]
        %v3432 = vld [vmem:[#allocation9 + $0x18] sm:$0xff]
        %v3433 = vld [vmem:[#allocation9 + $0x20] sm:$0xff]
        %v3434 = vld [vmem:[#allocation9 + $0x28] sm:$0xff]
        %v3435 = vld [vmem:[#allocation9 + $0x30] sm:$0xff]
        %v3436 = vld [vmem:[#allocation9 + $0x38] sm:$0xff]
        %v3437 = vld [vmem:[#allocation9 + $0x40] sm:$0xff]
        %v3438 = vld [vmem:[#allocation9 + $0x48] sm:$0xff]
        %v3439 = vld [vmem:[#allocation9 + $0x50] sm:$0xff]
        %v3440 = vld [vmem:[#allocation9 + $0x58] sm:$0xff]
        %v3441 = vld [vmem:[#allocation9 + $0x60] sm:$0xff]
        %v3442 = vld [vmem:[#allocation9 + $0x68] sm:$0xff]
        %v3443 = vld [vmem:[#allocation9 + $0x70] sm:$0xff]
        %v3444 = vld [vmem:[#allocation9 + $0x78] sm:$0xff]
        %v3445 = vld [vmem:[#allocation9 + $0x80] sm:$0xff]
        %v3446 = vld [vmem:[#allocation9 + $0x88] sm:$0xff]
        %v3447 = vld [vmem:[#allocation9 + $0x90] sm:$0xff]
        %v3448 = vld [vmem:[#allocation9 + $0x98] sm:$0xff]
        %v3449 = vld [vmem:[#allocation9 + $0xa0] sm:$0xff]
        %v3450 = vld [vmem:[#allocation9 + $0xa8] sm:$0xff]
        %v3451 = vld [vmem:[#allocation9 + $0xb0] sm:$0xff]
        %v3452 = vld [vmem:[#allocation9 + $0xb8] sm:$0xff]
        %v3453 = vld [vmem:[#allocation9 + $0xc0] sm:$0xff]
        %v3454 = vld [vmem:[#allocation9 + $0xc8] sm:$0xff]
        %v3455 = vld [vmem:[#allocation9 + $0xd0] sm:$0xff]
        %v3456 = vld [vmem:[#allocation9 + $0xd8] sm:$0xff]
        %v3457 = vld [vmem:[#allocation9 + $0xe0] sm:$0xff]
        %v3458 = vld [vmem:[#allocation9 + $0xe8] sm:$0xff]
        %v3459 = vld [vmem:[#allocation9 + $0xf0] sm:$0xff]
        %v3460 = vld [vmem:[#allocation9 + $0xf8] sm:$0xff]
        %v3461 = vld [vmem:[#allocation9 + $0x100] sm:$0xff]
        %v3462 = vld [vmem:[#allocation9 + $0x108] sm:$0xff]
        %v3463 = vld [vmem:[#allocation9 + $0x110] sm:$0xff]
        %v3464 = vld [vmem:[#allocation9 + $0x118] sm:$0xff]
        %v3465 = vld [vmem:[#allocation9 + $0x120] sm:$0xff]
        %v3466 = vld [vmem:[#allocation9 + $0x128] sm:$0xff]
        %v3467 = vld [vmem:[#allocation9 + $0x130] sm:$0xff]
        %v3468 = vld [vmem:[#allocation9 + $0x138] sm:$0xff]
        %v3469 = vld [vmem:[#allocation9 + $0x140] sm:$0xff]
        %v3470 = vld [vmem:[#allocation9 + $0x148] sm:$0xff]
        %v3471 = vld [vmem:[#allocation9 + $0x150] sm:$0xff]
        %v3472 = vld [vmem:[#allocation9 + $0x158] sm:$0xff]
        %v3473 = vld [vmem:[#allocation9 + $0x160] sm:$0xff]
        %v3474 = vld [vmem:[#allocation9 + $0x168] sm:$0xff]
        %v3475 = vld [vmem:[#allocation9 + $0x170] sm:$0xff]
        %v3476 = vld [vmem:[#allocation9 + $0x178] sm:$0xff]
        %v3525 = vunpack.c.l.b16 %v3429
        %v3526 = vunpack.c.h.b16 %v3429
        %v3527 = vunpack.c.l.b16 %v3430
        %v3528 = vunpack.c.h.b16 %v3430
        %v3529 = vunpack.c.l.b16 %v3431
        %v3530 = vunpack.c.h.b16 %v3431
        %v3531 = vunpack.c.l.b16 %v3432
        %v3532 = vunpack.c.h.b16 %v3432
        %v3533 = vunpack.c.l.b16 %v3433
        %v3534 = vunpack.c.h.b16 %v3433
        %v3535 = vunpack.c.l.b16 %v3434
        %v3536 = vunpack.c.h.b16 %v3434
        %v3537 = vunpack.c.l.b16 %v3435
        %v3538 = vunpack.c.h.b16 %v3435
        %v3539 = vunpack.c.l.b16 %v3436
        %v3540 = vunpack.c.h.b16 %v3436
        %v3541 = vunpack.c.l.b16 %v3437
        %v3542 = vunpack.c.h.b16 %v3437
        %v3543 = vunpack.c.l.b16 %v3438
        %v3544 = vunpack.c.h.b16 %v3438
        %v3545 = vunpack.c.l.b16 %v3439
        %v3546 = vunpack.c.h.b16 %v3439
        %v3547 = vunpack.c.l.b16 %v3440
        %v3548 = vunpack.c.h.b16 %v3440
        %v3549 = vunpack.c.l.b16 %v3441
        %v3550 = vunpack.c.h.b16 %v3441
        %v3551 = vunpack.c.l.b16 %v3442
        %v3552 = vunpack.c.h.b16 %v3442
        %v3553 = vunpack.c.l.b16 %v3443
        %v3554 = vunpack.c.h.b16 %v3443
        %v3555 = vunpack.c.l.b16 %v3444
        %v3556 = vunpack.c.h.b16 %v3444
        %v3557 = vunpack.c.l.b16 %v3445
        %v3558 = vunpack.c.h.b16 %v3445
        %v3559 = vunpack.c.l.b16 %v3446
        %v3560 = vunpack.c.h.b16 %v3446
        %v3561 = vunpack.c.l.b16 %v3447
        %v3562 = vunpack.c.h.b16 %v3447
        %v3563 = vunpack.c.l.b16 %v3448
        %v3564 = vunpack.c.h.b16 %v3448
        %v3565 = vunpack.c.l.b16 %v3449
        %v3566 = vunpack.c.h.b16 %v3449
        %v3567 = vunpack.c.l.b16 %v3450
        %v3568 = vunpack.c.h.b16 %v3450
        %v3569 = vunpack.c.l.b16 %v3451
        %v3570 = vunpack.c.h.b16 %v3451
        %v3571 = vunpack.c.l.b16 %v3452
        %v3572 = vunpack.c.h.b16 %v3452
        %v3573 = vunpack.c.l.b16 %v3453
        %v3574 = vunpack.c.h.b16 %v3453
        %v3575 = vunpack.c.l.b16 %v3454
        %v3576 = vunpack.c.h.b16 %v3454
        %v3577 = vunpack.c.l.b16 %v3455
        %v3578 = vunpack.c.h.b16 %v3455
        %v3579 = vunpack.c.l.b16 %v3456
        %v3580 = vunpack.c.h.b16 %v3456
        %v3581 = vunpack.c.l.b16 %v3457
        %v3582 = vunpack.c.h.b16 %v3457
        %v3583 = vunpack.c.l.b16 %v3458
        %v3584 = vunpack.c.h.b16 %v3458
        %v3585 = vunpack.c.l.b16 %v3459
        %v3586 = vunpack.c.h.b16 %v3459
        %v3587 = vunpack.c.l.b16 %v3460
        %v3588 = vunpack.c.h.b16 %v3460
        %v3589 = vunpack.c.l.b16 %v3461
        %v3590 = vunpack.c.h.b16 %v3461
        %v3591 = vunpack.c.l.b16 %v3462
        %v3592 = vunpack.c.h.b16 %v3462
        %v3593 = vunpack.c.l.b16 %v3463
        %v3594 = vunpack.c.h.b16 %v3463
        %v3595 = vunpack.c.l.b16 %v3464
        %v3596 = vunpack.c.h.b16 %v3464
        %v3597 = vunpack.c.l.b16 %v3465
        %v3598 = vunpack.c.h.b16 %v3465
        %v3599 = vunpack.c.l.b16 %v3466
        %v3600 = vunpack.c.h.b16 %v3466
        %v3601 = vunpack.c.l.b16 %v3467
        %v3602 = vunpack.c.h.b16 %v3467
        %v3603 = vunpack.c.l.b16 %v3468
        %v3604 = vunpack.c.h.b16 %v3468
        %v3605 = vunpack.c.l.b16 %v3469
        %v3606 = vunpack.c.h.b16 %v3469
        %v3607 = vunpack.c.l.b16 %v3470
        %v3608 = vunpack.c.h.b16 %v3470
        %v3609 = vunpack.c.l.b16 %v3471
        %v3610 = vunpack.c.h.b16 %v3471
        %v3611 = vunpack.c.l.b16 %v3472
        %v3612 = vunpack.c.h.b16 %v3472
        %v3613 = vunpack.c.l.b16 %v3473
        %v3614 = vunpack.c.h.b16 %v3473
        %v3615 = vunpack.c.l.b16 %v3474
        %v3616 = vunpack.c.h.b16 %v3474
        %v3617 = vunpack.c.l.b16 %v3475
        %v3618 = vunpack.c.h.b16 %v3475
        %v3619 = vunpack.c.l.b16 %v3476
        %v3620 = vunpack.c.h.b16 %v3476
        %v3621 = vpack.c.b16 %v3527, %v3525
        %v3622 = vpack.c.b16 %v3528, %v3526
        %v3623 = vpack.c.b16 %v3531, %v3529
        %v3624 = vpack.c.b16 %v3532, %v3530
        %v3625 = vpack.c.b16 %v3535, %v3533
        %v3626 = vpack.c.b16 %v3536, %v3534
        %v3627 = vpack.c.b16 %v3539, %v3537
        %v3628 = vpack.c.b16 %v3540, %v3538
        %v3629 = vpack.c.b16 %v3543, %v3541
        %v3630 = vpack.c.b16 %v3544, %v3542
        %v3631 = vpack.c.b16 %v3547, %v3545
        %v3632 = vpack.c.b16 %v3548, %v3546
        %v3633 = vpack.c.b16 %v3551, %v3549
        %v3634 = vpack.c.b16 %v3552, %v3550
        %v3635 = vpack.c.b16 %v3555, %v3553
        %v3636 = vpack.c.b16 %v3556, %v3554
        %v3637 = vpack.c.b16 %v3559, %v3557
        %v3638 = vpack.c.b16 %v3560, %v3558
        %v3639 = vpack.c.b16 %v3563, %v3561
        %v3640 = vpack.c.b16 %v3564, %v3562
        %v3641 = vpack.c.b16 %v3567, %v3565
        %v3642 = vpack.c.b16 %v3568, %v3566
        %v3643 = vpack.c.b16 %v3571, %v3569
        %v3644 = vpack.c.b16 %v3572, %v3570
        %v3645 = vpack.c.b16 %v3575, %v3573
        %v3646 = vpack.c.b16 %v3576, %v3574
        %v3647 = vpack.c.b16 %v3579, %v3577
        %v3648 = vpack.c.b16 %v3580, %v3578
        %v3649 = vpack.c.b16 %v3583, %v3581
        %v3650 = vpack.c.b16 %v3584, %v3582
        %v3651 = vpack.c.b16 %v3587, %v3585
        %v3652 = vpack.c.b16 %v3588, %v3586
        %v3653 = vpack.c.b16 %v3591, %v3589
        %v3654 = vpack.c.b16 %v3592, %v3590
        %v3655 = vpack.c.b16 %v3595, %v3593
        %v3656 = vpack.c.b16 %v3596, %v3594
        %v3657 = vpack.c.b16 %v3599, %v3597
        %v3658 = vpack.c.b16 %v3600, %v3598
        %v3659 = vpack.c.b16 %v3603, %v3601
        %v3660 = vpack.c.b16 %v3604, %v3602
        %v3661 = vpack.c.b16 %v3607, %v3605
        %v3662 = vpack.c.b16 %v3608, %v3606
        %v3663 = vpack.c.b16 %v3611, %v3609
        %v3664 = vpack.c.b16 %v3612, %v3610
        %v3665 = vpack.c.b16 %v3615, %v3613
        %v3666 = vpack.c.b16 %v3616, %v3614
        %v3667 = vpack.c.b16 %v3619, %v3617
        %v3668 = vpack.c.b16 %v3620, %v3618
        %3717 = vmatprep.subr.bf16.mxu0 %v3622
        %3718 = vmatpush1.bf16.msra.mxu0 %v3621
        %3719 = vmatprep.subr.bf16.mxu0 %v3624
        %3720 = vmatpush1.bf16.msra.mxu0 %v3623
        %3721 = vmatprep.subr.bf16.mxu0 %v3626
        %3722 = vmatpush1.bf16.msra.mxu0 %v3625
        %3723 = vmatprep.subr.bf16.mxu0 %v3628
        %3724 = vmatpush1.bf16.msra.mxu0 %v3627
        %3725 = vmatprep.subr.bf16.mxu0 %v3630
        %3726 = vmatpush1.bf16.msra.mxu0 %v3629
        %3727 = vmatprep.subr.bf16.mxu0 %v3632
        %3728 = vmatpush1.bf16.msra.mxu0 %v3631
        %3729 = vmatprep.subr.bf16.mxu0 %v3634
        %3730 = vmatpush1.bf16.msra.mxu0 %v3633
        %3731 = vmatprep.subr.bf16.mxu0 %v3636
        %3732 = vmatpush1.bf16.msra.mxu0 %v3635
        %3733 = vmatprep.subr.bf16.mxu0 %v3638
        %3734 = vmatpush1.bf16.msra.mxu0 %v3637
        %3735 = vmatprep.subr.bf16.mxu0 %v3640
        %3736 = vmatpush1.bf16.msra.mxu0 %v3639
        %3737 = vmatprep.subr.bf16.mxu0 %v3642
        %3738 = vmatpush1.bf16.msra.mxu0 %v3641
        %3739 = vmatprep.subr.bf16.mxu0 %v3644
        %3740 = vmatpush1.bf16.msra.mxu0 %v3643
        %3741 = vmatprep.subr.bf16.mxu0 %v3646
        %3742 = vmatpush1.bf16.msra.mxu0 %v3645
        %3743 = vmatprep.subr.bf16.mxu0 %v3648
        %3744 = vmatpush1.bf16.msra.mxu0 %v3647
        %3745 = vmatprep.subr.bf16.mxu0 %v3650
        %3746 = vmatpush1.bf16.msra.mxu0 %v3649
        %3747 = vmatprep.subr.bf16.mxu0 %v3652
        %3748 = vmatpush1.bf16.msra.mxu0 %v3651
        %3749 = vmatprep.mubr.bf16.mxu0 %v3382
        %3750 = vmatmul.mubr.bf16.gmra.mrb[0].mxu0 %v3381
        %v3751 = vpop.f32.mrb[0].mxu0
        %v3752 = vadd.f32 0.0, %v3751
        %v3753 = vpop.f32.mrb[0].mxu0
        %v3754 = vadd.f32 0.0, %v3753
        %v3755 = vpop.f32.mrb[0].mxu0
        %v3756 = vadd.f32 0.0, %v3755
        %v3757 = vpop.f32.mrb[0].mxu0
        %v3758 = vadd.f32 0.0, %v3757
        %3759 = vmatprep.mubr.bf16.mxu0 %v3385
        %3760 = vmatmul.mubr.bf16.gmra.mrb[0].mxu0 %v3384
        %v3761 = vpop.f32.mrb[0].mxu0
        %v3762 = vadd.f32 0.0, %v3761
        %v3763 = vpop.f32.mrb[0].mxu0
        %v3764 = vadd.f32 0.0, %v3763
        %v3765 = vpop.f32.mrb[0].mxu0
        %v3766 = vadd.f32 0.0, %v3765
        %v3767 = vpop.f32.mrb[0].mxu0
        %v3768 = vadd.f32 0.0, %v3767
        %3769 = vmatprep.mubr.bf16.mxu0 %v3388
        %3770 = vmatmul.mubr.bf16.gmra.mrb[0].mxu0 %v3387
        %v3771 = vpop.f32.mrb[0].mxu0
        %v3772 = vadd.f32 0.0, %v3771
        %v3773 = vpop.f32.mrb[0].mxu0
        %v3774 = vadd.f32 0.0, %v3773
        %v3775 = vpop.f32.mrb[0].mxu0
        %v3776 = vadd.f32 0.0, %v3775
        %v3777 = vpop.f32.mrb[0].mxu0
        %v3778 = vadd.f32 0.0, %v3777
        %3779 = vmatprep.mubr.bf16.mxu0 %v3391
        %3780 = vmatmul.mubr.bf16.gmra.mrb[0].mxu0 %v3390
        %v3781 = vpop.f32.mrb[0].mxu0
        %v3782 = vadd.f32 0.0, %v3781
        %v3783 = vpop.f32.mrb[0].mxu0
        %v3784 = vadd.f32 0.0, %v3783
        %v3785 = vpop.f32.mrb[0].mxu0
        %v3786 = vadd.f32 0.0, %v3785
        %v3787 = vpop.f32.mrb[0].mxu0
        %v3788 = vadd.f32 0.0, %v3787
        %3789 = vmatprep.mubr.bf16.mxu0 %v3394
        %3790 = vmatmul.mubr.bf16.gmra.mrb[0].mxu0 %v3393
        %v3791 = vpop.f32.mrb[0].mxu0
        %v3792 = vadd.f32 0.0, %v3791
        %v3793 = vpop.f32.mrb[0].mxu0
        %v3794 = vadd.f32 0.0, %v3793
        %v3795 = vpop.f32.mrb[0].mxu0
        %v3796 = vadd.f32 0.0, %v3795
        %v3797 = vpop.f32.mrb[0].mxu0
        %v3798 = vadd.f32 0.0, %v3797
        %3799 = vmatprep.mubr.bf16.mxu0 %v3397
        %3800 = vmatmul.mubr.bf16.gmra.mrb[0].mxu0 %v3396
        %v3801 = vpop.f32.mrb[0].mxu0
        %v3802 = vadd.f32 0.0, %v3801
        %v3803 = vpop.f32.mrb[0].mxu0
        %v3804 = vadd.f32 0.0, %v3803
        %v3805 = vpop.f32.mrb[0].mxu0
        %v3806 = vadd.f32 0.0, %v3805
        %v3807 = vpop.f32.mrb[0].mxu0
        %v3808 = vadd.f32 0.0, %v3807
        %3809 = vmatprep.mubr.bf16.mxu0 %v3400
        %3810 = vmatmul.mubr.bf16.gmra.mrb[0].mxu0 %v3399
        %v3811 = vpop.f32.mrb[0].mxu0
        %v3812 = vadd.f32 0.0, %v3811
        %v3813 = vpop.f32.mrb[0].mxu0
        %v3814 = vadd.f32 0.0, %v3813
        %v3815 = vpop.f32.mrb[0].mxu0
        %v3816 = vadd.f32 0.0, %v3815
        %v3817 = vpop.f32.mrb[0].mxu0
        %v3818 = vadd.f32 0.0, %v3817
        %3819 = vmatprep.mubr.bf16.mxu0 %v3403
        %3820 = vmatmul.mubr.bf16.gmra.mrb[0].mxu0 %v3402
        %v3821 = vpop.f32.mrb[0].mxu0
        %v3822 = vadd.f32 0.0, %v3821
        %v3823 = vpop.f32.mrb[0].mxu0
        %v3824 = vadd.f32 0.0, %v3823
        %v3825 = vpop.f32.mrb[0].mxu0
        %v3826 = vadd.f32 0.0, %v3825
        %v3827 = vpop.f32.mrb[0].mxu0
        %v3828 = vadd.f32 0.0, %v3827
        %3829 = vmatprep.mubr.bf16.mxu0 %v3406
        %3830 = vmatmul.mubr.bf16.gmra.mrb[0].mxu0 %v3405
        %v3831 = vpop.f32.mrb[0].mxu0
        %v3832 = vadd.f32 0.0, %v3831
        %v3833 = vpop.f32.mrb[0].mxu0
        %v3834 = vadd.f32 0.0, %v3833
        %v3835 = vpop.f32.mrb[0].mxu0
        %v3836 = vadd.f32 0.0, %v3835
        %v3837 = vpop.f32.mrb[0].mxu0
        %v3838 = vadd.f32 0.0, %v3837
        %3839 = vmatprep.mubr.bf16.mxu0 %v3409
        %3840 = vmatmul.mubr.bf16.gmra.mrb[0].mxu0 %v3408
        %v3841 = vpop.f32.mrb[0].mxu0
        %v3842 = vadd.f32 0.0, %v3841
        %v3843 = vpop.f32.mrb[0].mxu0
        %v3844 = vadd.f32 0.0, %v3843
        %v3845 = vpop.f32.mrb[0].mxu0
        %v3846 = vadd.f32 0.0, %v3845
        %v3847 = vpop.f32.mrb[0].mxu0
        %v3848 = vadd.f32 0.0, %v3847
        %3849 = vmatprep.mubr.bf16.mxu0 %v3412
        %3850 = vmatmul.mubr.bf16.gmra.mrb[0].mxu0 %v3411
        %v3851 = vpop.f32.mrb[0].mxu0
        %v3852 = vadd.f32 0.0, %v3851
        %v3853 = vpop.f32.mrb[0].mxu0
        %v3854 = vadd.f32 0.0, %v3853
        %v3855 = vpop.f32.mrb[0].mxu0
        %v3856 = vadd.f32 0.0, %v3855
        %v3857 = vpop.f32.mrb[0].mxu0
        %v3858 = vadd.f32 0.0, %v3857
        %3859 = vmatprep.mubr.bf16.mxu0 %v3415
        %3860 = vmatmul.mubr.bf16.gmra.mrb[0].mxu0 %v3414
        %v3861 = vpop.f32.mrb[0].mxu0
        %v3862 = vadd.f32 0.0, %v3861
        %v3863 = vpop.f32.mrb[0].mxu0
        %v3864 = vadd.f32 0.0, %v3863
        %v3865 = vpop.f32.mrb[0].mxu0
        %v3866 = vadd.f32 0.0, %v3865
        %v3867 = vpop.f32.mrb[0].mxu0
        %v3868 = vadd.f32 0.0, %v3867
        %3869 = vmatprep.mubr.bf16.mxu0 %v3418
        %3870 = vmatmul.mubr.bf16.gmra.mrb[0].mxu0 %v3417
        %v3871 = vpop.f32.mrb[0].mxu0
        %v3872 = vadd.f32 0.0, %v3871
        %v3873 = vpop.f32.mrb[0].mxu0
        %v3874 = vadd.f32 0.0, %v3873
        %v3875 = vpop.f32.mrb[0].mxu0
        %v3876 = vadd.f32 0.0, %v3875
        %v3877 = vpop.f32.mrb[0].mxu0
        %v3878 = vadd.f32 0.0, %v3877
        %3879 = vmatprep.mubr.bf16.mxu0 %v3421
        %3880 = vmatmul.mubr.bf16.gmra.mrb[0].mxu0 %v3420
        %v3881 = vpop.f32.mrb[0].mxu0
        %v3882 = vadd.f32 0.0, %v3881
        %v3883 = vpop.f32.mrb[0].mxu0
        %v3884 = vadd.f32 0.0, %v3883
        %v3885 = vpop.f32.mrb[0].mxu0
        %v3886 = vadd.f32 0.0, %v3885
        %v3887 = vpop.f32.mrb[0].mxu0
        %v3888 = vadd.f32 0.0, %v3887
        %3889 = vmatprep.mubr.bf16.mxu0 %v3424
        %3890 = vmatmul.mubr.bf16.gmra.mrb[0].mxu0 %v3423
        %v3891 = vpop.f32.mrb[0].mxu0
        %v3892 = vadd.f32 0.0, %v3891
        %v3893 = vpop.f32.mrb[0].mxu0
        %v3894 = vadd.f32 0.0, %v3893
        %v3895 = vpop.f32.mrb[0].mxu0
        %v3896 = vadd.f32 0.0, %v3895
        %v3897 = vpop.f32.mrb[0].mxu0
        %v3898 = vadd.f32 0.0, %v3897
        %3899 = vmatprep.mubr.bf16.mxu0 %v3427
        %3900 = vmatmul.mubr.bf16.gmra.mrb[0].mxu0 %v3426
        %v3901 = vpop.f32.mrb[0].mxu0
        %v3902 = vadd.f32 0.0, %v3901
        %v3903 = vpop.f32.mrb[0].mxu0
        %v3904 = vadd.f32 0.0, %v3903
        %v3905 = vpop.f32.mrb[0].mxu0
        %v3906 = vadd.f32 0.0, %v3905
        %v3907 = vpop.f32.mrb[0].mxu0
        %v3908 = vadd.f32 0.0, %v3907
        %3909 = vdwg.mxu0
        %3910 = vmatprep.subr.bf16.mxu0 %v3654
        %3911 = vmatpush1.bf16.msra.mxu0 %v3653
        %3912 = vmatprep.subr.bf16.mxu0 %v3656
        %3913 = vmatpush1.bf16.msra.mxu0 %v3655
        %3914 = vmatprep.subr.bf16.mxu0 %v3658
        %3915 = vmatpush1.bf16.msra.mxu0 %v3657
        %3916 = vmatprep.subr.bf16.mxu0 %v3660
        %3917 = vmatpush1.bf16.msra.mxu0 %v3659
        %3918 = vmatprep.subr.bf16.mxu0 %v3662
        %3919 = vmatpush1.bf16.msra.mxu0 %v3661
        %3920 = vmatprep.subr.bf16.mxu0 %v3664
        %3921 = vmatpush1.bf16.msra.mxu0 %v3663
        %3922 = vmatprep.subr.bf16.mxu0 %v3666
        %3923 = vmatpush1.bf16.msra.mxu0 %v3665
        %3924 = vmatprep.subr.bf16.mxu0 %v3668
        %3925 = vmatpush1.bf16.msra.mxu0 %v3667
        %3926 = vmatprep.subr.bf16.mxu0 0
        %3927 = vmatpush1.bf16.msra.mxu0 0
        %3928 = vmatprep.subr.bf16.mxu0 0
        %3929 = vmatpush1.bf16.msra.mxu0 0
        %3930 = vmatprep.subr.bf16.mxu0 0
        %3931 = vmatpush1.bf16.msra.mxu0 0
        %3932 = vmatprep.subr.bf16.mxu0 0
        %3933 = vmatpush1.bf16.msra.mxu0 0
        %3934 = vmatprep.subr.bf16.mxu0 0
        %3935 = vmatpush1.bf16.msra.mxu0 0
        %3936 = vmatprep.subr.bf16.mxu0 0
        %3937 = vmatpush1.bf16.msra.mxu0 0
        %3938 = vmatprep.subr.bf16.mxu0 0
        %3939 = vmatpush1.bf16.msra.mxu0 0
        %3940 = vmatprep.subr.bf16.mxu0 0
        %3941 = vmatpush1.bf16.msra.mxu0 0
        %3942 = vmatprep.mubr.bf16.mxu0 0
        %3943 = vmatmul.mubr.bf16.gmra.mrb[0].mxu0 %v3383
        %v3944 = vpop.f32.mrb[0].mxu0
        %v3945 = vadd.f32 %v3752, %v3944
        %v3946 = vpop.f32.mrb[0].mxu0
        %v3947 = vadd.f32 %v3754, %v3946
        %v3948 = vpop.f32.mrb[0].mxu0
        %v3949 = vadd.f32 %v3756, %v3948
        %v3950 = vpop.f32.mrb[0].mxu0
        %v3951 = vadd.f32 %v3758, %v3950
        %3952 = vmatprep.mubr.bf16.mxu0 0
        %3953 = vmatmul.mubr.bf16.gmra.mrb[0].mxu0 %v3386
        %v3954 = vpop.f32.mrb[0].mxu0
        %v3955 = vadd.f32 %v3762, %v3954
        %v3956 = vpop.f32.mrb[0].mxu0
        %v3957 = vadd.f32 %v3764, %v3956
        %v3958 = vpop.f32.mrb[0].mxu0
        %v3959 = vadd.f32 %v3766, %v3958
        %v3960 = vpop.f32.mrb[0].mxu0
        %v3961 = vadd.f32 %v3768, %v3960
        %3962 = vmatprep.mubr.bf16.mxu0 0
        %3963 = vmatmul.mubr.bf16.gmra.mrb[0].mxu0 %v3389
        %v3964 = vpop.f32.mrb[0].mxu0
        %v3965 = vadd.f32 %v3772, %v3964
        %v3966 = vpop.f32.mrb[0].mxu0
        %v3967 = vadd.f32 %v3774, %v3966
        %v3968 = vpop.f32.mrb[0].mxu0
        %v3969 = vadd.f32 %v3776, %v3968
        %v3970 = vpop.f32.mrb[0].mxu0
        %v3971 = vadd.f32 %v3778, %v3970
        %3972 = vmatprep.mubr.bf16.mxu0 0
        %3973 = vmatmul.mubr.bf16.gmra.mrb[0].mxu0 %v3392
        %v3974 = vpop.f32.mrb[0].mxu0
        %v3975 = vadd.f32 %v3782, %v3974
        %v3976 = vpop.f32.mrb[0].mxu0
        %v3977 = vadd.f32 %v3784, %v3976
        %v3978 = vpop.f32.mrb[0].mxu0
        %v3979 = vadd.f32 %v3786, %v3978
        %v3980 = vpop.f32.mrb[0].mxu0
        %v3981 = vadd.f32 %v3788, %v3980
        %3982 = vmatprep.mubr.bf16.mxu0 0
        %3983 = vmatmul.mubr.bf16.gmra.mrb[0].mxu0 %v3395
        %v3984 = vpop.f32.mrb[0].mxu0
        %v3985 = vadd.f32 %v3792, %v3984
        %v3986 = vpop.f32.mrb[0].mxu0
        %v3987 = vadd.f32 %v3794, %v3986
        %v3988 = vpop.f32.mrb[0].mxu0
        %v3989 = vadd.f32 %v3796, %v3988
        %v3990 = vpop.f32.mrb[0].mxu0
        %v3991 = vadd.f32 %v3798, %v3990
        %3992 = vmatprep.mubr.bf16.mxu0 0
        %3993 = vmatmul.mubr.bf16.gmra.mrb[0].mxu0 %v3398
        %v3994 = vpop.f32.mrb[0].mxu0
        %v3995 = vadd.f32 %v3802, %v3994
        %v3996 = vpop.f32.mrb[0].mxu0
        %v3997 = vadd.f32 %v3804, %v3996
        %v3998 = vpop.f32.mrb[0].mxu0
        %v3999 = vadd.f32 %v3806, %v3998
        %v4000 = vpop.f32.mrb[0].mxu0
        %v4001 = vadd.f32 %v3808, %v4000
        %4002 = vmatprep.mubr.bf16.mxu0 0
        %4003 = vmatmul.mubr.bf16.gmra.mrb[0].mxu0 %v3401
        %v4004 = vpop.f32.mrb[0].mxu0
        %v4005 = vadd.f32 %v3812, %v4004
        %v4006 = vpop.f32.mrb[0].mxu0
        %v4007 = vadd.f32 %v3814, %v4006
        %v4008 = vpop.f32.mrb[0].mxu0
        %v4009 = vadd.f32 %v3816, %v4008
        %v4010 = vpop.f32.mrb[0].mxu0
        %v4011 = vadd.f32 %v3818, %v4010
        %4012 = vmatprep.mubr.bf16.mxu0 0
        %4013 = vmatmul.mubr.bf16.gmra.mrb[0].mxu0 %v3404
        %v4014 = vpop.f32.mrb[0].mxu0
        %v4015 = vadd.f32 %v3822, %v4014
        %v4016 = vpop.f32.mrb[0].mxu0
        %v4017 = vadd.f32 %v3824, %v4016
        %v4018 = vpop.f32.mrb[0].mxu0
        %v4019 = vadd.f32 %v3826, %v4018
        %v4020 = vpop.f32.mrb[0].mxu0
        %v4021 = vadd.f32 %v3828, %v4020
        %4022 = vmatprep.mubr.bf16.mxu0 0
        %4023 = vmatmul.mubr.bf16.gmra.mrb[0].mxu0 %v3407
        %v4024 = vpop.f32.mrb[0].mxu0
        %v4025 = vadd.f32 %v3832, %v4024
        %v4026 = vpop.f32.mrb[0].mxu0
        %v4027 = vadd.f32 %v3834, %v4026
        %v4028 = vpop.f32.mrb[0].mxu0
        %v4029 = vadd.f32 %v3836, %v4028
        %v4030 = vpop.f32.mrb[0].mxu0
        %v4031 = vadd.f32 %v3838, %v4030
        %4032 = vmatprep.mubr.bf16.mxu0 0
        %4033 = vmatmul.mubr.bf16.gmra.mrb[0].mxu0 %v3410
        %v4034 = vpop.f32.mrb[0].mxu0
        %v4035 = vadd.f32 %v3842, %v4034
        %v4036 = vpop.f32.mrb[0].mxu0
        %v4037 = vadd.f32 %v3844, %v4036
        %v4038 = vpop.f32.mrb[0].mxu0
        %v4039 = vadd.f32 %v3846, %v4038
        %v4040 = vpop.f32.mrb[0].mxu0
        %v4041 = vadd.f32 %v3848, %v4040
        %4042 = vmatprep.mubr.bf16.mxu0 0
        %4043 = vmatmul.mubr.bf16.gmra.mrb[0].mxu0 %v3413
        %v4044 = vpop.f32.mrb[0].mxu0
        %v4045 = vadd.f32 %v3852, %v4044
        %v4046 = vpop.f32.mrb[0].mxu0
        %v4047 = vadd.f32 %v3854, %v4046
        %v4048 = vpop.f32.mrb[0].mxu0
        %v4049 = vadd.f32 %v3856, %v4048
        %v4050 = vpop.f32.mrb[0].mxu0
        %v4051 = vadd.f32 %v3858, %v4050
        %4052 = vmatprep.mubr.bf16.mxu0 0
        %4053 = vmatmul.mubr.bf16.gmra.mrb[0].mxu0 %v3416
        %v4054 = vpop.f32.mrb[0].mxu0
        %v4055 = vadd.f32 %v3862, %v4054
        %v4056 = vpop.f32.mrb[0].mxu0
        %v4057 = vadd.f32 %v3864, %v4056
        %v4058 = vpop.f32.mrb[0].mxu0
        %v4059 = vadd.f32 %v3866, %v4058
        %v4060 = vpop.f32.mrb[0].mxu0
        %v4061 = vadd.f32 %v3868, %v4060
        %4062 = vmatprep.mubr.bf16.mxu0 0
        %4063 = vmatmul.mubr.bf16.gmra.mrb[0].mxu0 %v3419
        %v4064 = vpop.f32.mrb[0].mxu0
        %v4065 = vadd.f32 %v3872, %v4064
        %v4066 = vpop.f32.mrb[0].mxu0
        %v4067 = vadd.f32 %v3874, %v4066
        %v4068 = vpop.f32.mrb[0].mxu0
        %v4069 = vadd.f32 %v3876, %v4068
        %v4070 = vpop.f32.mrb[0].mxu0
        %v4071 = vadd.f32 %v3878, %v4070
        %4072 = vmatprep.mubr.bf16.mxu0 0
        %4073 = vmatmul.mubr.bf16.gmra.mrb[0].mxu0 %v3422
        %v4074 = vpop.f32.mrb[0].mxu0
        %v4075 = vadd.f32 %v3882, %v4074
        %v4076 = vpop.f32.mrb[0].mxu0
        %v4077 = vadd.f32 %v3884, %v4076
        %v4078 = vpop.f32.mrb[0].mxu0
        %v4079 = vadd.f32 %v3886, %v4078
        %v4080 = vpop.f32.mrb[0].mxu0
        %v4081 = vadd.f32 %v3888, %v4080
        %4082 = vmatprep.mubr.bf16.mxu0 0
        %4083 = vmatmul.mubr.bf16.gmra.mrb[0].mxu0 %v3425
        %v4084 = vpop.f32.mrb[0].mxu0
        %v4085 = vadd.f32 %v3892, %v4084
        %v4086 = vpop.f32.mrb[0].mxu0
        %v4087 = vadd.f32 %v3894, %v4086
        %v4088 = vpop.f32.mrb[0].mxu0
        %v4089 = vadd.f32 %v3896, %v4088
        %v4090 = vpop.f32.mrb[0].mxu0
        %v4091 = vadd.f32 %v3898, %v4090
        %4092 = vmatprep.mubr.bf16.mxu0 0
        %4093 = vmatmul.mubr.bf16.gmra.mrb[0].mxu0 %v3428
        %v4094 = vpop.f32.mrb[0].mxu0
        %v4095 = vadd.f32 %v3902, %v4094
        %v4096 = vpop.f32.mrb[0].mxu0
        %v4097 = vadd.f32 %v3904, %v4096
        %v4098 = vpop.f32.mrb[0].mxu0
        %v4099 = vadd.f32 %v3906, %v4098
        %v4100 = vpop.f32.mrb[0].mxu0
        %v4101 = vadd.f32 %v3908, %v4100
        %4102 = vdwg.mxu0
        %v4103 = vld [vmem:[%s4] sm:$0xf]
        %v4105 = vlaneseq
        %v4106 = vshrl.u32 %v4105, 7
        %v4107 = vsub.s32 0, %v4106
        %v4108 = vrot.slane %v4103, %v4107
        %v4109 = vlaneseq
        %v4110 = vshrl.u32 %v4109, 7
        %v4111 = vsub.s32 2, %v4110
        %v4112 = vrot.slane %v4103, %v4111
        %v4115 = vlaneseq
        %v4116 = vshrl.u32 %v4115, 7
        %v4117 = vsub.s32 0, %v4116
        %v4118 = vrot.slane %v4108, %v4117
        %v4119 = vlaneseq
        %v4120 = vshrl.u32 %v4119, 7
        %v4121 = vsub.s32 0, %v4120
        %v4122 = vrot.slane %v4112, %v4121
        %v4123 = vmul.f32 %v3945, %v4118
        %v4124 = vmul.f32 %v3947, %v4122
        %v4125 = vmul.f32 %v3949, %v4118
        %v4126 = vmul.f32 %v3951, %v4122
        %v4127 = vmul.f32 %v3955, %v4118
        %v4128 = vmul.f32 %v3957, %v4122
        %v4129 = vmul.f32 %v3959, %v4118
        %v4130 = vmul.f32 %v3961, %v4122
        %v4131 = vmul.f32 %v3965, %v4118
        %v4132 = vmul.f32 %v3967, %v4122
        %v4133 = vmul.f32 %v3969, %v4118
        %v4134 = vmul.f32 %v3971, %v4122
        %v4135 = vmul.f32 %v3975, %v4118
        %v4136 = vmul.f32 %v3977, %v4122
        %v4137 = vmul.f32 %v3979, %v4118
        %v4138 = vmul.f32 %v3981, %v4122
        %v4139 = vmul.f32 %v3985, %v4118
        %v4140 = vmul.f32 %v3987, %v4122
        %v4141 = vmul.f32 %v3989, %v4118
        %v4142 = vmul.f32 %v3991, %v4122
        %v4143 = vmul.f32 %v3995, %v4118
        %v4144 = vmul.f32 %v3997, %v4122
        %v4145 = vmul.f32 %v3999, %v4118
        %v4146 = vmul.f32 %v4001, %v4122
        %v4147 = vmul.f32 %v4005, %v4118
        %v4148 = vmul.f32 %v4007, %v4122
        %v4149 = vmul.f32 %v4009, %v4118
        %v4150 = vmul.f32 %v4011, %v4122
        %v4151 = vmul.f32 %v4015, %v4118
        %v4152 = vmul.f32 %v4017, %v4122
        %v4153 = vmul.f32 %v4019, %v4118
        %v4154 = vmul.f32 %v4021, %v4122
        %v4155 = vmul.f32 %v4025, %v4118
        %v4156 = vmul.f32 %v4027, %v4122
        %v4157 = vmul.f32 %v4029, %v4118
        %v4158 = vmul.f32 %v4031, %v4122
        %v4159 = vmul.f32 %v4035, %v4118
        %v4160 = vmul.f32 %v4037, %v4122
        %v4161 = vmul.f32 %v4039, %v4118
        %v4162 = vmul.f32 %v4041, %v4122
        %v4163 = vmul.f32 %v4045, %v4118
        %v4164 = vmul.f32 %v4047, %v4122
        %v4165 = vmul.f32 %v4049, %v4118
        %v4166 = vmul.f32 %v4051, %v4122
        %v4167 = vmul.f32 %v4055, %v4118
        %v4168 = vmul.f32 %v4057, %v4122
        %v4169 = vmul.f32 %v4059, %v4118
        %v4170 = vmul.f32 %v4061, %v4122
        %v4171 = vmul.f32 %v4065, %v4118
        %v4172 = vmul.f32 %v4067, %v4122
        %v4173 = vmul.f32 %v4069, %v4118
        %v4174 = vmul.f32 %v4071, %v4122
        %v4175 = vmul.f32 %v4075, %v4118
        %v4176 = vmul.f32 %v4077, %v4122
        %v4177 = vmul.f32 %v4079, %v4118
        %v4178 = vmul.f32 %v4081, %v4122
        %v4179 = vmul.f32 %v4085, %v4118
        %v4180 = vmul.f32 %v4087, %v4122
        %v4181 = vmul.f32 %v4089, %v4118
        %v4182 = vmul.f32 %v4091, %v4122
        %v4183 = vmul.f32 %v4095, %v4118
        %v4184 = vmul.f32 %v4097, %v4122
        %v4185 = vmul.f32 %v4099, %v4118
        %v4186 = vmul.f32 %v4101, %v4122
        %v4187 = vlaneseq
        %v4188 = vshrl.u32 %v4187, 7
        %v4189 = vsub.s32 1, %v4188
        %v4190 = vrot.slane %v4103, %v4189
        %v4191 = vlaneseq
        %v4192 = vshrl.u32 %v4191, 7
        %v4193 = vsub.s32 3, %v4192
        %v4194 = vrot.slane %v4103, %v4193
        %v4197 = vlaneseq
        %v4198 = vshrl.u32 %v4197, 7
        %v4199 = vsub.s32 1, %v4198
        %v4200 = vrot.slane %v4190, %v4199
        %v4201 = vlaneseq
        %v4202 = vshrl.u32 %v4201, 7
        %v4203 = vsub.s32 1, %v4202
        %v4204 = vrot.slane %v4194, %v4203
        %v4205 = vadd.f32 %v4123, %v4200
        %v4206 = vadd.f32 %v4124, %v4204
        %v4207 = vadd.f32 %v4125, %v4200
        %v4208 = vadd.f32 %v4126, %v4204
        %v4209 = vadd.f32 %v4127, %v4200
        %v4210 = vadd.f32 %v4128, %v4204
        %v4211 = vadd.f32 %v4129, %v4200
        %v4212 = vadd.f32 %v4130, %v4204
        %v4213 = vadd.f32 %v4131, %v4200
        %v4214 = vadd.f32 %v4132, %v4204
        %v4215 = vadd.f32 %v4133, %v4200
        %v4216 = vadd.f32 %v4134, %v4204
        %v4217 = vadd.f32 %v4135, %v4200
        %v4218 = vadd.f32 %v4136, %v4204
        %v4219 = vadd.f32 %v4137, %v4200
        %v4220 = vadd.f32 %v4138, %v4204
        %v4221 = vadd.f32 %v4139, %v4200
        %v4222 = vadd.f32 %v4140, %v4204
        %v4223 = vadd.f32 %v4141, %v4200
        %v4224 = vadd.f32 %v4142, %v4204
        %v4225 = vadd.f32 %v4143, %v4200
        %v4226 = vadd.f32 %v4144, %v4204
        %v4227 = vadd.f32 %v4145, %v4200
        %v4228 = vadd.f32 %v4146, %v4204
        %v4229 = vadd.f32 %v4147, %v4200
        %v4230 = vadd.f32 %v4148, %v4204
        %v4231 = vadd.f32 %v4149, %v4200
        %v4232 = vadd.f32 %v4150, %v4204
        %v4233 = vadd.f32 %v4151, %v4200
        %v4234 = vadd.f32 %v4152, %v4204
        %v4235 = vadd.f32 %v4153, %v4200
        %v4236 = vadd.f32 %v4154, %v4204
        %v4237 = vadd.f32 %v4155, %v4200
        %v4238 = vadd.f32 %v4156, %v4204
        %v4239 = vadd.f32 %v4157, %v4200
        %v4240 = vadd.f32 %v4158, %v4204
        %v4241 = vadd.f32 %v4159, %v4200
        %v4242 = vadd.f32 %v4160, %v4204
        %v4243 = vadd.f32 %v4161, %v4200
        %v4244 = vadd.f32 %v4162, %v4204
        %v4245 = vadd.f32 %v4163, %v4200
        %v4246 = vadd.f32 %v4164, %v4204
        %v4247 = vadd.f32 %v4165, %v4200
        %v4248 = vadd.f32 %v4166, %v4204
        %v4249 = vadd.f32 %v4167, %v4200
        %v4250 = vadd.f32 %v4168, %v4204
        %v4251 = vadd.f32 %v4169, %v4200
        %v4252 = vadd.f32 %v4170, %v4204
        %v4253 = vadd.f32 %v4171, %v4200
        %v4254 = vadd.f32 %v4172, %v4204
        %v4255 = vadd.f32 %v4173, %v4200
        %v4256 = vadd.f32 %v4174, %v4204
        %v4257 = vadd.f32 %v4175, %v4200
        %v4258 = vadd.f32 %v4176, %v4204
        %v4259 = vadd.f32 %v4177, %v4200
        %v4260 = vadd.f32 %v4178, %v4204
        %v4261 = vadd.f32 %v4179, %v4200
        %v4262 = vadd.f32 %v4180, %v4204
        %v4263 = vadd.f32 %v4181, %v4200
        %v4264 = vadd.f32 %v4182, %v4204
        %v4265 = vadd.f32 %v4183, %v4200
        %v4266 = vadd.f32 %v4184, %v4204
        %v4267 = vadd.f32 %v4185, %v4200
        %v4268 = vadd.f32 %v4186, %v4204
        %v4269 = vmax.f32 %v4205, 0.0
        %v4270 = vmax.f32 %v4206, 0.0
        %v4271 = vmax.f32 %v4207, 0.0
        %v4272 = vmax.f32 %v4208, 0.0
        %v4273 = vmax.f32 %v4209, 0.0
        %v4274 = vmax.f32 %v4210, 0.0
        %v4275 = vmax.f32 %v4211, 0.0
        %v4276 = vmax.f32 %v4212, 0.0
        %v4277 = vmax.f32 %v4213, 0.0
        %v4278 = vmax.f32 %v4214, 0.0
        %v4279 = vmax.f32 %v4215, 0.0
        %v4280 = vmax.f32 %v4216, 0.0
        %v4281 = vmax.f32 %v4217, 0.0
        %v4282 = vmax.f32 %v4218, 0.0
        %v4283 = vmax.f32 %v4219, 0.0
        %v4284 = vmax.f32 %v4220, 0.0
        %v4285 = vmax.f32 %v4221, 0.0
        %v4286 = vmax.f32 %v4222, 0.0
        %v4287 = vmax.f32 %v4223, 0.0
        %v4288 = vmax.f32 %v4224, 0.0
        %v4289 = vmax.f32 %v4225, 0.0
        %v4290 = vmax.f32 %v4226, 0.0
        %v4291 = vmax.f32 %v4227, 0.0
        %v4292 = vmax.f32 %v4228, 0.0
        %v4293 = vmax.f32 %v4229, 0.0
        %v4294 = vmax.f32 %v4230, 0.0
        %v4295 = vmax.f32 %v4231, 0.0
        %v4296 = vmax.f32 %v4232, 0.0
        %v4297 = vmax.f32 %v4233, 0.0
        %v4298 = vmax.f32 %v4234, 0.0
        %v4299 = vmax.f32 %v4235, 0.0
        %v4300 = vmax.f32 %v4236, 0.0
        %v4301 = vmax.f32 %v4237, 0.0
        %v4302 = vmax.f32 %v4238, 0.0
        %v4303 = vmax.f32 %v4239, 0.0
        %v4304 = vmax.f32 %v4240, 0.0
        %v4305 = vmax.f32 %v4241, 0.0
        %v4306 = vmax.f32 %v4242, 0.0
        %v4307 = vmax.f32 %v4243, 0.0
        %v4308 = vmax.f32 %v4244, 0.0
        %v4309 = vmax.f32 %v4245, 0.0
        %v4310 = vmax.f32 %v4246, 0.0
        %v4311 = vmax.f32 %v4247, 0.0
        %v4312 = vmax.f32 %v4248, 0.0
        %v4313 = vmax.f32 %v4249, 0.0
        %v4314 = vmax.f32 %v4250, 0.0
        %v4315 = vmax.f32 %v4251, 0.0
        %v4316 = vmax.f32 %v4252, 0.0
        %v4317 = vmax.f32 %v4253, 0.0
        %v4318 = vmax.f32 %v4254, 0.0
        %v4319 = vmax.f32 %v4255, 0.0
        %v4320 = vmax.f32 %v4256, 0.0
        %v4321 = vmax.f32 %v4257, 0.0
        %v4322 = vmax.f32 %v4258, 0.0
        %v4323 = vmax.f32 %v4259, 0.0
        %v4324 = vmax.f32 %v4260, 0.0
        %v4325 = vmax.f32 %v4261, 0.0
        %v4326 = vmax.f32 %v4262, 0.0
        %v4327 = vmax.f32 %v4263, 0.0
        %v4328 = vmax.f32 %v4264, 0.0
        %v4329 = vmax.f32 %v4265, 0.0
        %v4330 = vmax.f32 %v4266, 0.0
        %v4331 = vmax.f32 %v4267, 0.0
        %v4332 = vmax.f32 %v4268, 0.0
        %v4333 = vmax.f32 %v4269, %v4270
        %v4334 = vmax.f32 %v4271, %v4272
        %v4335 = vmax.f32 %v4273, %v4274
        %v4336 = vmax.f32 %v4275, %v4276
        %v4337 = vmax.f32 %v4277, %v4278
        %v4338 = vmax.f32 %v4279, %v4280
        %v4339 = vmax.f32 %v4281, %v4282
        %v4340 = vmax.f32 %v4283, %v4284
        %v4341 = vmax.f32 %v4285, %v4286
        %v4342 = vmax.f32 %v4287, %v4288
        %v4343 = vmax.f32 %v4289, %v4290
        %v4344 = vmax.f32 %v4291, %v4292
        %v4345 = vmax.f32 %v4293, %v4294
        %v4346 = vmax.f32 %v4295, %v4296
        %v4347 = vmax.f32 %v4297, %v4298
        %v4348 = vmax.f32 %v4299, %v4300
        %v4349 = vmax.f32 %v4301, %v4302
        %v4350 = vmax.f32 %v4303, %v4304
        %v4351 = vmax.f32 %v4305, %v4306
        %v4352 = vmax.f32 %v4307, %v4308
        %v4353 = vmax.f32 %v4309, %v4310
        %v4354 = vmax.f32 %v4311, %v4312
        %v4355 = vmax.f32 %v4313, %v4314
        %v4356 = vmax.f32 %v4315, %v4316
        %v4357 = vmax.f32 %v4317, %v4318
        %v4358 = vmax.f32 %v4319, %v4320
        %v4359 = vmax.f32 %v4321, %v4322
        %v4360 = vmax.f32 %v4323, %v4324
        %v4361 = vmax.f32 %v4325, %v4326
        %v4362 = vmax.f32 %v4327, %v4328
        %v4363 = vmax.f32 %v4329, %v4330
        %v4364 = vmax.f32 %v4331, %v4332
        %4365 = vst [vmem:[#allocation3] sm:$0xff] %v4333
        %4366 = vst [vmem:[#allocation3 + $0x8] sm:$0xff] %v4334
        %4367 = vst [vmem:[#allocation3 + $0x10] sm:$0xff] %v4335
        %4368 = vst [vmem:[#allocation3 + $0x18] sm:$0xff] %v4336
        %4369 = vst [vmem:[#allocation3 + $0x20] sm:$0xff] %v4337
        %4370 = vst [vmem:[#allocation3 + $0x28] sm:$0xff] %v4338
        %4371 = vst [vmem:[#allocation3 + $0x30] sm:$0xff] %v4339
        %4372 = vst [vmem:[#allocation3 + $0x38] sm:$0xff] %v4340
        %4373 = vst [vmem:[#allocation3 + $0x40] sm:$0xff] %v4341
        %4374 = vst [vmem:[#allocation3 + $0x48] sm:$0xff] %v4342
        %4375 = vst [vmem:[#allocation3 + $0x50] sm:$0xff] %v4343
        %4376 = vst [vmem:[#allocation3 + $0x58] sm:$0xff] %v4344
        %4377 = vst [vmem:[#allocation3 + $0x60] sm:$0xff] %v4345
        %4378 = vst [vmem:[#allocation3 + $0x68] sm:$0xff] %v4346
        %4379 = vst [vmem:[#allocation3 + $0x70] sm:$0xff] %v4347
        %4380 = vst [vmem:[#allocation3 + $0x78] sm:$0xff] %v4348
        %4381 = vst [vmem:[#allocation3 + $0x80] sm:$0xff] %v4349
        %4382 = vst [vmem:[#allocation3 + $0x88] sm:$0xff] %v4350
        %4383 = vst [vmem:[#allocation3 + $0x90] sm:$0xff] %v4351
        %4384 = vst [vmem:[#allocation3 + $0x98] sm:$0xff] %v4352
        %4385 = vst [vmem:[#allocation3 + $0xa0] sm:$0xff] %v4353
        %4386 = vst [vmem:[#allocation3 + $0xa8] sm:$0xff] %v4354
        %4387 = vst [vmem:[#allocation3 + $0xb0] sm:$0xff] %v4355
        %4388 = vst [vmem:[#allocation3 + $0xb8] sm:$0xff] %v4356
        %4389 = vst [vmem:[#allocation3 + $0xc0] sm:$0xff] %v4357
        %4390 = vst [vmem:[#allocation3 + $0xc8] sm:$0xff] %v4358
        %4391 = vst [vmem:[#allocation3 + $0xd0] sm:$0xff] %v4359
        %4392 = vst [vmem:[#allocation3 + $0xd8] sm:$0xff] %v4360
        %4393 = vst [vmem:[#allocation3 + $0xe0] sm:$0xff] %v4361
        %4394 = vst [vmem:[#allocation3 + $0xe8] sm:$0xff] %v4362
        %4395 = vst [vmem:[#allocation3 + $0xf0] sm:$0xff] %v4363
        %4396 = vst [vmem:[#allocation3 + $0xf8] sm:$0xff] %v4364
        %v4397 = vld [vmem:[#allocation3] ss:$2 sm:$0xff]
        %s4398 = scalar_lea.vmem [#allocation3], 16
        %v4399 = vld [vmem:[%s4398] ss:$2 sm:$0xff]
        %s4400 = scalar_lea.vmem [#allocation3], 32
        %v4401 = vld [vmem:[%s4400] ss:$2 sm:$0xff]
        %s4402 = scalar_lea.vmem [#allocation3], 48
        %v4403 = vld [vmem:[%s4402] ss:$2 sm:$0xff]
        %s4404 = scalar_lea.vmem [#allocation3], 64
        %v4405 = vld [vmem:[%s4404] ss:$2 sm:$0xff]
        %s4406 = scalar_lea.vmem [#allocation3], 80
        %v4407 = vld [vmem:[%s4406] ss:$2 sm:$0xff]
        %s4408 = scalar_lea.vmem [#allocation3], 96
        %v4409 = vld [vmem:[%s4408] ss:$2 sm:$0xff]
        %s4410 = scalar_lea.vmem [#allocation3], 112
        %v4411 = vld [vmem:[%s4410] ss:$2 sm:$0xff]
        %s4412 = scalar_lea.vmem [#allocation3], 128
        %v4413 = vld [vmem:[%s4412] ss:$2 sm:$0xff]
        %s4414 = scalar_lea.vmem [#allocation3], 144
        %v4415 = vld [vmem:[%s4414] ss:$2 sm:$0xff]
        %s4416 = scalar_lea.vmem [#allocation3], 160
        %v4417 = vld [vmem:[%s4416] ss:$2 sm:$0xff]
        %s4418 = scalar_lea.vmem [#allocation3], 176
        %v4419 = vld [vmem:[%s4418] ss:$2 sm:$0xff]
        %s4420 = scalar_lea.vmem [#allocation3], 192
        %v4421 = vld [vmem:[%s4420] ss:$2 sm:$0xff]
        %s4422 = scalar_lea.vmem [#allocation3], 208
        %v4423 = vld [vmem:[%s4422] ss:$2 sm:$0xff]
        %s4424 = scalar_lea.vmem [#allocation3], 224
        %v4425 = vld [vmem:[%s4424] ss:$2 sm:$0xff]
        %s4426 = scalar_lea.vmem [#allocation3], 240
        %v4427 = vld [vmem:[%s4426] ss:$2 sm:$0xff]
        %v4428 = vld [vmem:[%s3029] ss:$2 sm:$0xff]
        %v4429 = vld [vmem:[%s3031] ss:$2 sm:$0xff]
        %v4430 = vld [vmem:[%s3033] ss:$2 sm:$0xff]
        %v4431 = vld [vmem:[%s3035] ss:$2 sm:$0xff]
        %v4432 = vld [vmem:[%s3037] ss:$2 sm:$0xff]
        %v4433 = vld [vmem:[%s3039] ss:$2 sm:$0xff]
        %v4434 = vld [vmem:[%s3041] ss:$2 sm:$0xff]
        %v4435 = vld [vmem:[%s3043] ss:$2 sm:$0xff]
        %v4436 = vld [vmem:[%s3045] ss:$2 sm:$0xff]
        %v4437 = vld [vmem:[%s3047] ss:$2 sm:$0xff]
        %v4438 = vld [vmem:[%s3049] ss:$2 sm:$0xff]
        %v4439 = vld [vmem:[%s3051] ss:$2 sm:$0xff]
        %v4440 = vld [vmem:[%s3053] ss:$2 sm:$0xff]
        %v4441 = vld [vmem:[%s3055] ss:$2 sm:$0xff]
        %v4442 = vld [vmem:[%s3057] ss:$2 sm:$0xff]
        %v4443 = vld [vmem:[%s3059] ss:$2 sm:$0xff]
        %v4444 = vmax.f32 %v4397, %v4428
        %v4445 = vmax.f32 %v4399, %v4429
        %v4446 = vmax.f32 %v4401, %v4430
        %v4447 = vmax.f32 %v4403, %v4431
        %v4448 = vmax.f32 %v4405, %v4432
        %v4449 = vmax.f32 %v4407, %v4433
        %v4450 = vmax.f32 %v4409, %v4434
        %v4451 = vmax.f32 %v4411, %v4435
        %v4452 = vmax.f32 %v4413, %v4436
        %v4453 = vmax.f32 %v4415, %v4437
        %v4454 = vmax.f32 %v4417, %v4438
        %v4455 = vmax.f32 %v4419, %v4439
        %v4456 = vmax.f32 %v4421, %v4440
        %v4457 = vmax.f32 %v4423, %v4441
        %v4458 = vmax.f32 %v4425, %v4442
        %v4459 = vmax.f32 %v4427, %v4443
        %4460 = vst [vmem:[#allocation2 + $0x8] sm:$0xff] %v4444
        %4461 = vst [vmem:[#allocation2 + $0x10] sm:$0xff] %v4445
        %4462 = vst [vmem:[#allocation2 + $0x18] sm:$0xff] %v4446
        %4463 = vst [vmem:[#allocation2 + $0x20] sm:$0xff] %v4447
        %4464 = vst [vmem:[#allocation2 + $0x28] sm:$0xff] %v4448
        %4465 = vst [vmem:[#allocation2 + $0x30] sm:$0xff] %v4449
        %4466 = vst [vmem:[#allocation2 + $0x38] sm:$0xff] %v4450
        %4467 = vst [vmem:[#allocation2 + $0x40] sm:$0xff] %v4451
        %4468 = vst [vmem:[#allocation2 + $0x48] sm:$0xff] %v4452
        %4469 = vst [vmem:[#allocation2 + $0x50] sm:$0xff] %v4453
        %4470 = vst [vmem:[#allocation2 + $0x58] sm:$0xff] %v4454
        %4471 = vst [vmem:[#allocation2 + $0x60] sm:$0xff] %v4455
        %4472 = vst [vmem:[#allocation2 + $0x68] sm:$0xff] %v4456
        %4473 = vst [vmem:[#allocation2 + $0x70] sm:$0xff] %v4457
        %4474 = vst [vmem:[#allocation2 + $0x78] sm:$0xff] %v4458
        %4475 = vst [vmem:[#allocation2 + $0x80] sm:$0xff] %v4459
        %v4476 = vld [vmem:[#allocation2 + $0x7] sm:$0xff]
        %v4477 = vld [vmem:[#allocation2 + $0xf] sm:$0xff]
        %v4478 = vld [vmem:[#allocation2 + $0x17] sm:$0xff]
        %v4479 = vld [vmem:[#allocation2 + $0x1f] sm:$0xff]
        %v4480 = vld [vmem:[#allocation2 + $0x27] sm:$0xff]
        %v4481 = vld [vmem:[#allocation2 + $0x2f] sm:$0xff]
        %v4482 = vld [vmem:[#allocation2 + $0x37] sm:$0xff]
        %v4483 = vld [vmem:[#allocation2 + $0x3f] sm:$0xff]
        %v4484 = vld [vmem:[#allocation2 + $0x47] sm:$0xff]
        %v4485 = vld [vmem:[#allocation2 + $0x4f] sm:$0xff]
        %v4486 = vld [vmem:[#allocation2 + $0x57] sm:$0xff]
        %v4487 = vld [vmem:[#allocation2 + $0x5f] sm:$0xff]
        %v4488 = vld [vmem:[#allocation2 + $0x67] sm:$0xff]
        %v4489 = vld [vmem:[#allocation2 + $0x6f] sm:$0xff]
        %v4490 = vld [vmem:[#allocation2 + $0x77] sm:$0xff]
        %v4491 = vld [vmem:[#allocation2 + $0x7f] sm:$0xff]
        %v4492 = vld [vmem:[#allocation2 + $0x9] sm:$0xff]
        %v4493 = vld [vmem:[#allocation2 + $0x11] sm:$0xff]
        %v4494 = vld [vmem:[#allocation2 + $0x19] sm:$0xff]
        %v4495 = vld [vmem:[#allocation2 + $0x21] sm:$0xff]
        %v4496 = vld [vmem:[#allocation2 + $0x29] sm:$0xff]
        %v4497 = vld [vmem:[#allocation2 + $0x31] sm:$0xff]
        %v4498 = vld [vmem:[#allocation2 + $0x39] sm:$0xff]
        %v4499 = vld [vmem:[#allocation2 + $0x41] sm:$0xff]
        %v4500 = vld [vmem:[#allocation2 + $0x49] sm:$0xff]
        %v4501 = vld [vmem:[#allocation2 + $0x51] sm:$0xff]
        %v4502 = vld [vmem:[#allocation2 + $0x59] sm:$0xff]
        %v4503 = vld [vmem:[#allocation2 + $0x61] sm:$0xff]
        %v4504 = vld [vmem:[#allocation2 + $0x69] sm:$0xff]
        %v4505 = vld [vmem:[#allocation2 + $0x71] sm:$0xff]
        %v4506 = vld [vmem:[#allocation2 + $0x79] sm:$0xff]
        %v4507 = vld [vmem:[#allocation2 + $0x81] sm:$0xff]
        %v4508 = vand.u32 %v942, 31
        %v4509 = vand.u32 %v943, 31
        %v4510 = vand.u32 %v944, 31
        %v4511 = vand.u32 %v945, 31
        %v4512 = vand.u32 %v946, 31
        %v4513 = vand.u32 %v947, 31
        %v4514 = vand.u32 %v948, 31
        %v4515 = vand.u32 %v949, 31
        %v4516 = vand.u32 %v950, 31
        %v4517 = vand.u32 %v951, 31
        %v4518 = vand.u32 %v952, 31
        %v4519 = vand.u32 %v953, 31
        %v4520 = vand.u32 %v954, 31
        %v4521 = vand.u32 %v955, 31
        %v4522 = vand.u32 %v956, 31
        %v4523 = vand.u32 %v957, 31
        %vm4524 = vcmp.eq.s32.totalorder %v4508, 0
        %vm4525 = vcmp.eq.s32.totalorder %v4509, 0
        %vm4526 = vcmp.eq.s32.totalorder %v4510, 0
        %vm4527 = vcmp.eq.s32.totalorder %v4511, 0
        %vm4528 = vcmp.eq.s32.totalorder %v4512, 0
        %vm4529 = vcmp.eq.s32.totalorder %v4513, 0
        %vm4530 = vcmp.eq.s32.totalorder %v4514, 0
        %vm4531 = vcmp.eq.s32.totalorder %v4515, 0
        %vm4532 = vcmp.eq.s32.totalorder %v4516, 0
        %vm4533 = vcmp.eq.s32.totalorder %v4517, 0
        %vm4534 = vcmp.eq.s32.totalorder %v4518, 0
        %vm4535 = vcmp.eq.s32.totalorder %v4519, 0
        %vm4536 = vcmp.eq.s32.totalorder %v4520, 0
        %vm4537 = vcmp.eq.s32.totalorder %v4521, 0
        %vm4538 = vcmp.eq.s32.totalorder %v4522, 0
        %vm4539 = vcmp.eq.s32.totalorder %v4523, 0
        %v4540 = vsel %vm4524, 0.0, %v4476
        %v4541 = vsel %vm4525, 0.0, %v4477
        %v4542 = vsel %vm4526, 0.0, %v4478
        %v4543 = vsel %vm4527, 0.0, %v4479
        %v4544 = vsel %vm4528, 0.0, %v4480
        %v4545 = vsel %vm4529, 0.0, %v4481
        %v4546 = vsel %vm4530, 0.0, %v4482
        %v4547 = vsel %vm4531, 0.0, %v4483
        %v4548 = vsel %vm4532, 0.0, %v4484
        %v4549 = vsel %vm4533, 0.0, %v4485
        %v4550 = vsel %vm4534, 0.0, %v4486
        %v4551 = vsel %vm4535, 0.0, %v4487
        %v4552 = vsel %vm4536, 0.0, %v4488
        %v4553 = vsel %vm4537, 0.0, %v4489
        %v4554 = vsel %vm4538, 0.0, %v4490
        %v4555 = vsel %vm4539, 0.0, %v4491
        %vm4556 = vcmp.eq.s32.totalorder %v4508, 31
        %vm4557 = vcmp.eq.s32.totalorder %v4509, 31
        %vm4558 = vcmp.eq.s32.totalorder %v4510, 31
        %vm4559 = vcmp.eq.s32.totalorder %v4511, 31
        %vm4560 = vcmp.eq.s32.totalorder %v4512, 31
        %vm4561 = vcmp.eq.s32.totalorder %v4513, 31
        %vm4562 = vcmp.eq.s32.totalorder %v4514, 31
        %vm4563 = vcmp.eq.s32.totalorder %v4515, 31
        %vm4564 = vcmp.eq.s32.totalorder %v4516, 31
        %vm4565 = vcmp.eq.s32.totalorder %v4517, 31
        %vm4566 = vcmp.eq.s32.totalorder %v4518, 31
        %vm4567 = vcmp.eq.s32.totalorder %v4519, 31
        %vm4568 = vcmp.eq.s32.totalorder %v4520, 31
        %vm4569 = vcmp.eq.s32.totalorder %v4521, 31
        %vm4570 = vcmp.eq.s32.totalorder %v4522, 31
        %vm4571 = vcmp.eq.s32.totalorder %v4523, 31
        %v4572 = vsel %vm4556, 0.0, %v4492
        %v4573 = vsel %vm4557, 0.0, %v4493
        %v4574 = vsel %vm4558, 0.0, %v4494
        %v4575 = vsel %vm4559, 0.0, %v4495
        %v4576 = vsel %vm4560, 0.0, %v4496
        %v4577 = vsel %vm4561, 0.0, %v4497
        %v4578 = vsel %vm4562, 0.0, %v4498
        %v4579 = vsel %vm4563, 0.0, %v4499
        %v4580 = vsel %vm4564, 0.0, %v4500
        %v4581 = vsel %vm4565, 0.0, %v4501
        %v4582 = vsel %vm4566, 0.0, %v4502
        %v4583 = vsel %vm4567, 0.0, %v4503
        %v4584 = vsel %vm4568, 0.0, %v4504
        %v4585 = vsel %vm4569, 0.0, %v4505
        %v4586 = vsel %vm4570, 0.0, %v4506
        %v4587 = vsel %vm4571, 0.0, %v4507
        %v4588 = vpack.c.bf16 %v4541, %v4540
        %v4589 = vpack.c.bf16 %v4445, %v4444
        %v4590 = vpack.c.bf16 %v4573, %v4572
        %v4591 = vpack.c.bf16 %v4543, %v4542
        %v4592 = vpack.c.bf16 %v4447, %v4446
        %v4593 = vpack.c.bf16 %v4575, %v4574
        %v4594 = vpack.c.bf16 %v4545, %v4544
        %v4595 = vpack.c.bf16 %v4449, %v4448
        %v4596 = vpack.c.bf16 %v4577, %v4576
        %v4597 = vpack.c.bf16 %v4547, %v4546
        %v4598 = vpack.c.bf16 %v4451, %v4450
        %v4599 = vpack.c.bf16 %v4579, %v4578
        %v4600 = vpack.c.bf16 %v4549, %v4548
        %v4601 = vpack.c.bf16 %v4453, %v4452
        %v4602 = vpack.c.bf16 %v4581, %v4580
        %v4603 = vpack.c.bf16 %v4551, %v4550
        %v4604 = vpack.c.bf16 %v4455, %v4454
        %v4605 = vpack.c.bf16 %v4583, %v4582
        %v4606 = vpack.c.bf16 %v4553, %v4552
        %v4607 = vpack.c.bf16 %v4457, %v4456
        %v4608 = vpack.c.bf16 %v4585, %v4584
        %v4609 = vpack.c.bf16 %v4555, %v4554
        %v4610 = vpack.c.bf16 %v4459, %v4458
        %v4611 = vpack.c.bf16 %v4587, %v4586
        %v4612 = vld [vmem:[#allocation10] sm:$0xff]
        %v4613 = vld [vmem:[#allocation10 + $0x8] sm:$0xff]
        %v4614 = vld [vmem:[#allocation10 + $0x10] sm:$0xff]
        %v4615 = vld [vmem:[#allocation10 + $0x18] sm:$0xff]
        %v4616 = vld [vmem:[#allocation10 + $0x20] sm:$0xff]
        %v4617 = vld [vmem:[#allocation10 + $0x28] sm:$0xff]
        %v4618 = vld [vmem:[#allocation10 + $0x30] sm:$0xff]
        %v4619 = vld [vmem:[#allocation10 + $0x38] sm:$0xff]
        %v4620 = vld [vmem:[#allocation10 + $0x40] sm:$0xff]
        %v4621 = vld [vmem:[#allocation10 + $0x48] sm:$0xff]
        %v4622 = vld [vmem:[#allocation10 + $0x50] sm:$0xff]
        %v4623 = vld [vmem:[#allocation10 + $0x58] sm:$0xff]
        %v4624 = vld [vmem:[#allocation10 + $0x60] sm:$0xff]
        %v4625 = vld [vmem:[#allocation10 + $0x68] sm:$0xff]
        %v4626 = vld [vmem:[#allocation10 + $0x70] sm:$0xff]
        %v4627 = vld [vmem:[#allocation10 + $0x78] sm:$0xff]
        %v4628 = vld [vmem:[#allocation10 + $0x80] sm:$0xff]
        %v4629 = vld [vmem:[#allocation10 + $0x88] sm:$0xff]
        %v4630 = vld [vmem:[#allocation10 + $0x90] sm:$0xff]
        %v4631 = vld [vmem:[#allocation10 + $0x98] sm:$0xff]
        %v4632 = vld [vmem:[#allocation10 + $0xa0] sm:$0xff]
        %v4633 = vld [vmem:[#allocation10 + $0xa8] sm:$0xff]
        %v4634 = vld [vmem:[#allocation10 + $0xb0] sm:$0xff]
        %v4635 = vld [vmem:[#allocation10 + $0xb8] sm:$0xff]
        %v4636 = vld [vmem:[#allocation10 + $0xc0] sm:$0xff]
        %v4637 = vld [vmem:[#allocation10 + $0xc8] sm:$0xff]
        %v4638 = vld [vmem:[#allocation10 + $0xd0] sm:$0xff]
        %v4639 = vld [vmem:[#allocation10 + $0xd8] sm:$0xff]
        %v4640 = vld [vmem:[#allocation10 + $0xe0] sm:$0xff]
        %v4641 = vld [vmem:[#allocation10 + $0xe8] sm:$0xff]
        %v4642 = vld [vmem:[#allocation10 + $0xf0] sm:$0xff]
        %v4643 = vld [vmem:[#allocation10 + $0xf8] sm:$0xff]
        %v4644 = vld [vmem:[#allocation10 + $0x100] sm:$0xff]
        %v4645 = vld [vmem:[#allocation10 + $0x108] sm:$0xff]
        %v4646 = vld [vmem:[#allocation10 + $0x110] sm:$0xff]
        %v4647 = vld [vmem:[#allocation10 + $0x118] sm:$0xff]
        %v4648 = vld [vmem:[#allocation10 + $0x120] sm:$0xff]
        %v4649 = vld [vmem:[#allocation10 + $0x128] sm:$0xff]
        %v4650 = vld [vmem:[#allocation10 + $0x130] sm:$0xff]
        %v4651 = vld [vmem:[#allocation10 + $0x138] sm:$0xff]
        %v4652 = vld [vmem:[#allocation10 + $0x140] sm:$0xff]
        %v4653 = vld [vmem:[#allocation10 + $0x148] sm:$0xff]
        %v4654 = vld [vmem:[#allocation10 + $0x150] sm:$0xff]
        %v4655 = vld [vmem:[#allocation10 + $0x158] sm:$0xff]
        %v4656 = vld [vmem:[#allocation10 + $0x160] sm:$0xff]
        %v4657 = vld [vmem:[#allocation10 + $0x168] sm:$0xff]
        %v4658 = vld [vmem:[#allocation10 + $0x170] sm:$0xff]
        %v4659 = vld [vmem:[#allocation10 + $0x178] sm:$0xff]
        %v4708 = vunpack.c.l.b16 %v4612
        %v4709 = vunpack.c.h.b16 %v4612
        %v4710 = vunpack.c.l.b16 %v4613
        %v4711 = vunpack.c.h.b16 %v4613
        %v4712 = vunpack.c.l.b16 %v4614
        %v4713 = vunpack.c.h.b16 %v4614
        %v4714 = vunpack.c.l.b16 %v4615
        %v4715 = vunpack.c.h.b16 %v4615
        %v4716 = vunpack.c.l.b16 %v4616
        %v4717 = vunpack.c.h.b16 %v4616
        %v4718 = vunpack.c.l.b16 %v4617
        %v4719 = vunpack.c.h.b16 %v4617
        %v4720 = vunpack.c.l.b16 %v4618
        %v4721 = vunpack.c.h.b16 %v4618
        %v4722 = vunpack.c.l.b16 %v4619
        %v4723 = vunpack.c.h.b16 %v4619
        %v4724 = vunpack.c.l.b16 %v4620
        %v4725 = vunpack.c.h.b16 %v4620
        %v4726 = vunpack.c.l.b16 %v4621
        %v4727 = vunpack.c.h.b16 %v4621
        %v4728 = vunpack.c.l.b16 %v4622
        %v4729 = vunpack.c.h.b16 %v4622
        %v4730 = vunpack.c.l.b16 %v4623
        %v4731 = vunpack.c.h.b16 %v4623
        %v4732 = vunpack.c.l.b16 %v4624
        %v4733 = vunpack.c.h.b16 %v4624
        %v4734 = vunpack.c.l.b16 %v4625
        %v4735 = vunpack.c.h.b16 %v4625
        %v4736 = vunpack.c.l.b16 %v4626
        %v4737 = vunpack.c.h.b16 %v4626
        %v4738 = vunpack.c.l.b16 %v4627
        %v4739 = vunpack.c.h.b16 %v4627
        %v4740 = vunpack.c.l.b16 %v4628
        %v4741 = vunpack.c.h.b16 %v4628
        %v4742 = vunpack.c.l.b16 %v4629
        %v4743 = vunpack.c.h.b16 %v4629
        %v4744 = vunpack.c.l.b16 %v4630
        %v4745 = vunpack.c.h.b16 %v4630
        %v4746 = vunpack.c.l.b16 %v4631
        %v4747 = vunpack.c.h.b16 %v4631
        %v4748 = vunpack.c.l.b16 %v4632
        %v4749 = vunpack.c.h.b16 %v4632
        %v4750 = vunpack.c.l.b16 %v4633
        %v4751 = vunpack.c.h.b16 %v4633
        %v4752 = vunpack.c.l.b16 %v4634
        %v4753 = vunpack.c.h.b16 %v4634
        %v4754 = vunpack.c.l.b16 %v4635
        %v4755 = vunpack.c.h.b16 %v4635
        %v4756 = vunpack.c.l.b16 %v4636
        %v4757 = vunpack.c.h.b16 %v4636
        %v4758 = vunpack.c.l.b16 %v4637
        %v4759 = vunpack.c.h.b16 %v4637
        %v4760 = vunpack.c.l.b16 %v4638
        %v4761 = vunpack.c.h.b16 %v4638
        %v4762 = vunpack.c.l.b16 %v4639
        %v4763 = vunpack.c.h.b16 %v4639
        %v4764 = vunpack.c.l.b16 %v4640
        %v4765 = vunpack.c.h.b16 %v4640
        %v4766 = vunpack.c.l.b16 %v4641
        %v4767 = vunpack.c.h.b16 %v4641
        %v4768 = vunpack.c.l.b16 %v4642
        %v4769 = vunpack.c.h.b16 %v4642
        %v4770 = vunpack.c.l.b16 %v4643
        %v4771 = vunpack.c.h.b16 %v4643
        %v4772 = vunpack.c.l.b16 %v4644
        %v4773 = vunpack.c.h.b16 %v4644
        %v4774 = vunpack.c.l.b16 %v4645
        %v4775 = vunpack.c.h.b16 %v4645
        %v4776 = vunpack.c.l.b16 %v4646
        %v4777 = vunpack.c.h.b16 %v4646
        %v4778 = vunpack.c.l.b16 %v4647
        %v4779 = vunpack.c.h.b16 %v4647
        %v4780 = vunpack.c.l.b16 %v4648
        %v4781 = vunpack.c.h.b16 %v4648
        %v4782 = vunpack.c.l.b16 %v4649
        %v4783 = vunpack.c.h.b16 %v4649
        %v4784 = vunpack.c.l.b16 %v4650
        %v4785 = vunpack.c.h.b16 %v4650
        %v4786 = vunpack.c.l.b16 %v4651
        %v4787 = vunpack.c.h.b16 %v4651
        %v4788 = vunpack.c.l.b16 %v4652
        %v4789 = vunpack.c.h.b16 %v4652
        %v4790 = vunpack.c.l.b16 %v4653
        %v4791 = vunpack.c.h.b16 %v4653
        %v4792 = vunpack.c.l.b16 %v4654
        %v4793 = vunpack.c.h.b16 %v4654
        %v4794 = vunpack.c.l.b16 %v4655
        %v4795 = vunpack.c.h.b16 %v4655
        %v4796 = vunpack.c.l.b16 %v4656
        %v4797 = vunpack.c.h.b16 %v4656
        %v4798 = vunpack.c.l.b16 %v4657
        %v4799 = vunpack.c.h.b16 %v4657
        %v4800 = vunpack.c.l.b16 %v4658
        %v4801 = vunpack.c.h.b16 %v4658
        %v4802 = vunpack.c.l.b16 %v4659
        %v4803 = vunpack.c.h.b16 %v4659
        %v4804 = vpack.c.b16 %v4710, %v4708
        %v4805 = vpack.c.b16 %v4711, %v4709
        %v4806 = vpack.c.b16 %v4714, %v4712
        %v4807 = vpack.c.b16 %v4715, %v4713
        %v4808 = vpack.c.b16 %v4718, %v4716
        %v4809 = vpack.c.b16 %v4719, %v4717
        %v4810 = vpack.c.b16 %v4722, %v4720
        %v4811 = vpack.c.b16 %v4723, %v4721
        %v4812 = vpack.c.b16 %v4726, %v4724
        %v4813 = vpack.c.b16 %v4727, %v4725
        %v4814 = vpack.c.b16 %v4730, %v4728
        %v4815 = vpack.c.b16 %v4731, %v4729
        %v4816 = vpack.c.b16 %v4734, %v4732
        %v4817 = vpack.c.b16 %v4735, %v4733
        %v4818 = vpack.c.b16 %v4738, %v4736
        %v4819 = vpack.c.b16 %v4739, %v4737
        %v4820 = vpack.c.b16 %v4742, %v4740
        %v4821 = vpack.c.b16 %v4743, %v4741
        %v4822 = vpack.c.b16 %v4746, %v4744
        %v4823 = vpack.c.b16 %v4747, %v4745
        %v4824 = vpack.c.b16 %v4750, %v4748
        %v4825 = vpack.c.b16 %v4751, %v4749
        %v4826 = vpack.c.b16 %v4754, %v4752
        %v4827 = vpack.c.b16 %v4755, %v4753
        %v4828 = vpack.c.b16 %v4758, %v4756
        %v4829 = vpack.c.b16 %v4759, %v4757
        %v4830 = vpack.c.b16 %v4762, %v4760
        %v4831 = vpack.c.b16 %v4763, %v4761
        %v4832 = vpack.c.b16 %v4766, %v4764
        %v4833 = vpack.c.b16 %v4767, %v4765
        %v4834 = vpack.c.b16 %v4770, %v4768
        %v4835 = vpack.c.b16 %v4771, %v4769
        %v4836 = vpack.c.b16 %v4774, %v4772
        %v4837 = vpack.c.b16 %v4775, %v4773
        %v4838 = vpack.c.b16 %v4778, %v4776
        %v4839 = vpack.c.b16 %v4779, %v4777
        %v4840 = vpack.c.b16 %v4782, %v4780
        %v4841 = vpack.c.b16 %v4783, %v4781
        %v4842 = vpack.c.b16 %v4786, %v4784
        %v4843 = vpack.c.b16 %v4787, %v4785
        %v4844 = vpack.c.b16 %v4790, %v4788
        %v4845 = vpack.c.b16 %v4791, %v4789
        %v4846 = vpack.c.b16 %v4794, %v4792
        %v4847 = vpack.c.b16 %v4795, %v4793
        %v4848 = vpack.c.b16 %v4798, %v4796
        %v4849 = vpack.c.b16 %v4799, %v4797
        %v4850 = vpack.c.b16 %v4802, %v4800
        %v4851 = vpack.c.b16 %v4803, %v4801
        %4900 = vmatprep.subr.bf16.mxu0 %v4805
        %4901 = vmatpush1.bf16.msra.mxu0 %v4804
        %4902 = vmatprep.subr.bf16.mxu0 %v4807
        %4903 = vmatpush1.bf16.msra.mxu0 %v4806
        %4904 = vmatprep.subr.bf16.mxu0 %v4809
        %4905 = vmatpush1.bf16.msra.mxu0 %v4808
        %4906 = vmatprep.subr.bf16.mxu0 %v4811
        %4907 = vmatpush1.bf16.msra.mxu0 %v4810
        %4908 = vmatprep.subr.bf16.mxu0 %v4813
        %4909 = vmatpush1.bf16.msra.mxu0 %v4812
        %4910 = vmatprep.subr.bf16.mxu0 %v4815
        %4911 = vmatpush1.bf16.msra.mxu0 %v4814
        %4912 = vmatprep.subr.bf16.mxu0 %v4817
        %4913 = vmatpush1.bf16.msra.mxu0 %v4816
        %4914 = vmatprep.subr.bf16.mxu0 %v4819
        %4915 = vmatpush1.bf16.msra.mxu0 %v4818
        %4916 = vmatprep.subr.bf16.mxu0 %v4821
        %4917 = vmatpush1.bf16.msra.mxu0 %v4820
        %4918 = vmatprep.subr.bf16.mxu0 %v4823
        %4919 = vmatpush1.bf16.msra.mxu0 %v4822
        %4920 = vmatprep.subr.bf16.mxu0 %v4825
        %4921 = vmatpush1.bf16.msra.mxu0 %v4824
        %4922 = vmatprep.subr.bf16.mxu0 %v4827
        %4923 = vmatpush1.bf16.msra.mxu0 %v4826
        %4924 = vmatprep.subr.bf16.mxu0 %v4829
        %4925 = vmatpush1.bf16.msra.mxu0 %v4828
        %4926 = vmatprep.subr.bf16.mxu0 %v4831
        %4927 = vmatpush1.bf16.msra.mxu0 %v4830
        %4928 = vmatprep.subr.bf16.mxu0 %v4833
        %4929 = vmatpush1.bf16.msra.mxu0 %v4832
        %4930 = vmatprep.subr.bf16.mxu0 %v4835
        %4931 = vmatpush1.bf16.msra.mxu0 %v4834
        %4932 = vmatprep.mubr.bf16.mxu0 %v4589
        %4933 = vmatmul.mubr.bf16.gmra.mrb[0].mxu0 %v4588
        %v4934 = vpop.f32.mrb[0].mxu0
        %v4935 = vadd.f32 0.0, %v4934
        %v4936 = vpop.f32.mrb[0].mxu0
        %v4937 = vadd.f32 0.0, %v4936
        %v4938 = vpop.f32.mrb[0].mxu0
        %v4939 = vadd.f32 0.0, %v4938
        %v4940 = vpop.f32.mrb[0].mxu0
        %v4941 = vadd.f32 0.0, %v4940
        %4942 = vmatprep.mubr.bf16.mxu0 %v4592
        %4943 = vmatmul.mubr.bf16.gmra.mrb[0].mxu0 %v4591
        %v4944 = vpop.f32.mrb[0].mxu0
        %v4945 = vadd.f32 0.0, %v4944
        %v4946 = vpop.f32.mrb[0].mxu0
        %v4947 = vadd.f32 0.0, %v4946
        %v4948 = vpop.f32.mrb[0].mxu0
        %v4949 = vadd.f32 0.0, %v4948
        %v4950 = vpop.f32.mrb[0].mxu0
        %v4951 = vadd.f32 0.0, %v4950
        %4952 = vmatprep.mubr.bf16.mxu0 %v4595
        %4953 = vmatmul.mubr.bf16.gmra.mrb[0].mxu0 %v4594
        %v4954 = vpop.f32.mrb[0].mxu0
        %v4955 = vadd.f32 0.0, %v4954
        %v4956 = vpop.f32.mrb[0].mxu0
        %v4957 = vadd.f32 0.0, %v4956
        %v4958 = vpop.f32.mrb[0].mxu0
        %v4959 = vadd.f32 0.0, %v4958
        %v4960 = vpop.f32.mrb[0].mxu0
        %v4961 = vadd.f32 0.0, %v4960
        %4962 = vmatprep.mubr.bf16.mxu0 %v4598
        %4963 = vmatmul.mubr.bf16.gmra.mrb[0].mxu0 %v4597
        %v4964 = vpop.f32.mrb[0].mxu0
        %v4965 = vadd.f32 0.0, %v4964
        %v4966 = vpop.f32.mrb[0].mxu0
        %v4967 = vadd.f32 0.0, %v4966
        %v4968 = vpop.f32.mrb[0].mxu0
        %v4969 = vadd.f32 0.0, %v4968
        %v4970 = vpop.f32.mrb[0].mxu0
        %v4971 = vadd.f32 0.0, %v4970
        %4972 = vmatprep.mubr.bf16.mxu0 %v4601
        %4973 = vmatmul.mubr.bf16.gmra.mrb[0].mxu0 %v4600
        %v4974 = vpop.f32.mrb[0].mxu0
        %v4975 = vadd.f32 0.0, %v4974
        %v4976 = vpop.f32.mrb[0].mxu0
        %v4977 = vadd.f32 0.0, %v4976
        %v4978 = vpop.f32.mrb[0].mxu0
        %v4979 = vadd.f32 0.0, %v4978
        %v4980 = vpop.f32.mrb[0].mxu0
        %v4981 = vadd.f32 0.0, %v4980
        %4982 = vmatprep.mubr.bf16.mxu0 %v4604
        %4983 = vmatmul.mubr.bf16.gmra.mrb[0].mxu0 %v4603
        %v4984 = vpop.f32.mrb[0].mxu0
        %v4985 = vadd.f32 0.0, %v4984
        %v4986 = vpop.f32.mrb[0].mxu0
        %v4987 = vadd.f32 0.0, %v4986
        %v4988 = vpop.f32.mrb[0].mxu0
        %v4989 = vadd.f32 0.0, %v4988
        %v4990 = vpop.f32.mrb[0].mxu0
        %v4991 = vadd.f32 0.0, %v4990
        %4992 = vmatprep.mubr.bf16.mxu0 %v4607
        %4993 = vmatmul.mubr.bf16.gmra.mrb[0].mxu0 %v4606
        %v4994 = vpop.f32.mrb[0].mxu0
        %v4995 = vadd.f32 0.0, %v4994
        %v4996 = vpop.f32.mrb[0].mxu0
        %v4997 = vadd.f32 0.0, %v4996
        %v4998 = vpop.f32.mrb[0].mxu0
        %v4999 = vadd.f32 0.0, %v4998
        %v5000 = vpop.f32.mrb[0].mxu0
        %v5001 = vadd.f32 0.0, %v5000
        %5002 = vmatprep.mubr.bf16.mxu0 %v4610
        %5003 = vmatmul.mubr.bf16.gmra.mrb[0].mxu0 %v4609
        %v5004 = vpop.f32.mrb[0].mxu0
        %v5005 = vadd.f32 0.0, %v5004
        %v5006 = vpop.f32.mrb[0].mxu0
        %v5007 = vadd.f32 0.0, %v5006
        %v5008 = vpop.f32.mrb[0].mxu0
        %v5009 = vadd.f32 0.0, %v5008
        %v5010 = vpop.f32.mrb[0].mxu0
        %v5011 = vadd.f32 0.0, %v5010
        %5012 = vdwg.mxu0
        %5013 = vmatprep.subr.bf16.mxu0 %v4837
        %5014 = vmatpush1.bf16.msra.mxu0 %v4836
        %5015 = vmatprep.subr.bf16.mxu0 %v4839
        %5016 = vmatpush1.bf16.msra.mxu0 %v4838
        %5017 = vmatprep.subr.bf16.mxu0 %v4841
        %5018 = vmatpush1.bf16.msra.mxu0 %v4840
        %5019 = vmatprep.subr.bf16.mxu0 %v4843
        %5020 = vmatpush1.bf16.msra.mxu0 %v4842
        %5021 = vmatprep.subr.bf16.mxu0 %v4845
        %5022 = vmatpush1.bf16.msra.mxu0 %v4844
        %5023 = vmatprep.subr.bf16.mxu0 %v4847
        %5024 = vmatpush1.bf16.msra.mxu0 %v4846
        %5025 = vmatprep.subr.bf16.mxu0 %v4849
        %5026 = vmatpush1.bf16.msra.mxu0 %v4848
        %5027 = vmatprep.subr.bf16.mxu0 %v4851
        %5028 = vmatpush1.bf16.msra.mxu0 %v4850
        %5029 = vmatprep.subr.bf16.mxu0 0
        %5030 = vmatpush1.bf16.msra.mxu0 0
        %5031 = vmatprep.subr.bf16.mxu0 0
        %5032 = vmatpush1.bf16.msra.mxu0 0
        %5033 = vmatprep.subr.bf16.mxu0 0
        %5034 = vmatpush1.bf16.msra.mxu0 0
        %5035 = vmatprep.subr.bf16.mxu0 0
        %5036 = vmatpush1.bf16.msra.mxu0 0
        %5037 = vmatprep.subr.bf16.mxu0 0
        %5038 = vmatpush1.bf16.msra.mxu0 0
        %5039 = vmatprep.subr.bf16.mxu0 0
        %5040 = vmatpush1.bf16.msra.mxu0 0
        %5041 = vmatprep.subr.bf16.mxu0 0
        %5042 = vmatpush1.bf16.msra.mxu0 0
        %5043 = vmatprep.subr.bf16.mxu0 0
        %5044 = vmatpush1.bf16.msra.mxu0 0
        %5045 = vmatprep.mubr.bf16.mxu0 0
        %5046 = vmatmul.mubr.bf16.gmra.mrb[0].mxu0 %v4590
        %v5047 = vpop.f32.mrb[0].mxu0
        %v5048 = vadd.f32 %v4935, %v5047
        %v5049 = vpop.f32.mrb[0].mxu0
        %v5050 = vadd.f32 %v4937, %v5049
        %v5051 = vpop.f32.mrb[0].mxu0
        %v5052 = vadd.f32 %v4939, %v5051
        %v5053 = vpop.f32.mrb[0].mxu0
        %v5054 = vadd.f32 %v4941, %v5053
        %5055 = vmatprep.mubr.bf16.mxu0 0
        %5056 = vmatmul.mubr.bf16.gmra.mrb[0].mxu0 %v4593
        %v5057 = vpop.f32.mrb[0].mxu0
        %v5058 = vadd.f32 %v4945, %v5057
        %v5059 = vpop.f32.mrb[0].mxu0
        %v5060 = vadd.f32 %v4947, %v5059
        %v5061 = vpop.f32.mrb[0].mxu0
        %v5062 = vadd.f32 %v4949, %v5061
        %v5063 = vpop.f32.mrb[0].mxu0
        %v5064 = vadd.f32 %v4951, %v5063
        %5065 = vmatprep.mubr.bf16.mxu0 0
        %5066 = vmatmul.mubr.bf16.gmra.mrb[0].mxu0 %v4596
        %v5067 = vpop.f32.mrb[0].mxu0
        %v5068 = vadd.f32 %v4955, %v5067
        %v5069 = vpop.f32.mrb[0].mxu0
        %v5070 = vadd.f32 %v4957, %v5069
        %v5071 = vpop.f32.mrb[0].mxu0
        %v5072 = vadd.f32 %v4959, %v5071
        %v5073 = vpop.f32.mrb[0].mxu0
        %v5074 = vadd.f32 %v4961, %v5073
        %5075 = vmatprep.mubr.bf16.mxu0 0
        %5076 = vmatmul.mubr.bf16.gmra.mrb[0].mxu0 %v4599
        %v5077 = vpop.f32.mrb[0].mxu0
        %v5078 = vadd.f32 %v4965, %v5077
        %v5079 = vpop.f32.mrb[0].mxu0
        %v5080 = vadd.f32 %v4967, %v5079
        %v5081 = vpop.f32.mrb[0].mxu0
        %v5082 = vadd.f32 %v4969, %v5081
        %v5083 = vpop.f32.mrb[0].mxu0
        %v5084 = vadd.f32 %v4971, %v5083
        %5085 = vmatprep.mubr.bf16.mxu0 0
        %5086 = vmatmul.mubr.bf16.gmra.mrb[0].mxu0 %v4602
        %v5087 = vpop.f32.mrb[0].mxu0
        %v5088 = vadd.f32 %v4975, %v5087
        %v5089 = vpop.f32.mrb[0].mxu0
        %v5090 = vadd.f32 %v4977, %v5089
        %v5091 = vpop.f32.mrb[0].mxu0
        %v5092 = vadd.f32 %v4979, %v5091
        %v5093 = vpop.f32.mrb[0].mxu0
        %v5094 = vadd.f32 %v4981, %v5093
        %5095 = vmatprep.mubr.bf16.mxu0 0
        %5096 = vmatmul.mubr.bf16.gmra.mrb[0].mxu0 %v4605
        %v5097 = vpop.f32.mrb[0].mxu0
        %v5098 = vadd.f32 %v4985, %v5097
        %v5099 = vpop.f32.mrb[0].mxu0
        %v5100 = vadd.f32 %v4987, %v5099
        %v5101 = vpop.f32.mrb[0].mxu0
        %v5102 = vadd.f32 %v4989, %v5101
        %v5103 = vpop.f32.mrb[0].mxu0
        %v5104 = vadd.f32 %v4991, %v5103
        %5105 = vmatprep.mubr.bf16.mxu0 0
        %5106 = vmatmul.mubr.bf16.gmra.mrb[0].mxu0 %v4608
        %v5107 = vpop.f32.mrb[0].mxu0
        %v5108 = vadd.f32 %v4995, %v5107
        %v5109 = vpop.f32.mrb[0].mxu0
        %v5110 = vadd.f32 %v4997, %v5109
        %v5111 = vpop.f32.mrb[0].mxu0
        %v5112 = vadd.f32 %v4999, %v5111
        %v5113 = vpop.f32.mrb[0].mxu0
        %v5114 = vadd.f32 %v5001, %v5113
        %5115 = vmatprep.mubr.bf16.mxu0 0
        %5116 = vmatmul.mubr.bf16.gmra.mrb[0].mxu0 %v4611
        %v5117 = vpop.f32.mrb[0].mxu0
        %v5118 = vadd.f32 %v5005, %v5117
        %v5119 = vpop.f32.mrb[0].mxu0
        %v5120 = vadd.f32 %v5007, %v5119
        %v5121 = vpop.f32.mrb[0].mxu0
        %v5122 = vadd.f32 %v5009, %v5121
        %v5123 = vpop.f32.mrb[0].mxu0
        %v5124 = vadd.f32 %v5011, %v5123
        %5125 = vdwg.mxu0
        %v5126 = vld [vmem:[%s6] sm:$0xf]
        %v5128 = vlaneseq
        %v5129 = vshrl.u32 %v5128, 7
        %v5130 = vsub.s32 0, %v5129
        %v5131 = vrot.slane %v5126, %v5130
        %v5132 = vlaneseq
        %v5133 = vshrl.u32 %v5132, 7
        %v5134 = vsub.s32 2, %v5133
        %v5135 = vrot.slane %v5126, %v5134
        %v5138 = vlaneseq
        %v5139 = vshrl.u32 %v5138, 7
        %v5140 = vsub.s32 0, %v5139
        %v5141 = vrot.slane %v5131, %v5140
        %v5142 = vlaneseq
        %v5143 = vshrl.u32 %v5142, 7
        %v5144 = vsub.s32 0, %v5143
        %v5145 = vrot.slane %v5135, %v5144
        %v5146 = vmul.f32 %v5048, %v5141
        %v5147 = vmul.f32 %v5050, %v5145
        %v5148 = vmul.f32 %v5052, %v5141
        %v5149 = vmul.f32 %v5054, %v5145
        %v5150 = vmul.f32 %v5058, %v5141
        %v5151 = vmul.f32 %v5060, %v5145
        %v5152 = vmul.f32 %v5062, %v5141
        %v5153 = vmul.f32 %v5064, %v5145
        %v5154 = vmul.f32 %v5068, %v5141
        %v5155 = vmul.f32 %v5070, %v5145
        %v5156 = vmul.f32 %v5072, %v5141
        %v5157 = vmul.f32 %v5074, %v5145
        %v5158 = vmul.f32 %v5078, %v5141
        %v5159 = vmul.f32 %v5080, %v5145
        %v5160 = vmul.f32 %v5082, %v5141
        %v5161 = vmul.f32 %v5084, %v5145
        %v5162 = vmul.f32 %v5088, %v5141
        %v5163 = vmul.f32 %v5090, %v5145
        %v5164 = vmul.f32 %v5092, %v5141
        %v5165 = vmul.f32 %v5094, %v5145
        %v5166 = vmul.f32 %v5098, %v5141
        %v5167 = vmul.f32 %v5100, %v5145
        %v5168 = vmul.f32 %v5102, %v5141
        %v5169 = vmul.f32 %v5104, %v5145
        %v5170 = vmul.f32 %v5108, %v5141
        %v5171 = vmul.f32 %v5110, %v5145
        %v5172 = vmul.f32 %v5112, %v5141
        %v5173 = vmul.f32 %v5114, %v5145
        %v5174 = vmul.f32 %v5118, %v5141
        %v5175 = vmul.f32 %v5120, %v5145
        %v5176 = vmul.f32 %v5122, %v5141
        %v5177 = vmul.f32 %v5124, %v5145
        %v5178 = vlaneseq
        %v5179 = vshrl.u32 %v5178, 7
        %v5180 = vsub.s32 1, %v5179
        %v5181 = vrot.slane %v5126, %v5180
        %v5182 = vlaneseq
        %v5183 = vshrl.u32 %v5182, 7
        %v5184 = vsub.s32 3, %v5183
        %v5185 = vrot.slane %v5126, %v5184
        %v5188 = vlaneseq
        %v5189 = vshrl.u32 %v5188, 7
        %v5190 = vsub.s32 1, %v5189
        %v5191 = vrot.slane %v5181, %v5190
        %v5192 = vlaneseq
        %v5193 = vshrl.u32 %v5192, 7
        %v5194 = vsub.s32 1, %v5193
        %v5195 = vrot.slane %v5185, %v5194
        %v5196 = vadd.f32 %v5146, %v5191
        %v5197 = vadd.f32 %v5147, %v5195
        %v5198 = vadd.f32 %v5148, %v5191
        %v5199 = vadd.f32 %v5149, %v5195
        %v5200 = vadd.f32 %v5150, %v5191
        %v5201 = vadd.f32 %v5151, %v5195
        %v5202 = vadd.f32 %v5152, %v5191
        %v5203 = vadd.f32 %v5153, %v5195
        %v5204 = vadd.f32 %v5154, %v5191
        %v5205 = vadd.f32 %v5155, %v5195
        %v5206 = vadd.f32 %v5156, %v5191
        %v5207 = vadd.f32 %v5157, %v5195
        %v5208 = vadd.f32 %v5158, %v5191
        %v5209 = vadd.f32 %v5159, %v5195
        %v5210 = vadd.f32 %v5160, %v5191
        %v5211 = vadd.f32 %v5161, %v5195
        %v5212 = vadd.f32 %v5162, %v5191
        %v5213 = vadd.f32 %v5163, %v5195
        %v5214 = vadd.f32 %v5164, %v5191
        %v5215 = vadd.f32 %v5165, %v5195
        %v5216 = vadd.f32 %v5166, %v5191
        %v5217 = vadd.f32 %v5167, %v5195
        %v5218 = vadd.f32 %v5168, %v5191
        %v5219 = vadd.f32 %v5169, %v5195
        %v5220 = vadd.f32 %v5170, %v5191
        %v5221 = vadd.f32 %v5171, %v5195
        %v5222 = vadd.f32 %v5172, %v5191
        %v5223 = vadd.f32 %v5173, %v5195
        %v5224 = vadd.f32 %v5174, %v5191
        %v5225 = vadd.f32 %v5175, %v5195
        %v5226 = vadd.f32 %v5176, %v5191
        %v5227 = vadd.f32 %v5177, %v5195
        %v5228 = vmax.f32 %v5196, 0.0
        %v5229 = vmax.f32 %v5197, 0.0
        %v5230 = vmax.f32 %v5198, 0.0
        %v5231 = vmax.f32 %v5199, 0.0
        %v5232 = vmax.f32 %v5200, 0.0
        %v5233 = vmax.f32 %v5201, 0.0
        %v5234 = vmax.f32 %v5202, 0.0
        %v5235 = vmax.f32 %v5203, 0.0
        %v5236 = vmax.f32 %v5204, 0.0
        %v5237 = vmax.f32 %v5205, 0.0
        %v5238 = vmax.f32 %v5206, 0.0
        %v5239 = vmax.f32 %v5207, 0.0
        %v5240 = vmax.f32 %v5208, 0.0
        %v5241 = vmax.f32 %v5209, 0.0
        %v5242 = vmax.f32 %v5210, 0.0
        %v5243 = vmax.f32 %v5211, 0.0
        %v5244 = vmax.f32 %v5212, 0.0
        %v5245 = vmax.f32 %v5213, 0.0
        %v5246 = vmax.f32 %v5214, 0.0
        %v5247 = vmax.f32 %v5215, 0.0
        %v5248 = vmax.f32 %v5216, 0.0
        %v5249 = vmax.f32 %v5217, 0.0
        %v5250 = vmax.f32 %v5218, 0.0
        %v5251 = vmax.f32 %v5219, 0.0
        %v5252 = vmax.f32 %v5220, 0.0
        %v5253 = vmax.f32 %v5221, 0.0
        %v5254 = vmax.f32 %v5222, 0.0
        %v5255 = vmax.f32 %v5223, 0.0
        %v5256 = vmax.f32 %v5224, 0.0
        %v5257 = vmax.f32 %v5225, 0.0
        %v5258 = vmax.f32 %v5226, 0.0
        %v5259 = vmax.f32 %v5227, 0.0
        %v5260 = vmax.f32 %v5228, %v5229
        %v5261 = vmax.f32 %v5230, %v5231
        %v5262 = vmax.f32 %v5232, %v5233
        %v5263 = vmax.f32 %v5234, %v5235
        %v5264 = vmax.f32 %v5236, %v5237
        %v5265 = vmax.f32 %v5238, %v5239
        %v5266 = vmax.f32 %v5240, %v5241
        %v5267 = vmax.f32 %v5242, %v5243
        %v5268 = vmax.f32 %v5244, %v5245
        %v5269 = vmax.f32 %v5246, %v5247
        %v5270 = vmax.f32 %v5248, %v5249
        %v5271 = vmax.f32 %v5250, %v5251
        %v5272 = vmax.f32 %v5252, %v5253
        %v5273 = vmax.f32 %v5254, %v5255
        %v5274 = vmax.f32 %v5256, %v5257
        %v5275 = vmax.f32 %v5258, %v5259
        %5276 = vst [vmem:[#allocation3] sm:$0xff] %v5260
        %5277 = vst [vmem:[#allocation3 + $0x8] sm:$0xff] %v5261
        %5278 = vst [vmem:[#allocation3 + $0x10] sm:$0xff] %v5262
        %5279 = vst [vmem:[#allocation3 + $0x18] sm:$0xff] %v5263
        %5280 = vst [vmem:[#allocation3 + $0x20] sm:$0xff] %v5264
        %5281 = vst [vmem:[#allocation3 + $0x28] sm:$0xff] %v5265
        %5282 = vst [vmem:[#allocation3 + $0x30] sm:$0xff] %v5266
        %5283 = vst [vmem:[#allocation3 + $0x38] sm:$0xff] %v5267
        %5284 = vst [vmem:[#allocation3 + $0x40] sm:$0xff] %v5268
        %5285 = vst [vmem:[#allocation3 + $0x48] sm:$0xff] %v5269
        %5286 = vst [vmem:[#allocation3 + $0x50] sm:$0xff] %v5270
        %5287 = vst [vmem:[#allocation3 + $0x58] sm:$0xff] %v5271
        %5288 = vst [vmem:[#allocation3 + $0x60] sm:$0xff] %v5272
        %5289 = vst [vmem:[#allocation3 + $0x68] sm:$0xff] %v5273
        %5290 = vst [vmem:[#allocation3 + $0x70] sm:$0xff] %v5274
        %5291 = vst [vmem:[#allocation3 + $0x78] sm:$0xff] %v5275
        %v5292 = vld [vmem:[#allocation3] ss:$2 sm:$0xff]
        %v5293 = vld [vmem:[%s4398] ss:$2 sm:$0xff]
        %v5294 = vld [vmem:[%s4400] ss:$2 sm:$0xff]
        %v5295 = vld [vmem:[%s4402] ss:$2 sm:$0xff]
        %v5296 = vld [vmem:[%s4404] ss:$2 sm:$0xff]
        %v5297 = vld [vmem:[%s4406] ss:$2 sm:$0xff]
        %v5298 = vld [vmem:[%s4408] ss:$2 sm:$0xff]
        %v5299 = vld [vmem:[%s4410] ss:$2 sm:$0xff]
        %v5300 = vld [vmem:[%s3029] ss:$2 sm:$0xff]
        %v5301 = vld [vmem:[%s3031] ss:$2 sm:$0xff]
        %v5302 = vld [vmem:[%s3033] ss:$2 sm:$0xff]
        %v5303 = vld [vmem:[%s3035] ss:$2 sm:$0xff]
        %v5304 = vld [vmem:[%s3037] ss:$2 sm:$0xff]
        %v5305 = vld [vmem:[%s3039] ss:$2 sm:$0xff]
        %v5306 = vld [vmem:[%s3041] ss:$2 sm:$0xff]
        %v5307 = vld [vmem:[%s3043] ss:$2 sm:$0xff]
        %v5308 = vmax.f32 %v5292, %v5300
        %v5309 = vmax.f32 %v5293, %v5301
        %v5310 = vmax.f32 %v5294, %v5302
        %v5311 = vmax.f32 %v5295, %v5303
        %v5312 = vmax.f32 %v5296, %v5304
        %v5313 = vmax.f32 %v5297, %v5305
        %v5314 = vmax.f32 %v5298, %v5306
        %v5315 = vmax.f32 %v5299, %v5307
        %5316 = vst [vmem:[#allocation2 + $0x8] sm:$0xff] %v5308
        %5317 = vst [vmem:[#allocation2 + $0x10] sm:$0xff] %v5309
        %5318 = vst [vmem:[#allocation2 + $0x18] sm:$0xff] %v5310
        %5319 = vst [vmem:[#allocation2 + $0x20] sm:$0xff] %v5311
        %5320 = vst [vmem:[#allocation2 + $0x28] sm:$0xff] %v5312
        %5321 = vst [vmem:[#allocation2 + $0x30] sm:$0xff] %v5313
        %5322 = vst [vmem:[#allocation2 + $0x38] sm:$0xff] %v5314
        %5323 = vst [vmem:[#allocation2 + $0x40] sm:$0xff] %v5315
        %v5324 = vld [vmem:[#allocation2 + $0x7] sm:$0xff]
        %v5325 = vld [vmem:[#allocation2 + $0xf] sm:$0xff]
        %v5326 = vld [vmem:[#allocation2 + $0x17] sm:$0xff]
        %v5327 = vld [vmem:[#allocation2 + $0x1f] sm:$0xff]
        %v5328 = vld [vmem:[#allocation2 + $0x27] sm:$0xff]
        %v5329 = vld [vmem:[#allocation2 + $0x2f] sm:$0xff]
        %v5330 = vld [vmem:[#allocation2 + $0x37] sm:$0xff]
        %v5331 = vld [vmem:[#allocation2 + $0x3f] sm:$0xff]
        %v5332 = vld [vmem:[#allocation2 + $0x9] sm:$0xff]
        %v5333 = vld [vmem:[#allocation2 + $0x11] sm:$0xff]
        %v5334 = vld [vmem:[#allocation2 + $0x19] sm:$0xff]
        %v5335 = vld [vmem:[#allocation2 + $0x21] sm:$0xff]
        %v5336 = vld [vmem:[#allocation2 + $0x29] sm:$0xff]
        %v5337 = vld [vmem:[#allocation2 + $0x31] sm:$0xff]
        %v5338 = vld [vmem:[#allocation2 + $0x39] sm:$0xff]
        %v5339 = vld [vmem:[#allocation2 + $0x41] sm:$0xff]
        %v5340 = vand.u32 %v942, 15
        %v5341 = vand.u32 %v943, 15
        %v5342 = vand.u32 %v944, 15
        %v5343 = vand.u32 %v945, 15
        %v5344 = vand.u32 %v946, 15
        %v5345 = vand.u32 %v947, 15
        %v5346 = vand.u32 %v948, 15
        %v5347 = vand.u32 %v949, 15
        %vm5348 = vcmp.eq.s32.totalorder %v5340, 0
        %vm5349 = vcmp.eq.s32.totalorder %v5341, 0
        %vm5350 = vcmp.eq.s32.totalorder %v5342, 0
        %vm5351 = vcmp.eq.s32.totalorder %v5343, 0
        %vm5352 = vcmp.eq.s32.totalorder %v5344, 0
        %vm5353 = vcmp.eq.s32.totalorder %v5345, 0
        %vm5354 = vcmp.eq.s32.totalorder %v5346, 0
        %vm5355 = vcmp.eq.s32.totalorder %v5347, 0
        %v5356 = vsel %vm5348, 0.0, %v5324
        %v5357 = vsel %vm5349, 0.0, %v5325
        %v5358 = vsel %vm5350, 0.0, %v5326
        %v5359 = vsel %vm5351, 0.0, %v5327
        %v5360 = vsel %vm5352, 0.0, %v5328
        %v5361 = vsel %vm5353, 0.0, %v5329
        %v5362 = vsel %vm5354, 0.0, %v5330
        %v5363 = vsel %vm5355, 0.0, %v5331
        %vm5364 = vcmp.eq.s32.totalorder %v5340, 15
        %vm5365 = vcmp.eq.s32.totalorder %v5341, 15
        %vm5366 = vcmp.eq.s32.totalorder %v5342, 15
        %vm5367 = vcmp.eq.s32.totalorder %v5343, 15
        %vm5368 = vcmp.eq.s32.totalorder %v5344, 15
        %vm5369 = vcmp.eq.s32.totalorder %v5345, 15
        %vm5370 = vcmp.eq.s32.totalorder %v5346, 15
        %vm5371 = vcmp.eq.s32.totalorder %v5347, 15
        %v5372 = vsel %vm5364, 0.0, %v5332
        %v5373 = vsel %vm5365, 0.0, %v5333
        %v5374 = vsel %vm5366, 0.0, %v5334
        %v5375 = vsel %vm5367, 0.0, %v5335
        %v5376 = vsel %vm5368, 0.0, %v5336
        %v5377 = vsel %vm5369, 0.0, %v5337
        %v5378 = vsel %vm5370, 0.0, %v5338
        %v5379 = vsel %vm5371, 0.0, %v5339
        %v5380 = vpack.c.bf16 %v5357, %v5356
        %v5381 = vpack.c.bf16 %v5309, %v5308
        %v5382 = vpack.c.bf16 %v5373, %v5372
        %v5383 = vpack.c.bf16 %v5359, %v5358
        %v5384 = vpack.c.bf16 %v5311, %v5310
        %v5385 = vpack.c.bf16 %v5375, %v5374
        %v5386 = vpack.c.bf16 %v5361, %v5360
        %v5387 = vpack.c.bf16 %v5313, %v5312
        %v5388 = vpack.c.bf16 %v5377, %v5376
        %v5389 = vpack.c.bf16 %v5363, %v5362
        %v5390 = vpack.c.bf16 %v5315, %v5314
        %v5391 = vpack.c.bf16 %v5379, %v5378
        %v5392 = vld [vmem:[#allocation12] sm:$0xff]
        %v5393 = vld [vmem:[#allocation12 + $0x8] sm:$0xff]
        %v5394 = vld [vmem:[#allocation12 + $0x10] sm:$0xff]
        %v5395 = vld [vmem:[#allocation12 + $0x18] sm:$0xff]
        %v5396 = vld [vmem:[#allocation12 + $0x20] sm:$0xff]
        %v5397 = vld [vmem:[#allocation12 + $0x28] sm:$0xff]
        %v5398 = vld [vmem:[#allocation12 + $0x30] sm:$0xff]
        %v5399 = vld [vmem:[#allocation12 + $0x38] sm:$0xff]
        %v5400 = vld [vmem:[#allocation12 + $0x40] sm:$0xff]
        %v5401 = vld [vmem:[#allocation12 + $0x48] sm:$0xff]
        %v5402 = vld [vmem:[#allocation12 + $0x50] sm:$0xff]
        %v5403 = vld [vmem:[#allocation12 + $0x58] sm:$0xff]
        %v5404 = vld [vmem:[#allocation12 + $0x60] sm:$0xff]
        %v5405 = vld [vmem:[#allocation12 + $0x68] sm:$0xff]
        %v5406 = vld [vmem:[#allocation12 + $0x70] sm:$0xff]
        %v5407 = vld [vmem:[#allocation12 + $0x78] sm:$0xff]
        %v5408 = vld [vmem:[#allocation12 + $0x80] sm:$0xff]
        %v5409 = vld [vmem:[#allocation12 + $0x88] sm:$0xff]
        %v5410 = vld [vmem:[#allocation12 + $0x90] sm:$0xff]
        %v5411 = vld [vmem:[#allocation12 + $0x98] sm:$0xff]
        %v5412 = vld [vmem:[#allocation12 + $0xa0] sm:$0xff]
        %v5413 = vld [vmem:[#allocation12 + $0xa8] sm:$0xff]
        %v5414 = vld [vmem:[#allocation12 + $0xb0] sm:$0xff]
        %v5415 = vld [vmem:[#allocation12 + $0xb8] sm:$0xff]
        %v5416 = vld [vmem:[#allocation12 + $0xc0] sm:$0xff]
        %v5417 = vld [vmem:[#allocation12 + $0xc8] sm:$0xff]
        %v5418 = vld [vmem:[#allocation12 + $0xd0] sm:$0xff]
        %v5419 = vld [vmem:[#allocation12 + $0xd8] sm:$0xff]
        %v5420 = vld [vmem:[#allocation12 + $0xe0] sm:$0xff]
        %v5421 = vld [vmem:[#allocation12 + $0xe8] sm:$0xff]
        %v5422 = vld [vmem:[#allocation12 + $0xf0] sm:$0xff]
        %v5423 = vld [vmem:[#allocation12 + $0xf8] sm:$0xff]
        %v5424 = vld [vmem:[#allocation12 + $0x100] sm:$0xff]
        %v5425 = vld [vmem:[#allocation12 + $0x108] sm:$0xff]
        %v5426 = vld [vmem:[#allocation12 + $0x110] sm:$0xff]
        %v5427 = vld [vmem:[#allocation12 + $0x118] sm:$0xff]
        %v5428 = vld [vmem:[#allocation12 + $0x120] sm:$0xff]
        %v5429 = vld [vmem:[#allocation12 + $0x128] sm:$0xff]
        %v5430 = vld [vmem:[#allocation12 + $0x130] sm:$0xff]
        %v5431 = vld [vmem:[#allocation12 + $0x138] sm:$0xff]
        %v5432 = vld [vmem:[#allocation12 + $0x140] sm:$0xff]
        %v5433 = vld [vmem:[#allocation12 + $0x148] sm:$0xff]
        %v5434 = vld [vmem:[#allocation12 + $0x150] sm:$0xff]
        %v5435 = vld [vmem:[#allocation12 + $0x158] sm:$0xff]
        %v5436 = vld [vmem:[#allocation12 + $0x160] sm:$0xff]
        %v5437 = vld [vmem:[#allocation12 + $0x168] sm:$0xff]
        %v5438 = vld [vmem:[#allocation12 + $0x170] sm:$0xff]
        %v5439 = vld [vmem:[#allocation12 + $0x178] sm:$0xff]
        %v5488 = vunpack.c.l.b16 %v5392
        %v5489 = vunpack.c.h.b16 %v5392
        %v5490 = vunpack.c.l.b16 %v5393
        %v5491 = vunpack.c.h.b16 %v5393
        %v5492 = vunpack.c.l.b16 %v5394
        %v5493 = vunpack.c.h.b16 %v5394
        %v5494 = vunpack.c.l.b16 %v5395
        %v5495 = vunpack.c.h.b16 %v5395
        %v5496 = vunpack.c.l.b16 %v5396
        %v5497 = vunpack.c.h.b16 %v5396
        %v5498 = vunpack.c.l.b16 %v5397
        %v5499 = vunpack.c.h.b16 %v5397
        %v5500 = vunpack.c.l.b16 %v5398
        %v5501 = vunpack.c.h.b16 %v5398
        %v5502 = vunpack.c.l.b16 %v5399
        %v5503 = vunpack.c.h.b16 %v5399
        %v5504 = vunpack.c.l.b16 %v5400
        %v5505 = vunpack.c.h.b16 %v5400
        %v5506 = vunpack.c.l.b16 %v5401
        %v5507 = vunpack.c.h.b16 %v5401
        %v5508 = vunpack.c.l.b16 %v5402
        %v5509 = vunpack.c.h.b16 %v5402
        %v5510 = vunpack.c.l.b16 %v5403
        %v5511 = vunpack.c.h.b16 %v5403
        %v5512 = vunpack.c.l.b16 %v5404
        %v5513 = vunpack.c.h.b16 %v5404
        %v5514 = vunpack.c.l.b16 %v5405
        %v5515 = vunpack.c.h.b16 %v5405
        %v5516 = vunpack.c.l.b16 %v5406
        %v5517 = vunpack.c.h.b16 %v5406
        %v5518 = vunpack.c.l.b16 %v5407
        %v5519 = vunpack.c.h.b16 %v5407
        %v5520 = vunpack.c.l.b16 %v5408
        %v5521 = vunpack.c.h.b16 %v5408
        %v5522 = vunpack.c.l.b16 %v5409
        %v5523 = vunpack.c.h.b16 %v5409
        %v5524 = vunpack.c.l.b16 %v5410
        %v5525 = vunpack.c.h.b16 %v5410
        %v5526 = vunpack.c.l.b16 %v5411
        %v5527 = vunpack.c.h.b16 %v5411
        %v5528 = vunpack.c.l.b16 %v5412
        %v5529 = vunpack.c.h.b16 %v5412
        %v5530 = vunpack.c.l.b16 %v5413
        %v5531 = vunpack.c.h.b16 %v5413
        %v5532 = vunpack.c.l.b16 %v5414
        %v5533 = vunpack.c.h.b16 %v5414
        %v5534 = vunpack.c.l.b16 %v5415
        %v5535 = vunpack.c.h.b16 %v5415
        %v5536 = vunpack.c.l.b16 %v5416
        %v5537 = vunpack.c.h.b16 %v5416
        %v5538 = vunpack.c.l.b16 %v5417
        %v5539 = vunpack.c.h.b16 %v5417
        %v5540 = vunpack.c.l.b16 %v5418
        %v5541 = vunpack.c.h.b16 %v5418
        %v5542 = vunpack.c.l.b16 %v5419
        %v5543 = vunpack.c.h.b16 %v5419
        %v5544 = vunpack.c.l.b16 %v5420
        %v5545 = vunpack.c.h.b16 %v5420
        %v5546 = vunpack.c.l.b16 %v5421
        %v5547 = vunpack.c.h.b16 %v5421
        %v5548 = vunpack.c.l.b16 %v5422
        %v5549 = vunpack.c.h.b16 %v5422
        %v5550 = vunpack.c.l.b16 %v5423
        %v5551 = vunpack.c.h.b16 %v5423
        %v5552 = vunpack.c.l.b16 %v5424
        %v5553 = vunpack.c.h.b16 %v5424
        %v5554 = vunpack.c.l.b16 %v5425
        %v5555 = vunpack.c.h.b16 %v5425
        %v5556 = vunpack.c.l.b16 %v5426
        %v5557 = vunpack.c.h.b16 %v5426
        %v5558 = vunpack.c.l.b16 %v5427
        %v5559 = vunpack.c.h.b16 %v5427
        %v5560 = vunpack.c.l.b16 %v5428
        %v5561 = vunpack.c.h.b16 %v5428
        %v5562 = vunpack.c.l.b16 %v5429
        %v5563 = vunpack.c.h.b16 %v5429
        %v5564 = vunpack.c.l.b16 %v5430
        %v5565 = vunpack.c.h.b16 %v5430
        %v5566 = vunpack.c.l.b16 %v5431
        %v5567 = vunpack.c.h.b16 %v5431
        %v5568 = vunpack.c.l.b16 %v5432
        %v5569 = vunpack.c.h.b16 %v5432
        %v5570 = vunpack.c.l.b16 %v5433
        %v5571 = vunpack.c.h.b16 %v5433
        %v5572 = vunpack.c.l.b16 %v5434
        %v5573 = vunpack.c.h.b16 %v5434
        %v5574 = vunpack.c.l.b16 %v5435
        %v5575 = vunpack.c.h.b16 %v5435
        %v5576 = vunpack.c.l.b16 %v5436
        %v5577 = vunpack.c.h.b16 %v5436
        %v5578 = vunpack.c.l.b16 %v5437
        %v5579 = vunpack.c.h.b16 %v5437
        %v5580 = vunpack.c.l.b16 %v5438
        %v5581 = vunpack.c.h.b16 %v5438
        %v5582 = vunpack.c.l.b16 %v5439
        %v5583 = vunpack.c.h.b16 %v5439
        %v5584 = vpack.c.b16 %v5490, %v5488
        %v5585 = vpack.c.b16 %v5491, %v5489
        %v5586 = vpack.c.b16 %v5494, %v5492
        %v5587 = vpack.c.b16 %v5495, %v5493
        %v5588 = vpack.c.b16 %v5498, %v5496
        %v5589 = vpack.c.b16 %v5499, %v5497
        %v5590 = vpack.c.b16 %v5502, %v5500
        %v5591 = vpack.c.b16 %v5503, %v5501
        %v5592 = vpack.c.b16 %v5506, %v5504
        %v5593 = vpack.c.b16 %v5507, %v5505
        %v5594 = vpack.c.b16 %v5510, %v5508
        %v5595 = vpack.c.b16 %v5511, %v5509
        %v5596 = vpack.c.b16 %v5514, %v5512
        %v5597 = vpack.c.b16 %v5515, %v5513
        %v5598 = vpack.c.b16 %v5518, %v5516
        %v5599 = vpack.c.b16 %v5519, %v5517
        %v5600 = vpack.c.b16 %v5522, %v5520
        %v5601 = vpack.c.b16 %v5523, %v5521
        %v5602 = vpack.c.b16 %v5526, %v5524
        %v5603 = vpack.c.b16 %v5527, %v5525
        %v5604 = vpack.c.b16 %v5530, %v5528
        %v5605 = vpack.c.b16 %v5531, %v5529
        %v5606 = vpack.c.b16 %v5534, %v5532
        %v5607 = vpack.c.b16 %v5535, %v5533
        %v5608 = vpack.c.b16 %v5538, %v5536
        %v5609 = vpack.c.b16 %v5539, %v5537
        %v5610 = vpack.c.b16 %v5542, %v5540
        %v5611 = vpack.c.b16 %v5543, %v5541
        %v5612 = vpack.c.b16 %v5546, %v5544
        %v5613 = vpack.c.b16 %v5547, %v5545
        %v5614 = vpack.c.b16 %v5550, %v5548
        %v5615 = vpack.c.b16 %v5551, %v5549
        %v5616 = vpack.c.b16 %v5554, %v5552
        %v5617 = vpack.c.b16 %v5555, %v5553
        %v5618 = vpack.c.b16 %v5558, %v5556
        %v5619 = vpack.c.b16 %v5559, %v5557
        %v5620 = vpack.c.b16 %v5562, %v5560
        %v5621 = vpack.c.b16 %v5563, %v5561
        %v5622 = vpack.c.b16 %v5566, %v5564
        %v5623 = vpack.c.b16 %v5567, %v5565
        %v5624 = vpack.c.b16 %v5570, %v5568
        %v5625 = vpack.c.b16 %v5571, %v5569
        %v5626 = vpack.c.b16 %v5574, %v5572
        %v5627 = vpack.c.b16 %v5575, %v5573
        %v5628 = vpack.c.b16 %v5578, %v5576
        %v5629 = vpack.c.b16 %v5579, %v5577
        %v5630 = vpack.c.b16 %v5582, %v5580
        %v5631 = vpack.c.b16 %v5583, %v5581
        %5680 = vmatprep.subr.bf16.mxu0 %v5585
        %5681 = vmatpush1.bf16.msra.mxu0 %v5584
        %5682 = vmatprep.subr.bf16.mxu0 %v5587
        %5683 = vmatpush1.bf16.msra.mxu0 %v5586
        %5684 = vmatprep.subr.bf16.mxu0 %v5589
        %5685 = vmatpush1.bf16.msra.mxu0 %v5588
        %5686 = vmatprep.subr.bf16.mxu0 %v5591
        %5687 = vmatpush1.bf16.msra.mxu0 %v5590
        %5688 = vmatprep.subr.bf16.mxu0 %v5593
        %5689 = vmatpush1.bf16.msra.mxu0 %v5592
        %5690 = vmatprep.subr.bf16.mxu0 %v5595
        %5691 = vmatpush1.bf16.msra.mxu0 %v5594
        %5692 = vmatprep.subr.bf16.mxu0 %v5597
        %5693 = vmatpush1.bf16.msra.mxu0 %v5596
        %5694 = vmatprep.subr.bf16.mxu0 %v5599
        %5695 = vmatpush1.bf16.msra.mxu0 %v5598
        %5696 = vmatprep.subr.bf16.mxu0 %v5601
        %5697 = vmatpush1.bf16.msra.mxu0 %v5600
        %5698 = vmatprep.subr.bf16.mxu0 %v5603
        %5699 = vmatpush1.bf16.msra.mxu0 %v5602
        %5700 = vmatprep.subr.bf16.mxu0 %v5605
        %5701 = vmatpush1.bf16.msra.mxu0 %v5604
        %5702 = vmatprep.subr.bf16.mxu0 %v5607
        %5703 = vmatpush1.bf16.msra.mxu0 %v5606
        %5704 = vmatprep.subr.bf16.mxu0 %v5609
        %5705 = vmatpush1.bf16.msra.mxu0 %v5608
        %5706 = vmatprep.subr.bf16.mxu0 %v5611
        %5707 = vmatpush1.bf16.msra.mxu0 %v5610
        %5708 = vmatprep.subr.bf16.mxu0 %v5613
        %5709 = vmatpush1.bf16.msra.mxu0 %v5612
        %5710 = vmatprep.subr.bf16.mxu0 %v5615
        %5711 = vmatpush1.bf16.msra.mxu0 %v5614
        %5712 = vmatprep.mubr.bf16.mxu0 %v5381
        %5713 = vmatmul.mubr.bf16.gmra.mrb[0].mxu0 %v5380
        %v5714 = vpop.f32.mrb[0].mxu0
        %v5715 = vadd.f32 0.0, %v5714
        %v5716 = vpop.f32.mrb[0].mxu0
        %v5717 = vadd.f32 0.0, %v5716
        %v5718 = vpop.f32.mrb[0].mxu0
        %v5719 = vadd.f32 0.0, %v5718
        %v5720 = vpop.f32.mrb[0].mxu0
        %v5721 = vadd.f32 0.0, %v5720
        %5722 = vmatprep.mubr.bf16.mxu0 %v5384
        %5723 = vmatmul.mubr.bf16.gmra.mrb[0].mxu0 %v5383
        %v5724 = vpop.f32.mrb[0].mxu0
        %v5725 = vadd.f32 0.0, %v5724
        %v5726 = vpop.f32.mrb[0].mxu0
        %v5727 = vadd.f32 0.0, %v5726
        %v5728 = vpop.f32.mrb[0].mxu0
        %v5729 = vadd.f32 0.0, %v5728
        %v5730 = vpop.f32.mrb[0].mxu0
        %v5731 = vadd.f32 0.0, %v5730
        %5732 = vmatprep.mubr.bf16.mxu0 %v5387
        %5733 = vmatmul.mubr.bf16.gmra.mrb[0].mxu0 %v5386
        %v5734 = vpop.f32.mrb[0].mxu0
        %v5735 = vadd.f32 0.0, %v5734
        %v5736 = vpop.f32.mrb[0].mxu0
        %v5737 = vadd.f32 0.0, %v5736
        %v5738 = vpop.f32.mrb[0].mxu0
        %v5739 = vadd.f32 0.0, %v5738
        %v5740 = vpop.f32.mrb[0].mxu0
        %v5741 = vadd.f32 0.0, %v5740
        %5742 = vmatprep.mubr.bf16.mxu0 %v5390
        %5743 = vmatmul.mubr.bf16.gmra.mrb[0].mxu0 %v5389
        %v5744 = vpop.f32.mrb[0].mxu0
        %v5745 = vadd.f32 0.0, %v5744
        %v5746 = vpop.f32.mrb[0].mxu0
        %v5747 = vadd.f32 0.0, %v5746
        %v5748 = vpop.f32.mrb[0].mxu0
        %v5749 = vadd.f32 0.0, %v5748
        %v5750 = vpop.f32.mrb[0].mxu0
        %v5751 = vadd.f32 0.0, %v5750
        %5752 = vdwg.mxu0
        %5753 = vmatprep.subr.bf16.mxu0 %v5617
        %5754 = vmatpush1.bf16.msra.mxu0 %v5616
        %5755 = vmatprep.subr.bf16.mxu0 %v5619
        %5756 = vmatpush1.bf16.msra.mxu0 %v5618
        %5757 = vmatprep.subr.bf16.mxu0 %v5621
        %5758 = vmatpush1.bf16.msra.mxu0 %v5620
        %5759 = vmatprep.subr.bf16.mxu0 %v5623
        %5760 = vmatpush1.bf16.msra.mxu0 %v5622
        %5761 = vmatprep.subr.bf16.mxu0 %v5625
        %5762 = vmatpush1.bf16.msra.mxu0 %v5624
        %5763 = vmatprep.subr.bf16.mxu0 %v5627
        %5764 = vmatpush1.bf16.msra.mxu0 %v5626
        %5765 = vmatprep.subr.bf16.mxu0 %v5629
        %5766 = vmatpush1.bf16.msra.mxu0 %v5628
        %5767 = vmatprep.subr.bf16.mxu0 %v5631
        %5768 = vmatpush1.bf16.msra.mxu0 %v5630
        %5769 = vmatprep.subr.bf16.mxu0 0
        %5770 = vmatpush1.bf16.msra.mxu0 0
        %5771 = vmatprep.subr.bf16.mxu0 0
        %5772 = vmatpush1.bf16.msra.mxu0 0
        %5773 = vmatprep.subr.bf16.mxu0 0
        %5774 = vmatpush1.bf16.msra.mxu0 0
        %5775 = vmatprep.subr.bf16.mxu0 0
        %5776 = vmatpush1.bf16.msra.mxu0 0
        %5777 = vmatprep.subr.bf16.mxu0 0
        %5778 = vmatpush1.bf16.msra.mxu0 0
        %5779 = vmatprep.subr.bf16.mxu0 0
        %5780 = vmatpush1.bf16.msra.mxu0 0
        %5781 = vmatprep.subr.bf16.mxu0 0
        %5782 = vmatpush1.bf16.msra.mxu0 0
        %5783 = vmatprep.subr.bf16.mxu0 0
        %5784 = vmatpush1.bf16.msra.mxu0 0
        %5785 = vmatprep.mubr.bf16.mxu0 0
        %5786 = vmatmul.mubr.bf16.gmra.mrb[0].mxu0 %v5382
        %v5787 = vpop.f32.mrb[0].mxu0
        %v5788 = vadd.f32 %v5715, %v5787
        %v5789 = vpop.f32.mrb[0].mxu0
        %v5790 = vadd.f32 %v5717, %v5789
        %v5791 = vpop.f32.mrb[0].mxu0
        %v5792 = vadd.f32 %v5719, %v5791
        %v5793 = vpop.f32.mrb[0].mxu0
        %v5794 = vadd.f32 %v5721, %v5793
        %5795 = vmatprep.mubr.bf16.mxu0 0
        %5796 = vmatmul.mubr.bf16.gmra.mrb[0].mxu0 %v5385
        %v5797 = vpop.f32.mrb[0].mxu0
        %v5798 = vadd.f32 %v5725, %v5797
        %v5799 = vpop.f32.mrb[0].mxu0
        %v5800 = vadd.f32 %v5727, %v5799
        %v5801 = vpop.f32.mrb[0].mxu0
        %v5802 = vadd.f32 %v5729, %v5801
        %v5803 = vpop.f32.mrb[0].mxu0
        %v5804 = vadd.f32 %v5731, %v5803
        %5805 = vmatprep.mubr.bf16.mxu0 0
        %5806 = vmatmul.mubr.bf16.gmra.mrb[0].mxu0 %v5388
        %v5807 = vpop.f32.mrb[0].mxu0
        %v5808 = vadd.f32 %v5735, %v5807
        %v5809 = vpop.f32.mrb[0].mxu0
        %v5810 = vadd.f32 %v5737, %v5809
        %v5811 = vpop.f32.mrb[0].mxu0
        %v5812 = vadd.f32 %v5739, %v5811
        %v5813 = vpop.f32.mrb[0].mxu0
        %v5814 = vadd.f32 %v5741, %v5813
        %5815 = vmatprep.mubr.bf16.mxu0 0
        %5816 = vmatmul.mubr.bf16.gmra.mrb[0].mxu0 %v5391
        %v5817 = vpop.f32.mrb[0].mxu0
        %v5818 = vadd.f32 %v5745, %v5817
        %v5819 = vpop.f32.mrb[0].mxu0
        %v5820 = vadd.f32 %v5747, %v5819
        %v5821 = vpop.f32.mrb[0].mxu0
        %v5822 = vadd.f32 %v5749, %v5821
        %v5823 = vpop.f32.mrb[0].mxu0
        %v5824 = vadd.f32 %v5751, %v5823
        %5825 = vdwg.mxu0
        %v5826 = vld [vmem:[%s8] sm:$0xf]
        %v5828 = vlaneseq
        %v5829 = vshrl.u32 %v5828, 7
        %v5830 = vsub.s32 0, %v5829
        %v5831 = vrot.slane %v5826, %v5830
        %v5832 = vlaneseq
        %v5833 = vshrl.u32 %v5832, 7
        %v5834 = vsub.s32 2, %v5833
        %v5835 = vrot.slane %v5826, %v5834
        %v5838 = vlaneseq
        %v5839 = vshrl.u32 %v5838, 7
        %v5840 = vsub.s32 0, %v5839
        %v5841 = vrot.slane %v5831, %v5840
        %v5842 = vlaneseq
        %v5843 = vshrl.u32 %v5842, 7
        %v5844 = vsub.s32 0, %v5843
        %v5845 = vrot.slane %v5835, %v5844
        %v5846 = vmul.f32 %v5788, %v5841
        %v5847 = vmul.f32 %v5790, %v5845
        %v5848 = vmul.f32 %v5792, %v5841
        %v5849 = vmul.f32 %v5794, %v5845
        %v5850 = vmul.f32 %v5798, %v5841
        %v5851 = vmul.f32 %v5800, %v5845
        %v5852 = vmul.f32 %v5802, %v5841
        %v5853 = vmul.f32 %v5804, %v5845
        %v5854 = vmul.f32 %v5808, %v5841
        %v5855 = vmul.f32 %v5810, %v5845
        %v5856 = vmul.f32 %v5812, %v5841
        %v5857 = vmul.f32 %v5814, %v5845
        %v5858 = vmul.f32 %v5818, %v5841
        %v5859 = vmul.f32 %v5820, %v5845
        %v5860 = vmul.f32 %v5822, %v5841
        %v5861 = vmul.f32 %v5824, %v5845
        %v5862 = vlaneseq
        %v5863 = vshrl.u32 %v5862, 7
        %v5864 = vsub.s32 1, %v5863
        %v5865 = vrot.slane %v5826, %v5864
        %v5866 = vlaneseq
        %v5867 = vshrl.u32 %v5866, 7
        %v5868 = vsub.s32 3, %v5867
        %v5869 = vrot.slane %v5826, %v5868
        %v5872 = vlaneseq
        %v5873 = vshrl.u32 %v5872, 7
        %v5874 = vsub.s32 1, %v5873
        %v5875 = vrot.slane %v5865, %v5874
        %v5876 = vlaneseq
        %v5877 = vshrl.u32 %v5876, 7
        %v5878 = vsub.s32 1, %v5877
        %v5879 = vrot.slane %v5869, %v5878
        %v5880 = vadd.f32 %v5846, %v5875
        %v5881 = vadd.f32 %v5847, %v5879
        %v5882 = vadd.f32 %v5848, %v5875
        %v5883 = vadd.f32 %v5849, %v5879
        %v5884 = vadd.f32 %v5850, %v5875
        %v5885 = vadd.f32 %v5851, %v5879
        %v5886 = vadd.f32 %v5852, %v5875
        %v5887 = vadd.f32 %v5853, %v5879
        %v5888 = vadd.f32 %v5854, %v5875
        %v5889 = vadd.f32 %v5855, %v5879
        %v5890 = vadd.f32 %v5856, %v5875
        %v5891 = vadd.f32 %v5857, %v5879
        %v5892 = vadd.f32 %v5858, %v5875
        %v5893 = vadd.f32 %v5859, %v5879
        %v5894 = vadd.f32 %v5860, %v5875
        %v5895 = vadd.f32 %v5861, %v5879
        %v5896 = vmax.f32 %v5880, 0.0
        %v5897 = vmax.f32 %v5881, 0.0
        %v5898 = vmax.f32 %v5882, 0.0
        %v5899 = vmax.f32 %v5883, 0.0
        %v5900 = vmax.f32 %v5884, 0.0
        %v5901 = vmax.f32 %v5885, 0.0
        %v5902 = vmax.f32 %v5886, 0.0
        %v5903 = vmax.f32 %v5887, 0.0
        %v5904 = vmax.f32 %v5888, 0.0
        %v5905 = vmax.f32 %v5889, 0.0
        %v5906 = vmax.f32 %v5890, 0.0
        %v5907 = vmax.f32 %v5891, 0.0
        %v5908 = vmax.f32 %v5892, 0.0
        %v5909 = vmax.f32 %v5893, 0.0
        %v5910 = vmax.f32 %v5894, 0.0
        %v5911 = vmax.f32 %v5895, 0.0
        %v5912 = vmax.f32 %v5896, %v5897
        %v5913 = vmax.f32 %v5898, %v5899
        %v5914 = vmax.f32 %v5900, %v5901
        %v5915 = vmax.f32 %v5902, %v5903
        %v5916 = vmax.f32 %v5904, %v5905
        %v5917 = vmax.f32 %v5906, %v5907
        %v5918 = vmax.f32 %v5908, %v5909
        %v5919 = vmax.f32 %v5910, %v5911
        %5920 = vst [vmem:[#allocation3] sm:$0xff] %v5912
        %5921 = vst [vmem:[#allocation3 + $0x8] sm:$0xff] %v5913
        %5922 = vst [vmem:[#allocation3 + $0x10] sm:$0xff] %v5914
        %5923 = vst [vmem:[#allocation3 + $0x18] sm:$0xff] %v5915
        %5924 = vst [vmem:[#allocation3 + $0x20] sm:$0xff] %v5916
        %5925 = vst [vmem:[#allocation3 + $0x28] sm:$0xff] %v5917
        %5926 = vst [vmem:[#allocation3 + $0x30] sm:$0xff] %v5918
        %5927 = vst [vmem:[#allocation3 + $0x38] sm:$0xff] %v5919
        %v5928 = vld [vmem:[#allocation3] ss:$2 sm:$0xff]
        %v5929 = vld [vmem:[%s4398] ss:$2 sm:$0xff]
        %v5930 = vld [vmem:[%s4400] ss:$2 sm:$0xff]
        %v5931 = vld [vmem:[%s4402] ss:$2 sm:$0xff]
        %v5932 = vld [vmem:[%s3029] ss:$2 sm:$0xff]
        %v5933 = vld [vmem:[%s3031] ss:$2 sm:$0xff]
        %v5934 = vld [vmem:[%s3033] ss:$2 sm:$0xff]
        %v5935 = vld [vmem:[%s3035] ss:$2 sm:$0xff]
        %v5936 = vmax.f32 %v5928, %v5932
        %v5937 = vmax.f32 %v5929, %v5933
        %v5938 = vmax.f32 %v5930, %v5934
        %v5939 = vmax.f32 %v5931, %v5935
        %5940 = vst [vmem:[#allocation2 + $0x8] sm:$0xff] %v5936
        %5941 = vst [vmem:[#allocation2 + $0x10] sm:$0xff] %v5937
        %5942 = vst [vmem:[#allocation2 + $0x18] sm:$0xff] %v5938
        %5943 = vst [vmem:[#allocation2 + $0x20] sm:$0xff] %v5939
        %v5944 = vld [vmem:[#allocation2 + $0x7] sm:$0xff]
        %v5945 = vld [vmem:[#allocation2 + $0xf] sm:$0xff]
        %v5946 = vld [vmem:[#allocation2 + $0x17] sm:$0xff]
        %v5947 = vld [vmem:[#allocation2 + $0x1f] sm:$0xff]
        %v5948 = vld [vmem:[#allocation2 + $0x9] sm:$0xff]
        %v5949 = vld [vmem:[#allocation2 + $0x11] sm:$0xff]
        %v5950 = vld [vmem:[#allocation2 + $0x19] sm:$0xff]
        %v5951 = vld [vmem:[#allocation2 + $0x21] sm:$0xff]
        %v5952 = vand.u32 %v942, 7
        %v5953 = vand.u32 %v943, 7
        %v5954 = vand.u32 %v944, 7
        %v5955 = vand.u32 %v945, 7
        %vm5956 = vcmp.eq.s32.totalorder %v5952, 0
        %vm5957 = vcmp.eq.s32.totalorder %v5953, 0
        %vm5958 = vcmp.eq.s32.totalorder %v5954, 0
        %vm5959 = vcmp.eq.s32.totalorder %v5955, 0
        %v5960 = vsel %vm5956, 0.0, %v5944
        %v5961 = vsel %vm5957, 0.0, %v5945
        %v5962 = vsel %vm5958, 0.0, %v5946
        %v5963 = vsel %vm5959, 0.0, %v5947
        %vm5964 = vcmp.eq.s32.totalorder %v5952, 7
        %vm5965 = vcmp.eq.s32.totalorder %v5953, 7
        %vm5966 = vcmp.eq.s32.totalorder %v5954, 7
        %vm5967 = vcmp.eq.s32.totalorder %v5955, 7
        %v5968 = vsel %vm5964, 0.0, %v5948
        %v5969 = vsel %vm5965, 0.0, %v5949
        %v5970 = vsel %vm5966, 0.0, %v5950
        %v5971 = vsel %vm5967, 0.0, %v5951
        %v5972 = vpack.c.bf16 %v5961, %v5960
        %v5973 = vpack.c.bf16 %v5937, %v5936
        %v5974 = vpack.c.bf16 %v5969, %v5968
        %v5975 = vpack.c.bf16 %v5963, %v5962
        %v5976 = vpack.c.bf16 %v5939, %v5938
        %v5977 = vpack.c.bf16 %v5971, %v5970
        %v5978 = vld [vmem:[#allocation13] sm:$0xff]
        %v5979 = vld [vmem:[#allocation13 + $0x8] sm:$0xff]
        %v5980 = vld [vmem:[#allocation13 + $0x10] sm:$0xff]
        %v5981 = vld [vmem:[#allocation13 + $0x18] sm:$0xff]
        %v5982 = vld [vmem:[#allocation13 + $0x20] sm:$0xff]
        %v5983 = vld [vmem:[#allocation13 + $0x28] sm:$0xff]
        %v5984 = vld [vmem:[#allocation13 + $0x30] sm:$0xff]
        %v5985 = vld [vmem:[#allocation13 + $0x38] sm:$0xff]
        %v5986 = vld [vmem:[#allocation13 + $0x40] sm:$0xff]
        %v5987 = vld [vmem:[#allocation13 + $0x48] sm:$0xff]
        %v5988 = vld [vmem:[#allocation13 + $0x50] sm:$0xff]
        %v5989 = vld [vmem:[#allocation13 + $0x58] sm:$0xff]
        %v5990 = vld [vmem:[#allocation13 + $0x60] sm:$0xff]
        %v5991 = vld [vmem:[#allocation13 + $0x68] sm:$0xff]
        %v5992 = vld [vmem:[#allocation13 + $0x70] sm:$0xff]
        %v5993 = vld [vmem:[#allocation13 + $0x78] sm:$0xff]
        %v5994 = vld [vmem:[#allocation13 + $0x80] sm:$0xff]
        %v5995 = vld [vmem:[#allocation13 + $0x88] sm:$0xff]
        %v5996 = vld [vmem:[#allocation13 + $0x90] sm:$0xff]
        %v5997 = vld [vmem:[#allocation13 + $0x98] sm:$0xff]
        %v5998 = vld [vmem:[#allocation13 + $0xa0] sm:$0xff]
        %v5999 = vld [vmem:[#allocation13 + $0xa8] sm:$0xff]
        %v6000 = vld [vmem:[#allocation13 + $0xb0] sm:$0xff]
        %v6001 = vld [vmem:[#allocation13 + $0xb8] sm:$0xff]
        %v6002 = vld [vmem:[#allocation13 + $0xc0] sm:$0xff]
        %v6003 = vld [vmem:[#allocation13 + $0xc8] sm:$0xff]
        %v6004 = vld [vmem:[#allocation13 + $0xd0] sm:$0xff]
        %v6005 = vld [vmem:[#allocation13 + $0xd8] sm:$0xff]
        %v6006 = vld [vmem:[#allocation13 + $0xe0] sm:$0xff]
        %v6007 = vld [vmem:[#allocation13 + $0xe8] sm:$0xff]
        %v6008 = vld [vmem:[#allocation13 + $0xf0] sm:$0xff]
        %v6009 = vld [vmem:[#allocation13 + $0xf8] sm:$0xff]
        %v6010 = vld [vmem:[#allocation13 + $0x100] sm:$0xff]
        %v6011 = vld [vmem:[#allocation13 + $0x108] sm:$0xff]
        %v6012 = vld [vmem:[#allocation13 + $0x110] sm:$0xff]
        %v6013 = vld [vmem:[#allocation13 + $0x118] sm:$0xff]
        %v6014 = vld [vmem:[#allocation13 + $0x120] sm:$0xff]
        %v6015 = vld [vmem:[#allocation13 + $0x128] sm:$0xff]
        %v6016 = vld [vmem:[#allocation13 + $0x130] sm:$0xff]
        %v6017 = vld [vmem:[#allocation13 + $0x138] sm:$0xff]
        %v6018 = vld [vmem:[#allocation13 + $0x140] sm:$0xff]
        %v6019 = vld [vmem:[#allocation13 + $0x148] sm:$0xff]
        %v6020 = vld [vmem:[#allocation13 + $0x150] sm:$0xff]
        %v6021 = vld [vmem:[#allocation13 + $0x158] sm:$0xff]
        %v6022 = vld [vmem:[#allocation13 + $0x160] sm:$0xff]
        %v6023 = vld [vmem:[#allocation13 + $0x168] sm:$0xff]
        %v6024 = vld [vmem:[#allocation13 + $0x170] sm:$0xff]
        %v6025 = vld [vmem:[#allocation13 + $0x178] sm:$0xff]
        %v6074 = vunpack.c.l.b16 %v5978
        %v6075 = vunpack.c.h.b16 %v5978
        %v6076 = vunpack.c.l.b16 %v5979
        %v6077 = vunpack.c.h.b16 %v5979
        %v6078 = vunpack.c.l.b16 %v5980
        %v6079 = vunpack.c.h.b16 %v5980
        %v6080 = vunpack.c.l.b16 %v5981
        %v6081 = vunpack.c.h.b16 %v5981
        %v6082 = vunpack.c.l.b16 %v5982
        %v6083 = vunpack.c.h.b16 %v5982
        %v6084 = vunpack.c.l.b16 %v5983
        %v6085 = vunpack.c.h.b16 %v5983
        %v6086 = vunpack.c.l.b16 %v5984
        %v6087 = vunpack.c.h.b16 %v5984
        %v6088 = vunpack.c.l.b16 %v5985
        %v6089 = vunpack.c.h.b16 %v5985
        %v6090 = vunpack.c.l.b16 %v5986
        %v6091 = vunpack.c.h.b16 %v5986
        %v6092 = vunpack.c.l.b16 %v5987
        %v6093 = vunpack.c.h.b16 %v5987
        %v6094 = vunpack.c.l.b16 %v5988
        %v6095 = vunpack.c.h.b16 %v5988
        %v6096 = vunpack.c.l.b16 %v5989
        %v6097 = vunpack.c.h.b16 %v5989
        %v6098 = vunpack.c.l.b16 %v5990
        %v6099 = vunpack.c.h.b16 %v5990
        %v6100 = vunpack.c.l.b16 %v5991
        %v6101 = vunpack.c.h.b16 %v5991
        %v6102 = vunpack.c.l.b16 %v5992
        %v6103 = vunpack.c.h.b16 %v5992
        %v6104 = vunpack.c.l.b16 %v5993
        %v6105 = vunpack.c.h.b16 %v5993
        %v6106 = vunpack.c.l.b16 %v5994
        %v6107 = vunpack.c.h.b16 %v5994
        %v6108 = vunpack.c.l.b16 %v5995
        %v6109 = vunpack.c.h.b16 %v5995
        %v6110 = vunpack.c.l.b16 %v5996
        %v6111 = vunpack.c.h.b16 %v5996
        %v6112 = vunpack.c.l.b16 %v5997
        %v6113 = vunpack.c.h.b16 %v5997
        %v6114 = vunpack.c.l.b16 %v5998
        %v6115 = vunpack.c.h.b16 %v5998
        %v6116 = vunpack.c.l.b16 %v5999
        %v6117 = vunpack.c.h.b16 %v5999
        %v6118 = vunpack.c.l.b16 %v6000
        %v6119 = vunpack.c.h.b16 %v6000
        %v6120 = vunpack.c.l.b16 %v6001
        %v6121 = vunpack.c.h.b16 %v6001
        %v6122 = vunpack.c.l.b16 %v6002
        %v6123 = vunpack.c.h.b16 %v6002
        %v6124 = vunpack.c.l.b16 %v6003
        %v6125 = vunpack.c.h.b16 %v6003
        %v6126 = vunpack.c.l.b16 %v6004
        %v6127 = vunpack.c.h.b16 %v6004
        %v6128 = vunpack.c.l.b16 %v6005
        %v6129 = vunpack.c.h.b16 %v6005
        %v6130 = vunpack.c.l.b16 %v6006
        %v6131 = vunpack.c.h.b16 %v6006
        %v6132 = vunpack.c.l.b16 %v6007
        %v6133 = vunpack.c.h.b16 %v6007
        %v6134 = vunpack.c.l.b16 %v6008
        %v6135 = vunpack.c.h.b16 %v6008
        %v6136 = vunpack.c.l.b16 %v6009
        %v6137 = vunpack.c.h.b16 %v6009
        %v6138 = vunpack.c.l.b16 %v6010
        %v6139 = vunpack.c.h.b16 %v6010
        %v6140 = vunpack.c.l.b16 %v6011
        %v6141 = vunpack.c.h.b16 %v6011
        %v6142 = vunpack.c.l.b16 %v6012
        %v6143 = vunpack.c.h.b16 %v6012
        %v6144 = vunpack.c.l.b16 %v6013
        %v6145 = vunpack.c.h.b16 %v6013
        %v6146 = vunpack.c.l.b16 %v6014
        %v6147 = vunpack.c.h.b16 %v6014
        %v6148 = vunpack.c.l.b16 %v6015
        %v6149 = vunpack.c.h.b16 %v6015
        %v6150 = vunpack.c.l.b16 %v6016
        %v6151 = vunpack.c.h.b16 %v6016
        %v6152 = vunpack.c.l.b16 %v6017
        %v6153 = vunpack.c.h.b16 %v6017
        %v6154 = vunpack.c.l.b16 %v6018
        %v6155 = vunpack.c.h.b16 %v6018
        %v6156 = vunpack.c.l.b16 %v6019
        %v6157 = vunpack.c.h.b16 %v6019
        %v6158 = vunpack.c.l.b16 %v6020
        %v6159 = vunpack.c.h.b16 %v6020
        %v6160 = vunpack.c.l.b16 %v6021
        %v6161 = vunpack.c.h.b16 %v6021
        %v6162 = vunpack.c.l.b16 %v6022
        %v6163 = vunpack.c.h.b16 %v6022
        %v6164 = vunpack.c.l.b16 %v6023
        %v6165 = vunpack.c.h.b16 %v6023
        %v6166 = vunpack.c.l.b16 %v6024
        %v6167 = vunpack.c.h.b16 %v6024
        %v6168 = vunpack.c.l.b16 %v6025
        %v6169 = vunpack.c.h.b16 %v6025
        %v6170 = vpack.c.b16 %v6076, %v6074
        %v6171 = vpack.c.b16 %v6077, %v6075
        %v6172 = vpack.c.b16 %v6080, %v6078
        %v6173 = vpack.c.b16 %v6081, %v6079
        %v6174 = vpack.c.b16 %v6084, %v6082
        %v6175 = vpack.c.b16 %v6085, %v6083
        %v6176 = vpack.c.b16 %v6088, %v6086
        %v6177 = vpack.c.b16 %v6089, %v6087
        %v6178 = vpack.c.b16 %v6092, %v6090
        %v6179 = vpack.c.b16 %v6093, %v6091
        %v6180 = vpack.c.b16 %v6096, %v6094
        %v6181 = vpack.c.b16 %v6097, %v6095
        %v6182 = vpack.c.b16 %v6100, %v6098
        %v6183 = vpack.c.b16 %v6101, %v6099
        %v6184 = vpack.c.b16 %v6104, %v6102
        %v6185 = vpack.c.b16 %v6105, %v6103
        %v6186 = vpack.c.b16 %v6108, %v6106
        %v6187 = vpack.c.b16 %v6109, %v6107
        %v6188 = vpack.c.b16 %v6112, %v6110
        %v6189 = vpack.c.b16 %v6113, %v6111
        %v6190 = vpack.c.b16 %v6116, %v6114
        %v6191 = vpack.c.b16 %v6117, %v6115
        %v6192 = vpack.c.b16 %v6120, %v6118
        %v6193 = vpack.c.b16 %v6121, %v6119
        %v6194 = vpack.c.b16 %v6124, %v6122
        %v6195 = vpack.c.b16 %v6125, %v6123
        %v6196 = vpack.c.b16 %v6128, %v6126
        %v6197 = vpack.c.b16 %v6129, %v6127
        %v6198 = vpack.c.b16 %v6132, %v6130
        %v6199 = vpack.c.b16 %v6133, %v6131
        %v6200 = vpack.c.b16 %v6136, %v6134
        %v6201 = vpack.c.b16 %v6137, %v6135
        %v6202 = vpack.c.b16 %v6140, %v6138
        %v6203 = vpack.c.b16 %v6141, %v6139
        %v6204 = vpack.c.b16 %v6144, %v6142
        %v6205 = vpack.c.b16 %v6145, %v6143
        %v6206 = vpack.c.b16 %v6148, %v6146
        %v6207 = vpack.c.b16 %v6149, %v6147
        %v6208 = vpack.c.b16 %v6152, %v6150
        %v6209 = vpack.c.b16 %v6153, %v6151
        %v6210 = vpack.c.b16 %v6156, %v6154
        %v6211 = vpack.c.b16 %v6157, %v6155
        %v6212 = vpack.c.b16 %v6160, %v6158
        %v6213 = vpack.c.b16 %v6161, %v6159
        %v6214 = vpack.c.b16 %v6164, %v6162
        %v6215 = vpack.c.b16 %v6165, %v6163
        %v6216 = vpack.c.b16 %v6168, %v6166
        %v6217 = vpack.c.b16 %v6169, %v6167
        %6266 = vmatprep.subr.bf16.mxu0 %v6171
        %6267 = vmatpush1.bf16.msra.mxu0 %v6170
        %6268 = vmatprep.subr.bf16.mxu0 %v6173
        %6269 = vmatpush1.bf16.msra.mxu0 %v6172
        %6270 = vmatprep.subr.bf16.mxu0 %v6175
        %6271 = vmatpush1.bf16.msra.mxu0 %v6174
        %6272 = vmatprep.subr.bf16.mxu0 %v6177
        %6273 = vmatpush1.bf16.msra.mxu0 %v6176
        %6274 = vmatprep.subr.bf16.mxu0 %v6179
        %6275 = vmatpush1.bf16.msra.mxu0 %v6178
        %6276 = vmatprep.subr.bf16.mxu0 %v6181
        %6277 = vmatpush1.bf16.msra.mxu0 %v6180
        %6278 = vmatprep.subr.bf16.mxu0 %v6183
        %6279 = vmatpush1.bf16.msra.mxu0 %v6182
        %6280 = vmatprep.subr.bf16.mxu0 %v6185
        %6281 = vmatpush1.bf16.msra.mxu0 %v6184
        %6282 = vmatprep.subr.bf16.mxu0 %v6187
        %6283 = vmatpush1.bf16.msra.mxu0 %v6186
        %6284 = vmatprep.subr.bf16.mxu0 %v6189
        %6285 = vmatpush1.bf16.msra.mxu0 %v6188
        %6286 = vmatprep.subr.bf16.mxu0 %v6191
        %6287 = vmatpush1.bf16.msra.mxu0 %v6190
        %6288 = vmatprep.subr.bf16.mxu0 %v6193
        %6289 = vmatpush1.bf16.msra.mxu0 %v6192
        %6290 = vmatprep.subr.bf16.mxu0 %v6195
        %6291 = vmatpush1.bf16.msra.mxu0 %v6194
        %6292 = vmatprep.subr.bf16.mxu0 %v6197
        %6293 = vmatpush1.bf16.msra.mxu0 %v6196
        %6294 = vmatprep.subr.bf16.mxu0 %v6199
        %6295 = vmatpush1.bf16.msra.mxu0 %v6198
        %6296 = vmatprep.subr.bf16.mxu0 %v6201
        %6297 = vmatpush1.bf16.msra.mxu0 %v6200
        %6298 = vmatprep.mubr.bf16.mxu0 %v5973
        %6299 = vmatmul.mubr.bf16.gmra.mrb[0].mxu0 %v5972
        %v6300 = vpop.f32.mrb[0].mxu0
        %v6301 = vadd.f32 0.0, %v6300
        %v6302 = vpop.f32.mrb[0].mxu0
        %v6303 = vadd.f32 0.0, %v6302
        %v6304 = vpop.f32.mrb[0].mxu0
        %v6305 = vadd.f32 0.0, %v6304
        %v6306 = vpop.f32.mrb[0].mxu0
        %v6307 = vadd.f32 0.0, %v6306
        %6308 = vmatprep.mubr.bf16.mxu0 %v5976
        %6309 = vmatmul.mubr.bf16.gmra.mrb[0].mxu0 %v5975
        %v6310 = vpop.f32.mrb[0].mxu0
        %v6311 = vadd.f32 0.0, %v6310
        %v6312 = vpop.f32.mrb[0].mxu0
        %v6313 = vadd.f32 0.0, %v6312
        %v6314 = vpop.f32.mrb[0].mxu0
        %v6315 = vadd.f32 0.0, %v6314
        %v6316 = vpop.f32.mrb[0].mxu0
        %v6317 = vadd.f32 0.0, %v6316
        %6318 = vdwg.mxu0
        %6319 = vmatprep.subr.bf16.mxu0 %v6203
        %6320 = vmatpush1.bf16.msra.mxu0 %v6202
        %6321 = vmatprep.subr.bf16.mxu0 %v6205
        %6322 = vmatpush1.bf16.msra.mxu0 %v6204
        %6323 = vmatprep.subr.bf16.mxu0 %v6207
        %6324 = vmatpush1.bf16.msra.mxu0 %v6206
        %6325 = vmatprep.subr.bf16.mxu0 %v6209
        %6326 = vmatpush1.bf16.msra.mxu0 %v6208
        %6327 = vmatprep.subr.bf16.mxu0 %v6211
        %6328 = vmatpush1.bf16.msra.mxu0 %v6210
        %6329 = vmatprep.subr.bf16.mxu0 %v6213
        %6330 = vmatpush1.bf16.msra.mxu0 %v6212
        %6331 = vmatprep.subr.bf16.mxu0 %v6215
        %6332 = vmatpush1.bf16.msra.mxu0 %v6214
        %6333 = vmatprep.subr.bf16.mxu0 %v6217
        %6334 = vmatpush1.bf16.msra.mxu0 %v6216
        %6335 = vmatprep.subr.bf16.mxu0 0
        %6336 = vmatpush1.bf16.msra.mxu0 0
        %6337 = vmatprep.subr.bf16.mxu0 0
        %6338 = vmatpush1.bf16.msra.mxu0 0
        %6339 = vmatprep.subr.bf16.mxu0 0
        %6340 = vmatpush1.bf16.msra.mxu0 0
        %6341 = vmatprep.subr.bf16.mxu0 0
        %6342 = vmatpush1.bf16.msra.mxu0 0
        %6343 = vmatprep.subr.bf16.mxu0 0
        %6344 = vmatpush1.bf16.msra.mxu0 0
        %6345 = vmatprep.subr.bf16.mxu0 0
        %6346 = vmatpush1.bf16.msra.mxu0 0
        %6347 = vmatprep.subr.bf16.mxu0 0
        %6348 = vmatpush1.bf16.msra.mxu0 0
        %6349 = vmatprep.subr.bf16.mxu0 0
        %6350 = vmatpush1.bf16.msra.mxu0 0
        %6351 = vmatprep.mubr.bf16.mxu0 0
        %6352 = vmatmul.mubr.bf16.gmra.mrb[0].mxu0 %v5974
        %v6353 = vpop.f32.mrb[0].mxu0
        %v6354 = vadd.f32 %v6301, %v6353
        %v6355 = vpop.f32.mrb[0].mxu0
        %v6356 = vadd.f32 %v6303, %v6355
        %v6357 = vpop.f32.mrb[0].mxu0
        %v6358 = vadd.f32 %v6305, %v6357
        %v6359 = vpop.f32.mrb[0].mxu0
        %v6360 = vadd.f32 %v6307, %v6359
        %6361 = vmatprep.mubr.bf16.mxu0 0
        %6362 = vmatmul.mubr.bf16.gmra.mrb[0].mxu0 %v5977
        %v6363 = vpop.f32.mrb[0].mxu0
        %v6364 = vadd.f32 %v6311, %v6363
        %v6365 = vpop.f32.mrb[0].mxu0
        %v6366 = vadd.f32 %v6313, %v6365
        %v6367 = vpop.f32.mrb[0].mxu0
        %v6368 = vadd.f32 %v6315, %v6367
        %v6369 = vpop.f32.mrb[0].mxu0
        %v6370 = vadd.f32 %v6317, %v6369
        %6371 = vdwg.mxu0
        %v6372 = vld [vmem:[%s10] sm:$0xf]
        %v6374 = vlaneseq
        %v6375 = vshrl.u32 %v6374, 7
        %v6376 = vsub.s32 0, %v6375
        %v6377 = vrot.slane %v6372, %v6376
        %v6378 = vlaneseq
        %v6379 = vshrl.u32 %v6378, 7
        %v6380 = vsub.s32 2, %v6379
        %v6381 = vrot.slane %v6372, %v6380
        %v6384 = vlaneseq
        %v6385 = vshrl.u32 %v6384, 7
        %v6386 = vsub.s32 0, %v6385
        %v6387 = vrot.slane %v6377, %v6386
        %v6388 = vlaneseq
        %v6389 = vshrl.u32 %v6388, 7
        %v6390 = vsub.s32 0, %v6389
        %v6391 = vrot.slane %v6381, %v6390
        %v6392 = vmul.f32 %v6354, %v6387
        %v6393 = vmul.f32 %v6356, %v6391
        %v6394 = vmul.f32 %v6358, %v6387
        %v6395 = vmul.f32 %v6360, %v6391
        %v6396 = vmul.f32 %v6364, %v6387
        %v6397 = vmul.f32 %v6366, %v6391
        %v6398 = vmul.f32 %v6368, %v6387
        %v6399 = vmul.f32 %v6370, %v6391
        %v6400 = vlaneseq
        %v6401 = vshrl.u32 %v6400, 7
        %v6402 = vsub.s32 1, %v6401
        %v6403 = vrot.slane %v6372, %v6402
        %v6404 = vlaneseq
        %v6405 = vshrl.u32 %v6404, 7
        %v6406 = vsub.s32 3, %v6405
        %v6407 = vrot.slane %v6372, %v6406
        %v6410 = vlaneseq
        %v6411 = vshrl.u32 %v6410, 7
        %v6412 = vsub.s32 1, %v6411
        %v6413 = vrot.slane %v6403, %v6412
        %v6414 = vlaneseq
        %v6415 = vshrl.u32 %v6414, 7
        %v6416 = vsub.s32 1, %v6415
        %v6417 = vrot.slane %v6407, %v6416
        %v6418 = vadd.f32 %v6392, %v6413
        %v6419 = vadd.f32 %v6393, %v6417
        %v6420 = vadd.f32 %v6394, %v6413
        %v6421 = vadd.f32 %v6395, %v6417
        %v6422 = vadd.f32 %v6396, %v6413
        %v6423 = vadd.f32 %v6397, %v6417
        %v6424 = vadd.f32 %v6398, %v6413
        %v6425 = vadd.f32 %v6399, %v6417
        %v6426 = vmax.f32 %v6418, 0.0
        %v6427 = vmax.f32 %v6419, 0.0
        %v6428 = vmax.f32 %v6420, 0.0
        %v6429 = vmax.f32 %v6421, 0.0
        %v6430 = vmax.f32 %v6422, 0.0
        %v6431 = vmax.f32 %v6423, 0.0
        %v6432 = vmax.f32 %v6424, 0.0
        %v6433 = vmax.f32 %v6425, 0.0
        %v6434 = vmax.f32 %v6426, %v6427
        %v6435 = vmax.f32 %v6428, %v6429
        %v6436 = vmax.f32 %v6430, %v6431
        %v6437 = vmax.f32 %v6432, %v6433
        %6438 = vst [vmem:[#allocation3] sm:$0xff] %v6434
        %6439 = vst [vmem:[#allocation3 + $0x8] sm:$0xff] %v6435
        %6440 = vst [vmem:[#allocation3 + $0x10] sm:$0xff] %v6436
        %6441 = vst [vmem:[#allocation3 + $0x18] sm:$0xff] %v6437
        %v6442 = vld [vmem:[#allocation3] ss:$2 sm:$0xff]
        %v6443 = vld [vmem:[%s4398] ss:$2 sm:$0xff]
        %v6444 = vld [vmem:[%s3029] ss:$2 sm:$0xff]
        %v6445 = vld [vmem:[%s3031] ss:$2 sm:$0xff]
        %v6446 = vmax.f32 %v6442, %v6444
        %v6447 = vmax.f32 %v6443, %v6445
        %6448 = vst [vmem:[#allocation2 + $0x8] sm:$0xff] %v6446
        %6449 = vst [vmem:[#allocation2 + $0x10] sm:$0xff] %v6447
        %v6450 = vld [vmem:[#allocation2 + $0x7] sm:$0xff]
        %v6451 = vld [vmem:[#allocation2 + $0xf] sm:$0xff]
        %v6452 = vld [vmem:[#allocation2 + $0x9] sm:$0xff]
        %v6453 = vld [vmem:[#allocation2 + $0x11] sm:$0xff]
        %v6454 = vand.u32 %v942, 3
        %v6455 = vand.u32 %v943, 3
        %vm6456 = vcmp.eq.s32.totalorder %v6454, 0
        %vm6457 = vcmp.eq.s32.totalorder %v6455, 0
        %v6458 = vsel %vm6456, 0.0, %v6450
        %v6459 = vsel %vm6457, 0.0, %v6451
        %vm6460 = vcmp.eq.s32.totalorder %v6454, 3
        %vm6461 = vcmp.eq.s32.totalorder %v6455, 3
        %v6462 = vsel %vm6460, 0.0, %v6452
        %v6463 = vsel %vm6461, 0.0, %v6453
        %v6464 = vpack.c.bf16 %v6459, %v6458
        %v6465 = vpack.c.bf16 %v6447, %v6446
        %v6466 = vpack.c.bf16 %v6463, %v6462
        %v6467 = vld [vmem:[#allocation15] sm:$0xff]
        %v6468 = vld [vmem:[#allocation15 + $0x8] sm:$0xff]
        %v6469 = vld [vmem:[#allocation15 + $0x10] sm:$0xff]
        %v6470 = vld [vmem:[#allocation15 + $0x18] sm:$0xff]
        %v6471 = vld [vmem:[#allocation15 + $0x20] sm:$0xff]
        %v6472 = vld [vmem:[#allocation15 + $0x28] sm:$0xff]
        %v6473 = vld [vmem:[#allocation15 + $0x30] sm:$0xff]
        %v6474 = vld [vmem:[#allocation15 + $0x38] sm:$0xff]
        %v6475 = vld [vmem:[#allocation15 + $0x40] sm:$0xff]
        %v6476 = vld [vmem:[#allocation15 + $0x48] sm:$0xff]
        %v6477 = vld [vmem:[#allocation15 + $0x50] sm:$0xff]
        %v6478 = vld [vmem:[#allocation15 + $0x58] sm:$0xff]
        %v6479 = vld [vmem:[#allocation15 + $0x60] sm:$0xff]
        %v6480 = vld [vmem:[#allocation15 + $0x68] sm:$0xff]
        %v6481 = vld [vmem:[#allocation15 + $0x70] sm:$0xff]
        %v6482 = vld [vmem:[#allocation15 + $0x78] sm:$0xff]
        %v6483 = vld [vmem:[#allocation15 + $0x80] sm:$0xff]
        %v6484 = vld [vmem:[#allocation15 + $0x88] sm:$0xff]
        %v6485 = vld [vmem:[#allocation15 + $0x90] sm:$0xff]
        %v6486 = vld [vmem:[#allocation15 + $0x98] sm:$0xff]
        %v6487 = vld [vmem:[#allocation15 + $0xa0] sm:$0xff]
        %v6488 = vld [vmem:[#allocation15 + $0xa8] sm:$0xff]
        %v6489 = vld [vmem:[#allocation15 + $0xb0] sm:$0xff]
        %v6490 = vld [vmem:[#allocation15 + $0xb8] sm:$0xff]
        %v6491 = vld [vmem:[#allocation15 + $0xc0] sm:$0xff]
        %v6492 = vld [vmem:[#allocation15 + $0xc8] sm:$0xff]
        %v6493 = vld [vmem:[#allocation15 + $0xd0] sm:$0xff]
        %v6494 = vld [vmem:[#allocation15 + $0xd8] sm:$0xff]
        %v6495 = vld [vmem:[#allocation15 + $0xe0] sm:$0xff]
        %v6496 = vld [vmem:[#allocation15 + $0xe8] sm:$0xff]
        %v6497 = vld [vmem:[#allocation15 + $0xf0] sm:$0xff]
        %v6498 = vld [vmem:[#allocation15 + $0xf8] sm:$0xff]
        %v6499 = vld [vmem:[#allocation15 + $0x100] sm:$0xff]
        %v6500 = vld [vmem:[#allocation15 + $0x108] sm:$0xff]
        %v6501 = vld [vmem:[#allocation15 + $0x110] sm:$0xff]
        %v6502 = vld [vmem:[#allocation15 + $0x118] sm:$0xff]
        %v6503 = vld [vmem:[#allocation15 + $0x120] sm:$0xff]
        %v6504 = vld [vmem:[#allocation15 + $0x128] sm:$0xff]
        %v6505 = vld [vmem:[#allocation15 + $0x130] sm:$0xff]
        %v6506 = vld [vmem:[#allocation15 + $0x138] sm:$0xff]
        %v6507 = vld [vmem:[#allocation15 + $0x140] sm:$0xff]
        %v6508 = vld [vmem:[#allocation15 + $0x148] sm:$0xff]
        %v6509 = vld [vmem:[#allocation15 + $0x150] sm:$0xff]
        %v6510 = vld [vmem:[#allocation15 + $0x158] sm:$0xff]
        %v6511 = vld [vmem:[#allocation15 + $0x160] sm:$0xff]
        %v6512 = vld [vmem:[#allocation15 + $0x168] sm:$0xff]
        %v6513 = vld [vmem:[#allocation15 + $0x170] sm:$0xff]
        %v6514 = vld [vmem:[#allocation15 + $0x178] sm:$0xff]
        %v6563 = vunpack.c.l.b16 %v6467
        %v6564 = vunpack.c.h.b16 %v6467
        %v6565 = vunpack.c.l.b16 %v6468
        %v6566 = vunpack.c.h.b16 %v6468
        %v6567 = vunpack.c.l.b16 %v6469
        %v6568 = vunpack.c.h.b16 %v6469
        %v6569 = vunpack.c.l.b16 %v6470
        %v6570 = vunpack.c.h.b16 %v6470
        %v6571 = vunpack.c.l.b16 %v6471
        %v6572 = vunpack.c.h.b16 %v6471
        %v6573 = vunpack.c.l.b16 %v6472
        %v6574 = vunpack.c.h.b16 %v6472
        %v6575 = vunpack.c.l.b16 %v6473
        %v6576 = vunpack.c.h.b16 %v6473
        %v6577 = vunpack.c.l.b16 %v6474
        %v6578 = vunpack.c.h.b16 %v6474
        %v6579 = vunpack.c.l.b16 %v6475
        %v6580 = vunpack.c.h.b16 %v6475
        %v6581 = vunpack.c.l.b16 %v6476
        %v6582 = vunpack.c.h.b16 %v6476
        %v6583 = vunpack.c.l.b16 %v6477
        %v6584 = vunpack.c.h.b16 %v6477
        %v6585 = vunpack.c.l.b16 %v6478
        %v6586 = vunpack.c.h.b16 %v6478
        %v6587 = vunpack.c.l.b16 %v6479
        %v6588 = vunpack.c.h.b16 %v6479
        %v6589 = vunpack.c.l.b16 %v6480
        %v6590 = vunpack.c.h.b16 %v6480
        %v6591 = vunpack.c.l.b16 %v6481
        %v6592 = vunpack.c.h.b16 %v6481
        %v6593 = vunpack.c.l.b16 %v6482
        %v6594 = vunpack.c.h.b16 %v6482
        %v6595 = vunpack.c.l.b16 %v6483
        %v6596 = vunpack.c.h.b16 %v6483
        %v6597 = vunpack.c.l.b16 %v6484
        %v6598 = vunpack.c.h.b16 %v6484
        %v6599 = vunpack.c.l.b16 %v6485
        %v6600 = vunpack.c.h.b16 %v6485
        %v6601 = vunpack.c.l.b16 %v6486
        %v6602 = vunpack.c.h.b16 %v6486
        %v6603 = vunpack.c.l.b16 %v6487
        %v6604 = vunpack.c.h.b16 %v6487
        %v6605 = vunpack.c.l.b16 %v6488
        %v6606 = vunpack.c.h.b16 %v6488
        %v6607 = vunpack.c.l.b16 %v6489
        %v6608 = vunpack.c.h.b16 %v6489
        %v6609 = vunpack.c.l.b16 %v6490
        %v6610 = vunpack.c.h.b16 %v6490
        %v6611 = vunpack.c.l.b16 %v6491
        %v6612 = vunpack.c.h.b16 %v6491
        %v6613 = vunpack.c.l.b16 %v6492
        %v6614 = vunpack.c.h.b16 %v6492
        %v6615 = vunpack.c.l.b16 %v6493
        %v6616 = vunpack.c.h.b16 %v6493
        %v6617 = vunpack.c.l.b16 %v6494
        %v6618 = vunpack.c.h.b16 %v6494
        %v6619 = vunpack.c.l.b16 %v6495
        %v6620 = vunpack.c.h.b16 %v6495
        %v6621 = vunpack.c.l.b16 %v6496
        %v6622 = vunpack.c.h.b16 %v6496
        %v6623 = vunpack.c.l.b16 %v6497
        %v6624 = vunpack.c.h.b16 %v6497
        %v6625 = vunpack.c.l.b16 %v6498
        %v6626 = vunpack.c.h.b16 %v6498
        %v6627 = vunpack.c.l.b16 %v6499
        %v6628 = vunpack.c.h.b16 %v6499
        %v6629 = vunpack.c.l.b16 %v6500
        %v6630 = vunpack.c.h.b16 %v6500
        %v6631 = vunpack.c.l.b16 %v6501
        %v6632 = vunpack.c.h.b16 %v6501
        %v6633 = vunpack.c.l.b16 %v6502
        %v6634 = vunpack.c.h.b16 %v6502
        %v6635 = vunpack.c.l.b16 %v6503
        %v6636 = vunpack.c.h.b16 %v6503
        %v6637 = vunpack.c.l.b16 %v6504
        %v6638 = vunpack.c.h.b16 %v6504
        %v6639 = vunpack.c.l.b16 %v6505
        %v6640 = vunpack.c.h.b16 %v6505
        %v6641 = vunpack.c.l.b16 %v6506
        %v6642 = vunpack.c.h.b16 %v6506
        %v6643 = vunpack.c.l.b16 %v6507
        %v6644 = vunpack.c.h.b16 %v6507
        %v6645 = vunpack.c.l.b16 %v6508
        %v6646 = vunpack.c.h.b16 %v6508
        %v6647 = vunpack.c.l.b16 %v6509
        %v6648 = vunpack.c.h.b16 %v6509
        %v6649 = vunpack.c.l.b16 %v6510
        %v6650 = vunpack.c.h.b16 %v6510
        %v6651 = vunpack.c.l.b16 %v6511
        %v6652 = vunpack.c.h.b16 %v6511
        %v6653 = vunpack.c.l.b16 %v6512
        %v6654 = vunpack.c.h.b16 %v6512
        %v6655 = vunpack.c.l.b16 %v6513
        %v6656 = vunpack.c.h.b16 %v6513
        %v6657 = vunpack.c.l.b16 %v6514
        %v6658 = vunpack.c.h.b16 %v6514
        %v6659 = vpack.c.b16 %v6565, %v6563
        %v6660 = vpack.c.b16 %v6566, %v6564
        %v6661 = vpack.c.b16 %v6569, %v6567
        %v6662 = vpack.c.b16 %v6570, %v6568
        %v6663 = vpack.c.b16 %v6573, %v6571
        %v6664 = vpack.c.b16 %v6574, %v6572
        %v6665 = vpack.c.b16 %v6577, %v6575
        %v6666 = vpack.c.b16 %v6578, %v6576
        %v6667 = vpack.c.b16 %v6581, %v6579
        %v6668 = vpack.c.b16 %v6582, %v6580
        %v6669 = vpack.c.b16 %v6585, %v6583
        %v6670 = vpack.c.b16 %v6586, %v6584
        %v6671 = vpack.c.b16 %v6589, %v6587
        %v6672 = vpack.c.b16 %v6590, %v6588
        %v6673 = vpack.c.b16 %v6593, %v6591
        %v6674 = vpack.c.b16 %v6594, %v6592
        %v6675 = vpack.c.b16 %v6597, %v6595
        %v6676 = vpack.c.b16 %v6598, %v6596
        %v6677 = vpack.c.b16 %v6601, %v6599
        %v6678 = vpack.c.b16 %v6602, %v6600
        %v6679 = vpack.c.b16 %v6605, %v6603
        %v6680 = vpack.c.b16 %v6606, %v6604
        %v6681 = vpack.c.b16 %v6609, %v6607
        %v6682 = vpack.c.b16 %v6610, %v6608
        %v6683 = vpack.c.b16 %v6613, %v6611
        %v6684 = vpack.c.b16 %v6614, %v6612
        %v6685 = vpack.c.b16 %v6617, %v6615
        %v6686 = vpack.c.b16 %v6618, %v6616
        %v6687 = vpack.c.b16 %v6621, %v6619
        %v6688 = vpack.c.b16 %v6622, %v6620
        %v6689 = vpack.c.b16 %v6625, %v6623
        %v6690 = vpack.c.b16 %v6626, %v6624
        %v6691 = vpack.c.b16 %v6629, %v6627
        %v6692 = vpack.c.b16 %v6630, %v6628
        %v6693 = vpack.c.b16 %v6633, %v6631
        %v6694 = vpack.c.b16 %v6634, %v6632
        %v6695 = vpack.c.b16 %v6637, %v6635
        %v6696 = vpack.c.b16 %v6638, %v6636
        %v6697 = vpack.c.b16 %v6641, %v6639
        %v6698 = vpack.c.b16 %v6642, %v6640
        %v6699 = vpack.c.b16 %v6645, %v6643
        %v6700 = vpack.c.b16 %v6646, %v6644
        %v6701 = vpack.c.b16 %v6649, %v6647
        %v6702 = vpack.c.b16 %v6650, %v6648
        %v6703 = vpack.c.b16 %v6653, %v6651
        %v6704 = vpack.c.b16 %v6654, %v6652
        %v6705 = vpack.c.b16 %v6657, %v6655
        %v6706 = vpack.c.b16 %v6658, %v6656
        %6755 = vmatprep.subr.bf16.mxu0 %v6660
        %6756 = vmatpush1.bf16.msra.mxu0 %v6659
        %6757 = vmatprep.subr.bf16.mxu0 %v6662
        %6758 = vmatpush1.bf16.msra.mxu0 %v6661
        %6759 = vmatprep.subr.bf16.mxu0 %v6664
        %6760 = vmatpush1.bf16.msra.mxu0 %v6663
        %6761 = vmatprep.subr.bf16.mxu0 %v6666
        %6762 = vmatpush1.bf16.msra.mxu0 %v6665
        %6763 = vmatprep.subr.bf16.mxu0 %v6668
        %6764 = vmatpush1.bf16.msra.mxu0 %v6667
        %6765 = vmatprep.subr.bf16.mxu0 %v6670
        %6766 = vmatpush1.bf16.msra.mxu0 %v6669
        %6767 = vmatprep.subr.bf16.mxu0 %v6672
        %6768 = vmatpush1.bf16.msra.mxu0 %v6671
        %6769 = vmatprep.subr.bf16.mxu0 %v6674
        %6770 = vmatpush1.bf16.msra.mxu0 %v6673
        %6771 = vmatprep.subr.bf16.mxu0 %v6676
        %6772 = vmatpush1.bf16.msra.mxu0 %v6675
        %6773 = vmatprep.subr.bf16.mxu0 %v6678
        %6774 = vmatpush1.bf16.msra.mxu0 %v6677
        %6775 = vmatprep.subr.bf16.mxu0 %v6680
        %6776 = vmatpush1.bf16.msra.mxu0 %v6679
        %6777 = vmatprep.subr.bf16.mxu0 %v6682
        %6778 = vmatpush1.bf16.msra.mxu0 %v6681
        %6779 = vmatprep.subr.bf16.mxu0 %v6684
        %6780 = vmatpush1.bf16.msra.mxu0 %v6683
        %6781 = vmatprep.subr.bf16.mxu0 %v6686
        %6782 = vmatpush1.bf16.msra.mxu0 %v6685
        %6783 = vmatprep.subr.bf16.mxu0 %v6688
        %6784 = vmatpush1.bf16.msra.mxu0 %v6687
        %6785 = vmatprep.subr.bf16.mxu0 %v6690
        %6786 = vmatpush1.bf16.msra.mxu0 %v6689
        %6787 = vmatprep.mubr.bf16.mxu0 %v6465
        %6788 = vmatmul.mubr.bf16.gmra.mrb[0].mxu0 %v6464
        %v6789 = vpop.f32.mrb[0].mxu0
        %v6790 = vadd.f32 0.0, %v6789
        %v6791 = vpop.f32.mrb[0].mxu0
        %v6792 = vadd.f32 0.0, %v6791
        %v6793 = vpop.f32.mrb[0].mxu0
        %v6794 = vadd.f32 0.0, %v6793
        %v6795 = vpop.f32.mrb[0].mxu0
        %v6796 = vadd.f32 0.0, %v6795
        %6797 = vdwg.mxu0
        %6798 = vmatprep.subr.bf16.mxu0 %v6692
        %6799 = vmatpush1.bf16.msra.mxu0 %v6691
        %6800 = vmatprep.subr.bf16.mxu0 %v6694
        %6801 = vmatpush1.bf16.msra.mxu0 %v6693
        %6802 = vmatprep.subr.bf16.mxu0 %v6696
        %6803 = vmatpush1.bf16.msra.mxu0 %v6695
        %6804 = vmatprep.subr.bf16.mxu0 %v6698
        %6805 = vmatpush1.bf16.msra.mxu0 %v6697
        %6806 = vmatprep.subr.bf16.mxu0 %v6700
        %6807 = vmatpush1.bf16.msra.mxu0 %v6699
        %6808 = vmatprep.subr.bf16.mxu0 %v6702
        %6809 = vmatpush1.bf16.msra.mxu0 %v6701
        %6810 = vmatprep.subr.bf16.mxu0 %v6704
        %6811 = vmatpush1.bf16.msra.mxu0 %v6703
        %6812 = vmatprep.subr.bf16.mxu0 %v6706
        %6813 = vmatpush1.bf16.msra.mxu0 %v6705
        %6814 = vmatprep.subr.bf16.mxu0 0
        %6815 = vmatpush1.bf16.msra.mxu0 0
        %6816 = vmatprep.subr.bf16.mxu0 0
        %6817 = vmatpush1.bf16.msra.mxu0 0
        %6818 = vmatprep.subr.bf16.mxu0 0
        %6819 = vmatpush1.bf16.msra.mxu0 0
        %6820 = vmatprep.subr.bf16.mxu0 0
        %6821 = vmatpush1.bf16.msra.mxu0 0
        %6822 = vmatprep.subr.bf16.mxu0 0
        %6823 = vmatpush1.bf16.msra.mxu0 0
        %6824 = vmatprep.subr.bf16.mxu0 0
        %6825 = vmatpush1.bf16.msra.mxu0 0
        %6826 = vmatprep.subr.bf16.mxu0 0
        %6827 = vmatpush1.bf16.msra.mxu0 0
        %6828 = vmatprep.subr.bf16.mxu0 0
        %6829 = vmatpush1.bf16.msra.mxu0 0
        %6830 = vmatprep.mubr.bf16.mxu0 0
        %6831 = vmatmul.mubr.bf16.gmra.mrb[0].mxu0 %v6466
        %v6832 = vpop.f32.mrb[0].mxu0
        %v6833 = vadd.f32 %v6790, %v6832
        %v6834 = vpop.f32.mrb[0].mxu0
        %v6835 = vadd.f32 %v6792, %v6834
        %v6836 = vpop.f32.mrb[0].mxu0
        %v6837 = vadd.f32 %v6794, %v6836
        %v6838 = vpop.f32.mrb[0].mxu0
        %v6839 = vadd.f32 %v6796, %v6838
        %6840 = vdwg.mxu0
        %v6841 = vld [vmem:[%s12] sm:$0xf]
        %v6843 = vlaneseq
        %v6844 = vshrl.u32 %v6843, 7
        %v6845 = vsub.s32 0, %v6844
        %v6846 = vrot.slane %v6841, %v6845
        %v6847 = vlaneseq
        %v6848 = vshrl.u32 %v6847, 7
        %v6849 = vsub.s32 2, %v6848
        %v6850 = vrot.slane %v6841, %v6849
        %v6853 = vlaneseq
        %v6854 = vshrl.u32 %v6853, 7
        %v6855 = vsub.s32 0, %v6854
        %v6856 = vrot.slane %v6846, %v6855
        %v6857 = vlaneseq
        %v6858 = vshrl.u32 %v6857, 7
        %v6859 = vsub.s32 0, %v6858
        %v6860 = vrot.slane %v6850, %v6859
        %v6861 = vmul.f32 %v6833, %v6856
        %v6862 = vmul.f32 %v6835, %v6860
        %v6863 = vmul.f32 %v6837, %v6856
        %v6864 = vmul.f32 %v6839, %v6860
        %v6865 = vlaneseq
        %v6866 = vshrl.u32 %v6865, 7
        %v6867 = vsub.s32 1, %v6866
        %v6868 = vrot.slane %v6841, %v6867
        %v6869 = vlaneseq
        %v6870 = vshrl.u32 %v6869, 7
        %v6871 = vsub.s32 3, %v6870
        %v6872 = vrot.slane %v6841, %v6871
        %v6875 = vlaneseq
        %v6876 = vshrl.u32 %v6875, 7
        %v6877 = vsub.s32 1, %v6876
        %v6878 = vrot.slane %v6868, %v6877
        %v6879 = vlaneseq
        %v6880 = vshrl.u32 %v6879, 7
        %v6881 = vsub.s32 1, %v6880
        %v6882 = vrot.slane %v6872, %v6881
        %v6883 = vadd.f32 %v6861, %v6878
        %v6884 = vadd.f32 %v6862, %v6882
        %v6885 = vadd.f32 %v6863, %v6878
        %v6886 = vadd.f32 %v6864, %v6882
        %v6887 = vmax.f32 %v6883, 0.0
        %v6888 = vmax.f32 %v6884, 0.0
        %v6889 = vmax.f32 %v6885, 0.0
        %v6890 = vmax.f32 %v6886, 0.0
        %v6891 = vmax.f32 %v6887, %v6888
        %v6892 = vmax.f32 %v6889, %v6890
        %6893 = vst [vmem:[#allocation3] sm:$0xff] %v6891
        %6894 = vst [vmem:[#allocation3 + $0x8] sm:$0xff] %v6892
        %v6895 = vld [vmem:[#allocation3] ss:$2 sm:$0xff]
        %v6896 = vld [vmem:[%s3029] ss:$2 sm:$0xff]
        %v6897 = vmax.f32 %v6895, %v6896
        %6898 = vst [vmem:[#allocation3] sm:$0xff] %v6897
        %v6899 = vld [vmem:[#allocation3] ss:$2 sm:$0xf]
        %v6900 = vld [vmem:[%s3029] ss:$2 sm:$0xf]
        %v6901 = vpack.c.bf16 %v6899, %v6899
        %v6902 = vpack.c.bf16 %v6900, %v6900
        %v6903 = vld [vmem:[#allocation16] sm:$0xff]
        %v6904 = vld [vmem:[#allocation16 + $0x8] sm:$0xff]
        %v6905 = vld [vmem:[#allocation16 + $0x10] sm:$0xff]
        %v6906 = vld [vmem:[#allocation16 + $0x18] sm:$0xff]
        %v6907 = vld [vmem:[#allocation16 + $0x20] sm:$0xff]
        %v6908 = vld [vmem:[#allocation16 + $0x28] sm:$0xff]
        %v6909 = vld [vmem:[#allocation16 + $0x30] sm:$0xff]
        %v6910 = vld [vmem:[#allocation16 + $0x38] sm:$0xff]
        %v6911 = vld [vmem:[#allocation16 + $0x40] sm:$0xff]
        %v6912 = vld [vmem:[#allocation16 + $0x48] sm:$0xff]
        %v6913 = vld [vmem:[#allocation16 + $0x50] sm:$0xff]
        %v6914 = vld [vmem:[#allocation16 + $0x58] sm:$0xff]
        %v6915 = vld [vmem:[#allocation16 + $0x60] sm:$0xff]
        %v6916 = vld [vmem:[#allocation16 + $0x68] sm:$0xff]
        %v6917 = vld [vmem:[#allocation16 + $0x70] sm:$0xff]
        %v6918 = vld [vmem:[#allocation16 + $0x78] sm:$0xff]
        %v6919 = vld [vmem:[#allocation16 + $0x80] sm:$0xff]
        %v6920 = vld [vmem:[#allocation16 + $0x88] sm:$0xff]
        %v6921 = vld [vmem:[#allocation16 + $0x90] sm:$0xff]
        %v6922 = vld [vmem:[#allocation16 + $0x98] sm:$0xff]
        %v6923 = vld [vmem:[#allocation16 + $0xa0] sm:$0xff]
        %v6924 = vld [vmem:[#allocation16 + $0xa8] sm:$0xff]
        %v6925 = vld [vmem:[#allocation16 + $0xb0] sm:$0xff]
        %v6926 = vld [vmem:[#allocation16 + $0xb8] sm:$0xff]
        %v6927 = vld [vmem:[#allocation16 + $0xc0] sm:$0xff]
        %v6928 = vld [vmem:[#allocation16 + $0xc8] sm:$0xff]
        %v6929 = vld [vmem:[#allocation16 + $0xd0] sm:$0xff]
        %v6930 = vld [vmem:[#allocation16 + $0xd8] sm:$0xff]
        %v6931 = vld [vmem:[#allocation16 + $0xe0] sm:$0xff]
        %v6932 = vld [vmem:[#allocation16 + $0xe8] sm:$0xff]
        %v6933 = vld [vmem:[#allocation16 + $0xf0] sm:$0xff]
        %v6934 = vld [vmem:[#allocation16 + $0xf8] sm:$0xff]
        %v6935 = vld [vmem:[%s14] sm:$0x3]
        %v6937 = vlaneseq
        %v6938 = vshrl.u32 %v6937, 7
        %v6939 = vsub.s32 0, %v6938
        %v6940 = vrot.slane %v6935, %v6939
        %v6941 = vlaneseq
        %v6942 = vshrl.u32 %v6941, 7
        %v6943 = vsub.s32 1, %v6942
        %v6944 = vrot.slane %v6935, %v6943
        %v6979 = vunpack.c.l.b16 %v6903
        %v6980 = vunpack.c.h.b16 %v6903
        %v6981 = vunpack.c.l.b16 %v6904
        %v6982 = vunpack.c.h.b16 %v6904
        %v6983 = vunpack.c.l.b16 %v6905
        %v6984 = vunpack.c.h.b16 %v6905
        %v6985 = vunpack.c.l.b16 %v6906
        %v6986 = vunpack.c.h.b16 %v6906
        %v6987 = vunpack.c.l.b16 %v6907
        %v6988 = vunpack.c.h.b16 %v6907
        %v6989 = vunpack.c.l.b16 %v6908
        %v6990 = vunpack.c.h.b16 %v6908
        %v6991 = vunpack.c.l.b16 %v6909
        %v6992 = vunpack.c.h.b16 %v6909
        %v6993 = vunpack.c.l.b16 %v6910
        %v6994 = vunpack.c.h.b16 %v6910
        %v6995 = vunpack.c.l.b16 %v6911
        %v6996 = vunpack.c.h.b16 %v6911
        %v6997 = vunpack.c.l.b16 %v6912
        %v6998 = vunpack.c.h.b16 %v6912
        %v6999 = vunpack.c.l.b16 %v6913
        %v7000 = vunpack.c.h.b16 %v6913
        %v7001 = vunpack.c.l.b16 %v6914
        %v7002 = vunpack.c.h.b16 %v6914
        %v7003 = vunpack.c.l.b16 %v6915
        %v7004 = vunpack.c.h.b16 %v6915
        %v7005 = vunpack.c.l.b16 %v6916
        %v7006 = vunpack.c.h.b16 %v6916
        %v7007 = vunpack.c.l.b16 %v6917
        %v7008 = vunpack.c.h.b16 %v6917
        %v7009 = vunpack.c.l.b16 %v6918
        %v7010 = vunpack.c.h.b16 %v6918
        %v7011 = vunpack.c.l.b16 %v6919
        %v7012 = vunpack.c.h.b16 %v6919
        %v7013 = vunpack.c.l.b16 %v6920
        %v7014 = vunpack.c.h.b16 %v6920
        %v7015 = vunpack.c.l.b16 %v6921
        %v7016 = vunpack.c.h.b16 %v6921
        %v7017 = vunpack.c.l.b16 %v6922
        %v7018 = vunpack.c.h.b16 %v6922
        %v7019 = vunpack.c.l.b16 %v6923
        %v7020 = vunpack.c.h.b16 %v6923
        %v7021 = vunpack.c.l.b16 %v6924
        %v7022 = vunpack.c.h.b16 %v6924
        %v7023 = vunpack.c.l.b16 %v6925
        %v7024 = vunpack.c.h.b16 %v6925
        %v7025 = vunpack.c.l.b16 %v6926
        %v7026 = vunpack.c.h.b16 %v6926
        %v7027 = vunpack.c.l.b16 %v6927
        %v7028 = vunpack.c.h.b16 %v6927
        %v7029 = vunpack.c.l.b16 %v6928
        %v7030 = vunpack.c.h.b16 %v6928
        %v7031 = vunpack.c.l.b16 %v6929
        %v7032 = vunpack.c.h.b16 %v6929
        %v7033 = vunpack.c.l.b16 %v6930
        %v7034 = vunpack.c.h.b16 %v6930
        %v7035 = vunpack.c.l.b16 %v6931
        %v7036 = vunpack.c.h.b16 %v6931
        %v7037 = vunpack.c.l.b16 %v6932
        %v7038 = vunpack.c.h.b16 %v6932
        %v7039 = vunpack.c.l.b16 %v6933
        %v7040 = vunpack.c.h.b16 %v6933
        %v7041 = vunpack.c.l.b16 %v6934
        %v7042 = vunpack.c.h.b16 %v6934
        %v7043 = vpack.c.b16 %v6981, %v6979
        %v7044 = vpack.c.b16 %v6982, %v6980
        %v7045 = vpack.c.b16 %v6985, %v6983
        %v7046 = vpack.c.b16 %v6986, %v6984
        %v7047 = vpack.c.b16 %v6989, %v6987
        %v7048 = vpack.c.b16 %v6990, %v6988
        %v7049 = vpack.c.b16 %v6993, %v6991
        %v7050 = vpack.c.b16 %v6994, %v6992
        %v7051 = vpack.c.b16 %v6997, %v6995
        %v7052 = vpack.c.b16 %v6998, %v6996
        %v7053 = vpack.c.b16 %v7001, %v6999
        %v7054 = vpack.c.b16 %v7002, %v7000
        %v7055 = vpack.c.b16 %v7005, %v7003
        %v7056 = vpack.c.b16 %v7006, %v7004
        %v7057 = vpack.c.b16 %v7009, %v7007
        %v7058 = vpack.c.b16 %v7010, %v7008
        %v7059 = vpack.c.b16 %v7013, %v7011
        %v7060 = vpack.c.b16 %v7014, %v7012
        %v7061 = vpack.c.b16 %v7017, %v7015
        %v7062 = vpack.c.b16 %v7018, %v7016
        %v7063 = vpack.c.b16 %v7021, %v7019
        %v7064 = vpack.c.b16 %v7022, %v7020
        %v7065 = vpack.c.b16 %v7025, %v7023
        %v7066 = vpack.c.b16 %v7026, %v7024
        %v7067 = vpack.c.b16 %v7029, %v7027
        %v7068 = vpack.c.b16 %v7030, %v7028
        %v7069 = vpack.c.b16 %v7033, %v7031
        %v7070 = vpack.c.b16 %v7034, %v7032
        %v7071 = vpack.c.b16 %v7037, %v7035
        %v7072 = vpack.c.b16 %v7038, %v7036
        %v7073 = vpack.c.b16 %v7041, %v7039
        %v7074 = vpack.c.b16 %v7042, %v7040
        %7107 = vmatprep.subr.bf16.mxu0 %v7044
        %7108 = vmatpush1.bf16.msra.mxu0 %v7043
        %7109 = vmatprep.subr.bf16.mxu0 %v7046
        %7110 = vmatpush1.bf16.msra.mxu0 %v7045
        %7111 = vmatprep.subr.bf16.mxu0 %v7048
        %7112 = vmatpush1.bf16.msra.mxu0 %v7047
        %7113 = vmatprep.subr.bf16.mxu0 %v7050
        %7114 = vmatpush1.bf16.msra.mxu0 %v7049
        %7115 = vmatprep.subr.bf16.mxu0 %v7052
        %7116 = vmatpush1.bf16.msra.mxu0 %v7051
        %7117 = vmatprep.subr.bf16.mxu0 %v7054
        %7118 = vmatpush1.bf16.msra.mxu0 %v7053
        %7119 = vmatprep.subr.bf16.mxu0 %v7056
        %7120 = vmatpush1.bf16.msra.mxu0 %v7055
        %7121 = vmatprep.subr.bf16.mxu0 %v7058
        %7122 = vmatpush1.bf16.msra.mxu0 %v7057
        %7123 = vmatprep.subr.bf16.mxu0 %v7060
        %7124 = vmatpush1.bf16.msra.mxu0 %v7059
        %7125 = vmatprep.subr.bf16.mxu0 %v7062
        %7126 = vmatpush1.bf16.msra.mxu0 %v7061
        %7127 = vmatprep.subr.bf16.mxu0 %v7064
        %7128 = vmatpush1.bf16.msra.mxu0 %v7063
        %7129 = vmatprep.subr.bf16.mxu0 %v7066
        %7130 = vmatpush1.bf16.msra.mxu0 %v7065
        %7131 = vmatprep.subr.bf16.mxu0 %v7068
        %7132 = vmatpush1.bf16.msra.mxu0 %v7067
        %7133 = vmatprep.subr.bf16.mxu0 %v7070
        %7134 = vmatpush1.bf16.msra.mxu0 %v7069
        %7135 = vmatprep.subr.bf16.mxu0 %v7072
        %7136 = vmatpush1.bf16.msra.mxu0 %v7071
        %7137 = vmatprep.subr.bf16.mxu0 %v7074
        %7138 = vmatpush1.bf16.msra.mxu0 %v7073
        %7139 = vmatprep.mubr.bf16.mxu0 %v6902
        %7140 = vmatmul.mubr.bf16.gmra.mrb[0].mxu0 %v6901
        %v7141 = vpop.f32.mrb[0].mxu0
        %v7142 = vadd.f32 %v6940, %v7141
        %v7143 = vpop.f32.mrb[0].mxu0
        %v7144 = vadd.f32 %v6944, %v7143
        %v7145 = vpop.f32.mrb[0].mxu0
        %v7146 = vpop.f32.mrb[0].mxu0
        %7147 = vdwg.mxu0
        %v7148 = vmax.f32 %v7142, 0.0
        %v7149 = vmax.f32 %v7144, 0.0
        %v7150 = vpack.c.bf16 %v7148, %v7148
        %v7151 = vpack.c.bf16 %v7149, %v7149
        %v7152 = vld [vmem:[#allocation18] sm:$0xf]
        %v7153 = vld [vmem:[#allocation18 + $0x4] sm:$0xf]
        %v7154 = vld [vmem:[#allocation18 + $0x8] sm:$0xf]
        %v7155 = vld [vmem:[#allocation18 + $0xc] sm:$0xf]
        %v7156 = vld [vmem:[#allocation18 + $0x10] sm:$0xf]
        %v7157 = vld [vmem:[#allocation18 + $0x14] sm:$0xf]
        %v7158 = vld [vmem:[#allocation18 + $0x18] sm:$0xf]
        %v7159 = vld [vmem:[#allocation18 + $0x1c] sm:$0xf]
        %v7160 = vld [vmem:[#allocation18 + $0x20] sm:$0xf]
        %v7161 = vld [vmem:[#allocation18 + $0x24] sm:$0xf]
        %v7162 = vld [vmem:[#allocation18 + $0x28] sm:$0xf]
        %v7163 = vld [vmem:[#allocation18 + $0x2c] sm:$0xf]
        %v7164 = vld [vmem:[#allocation18 + $0x30] sm:$0xf]
        %v7165 = vld [vmem:[#allocation18 + $0x34] sm:$0xf]
        %v7166 = vld [vmem:[#allocation18 + $0x38] sm:$0xf]
        %v7167 = vld [vmem:[#allocation18 + $0x3c] sm:$0xf]
        %v7168 = vld [vmem:[#allocation18 + $0x40] sm:$0xf]
        %v7169 = vld [vmem:[#allocation18 + $0x44] sm:$0xf]
        %v7170 = vld [vmem:[#allocation18 + $0x48] sm:$0xf]
        %v7171 = vld [vmem:[#allocation18 + $0x4c] sm:$0xf]
        %v7172 = vld [vmem:[#allocation18 + $0x50] sm:$0xf]
        %v7173 = vld [vmem:[#allocation18 + $0x54] sm:$0xf]
        %v7174 = vld [vmem:[#allocation18 + $0x58] sm:$0xf]
        %v7175 = vld [vmem:[#allocation18 + $0x5c] sm:$0xf]
        %v7176 = vld [vmem:[#allocation18 + $0x60] sm:$0xf]
        %v7177 = vld [vmem:[#allocation18 + $0x64] sm:$0xf]
        %v7178 = vld [vmem:[#allocation18 + $0x68] sm:$0xf]
        %v7179 = vld [vmem:[#allocation18 + $0x6c] sm:$0xf]
        %v7180 = vld [vmem:[#allocation18 + $0x70] sm:$0xf]
        %v7181 = vld [vmem:[#allocation18 + $0x74] sm:$0xf]
        %v7182 = vld [vmem:[#allocation18 + $0x78] sm:$0xf]
        %v7183 = vld [vmem:[#allocation18 + $0x7c] sm:$0xf]
        %v7184 = vld [vmem:[%s16] sm:$0x1]
        %v7186 = vlaneseq
        %v7187 = vshrl.u32 %v7186, 7
        %v7188 = vsub.s32 0, %v7187
        %v7189 = vrot.slane %v7184, %v7188
        %v7223 = vunpack.c.l.b16 %v7152
        %v7224 = vunpack.c.l.b16 %v7153
        %v7225 = vunpack.c.l.b16 %v7154
        %v7226 = vunpack.c.l.b16 %v7155
        %v7227 = vunpack.c.l.b16 %v7156
        %v7228 = vunpack.c.l.b16 %v7157
        %v7229 = vunpack.c.l.b16 %v7158
        %v7230 = vunpack.c.l.b16 %v7159
        %v7231 = vunpack.c.l.b16 %v7160
        %v7232 = vunpack.c.l.b16 %v7161
        %v7233 = vunpack.c.l.b16 %v7162
        %v7234 = vunpack.c.l.b16 %v7163
        %v7235 = vunpack.c.l.b16 %v7164
        %v7236 = vunpack.c.l.b16 %v7165
        %v7237 = vunpack.c.l.b16 %v7166
        %v7238 = vunpack.c.l.b16 %v7167
        %v7239 = vunpack.c.l.b16 %v7168
        %v7240 = vunpack.c.l.b16 %v7169
        %v7241 = vunpack.c.l.b16 %v7170
        %v7242 = vunpack.c.l.b16 %v7171
        %v7243 = vunpack.c.l.b16 %v7172
        %v7244 = vunpack.c.l.b16 %v7173
        %v7245 = vunpack.c.l.b16 %v7174
        %v7246 = vunpack.c.l.b16 %v7175
        %v7247 = vunpack.c.l.b16 %v7176
        %v7248 = vunpack.c.l.b16 %v7177
        %v7249 = vunpack.c.l.b16 %v7178
        %v7250 = vunpack.c.l.b16 %v7179
        %v7251 = vunpack.c.l.b16 %v7180
        %v7252 = vunpack.c.l.b16 %v7181
        %v7253 = vunpack.c.l.b16 %v7182
        %v7254 = vunpack.c.l.b16 %v7183
        %v7255 = vpack.c.b16 %v7224, %v7223
        %v7256 = vpack.c.b16 %v7226, %v7225
        %v7257 = vpack.c.b16 %v7228, %v7227
        %v7258 = vpack.c.b16 %v7230, %v7229
        %v7259 = vpack.c.b16 %v7232, %v7231
        %v7260 = vpack.c.b16 %v7234, %v7233
        %v7261 = vpack.c.b16 %v7236, %v7235
        %v7262 = vpack.c.b16 %v7238, %v7237
        %v7263 = vpack.c.b16 %v7240, %v7239
        %v7264 = vpack.c.b16 %v7242, %v7241
        %v7265 = vpack.c.b16 %v7244, %v7243
        %v7266 = vpack.c.b16 %v7246, %v7245
        %v7267 = vpack.c.b16 %v7248, %v7247
        %v7268 = vpack.c.b16 %v7250, %v7249
        %v7269 = vpack.c.b16 %v7252, %v7251
        %v7270 = vpack.c.b16 %v7254, %v7253
        %7287 = vmatprep.subr.bf16.mxu0 0
        %7288 = vmatpush1.bf16.msra.mxu0 %v7255
        %7289 = vmatprep.subr.bf16.mxu0 0
        %7290 = vmatpush1.bf16.msra.mxu0 %v7256
        %7291 = vmatprep.subr.bf16.mxu0 0
        %7292 = vmatpush1.bf16.msra.mxu0 %v7257
        %7293 = vmatprep.subr.bf16.mxu0 0
        %7294 = vmatpush1.bf16.msra.mxu0 %v7258
        %7295 = vmatprep.subr.bf16.mxu0 0
        %7296 = vmatpush1.bf16.msra.mxu0 %v7259
        %7297 = vmatprep.subr.bf16.mxu0 0
        %7298 = vmatpush1.bf16.msra.mxu0 %v7260
        %7299 = vmatprep.subr.bf16.mxu0 0
        %7300 = vmatpush1.bf16.msra.mxu0 %v7261
        %7301 = vmatprep.subr.bf16.mxu0 0
        %7302 = vmatpush1.bf16.msra.mxu0 %v7262
        %7303 = vmatprep.subr.bf16.mxu0 0
        %7304 = vmatpush1.bf16.msra.mxu0 %v7263
        %7305 = vmatprep.subr.bf16.mxu0 0
        %7306 = vmatpush1.bf16.msra.mxu0 %v7264
        %7307 = vmatprep.subr.bf16.mxu0 0
        %7308 = vmatpush1.bf16.msra.mxu0 %v7265
        %7309 = vmatprep.subr.bf16.mxu0 0
        %7310 = vmatpush1.bf16.msra.mxu0 %v7266
        %7311 = vmatprep.subr.bf16.mxu0 0
        %7312 = vmatpush1.bf16.msra.mxu0 %v7267
        %7313 = vmatprep.subr.bf16.mxu0 0
        %7314 = vmatpush1.bf16.msra.mxu0 %v7268
        %7315 = vmatprep.subr.bf16.mxu0 0
        %7316 = vmatpush1.bf16.msra.mxu0 %v7269
        %7317 = vmatprep.subr.bf16.mxu0 0
        %7318 = vmatpush1.bf16.msra.mxu0 %v7270
        %7319 = vmatprep.mubr.bf16.mxu0 %v7151
        %7320 = vmatmul.mubr.bf16.gmra.mrb[0].mxu0 %v7150
        %v7321 = vpop.f32.mrb[0].mxu0
        %v7322 = vadd.f32 %v7189, %v7321
        %v7323 = vpop.f32.mrb[0].mxu0
        %v7324 = vpop.f32.mrb[0].mxu0
        %v7325 = vpop.f32.mrb[0].mxu0
        %7326 = vdwg.mxu0
        %vm7327 = vcmask 1043456
        %v7328 = vsel %vm7327, %v7322, -inf
        %7329 = vmax.xlane.f32.xlu0 %v7328
        %v7330 = vpop.xlane.xlu0 %7329
        %v7331 = vsub.f32 %v7322, %v7330
        %v7332 = vmul.f32 %v7331, 1.442695
        %v7333 = vpow.pop %v7332
        %v7334 = vsel %vm7327, %v7333, 0.0
        %7335 = vadd.xlane.f32.xlu0 %v7334
        %v7336 = vpop.xlane.xlu0 %7335
        %v7337 = vrcp.pop %v7336
        %v7338 = vmul.f32 %v7333, %v7337
        %7339 = vst [vmem:[%s682] sm:$0xf] %v7338
        %s7340 = sand.u32 %s408, 1
        %s7341 = scalar_lea.sflag [#allocation6], %s7340
        %s7342 = sand.u32 %s408, 1
        %s7343 = smul.addr %s7342, 4
        %s7344 = scalar_lea.vmem [#allocation19], %s7343
        // Predicated region
        $region125: #{_lambda_.1} parent=87 // pred_check
          %p7345 = pneg %p418
        $region126: #{_lambda_.1} parent=87 // pred_check_branch
          %7347 = sbr.rel (%p7345) target = $region128
        $region127: #{_lambda_.1} parent=87 // pred_region
          %s7349 = ssub.s32 64, 64
          %7350 = vsyncadd %s7341, %s7349
          %s7351 = smul.addr %s38, 64
          %s7352 = scalar_lea.hbm %s17, %s7351
          %s7354 = sshll.u32 %s7344, 4
          %s7355 = int_to_ptr.vmem [resolvable:$true] %s7354
          %7357 = dma.vmem_to_hbm [thread:$0]  %s7355, 64, %s7352, %s7341
        $region128: #{_lambda_.1} parent=87 // pred_fallthru
          _
      $region88: #{_lambda_.1} parent=5 // pred_fallthru
        _
      %p7358 = scmp.le.s32.totalorder 2, %s33
      // Predicated region
      $region129: #{_lambda_.1} parent=5 // pred_check
        %p7359 = pneg %p7358
      $region130: #{_lambda_.1} parent=5 // pred_check_branch
        %7361 = sbr.rel (%p7359) target = $region132
      $region131: #{_lambda_.1} parent=5 // pred_region
        %s7362 = ssub.s32 %s33, 2
        // Predicated region
        $region133: #{_lambda_.1} parent=131 // pred_check
          %p7363 = pneg %p424
        $region134: #{_lambda_.1} parent=131 // pred_check_branch
          %7365 = sbr.rel (%p7363) target = $region136
        $region135: #{_lambda_.1} parent=131 // pred_region
          %s7366 = sand.u32 %s409, 1
          %s7367 = scalar_lea.sflag [#allocation6], %s7366
          %s7368 = sand.u32 %s409, 1
          %s7369 = smul.addr %s7368, 4
          %s7370 = scalar_lea.vmem [#allocation19], %s7369
          %7371 = dma.done %s7367, 64
        $region136: #{_lambda_.1} parent=131 // pred_fallthru
          _
      $region132: #{_lambda_.1} parent=5 // pred_fallthru
        _
    $region6: #{_lambda_.1} parent=1 // loop_footer
      %s37 = sadd.s32 1, %s33
    $region7: #{_lambda_.1} parent=1 // loop_footer_branch
      %32 = sbr.rel target = $region3
    $region8: #{_lambda_.1} parent=1 // loop_exit
      _
    %7372 = vsyncpa [#allocation5], 1
    %s7373 = scalar_lea.sflag [#allocation5], 1
    %7374 = vsyncpa %s7373, 1
    %7375 = vsyncpa [#allocation8], 1
    %7376 = vsyncpa [#allocation11], 1
    %7377 = vsyncpa [#allocation14], 1
    %7378 = vsyncpa [#allocation17], 1
    %7379 = vsyncpa [#allocation6], 1
    %s7380 = scalar_lea.sflag [#allocation6], 1
    %7381 = vsyncpa %s7380, 1

</llo_original>
